<compile_context>
chip_gen: v6e
topology: v6e:2x2x1
jax: 0.10.0
libtpu: 0.0.40
codegen_flags: <defaults>
</compile_context>

<pallas_src>
import jax
import jax.numpy as jnp
from jax.experimental import pallas as pl
from jax.experimental.pallas import tpu as pltpu

INPUT_DIM = 784
HIDDEN_DIM = 400
LATENT_DIM = 20

# Lane-dense (multiple-of-128) padded internal dims. Input/output stay 784.
PAD_HID = 512   # 400 -> 512
PAD_LAT = 128   # 20  -> 128


def _round_up(n, m):
    return ((n + m - 1) // m) * m


def _cdiv(a, b):
    return -(-a // b)


def _autoencoder_kernel(x_ref,
                        w1_ref, b1_ref,
                        w2_ref, b2_ref,
                        w3_ref, b3_ref,
                        w4_ref, b4_ref,
                        out_ref):
    # bf16 operands into the MXU, f32 accumulation; bias/ReLU stay f32
    # (v5e has no bf16 VPU). Input cast happens here so the wrapper moves
    # no extra HBM traffic.
    x = x_ref[...].astype(jnp.bfloat16)                                 # (TB, 784)

    h1 = jnp.dot(x, w1_ref[...], preferred_element_type=jnp.float32) + b1_ref[...]
    h1 = jnp.maximum(h1, 0.0).astype(jnp.bfloat16)                      # (TB, 512)

    z = jnp.dot(h1, w2_ref[...], preferred_element_type=jnp.float32) + b2_ref[...]
    z = jnp.maximum(z, 0.0).astype(jnp.bfloat16)                        # (TB, 128)

    h2 = jnp.dot(z, w3_ref[...], preferred_element_type=jnp.float32) + b3_ref[...]
    h2 = jnp.maximum(h2, 0.0).astype(jnp.bfloat16)                      # (TB, 512)

    logits = jnp.dot(h2, w4_ref[...], preferred_element_type=jnp.float32) + b4_ref[...]
    # sigmoid(x) = 0.5 * tanh(x/2) + 0.5: single EUP op, no exp overflow/NaN.
    out = 0.5 * jnp.tanh(0.5 * logits) + 0.5
    out_ref[...] = out.astype(out_ref.dtype)                            # (TB, 784)


def prepare_params(params):
    """One-time padding/casting of weights (bf16) and biases (f32).

    Call once at model setup and pass the result to every forward call.
    Weights come in as (in_features, out_features)."""
    (w1, b1), (w2, b2), (w3, b3), (w4, b4) = params

    def pad_w(w, rows, cols):
        wp = jnp.zeros((rows, cols), jnp.float32)
        wp = wp.at[: w.shape[0], : w.shape[1]].set(w.astype(jnp.float32))
        return wp.astype(jnp.bfloat16)

    def pad_b(b, cols):
        b = jnp.reshape(b, (1, -1)).astype(jnp.float32)
        bp = jnp.zeros((1, cols), jnp.float32)
        return bp.at[:, : b.shape[1]].set(b)

    return (pad_w(w1, INPUT_DIM, PAD_HID), pad_b(b1, PAD_HID),
            pad_w(w2, PAD_HID, PAD_LAT), pad_b(b2, PAD_LAT),
            pad_w(w3, PAD_LAT, PAD_HID), pad_b(b3, PAD_HID),
            pad_w(w4, PAD_HID, INPUT_DIM), pad_b(b4, INPUT_DIM))


def standard_autoencoder_forward(x, padded_params, *, tb=1024,
                                 out_dtype=jnp.bfloat16):
    """x: any shape whose trailing elements flatten to rows of 784
    (same as x.view(-1, 784)). padded_params: output of prepare_params().
    Returns decoded output of shape (B, 784)."""
    x2d = x.reshape(-1, INPUT_DIM)
    B = x2d.shape[0]

    # Row-pad only up to the 8-sublane minimum (rare; tiny copy). Across
    # tiles we rely on a ragged last block instead of materializing rows.
    Bp = _round_up(B, 8)
    if Bp != B:
        x2d = jnp.zeros((Bp, INPUT_DIM), x2d.dtype).at[:B].set(x2d)

    # Batch tile: large enough to amortize the ~0.35us/step pipeline overhead,
    # small enough that the parallel grid has >=4 steps (>=2 per TC on v7x).
    tb = max(8, min(tb, _round_up(_cdiv(Bp, 4), 8)))
    num_steps = _cdiv(Bp, tb)

    w1, b1, w2, b2, w3, b3, w4, b4 = padded_params

    weight_bytes = sum(int(a.size) * a.dtype.itemsize for a in padded_params)
    cost = pl.CostEstimate(
        flops=2 * Bp * (INPUT_DIM * PAD_HID + PAD_HID * PAD_LAT
                        + PAD_LAT * PAD_HID + PAD_HID * INPUT_DIM),
        transcendentals=Bp * INPUT_DIM,
        bytes_accessed=Bp * INPUT_DIM * (x2d.dtype.itemsize
                                         + jnp.dtype(out_dtype).itemsize)
        + weight_bytes,
    )

    def build(single_buffer_weights):
        if single_buffer_weights:
            # Constant block index -> no re-DMA; single buffer frees ~2 MB VMEM.
            def resident(shape):
                return pl.BlockSpec(shape, lambda i: (0, 0),
                                    pipeline_mode=pl.Buffered(1))
        else:
            def resident(shape):
                return pl.BlockSpec(shape, lambda i: (0, 0))

        return pl.pallas_call(
            _autoencoder_kernel,
            out_shape=jax.ShapeDtypeStruct((Bp, INPUT_DIM), out_dtype),
            grid=(num_steps,),
            in_specs=[
                pl.BlockSpec((tb, INPUT_DIM), lambda i: (i, 0)),   # x streams
                resident((INPUT_DIM, PAD_HID)), resident((1, PAD_HID)),
                resident((PAD_HID, PAD_LAT)), resident((1, PAD_LAT)),
                resident((PAD_LAT, PAD_HID)), resident((1, PAD_HID)),
                resident((PAD_HID, INPUT_DIM)), resident((1, INPUT_DIM)),
            ],
            out_specs=pl.BlockSpec((tb, INPUT_DIM), lambda i: (i, 0)),
            compiler_params=pltpu.CompilerParams(
                dimension_semantics=("parallel",),   # megacore split on v7x
                vmem_limit_bytes=48 << 20,           # fits v7x's 64 MiB/TC
            ),
            cost_estimate=cost,
        )

    args = (x2d, w1, b1, w2, b2, w3, b3, w4, b4)
    try:
        out = build(True)(*args)
    except Exception:
        # pipeline_mode=pl.Buffered(1) not supported by this jax build;
        # fall back to default double-buffered (correctness unaffected).
        out = build(False)(*args)

    return out if Bp == B else out[:B]


def init_params(key):
    """Deterministic init mimicking nn.Linear's uniform(-1/sqrt(fan_in), 1/sqrt(fan_in)).
    Weights stored as (in_features, out_features)."""
    dims = [(INPUT_DIM, HIDDEN_DIM),
            (HIDDEN_DIM, LATENT_DIM),
            (LATENT_DIM, HIDDEN_DIM),
            (HIDDEN_DIM, INPUT_DIM)]
    params = []
    for (fan_in, fan_out) in dims:
        key, kw, kb = jax.random.split(key, 3)
        bound = 1.0 / jnp.sqrt(float(fan_in))
        w = jax.random.uniform(kw, (fan_in, fan_out), jnp.float32, -bound, bound)
        b = jax.random.uniform(kb, (1, fan_out), jnp.float32, -bound, bound)
        params.append((w, b))
    return params


def _reference_forward(x, params):
    """Pure-JAX f32 reference for correctness checking."""
    x2d = x.reshape(-1, INPUT_DIM).astype(jnp.float32)
    (w1, b1), (w2, b2), (w3, b3), (w4, b4) = params
    h = jnp.maximum(x2d @ w1 + b1, 0.0)
    z = jnp.maximum(h @ w2 + b2, 0.0)
    d = jnp.maximum(z @ w3 + b3, 0.0)
    return jax.nn.sigmoid(d @ w4 + b4)


if __name__ == "__main__":
    key = jax.random.PRNGKey(0)
    key, kx = jax.random.split(key)

    # Small MNIST-like batch, NCHW: (batch=2, channels=1, 28, 28) -> view(-1, 784)
    x = jax.random.normal(kx, (2, 1, 28, 28), jnp.float32)

    params = init_params(key)
    padded_params = prepare_params(params)   # hoisted: pad/cast weights once

    out = standard_autoencoder_forward(x, padded_params)
    out = jax.block_until_ready(out)

    ref = _reference_forward(x, params)
    assert out.shape == (2, INPUT_DIM)
    # bf16 matmul operands + bf16 output vs f32 reference -> relaxed tolerance.
    err = jnp.max(jnp.abs(out.astype(jnp.float32) - ref))
    assert err < 3e-2, err

    print("KERNEL_OK")
</pallas_src>

<mosaic_0001>
module attributes {stable_mosaic.version = 11 : i64} {
  func.func @_autoencoder_kernel(%arg0: i32, %arg1: memref<8x784xf32, #tpu.memory_space<vmem>>, %arg2: memref<784x512xbf16, #tpu.memory_space<vmem>>, %arg3: memref<1x512xf32, #tpu.memory_space<vmem>>, %arg4: memref<512x128xbf16, #tpu.memory_space<vmem>>, %arg5: memref<1x128xf32, #tpu.memory_space<vmem>>, %arg6: memref<128x512xbf16, #tpu.memory_space<vmem>>, %arg7: memref<1x512xf32, #tpu.memory_space<vmem>>, %arg8: memref<512x784xbf16, #tpu.memory_space<vmem>>, %arg9: memref<1x784xf32, #tpu.memory_space<vmem>>, %arg10: memref<8x784xbf16, #tpu.memory_space<vmem>>) attributes {dimension_semantics = [#tpu.dimension_semantics<parallel>], iteration_bounds = array<i64: 1>, scalar_prefetch = 0 : i64, scratch_operands = 0 : i64, tpu.core_type = #tpu.core_type<tc>, window_params = [{transform_indices = @transform_0, window_bounds = array<i64: 8, 784>}, {pipeline_mode = #tpu.pipeline_mode<synchronous>, transform_indices = @transform_1, window_bounds = array<i64: 784, 512>}, {pipeline_mode = #tpu.pipeline_mode<synchronous>, transform_indices = @transform_2, window_bounds = array<i64: 1, 512>}, {pipeline_mode = #tpu.pipeline_mode<synchronous>, transform_indices = @transform_3, window_bounds = array<i64: 512, 128>}, {pipeline_mode = #tpu.pipeline_mode<synchronous>, transform_indices = @transform_4, window_bounds = array<i64: 1, 128>}, {pipeline_mode = #tpu.pipeline_mode<synchronous>, transform_indices = @transform_5, window_bounds = array<i64: 128, 512>}, {pipeline_mode = #tpu.pipeline_mode<synchronous>, transform_indices = @transform_6, window_bounds = array<i64: 1, 512>}, {pipeline_mode = #tpu.pipeline_mode<synchronous>, transform_indices = @transform_7, window_bounds = array<i64: 512, 784>}, {pipeline_mode = #tpu.pipeline_mode<synchronous>, transform_indices = @transform_8, window_bounds = array<i64: 1, 784>}, {transform_indices = @transform_9, window_bounds = array<i64: 8, 784>}]} {
    %c0 = arith.constant 0 : index
    %c0_0 = arith.constant 0 : index
    %0 = vector.load %arg1[%c0, %c0_0] : memref<8x784xf32, #tpu.memory_space<vmem>>, vector<8x784xf32>
    %1 = arith.truncf %0 : vector<8x784xf32> to vector<8x784xbf16>
    %c0_1 = arith.constant 0 : index
    %c0_2 = arith.constant 0 : index
    %2 = vector.load %arg2[%c0_1, %c0_2] : memref<784x512xbf16, #tpu.memory_space<vmem>>, vector<784x512xbf16>
    %cst = arith.constant dense<0.000000e+00> : vector<8x512xf32>
    %3 = tpu.matmul %1, %2, %cst {dimension_numbers = #tpu.dot_dimension_numbers<[1], [0], [0], [1], [0, 0, 1, 1], [], []>} : vector<8x784xbf16>, vector<784x512xbf16>, vector<8x512xf32> -> vector<8x512xf32>
    %c0_3 = arith.constant 0 : index
    %c0_4 = arith.constant 0 : index
    %4 = vector.load %arg3[%c0_3, %c0_4] : memref<1x512xf32, #tpu.memory_space<vmem>>, vector<1x512xf32>
    %5 = vector.broadcast %4 : vector<1x512xf32> to vector<8x512xf32>
    %6 = arith.addf %3, %5 : vector<8x512xf32>
    %cst_5 = arith.constant 0.000000e+00 : f32
    %7 = vector.broadcast %cst_5 : f32 to vector<8x512xf32>
    %8 = arith.maximumf %6, %7 : vector<8x512xf32>
    %9 = arith.truncf %8 : vector<8x512xf32> to vector<8x512xbf16>
    %c0_6 = arith.constant 0 : index
    %c0_7 = arith.constant 0 : index
    %10 = vector.load %arg4[%c0_6, %c0_7] : memref<512x128xbf16, #tpu.memory_space<vmem>>, vector<512x128xbf16>
    %cst_8 = arith.constant dense<0.000000e+00> : vector<8x128xf32>
    %11 = tpu.matmul %9, %10, %cst_8 {dimension_numbers = #tpu.dot_dimension_numbers<[1], [0], [0], [1], [0, 0, 1, 1], [], []>} : vector<8x512xbf16>, vector<512x128xbf16>, vector<8x128xf32> -> vector<8x128xf32>
    %c0_9 = arith.constant 0 : index
    %c0_10 = arith.constant 0 : index
    %12 = vector.load %arg5[%c0_9, %c0_10] : memref<1x128xf32, #tpu.memory_space<vmem>>, vector<1x128xf32>
    %13 = vector.broadcast %12 : vector<1x128xf32> to vector<8x128xf32>
    %14 = arith.addf %11, %13 : vector<8x128xf32>
    %cst_11 = arith.constant 0.000000e+00 : f32
    %15 = vector.broadcast %cst_11 : f32 to vector<8x128xf32>
    %16 = arith.maximumf %14, %15 : vector<8x128xf32>
    %17 = arith.truncf %16 : vector<8x128xf32> to vector<8x128xbf16>
    %c0_12 = arith.constant 0 : index
    %c0_13 = arith.constant 0 : index
    %18 = vector.load %arg6[%c0_12, %c0_13] : memref<128x512xbf16, #tpu.memory_space<vmem>>, vector<128x512xbf16>
    %cst_14 = arith.constant dense<0.000000e+00> : vector<8x512xf32>
    %19 = tpu.matmul %17, %18, %cst_14 {dimension_numbers = #tpu.dot_dimension_numbers<[1], [0], [0], [1], [0, 0, 1, 1], [], []>} : vector<8x128xbf16>, vector<128x512xbf16>, vector<8x512xf32> -> vector<8x512xf32>
    %c0_15 = arith.constant 0 : index
    %c0_16 = arith.constant 0 : index
    %20 = vector.load %arg7[%c0_15, %c0_16] : memref<1x512xf32, #tpu.memory_space<vmem>>, vector<1x512xf32>
    %21 = vector.broadcast %20 : vector<1x512xf32> to vector<8x512xf32>
    %22 = arith.addf %19, %21 : vector<8x512xf32>
    %cst_17 = arith.constant 0.000000e+00 : f32
    %23 = vector.broadcast %cst_17 : f32 to vector<8x512xf32>
    %24 = arith.maximumf %22, %23 : vector<8x512xf32>
    %25 = arith.truncf %24 : vector<8x512xf32> to vector<8x512xbf16>
    %c0_18 = arith.constant 0 : index
    %c0_19 = arith.constant 0 : index
    %26 = vector.load %arg8[%c0_18, %c0_19] : memref<512x784xbf16, #tpu.memory_space<vmem>>, vector<512x784xbf16>
    %cst_20 = arith.constant dense<0.000000e+00> : vector<8x784xf32>
    %27 = tpu.matmul %25, %26, %cst_20 {dimension_numbers = #tpu.dot_dimension_numbers<[1], [0], [0], [1], [0, 0, 1, 1], [], []>} : vector<8x512xbf16>, vector<512x784xbf16>, vector<8x784xf32> -> vector<8x784xf32>
    %c0_21 = arith.constant 0 : index
    %c0_22 = arith.constant 0 : index
    %28 = vector.load %arg9[%c0_21, %c0_22] : memref<1x784xf32, #tpu.memory_space<vmem>>, vector<1x784xf32>
    %29 = vector.broadcast %28 : vector<1x784xf32> to vector<8x784xf32>
    %30 = arith.addf %27, %29 : vector<8x784xf32>
    %cst_23 = arith.constant 5.000000e-01 : f32
    %31 = vector.broadcast %cst_23 : f32 to vector<8x784xf32>
    %32 = arith.mulf %31, %30 : vector<8x784xf32>
    %33 = math.tanh %32 : vector<8x784xf32>
    %cst_24 = arith.constant 5.000000e-01 : f32
    %34 = vector.broadcast %cst_24 : f32 to vector<8x784xf32>
    %35 = arith.mulf %34, %33 : vector<8x784xf32>
    %cst_25 = arith.constant 5.000000e-01 : f32
    %36 = vector.broadcast %cst_25 : f32 to vector<8x784xf32>
    %37 = arith.addf %35, %36 : vector<8x784xf32>
    %38 = arith.truncf %37 : vector<8x784xf32> to vector<8x784xbf16>
    %c0_26 = arith.constant 0 : index
    %c0_27 = arith.constant 0 : index
    %39 = vector.load %arg10[%c0_26, %c0_27] : memref<8x784xbf16, #tpu.memory_space<vmem>>, vector<8x784xbf16>
    tpu.vector_store %arg10[%c0_26, %c0_27], %38 {strides = array<i32>} : memref<8x784xbf16, #tpu.memory_space<vmem>>, vector<8x784xbf16>,
    return
  }
  func.func @transform_0(%arg0: i32) -> (i32, i32) {
    %c0_i32 = arith.constant 0 : i32
    %c0_i32_0 = arith.constant 0 : i32
    return %arg0, %c0_i32 : i32, i32
  }
  func.func @transform_1(%arg0: i32) -> (i32, i32) {
    %c0_i32 = arith.constant 0 : i32
    %c0_i32_0 = arith.constant 0 : i32
    %c0_i32_1 = arith.constant 0 : i32
    return %c0_i32, %c0_i32_0 : i32, i32
  }
  func.func @transform_2(%arg0: i32) -> (i32, i32) {
    %c0_i32 = arith.constant 0 : i32
    %c0_i32_0 = arith.constant 0 : i32
    %c0_i32_1 = arith.constant 0 : i32
    return %c0_i32, %c0_i32_0 : i32, i32
  }
  func.func @transform_3(%arg0: i32) -> (i32, i32) {
    %c0_i32 = arith.constant 0 : i32
    %c0_i32_0 = arith.constant 0 : i32
    %c0_i32_1 = arith.constant 0 : i32
    return %c0_i32, %c0_i32_0 : i32, i32
  }
  func.func @transform_4(%arg0: i32) -> (i32, i32) {
    %c0_i32 = arith.constant 0 : i32
    %c0_i32_0 = arith.constant 0 : i32
    %c0_i32_1 = arith.constant 0 : i32
    return %c0_i32, %c0_i32_0 : i32, i32
  }
  func.func @transform_5(%arg0: i32) -> (i32, i32) {
    %c0_i32 = arith.constant 0 : i32
    %c0_i32_0 = arith.constant 0 : i32
    %c0_i32_1 = arith.constant 0 : i32
    return %c0_i32, %c0_i32_0 : i32, i32
  }
  func.func @transform_6(%arg0: i32) -> (i32, i32) {
    %c0_i32 = arith.constant 0 : i32
    %c0_i32_0 = arith.constant 0 : i32
    %c0_i32_1 = arith.constant 0 : i32
    return %c0_i32, %c0_i32_0 : i32, i32
  }
  func.func @transform_7(%arg0: i32) -> (i32, i32) {
    %c0_i32 = arith.constant 0 : i32
    %c0_i32_0 = arith.constant 0 : i32
    %c0_i32_1 = arith.constant 0 : i32
    return %c0_i32, %c0_i32_0 : i32, i32
  }
  func.func @transform_8(%arg0: i32) -> (i32, i32) {
    %c0_i32 = arith.constant 0 : i32
    %c0_i32_0 = arith.constant 0 : i32
    %c0_i32_1 = arith.constant 0 : i32
    return %c0_i32, %c0_i32_0 : i32, i32
  }
  func.func @transform_9(%arg0: i32) -> (i32, i32) {
    %c0_i32 = arith.constant 0 : i32
    %c0_i32_0 = arith.constant 0 : i32
    return %arg0, %c0_i32 : i32, i32
  }
}

module attributes {stable_mosaic.version = 11 : i64} {
  func.func @_autoencoder_kernel(%arg0: i32, %arg1: memref<8x784xf32, #tpu.memory_space<vmem>>, %arg2: memref<784x512xbf16, #tpu.memory_space<vmem>>, %arg3: memref<1x512xf32, #tpu.memory_space<vmem>>, %arg4: memref<512x128xbf16, #tpu.memory_space<vmem>>, %arg5: memref<1x128xf32, #tpu.memory_space<vmem>>, %arg6: memref<128x512xbf16, #tpu.memory_space<vmem>>, %arg7: memref<1x512xf32, #tpu.memory_space<vmem>>, %arg8: memref<512x784xbf16, #tpu.memory_space<vmem>>, %arg9: memref<1x784xf32, #tpu.memory_space<vmem>>, %arg10: memref<8x784xbf16, #tpu.memory_space<vmem>>) attributes {dimension_semantics = [#tpu.dimension_semantics<parallel>], iteration_bounds = array<i64: 1>, scalar_prefetch = 0 : i64, scratch_operands = 0 : i64, tpu.core_type = #tpu.core_type<tc>, window_params = [{transform_indices = @transform_0, window_bounds = array<i64: 8, 784>}, {pipeline_mode = #tpu.pipeline_mode<synchronous>, transform_indices = @transform_1, window_bounds = array<i64: 784, 512>}, {pipeline_mode = #tpu.pipeline_mode<synchronous>, transform_indices = @transform_2, window_bounds = array<i64: 1, 512>}, {pipeline_mode = #tpu.pipeline_mode<synchronous>, transform_indices = @transform_3, window_bounds = array<i64: 512, 128>}, {pipeline_mode = #tpu.pipeline_mode<synchronous>, transform_indices = @transform_4, window_bounds = array<i64: 1, 128>}, {pipeline_mode = #tpu.pipeline_mode<synchronous>, transform_indices = @transform_5, window_bounds = array<i64: 128, 512>}, {pipeline_mode = #tpu.pipeline_mode<synchronous>, transform_indices = @transform_6, window_bounds = array<i64: 1, 512>}, {pipeline_mode = #tpu.pipeline_mode<synchronous>, transform_indices = @transform_7, window_bounds = array<i64: 512, 784>}, {pipeline_mode = #tpu.pipeline_mode<synchronous>, transform_indices = @transform_8, window_bounds = array<i64: 1, 784>}, {transform_indices = @transform_9, window_bounds = array<i64: 8, 784>}]} {
    %c0 = arith.constant 0 : index
    %c0_0 = arith.constant 0 : index
    %0 = vector.load %arg1[%c0, %c0_0] : memref<8x784xf32, #tpu.memory_space<vmem>>, vector<8x784xf32>
    %1 = arith.truncf %0 : vector<8x784xf32> to vector<8x784xbf16>
    %c0_1 = arith.constant 0 : index
    %c0_2 = arith.constant 0 : index
    %2 = vector.load %arg2[%c0_1, %c0_2] : memref<784x512xbf16, #tpu.memory_space<vmem>>, vector<784x512xbf16>
    %cst = arith.constant dense<0.000000e+00> : vector<8x512xf32>
    %3 = tpu.matmul %1, %2, %cst {dimension_numbers = #tpu.dot_dimension_numbers<[1], [0], [0], [1], [0, 0, 1, 1], [], []>} : vector<8x784xbf16>, vector<784x512xbf16>, vector<8x512xf32> -> vector<8x512xf32>
    %c0_3 = arith.constant 0 : index
    %c0_4 = arith.constant 0 : index
    %4 = vector.load %arg3[%c0_3, %c0_4] : memref<1x512xf32, #tpu.memory_space<vmem>>, vector<1x512xf32>
    %5 = vector.broadcast %4 : vector<1x512xf32> to vector<8x512xf32>
    %6 = arith.addf %3, %5 : vector<8x512xf32>
    %cst_5 = arith.constant 0.000000e+00 : f32
    %7 = vector.broadcast %cst_5 : f32 to vector<8x512xf32>
    %8 = arith.maximumf %6, %7 : vector<8x512xf32>
    %9 = arith.truncf %8 : vector<8x512xf32> to vector<8x512xbf16>
    %c0_6 = arith.constant 0 : index
    %c0_7 = arith.constant 0 : index
    %10 = vector.load %arg4[%c0_6, %c0_7] : memref<512x128xbf16, #tpu.memory_space<vmem>>, vector<512x128xbf16>
    %cst_8 = arith.constant dense<0.000000e+00> : vector<8x128xf32>
    %11 = tpu.matmul %9, %10, %cst_8 {dimension_numbers = #tpu.dot_dimension_numbers<[1], [0], [0], [1], [0, 0, 1, 1], [], []>} : vector<8x512xbf16>, vector<512x128xbf16>, vector<8x128xf32> -> vector<8x128xf32>
    %c0_9 = arith.constant 0 : index
    %c0_10 = arith.constant 0 : index
    %12 = vector.load %arg5[%c0_9, %c0_10] : memref<1x128xf32, #tpu.memory_space<vmem>>, vector<1x128xf32>
    %13 = vector.broadcast %12 : vector<1x128xf32> to vector<8x128xf32>
    %14 = arith.addf %11, %13 : vector<8x128xf32>
    %cst_11 = arith.constant 0.000000e+00 : f32
    %15 = vector.broadcast %cst_11 : f32 to vector<8x128xf32>
    %16 = arith.maximumf %14, %15 : vector<8x128xf32>
    %17 = arith.truncf %16 : vector<8x128xf32> to vector<8x128xbf16>
    %c0_12 = arith.constant 0 : index
    %c0_13 = arith.constant 0 : index
    %18 = vector.load %arg6[%c0_12, %c0_13] : memref<128x512xbf16, #tpu.memory_space<vmem>>, vector<128x512xbf16>
    %cst_14 = arith.constant dense<0.000000e+00> : vector<8x512xf32>
    %19 = tpu.matmul %17, %18, %cst_14 {dimension_numbers = #tpu.dot_dimension_numbers<[1], [0], [0], [1], [0, 0, 1, 1], [], []>} : vector<8x128xbf16>, vector<128x512xbf16>, vector<8x512xf32> -> vector<8x512xf32>
    %c0_15 = arith.constant 0 : index
    %c0_16 = arith.constant 0 : index
    %20 = vector.load %arg7[%c0_15, %c0_16] : memref<1x512xf32, #tpu.memory_space<vmem>>, vector<1x512xf32>
    %21 = vector.broadcast %20 : vector<1x512xf32> to vector<8x512xf32>
    %22 = arith.addf %19, %21 : vector<8x512xf32>
    %cst_17 = arith.constant 0.000000e+00 : f32
    %23 = vector.broadcast %cst_17 : f32 to vector<8x512xf32>
    %24 = arith.maximumf %22, %23 : vector<8x512xf32>
    %25 = arith.truncf %24 : vector<8x512xf32> to vector<8x512xbf16>
    %c0_18 = arith.constant 0 : index
    %c0_19 = arith.constant 0 : index
    %26 = vector.load %arg8[%c0_18, %c0_19] : memref<512x784xbf16, #tpu.memory_space<vmem>>, vector<512x784xbf16>
    %cst_20 = arith.constant dense<0.000000e+00> : vector<8x784xf32>
    %27 = tpu.matmul %25, %26, %cst_20 {dimension_numbers = #tpu.dot_dimension_numbers<[1], [0], [0], [1], [0, 0, 1, 1], [], []>} : vector<8x512xbf16>, vector<512x784xbf16>, vector<8x784xf32> -> vector<8x784xf32>
    %c0_21 = arith.constant 0 : index
    %c0_22 = arith.constant 0 : index
    %28 = vector.load %arg9[%c0_21, %c0_22] : memref<1x784xf32, #tpu.memory_space<vmem>>, vector<1x784xf32>
    %29 = vector.broadcast %28 : vector<1x784xf32> to vector<8x784xf32>
    %30 = arith.addf %27, %29 : vector<8x784xf32>
    %cst_23 = arith.constant 5.000000e-01 : f32
    %31 = vector.broadcast %cst_23 : f32 to vector<8x784xf32>
    %32 = arith.mulf %31, %30 : vector<8x784xf32>
    %33 = math.tanh %32 : vector<8x784xf32>
    %cst_24 = arith.constant 5.000000e-01 : f32
    %34 = vector.broadcast %cst_24 : f32 to vector<8x784xf32>
    %35 = arith.mulf %34, %33 : vector<8x784xf32>
    %cst_25 = arith.constant 5.000000e-01 : f32
    %36 = vector.broadcast %cst_25 : f32 to vector<8x784xf32>
    %37 = arith.addf %35, %36 : vector<8x784xf32>
    %38 = arith.truncf %37 : vector<8x784xf32> to vector<8x784xbf16>
    %c0_26 = arith.constant 0 : index
    %c0_27 = arith.constant 0 : index
    %39 = vector.load %arg10[%c0_26, %c0_27] : memref<8x784xbf16, #tpu.memory_space<vmem>>, vector<8x784xbf16>
    tpu.vector_store %arg10[%c0_26, %c0_27], %38 {strides = array<i32>} : memref<8x784xbf16, #tpu.memory_space<vmem>>, vector<8x784xbf16>,
    return
  }
  func.func @transform_0(%arg0: i32) -> (i32, i32) {
    %c0_i32 = arith.constant 0 : i32
    %c0_i32_0 = arith.constant 0 : i32
    return %arg0, %c0_i32 : i32, i32
  }
  func.func @transform_1(%arg0: i32) -> (i32, i32) {
    %c0_i32 = arith.constant 0 : i32
    %c0_i32_0 = arith.constant 0 : i32
    %c0_i32_1 = arith.constant 0 : i32
    return %c0_i32, %c0_i32_0 : i32, i32
  }
  func.func @transform_2(%arg0: i32) -> (i32, i32) {
    %c0_i32 = arith.constant 0 : i32
    %c0_i32_0 = arith.constant 0 : i32
    %c0_i32_1 = arith.constant 0 : i32
    return %c0_i32, %c0_i32_0 : i32, i32
  }
  func.func @transform_3(%arg0: i32) -> (i32, i32) {
    %c0_i32 = arith.constant 0 : i32
    %c0_i32_0 = arith.constant 0 : i32
    %c0_i32_1 = arith.constant 0 : i32
    return %c0_i32, %c0_i32_0 : i32, i32
  }
  func.func @transform_4(%arg0: i32) -> (i32, i32) {
    %c0_i32 = arith.constant 0 : i32
    %c0_i32_0 = arith.constant 0 : i32
    %c0_i32_1 = arith.constant 0 : i32
    return %c0_i32, %c0_i32_0 : i32, i32
  }
  func.func @transform_5(%arg0: i32) -> (i32, i32) {
    %c0_i32 = arith.constant 0 : i32
    %c0_i32_0 = arith.constant 0 : i32
    %c0_i32_1 = arith.constant 0 : i32
    return %c0_i32, %c0_i32_0 : i32, i32
  }
  func.func @transform_6(%arg0: i32) -> (i32, i32) {
    %c0_i32 = arith.constant 0 : i32
    %c0_i32_0 = arith.constant 0 : i32
    %c0_i32_1 = arith.constant 0 : i32
    return %c0_i32, %c0_i32_0 : i32, i32
  }
  func.func @transform_7(%arg0: i32) -> (i32, i32) {
    %c0_i32 = arith.constant 0 : i32
    %c0_i32_0 = arith.constant 0 : i32
    %c0_i32_1 = arith.constant 0 : i32
    return %c0_i32, %c0_i32_0 : i32, i32
  }
  func.func @transform_8(%arg0: i32) -> (i32, i32) {
    %c0_i32 = arith.constant 0 : i32
    %c0_i32_0 = arith.constant 0 : i32
    %c0_i32_1 = arith.constant 0 : i32
    return %c0_i32, %c0_i32_0 : i32, i32
  }
  func.func @transform_9(%arg0: i32) -> (i32, i32) {
    %c0_i32 = arith.constant 0 : i32
    %c0_i32_0 = arith.constant 0 : i32
    return %arg0, %c0_i32 : i32, i32
  }
}

</mosaic_0001>

<llo_original>
// kernel: tpu_custom_call.1
$region0: #{tpu_custom_call.1}
  #allocation0 [shape = 'u32[]', space=smem, size = 0x4, offset = 0x4, fixed_abs, tag = 'smem constant byte address 0x4 - core index']
  #allocation1 [shape = 'u32[144,128]{1,0:T(1,128)}', space=vmem, size = 0x12000, scoped, tag = 'internal scratch']
  %s0 = inlined_call_operand.vmem [shape: f32[8,784], index: 0, kind: input, shape index: {}]
  %s1 = inlined_call_operand.vmem [shape: bf16[784,512], index: 1, kind: input, shape index: {}]
  %s2 = inlined_call_operand.vmem [shape: f32[1,512], index: 2, kind: input, shape index: {}]
  %s3 = inlined_call_operand.vmem [shape: bf16[512,128], index: 3, kind: input, shape index: {}]
  %s4 = inlined_call_operand.vmem [shape: f32[1,128], index: 4, kind: input, shape index: {}]
  %s5 = inlined_call_operand.vmem [shape: bf16[128,512], index: 5, kind: input, shape index: {}]
  %s6 = inlined_call_operand.vmem [shape: f32[1,512], index: 6, kind: input, shape index: {}]
  %s7 = inlined_call_operand.vmem [shape: bf16[512,784], index: 7, kind: input, shape index: {}]
  %s8 = inlined_call_operand.vmem [shape: f32[1,784], index: 8, kind: input, shape index: {}]
  %s9 = inlined_call_operand.hbm [shape: bf16[8,784], index: 9, kind: output, shape index: {}]
  %s10 = sld [smem:[#allocation0]]
  $region46: #{tpu_custom_call.1} parent=0
    _
  %s12 = ssub.s32 1, %s10
  %s13 = scalar_select 0, %s12, %s10
  $region1: #{tpu_custom_call.1} parent=0
    #allocation2 [shape = 'u8[14336]{0}', space=vmem, size = 0x3800, scoped, tag = 'output window, operand 0, single buffered']
    #allocation3 [shape = 's32[1]{0}', space=sflag, size = 0x4, scoped, tag = 'scoped memory for tpu_custom_call.1']
    %14 = vsyncpa [#allocation3], 0
    // Predicated region
    $region2: #{tpu_custom_call.1} parent=1 // pred_check
      _
    $region3: #{tpu_custom_call.1} parent=1 // pred_check_branch
      %16 = sbr.rel (0) target = $region5
    $region4: #{tpu_custom_call.1} parent=1 // pred_region
      _
    $region5: #{tpu_custom_call.1} parent=1 // pred_fallthru
      _
    // Predicated region
    $region6: #{tpu_custom_call.1} parent=1 // pred_check
      _
    $region7: #{tpu_custom_call.1} parent=1 // pred_check_branch
      %18 = sbr.rel (0) target = $region9
    $region8: #{tpu_custom_call.1} parent=1 // pred_region
      _
    $region9: #{tpu_custom_call.1} parent=1 // pred_fallthru
      _
    // Predicated region
    $region10: #{tpu_custom_call.1} parent=1 // pred_check
      _
    $region11: #{tpu_custom_call.1} parent=1 // pred_check_branch
      %20 = sbr.rel (0) target = $region13
    $region12: #{tpu_custom_call.1} parent=1 // pred_region
      _
    $region13: #{tpu_custom_call.1} parent=1 // pred_fallthru
      _
    // Predicated region
    $region14: #{tpu_custom_call.1} parent=1 // pred_check
      _
    $region15: #{tpu_custom_call.1} parent=1 // pred_check_branch
      %22 = sbr.rel (0) target = $region17
    $region16: #{tpu_custom_call.1} parent=1 // pred_region
      _
    $region17: #{tpu_custom_call.1} parent=1 // pred_fallthru
      _
    // Predicated region
    $region18: #{tpu_custom_call.1} parent=1 // pred_check
      _
    $region19: #{tpu_custom_call.1} parent=1 // pred_check_branch
      %24 = sbr.rel (0) target = $region21
    $region20: #{tpu_custom_call.1} parent=1 // pred_region
      _
    $region21: #{tpu_custom_call.1} parent=1 // pred_fallthru
      _
    // Predicated region
    $region22: #{tpu_custom_call.1} parent=1 // pred_check
      _
    $region23: #{tpu_custom_call.1} parent=1 // pred_check_branch
      %26 = sbr.rel (0) target = $region25
    $region24: #{tpu_custom_call.1} parent=1 // pred_region
      _
    $region25: #{tpu_custom_call.1} parent=1 // pred_fallthru
      _
    // Predicated region
    $region26: #{tpu_custom_call.1} parent=1 // pred_check
      _
    $region27: #{tpu_custom_call.1} parent=1 // pred_check_branch
      %28 = sbr.rel (0) target = $region29
    $region28: #{tpu_custom_call.1} parent=1 // pred_region
      _
    $region29: #{tpu_custom_call.1} parent=1 // pred_fallthru
      _
    // Predicated region
    $region30: #{tpu_custom_call.1} parent=1 // pred_check
      _
    $region31: #{tpu_custom_call.1} parent=1 // pred_check_branch
      %30 = sbr.rel (0) target = $region33
    $region32: #{tpu_custom_call.1} parent=1 // pred_region
      _
    $region33: #{tpu_custom_call.1} parent=1 // pred_fallthru
      _
    // Predicated region
    $region34: #{tpu_custom_call.1} parent=1 // pred_check
      _
    $region35: #{tpu_custom_call.1} parent=1 // pred_check_branch
      %32 = sbr.rel (0) target = $region37
    $region36: #{tpu_custom_call.1} parent=1 // pred_region
      _
    $region37: #{tpu_custom_call.1} parent=1 // pred_fallthru
      _
    %v34 = vld [vmem:[%s0] sm:$0xff]
    %v35 = vld [vmem:[%s0 + $0x8] sm:$0xff]
    %v36 = vld [vmem:[%s0 + $0x10] sm:$0xff]
    %v37 = vld [vmem:[%s0 + $0x18] sm:$0xff]
    %v38 = vld [vmem:[%s0 + $0x20] sm:$0xff]
    %v39 = vld [vmem:[%s0 + $0x28] sm:$0xff]
    %v40 = vld [vmem:[%s0 + $0x30] sm:$0xff]
    %v41 = vpack.c.bf16 %v34, %v34
    %v42 = vpack.c.bf16 %v35, %v35
    %v43 = vpack.c.bf16 %v36, %v36
    %v44 = vpack.c.bf16 %v37, %v37
    %v45 = vpack.c.bf16 %v38, %v38
    %v46 = vpack.c.bf16 %v39, %v39
    %v47 = vpack.c.bf16 %v40, %v40
    %v48 = vld [vmem:[%s1] sm:$0xff]
    %v49 = vld [vmem:[%s1 + $0x8] sm:$0xff]
    %v50 = vld [vmem:[%s1 + $0x10] sm:$0xff]
    %v51 = vld [vmem:[%s1 + $0x18] sm:$0xff]
    %v52 = vld [vmem:[%s1 + $0x20] sm:$0xff]
    %v53 = vld [vmem:[%s1 + $0x28] sm:$0xff]
    %v54 = vld [vmem:[%s1 + $0x30] sm:$0xff]
    %v55 = vld [vmem:[%s1 + $0x38] sm:$0xff]
    %v56 = vld [vmem:[%s1 + $0x40] sm:$0xff]
    %v57 = vld [vmem:[%s1 + $0x48] sm:$0xff]
    %v58 = vld [vmem:[%s1 + $0x50] sm:$0xff]
    %v59 = vld [vmem:[%s1 + $0x58] sm:$0xff]
    %v60 = vld [vmem:[%s1 + $0x60] sm:$0xff]
    %v61 = vld [vmem:[%s1 + $0x68] sm:$0xff]
    %v62 = vld [vmem:[%s1 + $0x70] sm:$0xff]
    %v63 = vld [vmem:[%s1 + $0x78] sm:$0xff]
    %v64 = vld [vmem:[%s1 + $0x80] sm:$0xff]
    %v65 = vld [vmem:[%s1 + $0x88] sm:$0xff]
    %v66 = vld [vmem:[%s1 + $0x90] sm:$0xff]
    %v67 = vld [vmem:[%s1 + $0x98] sm:$0xff]
    %v68 = vld [vmem:[%s1 + $0xa0] sm:$0xff]
    %v69 = vld [vmem:[%s1 + $0xa8] sm:$0xff]
    %v70 = vld [vmem:[%s1 + $0xb0] sm:$0xff]
    %v71 = vld [vmem:[%s1 + $0xb8] sm:$0xff]
    %v72 = vld [vmem:[%s1 + $0xc0] sm:$0xff]
    %v73 = vld [vmem:[%s1 + $0xc8] sm:$0xff]
    %v74 = vld [vmem:[%s1 + $0xd0] sm:$0xff]
    %v75 = vld [vmem:[%s1 + $0xd8] sm:$0xff]
    %v76 = vld [vmem:[%s1 + $0xe0] sm:$0xff]
    %v77 = vld [vmem:[%s1 + $0xe8] sm:$0xff]
    %v78 = vld [vmem:[%s1 + $0xf0] sm:$0xff]
    %v79 = vld [vmem:[%s1 + $0xf8] sm:$0xff]
    %v80 = vld [vmem:[%s1 + $0x100] sm:$0xff]
    %v81 = vld [vmem:[%s1 + $0x108] sm:$0xff]
    %v82 = vld [vmem:[%s1 + $0x110] sm:$0xff]
    %v83 = vld [vmem:[%s1 + $0x118] sm:$0xff]
    %v84 = vld [vmem:[%s1 + $0x120] sm:$0xff]
    %v85 = vld [vmem:[%s1 + $0x128] sm:$0xff]
    %v86 = vld [vmem:[%s1 + $0x130] sm:$0xff]
    %v87 = vld [vmem:[%s1 + $0x138] sm:$0xff]
    %v88 = vld [vmem:[%s1 + $0x140] sm:$0xff]
    %v89 = vld [vmem:[%s1 + $0x148] sm:$0xff]
    %v90 = vld [vmem:[%s1 + $0x150] sm:$0xff]
    %v91 = vld [vmem:[%s1 + $0x158] sm:$0xff]
    %v92 = vld [vmem:[%s1 + $0x160] sm:$0xff]
    %v93 = vld [vmem:[%s1 + $0x168] sm:$0xff]
    %v94 = vld [vmem:[%s1 + $0x170] sm:$0xff]
    %v95 = vld [vmem:[%s1 + $0x178] sm:$0xff]
    %v96 = vld [vmem:[%s1 + $0x180] sm:$0xff]
    %v97 = vld [vmem:[%s1 + $0x188] sm:$0xff]
    %v98 = vld [vmem:[%s1 + $0x190] sm:$0xff]
    %v99 = vld [vmem:[%s1 + $0x198] sm:$0xff]
    %v100 = vld [vmem:[%s1 + $0x1a0] sm:$0xff]
    %v101 = vld [vmem:[%s1 + $0x1a8] sm:$0xff]
    %v102 = vld [vmem:[%s1 + $0x1b0] sm:$0xff]
    %v103 = vld [vmem:[%s1 + $0x1b8] sm:$0xff]
    %v104 = vld [vmem:[%s1 + $0x1c0] sm:$0xff]
    %v105 = vld [vmem:[%s1 + $0x1c8] sm:$0xff]
    %v106 = vld [vmem:[%s1 + $0x1d0] sm:$0xff]
    %v107 = vld [vmem:[%s1 + $0x1d8] sm:$0xff]
    %v108 = vld [vmem:[%s1 + $0x1e0] sm:$0xff]
    %v109 = vld [vmem:[%s1 + $0x1e8] sm:$0xff]
    %v110 = vld [vmem:[%s1 + $0x1f0] sm:$0xff]
    %v111 = vld [vmem:[%s1 + $0x1f8] sm:$0xff]
    %v112 = vld [vmem:[%s1 + $0x200] sm:$0xff]
    %v113 = vld [vmem:[%s1 + $0x208] sm:$0xff]
    %v114 = vld [vmem:[%s1 + $0x210] sm:$0xff]
    %v115 = vld [vmem:[%s1 + $0x218] sm:$0xff]
    %v116 = vld [vmem:[%s1 + $0x220] sm:$0xff]
    %v117 = vld [vmem:[%s1 + $0x228] sm:$0xff]
    %v118 = vld [vmem:[%s1 + $0x230] sm:$0xff]
    %v119 = vld [vmem:[%s1 + $0x238] sm:$0xff]
    %v120 = vld [vmem:[%s1 + $0x240] sm:$0xff]
    %v121 = vld [vmem:[%s1 + $0x248] sm:$0xff]
    %v122 = vld [vmem:[%s1 + $0x250] sm:$0xff]
    %v123 = vld [vmem:[%s1 + $0x258] sm:$0xff]
    %v124 = vld [vmem:[%s1 + $0x260] sm:$0xff]
    %v125 = vld [vmem:[%s1 + $0x268] sm:$0xff]
    %v126 = vld [vmem:[%s1 + $0x270] sm:$0xff]
    %v127 = vld [vmem:[%s1 + $0x278] sm:$0xff]
    %v128 = vld [vmem:[%s1 + $0x280] sm:$0xff]
    %v129 = vld [vmem:[%s1 + $0x288] sm:$0xff]
    %v130 = vld [vmem:[%s1 + $0x290] sm:$0xff]
    %v131 = vld [vmem:[%s1 + $0x298] sm:$0xff]
    %v132 = vld [vmem:[%s1 + $0x2a0] sm:$0xff]
    %v133 = vld [vmem:[%s1 + $0x2a8] sm:$0xff]
    %v134 = vld [vmem:[%s1 + $0x2b0] sm:$0xff]
    %v135 = vld [vmem:[%s1 + $0x2b8] sm:$0xff]
    %v136 = vld [vmem:[%s1 + $0x2c0] sm:$0xff]
    %v137 = vld [vmem:[%s1 + $0x2c8] sm:$0xff]
    %v138 = vld [vmem:[%s1 + $0x2d0] sm:$0xff]
    %v139 = vld [vmem:[%s1 + $0x2d8] sm:$0xff]
    %v140 = vld [vmem:[%s1 + $0x2e0] sm:$0xff]
    %v141 = vld [vmem:[%s1 + $0x2e8] sm:$0xff]
    %v142 = vld [vmem:[%s1 + $0x2f0] sm:$0xff]
    %v143 = vld [vmem:[%s1 + $0x2f8] sm:$0xff]
    %v144 = vld [vmem:[%s1 + $0x300] sm:$0xff]
    %v145 = vld [vmem:[%s1 + $0x308] sm:$0xff]
    %v146 = vld [vmem:[%s1 + $0x310] sm:$0xff]
    %v147 = vld [vmem:[%s1 + $0x318] sm:$0xff]
    %v148 = vld [vmem:[%s1 + $0x320] sm:$0xff]
    %v149 = vld [vmem:[%s1 + $0x328] sm:$0xff]
    %v150 = vld [vmem:[%s1 + $0x330] sm:$0xff]
    %v151 = vld [vmem:[%s1 + $0x338] sm:$0xff]
    %v152 = vld [vmem:[%s1 + $0x340] sm:$0xff]
    %v153 = vld [vmem:[%s1 + $0x348] sm:$0xff]
    %v154 = vld [vmem:[%s1 + $0x350] sm:$0xff]
    %v155 = vld [vmem:[%s1 + $0x358] sm:$0xff]
    %v156 = vld [vmem:[%s1 + $0x360] sm:$0xff]
    %v157 = vld [vmem:[%s1 + $0x368] sm:$0xff]
    %v158 = vld [vmem:[%s1 + $0x370] sm:$0xff]
    %v159 = vld [vmem:[%s1 + $0x378] sm:$0xff]
    %v160 = vld [vmem:[%s1 + $0x380] sm:$0xff]
    %v161 = vld [vmem:[%s1 + $0x388] sm:$0xff]
    %v162 = vld [vmem:[%s1 + $0x390] sm:$0xff]
    %v163 = vld [vmem:[%s1 + $0x398] sm:$0xff]
    %v164 = vld [vmem:[%s1 + $0x3a0] sm:$0xff]
    %v165 = vld [vmem:[%s1 + $0x3a8] sm:$0xff]
    %v166 = vld [vmem:[%s1 + $0x3b0] sm:$0xff]
    %v167 = vld [vmem:[%s1 + $0x3b8] sm:$0xff]
    %v168 = vld [vmem:[%s1 + $0x3c0] sm:$0xff]
    %v169 = vld [vmem:[%s1 + $0x3c8] sm:$0xff]
    %v170 = vld [vmem:[%s1 + $0x3d0] sm:$0xff]
    %v171 = vld [vmem:[%s1 + $0x3d8] sm:$0xff]
    %v172 = vld [vmem:[%s1 + $0x3e0] sm:$0xff]
    %v173 = vld [vmem:[%s1 + $0x3e8] sm:$0xff]
    %v174 = vld [vmem:[%s1 + $0x3f0] sm:$0xff]
    %v175 = vld [vmem:[%s1 + $0x3f8] sm:$0xff]
    %v176 = vld [vmem:[%s1 + $0x400] sm:$0xff]
    %v177 = vld [vmem:[%s1 + $0x408] sm:$0xff]
    %v178 = vld [vmem:[%s1 + $0x410] sm:$0xff]
    %v179 = vld [vmem:[%s1 + $0x418] sm:$0xff]
    %v180 = vld [vmem:[%s1 + $0x420] sm:$0xff]
    %v181 = vld [vmem:[%s1 + $0x428] sm:$0xff]
    %v182 = vld [vmem:[%s1 + $0x430] sm:$0xff]
    %v183 = vld [vmem:[%s1 + $0x438] sm:$0xff]
    %v184 = vld [vmem:[%s1 + $0x440] sm:$0xff]
    %v185 = vld [vmem:[%s1 + $0x448] sm:$0xff]
    %v186 = vld [vmem:[%s1 + $0x450] sm:$0xff]
    %v187 = vld [vmem:[%s1 + $0x458] sm:$0xff]
    %v188 = vld [vmem:[%s1 + $0x460] sm:$0xff]
    %v189 = vld [vmem:[%s1 + $0x468] sm:$0xff]
    %v190 = vld [vmem:[%s1 + $0x470] sm:$0xff]
    %v191 = vld [vmem:[%s1 + $0x478] sm:$0xff]
    %v192 = vld [vmem:[%s1 + $0x480] sm:$0xff]
    %v193 = vld [vmem:[%s1 + $0x488] sm:$0xff]
    %v194 = vld [vmem:[%s1 + $0x490] sm:$0xff]
    %v195 = vld [vmem:[%s1 + $0x498] sm:$0xff]
    %v196 = vld [vmem:[%s1 + $0x4a0] sm:$0xff]
    %v197 = vld [vmem:[%s1 + $0x4a8] sm:$0xff]
    %v198 = vld [vmem:[%s1 + $0x4b0] sm:$0xff]
    %v199 = vld [vmem:[%s1 + $0x4b8] sm:$0xff]
    %v200 = vld [vmem:[%s1 + $0x4c0] sm:$0xff]
    %v201 = vld [vmem:[%s1 + $0x4c8] sm:$0xff]
    %v202 = vld [vmem:[%s1 + $0x4d0] sm:$0xff]
    %v203 = vld [vmem:[%s1 + $0x4d8] sm:$0xff]
    %v204 = vld [vmem:[%s1 + $0x4e0] sm:$0xff]
    %v205 = vld [vmem:[%s1 + $0x4e8] sm:$0xff]
    %v206 = vld [vmem:[%s1 + $0x4f0] sm:$0xff]
    %v207 = vld [vmem:[%s1 + $0x4f8] sm:$0xff]
    %v208 = vld [vmem:[%s1 + $0x500] sm:$0xff]
    %v209 = vld [vmem:[%s1 + $0x508] sm:$0xff]
    %v210 = vld [vmem:[%s1 + $0x510] sm:$0xff]
    %v211 = vld [vmem:[%s1 + $0x518] sm:$0xff]
    %v212 = vld [vmem:[%s1 + $0x520] sm:$0xff]
    %v213 = vld [vmem:[%s1 + $0x528] sm:$0xff]
    %v214 = vld [vmem:[%s1 + $0x530] sm:$0xff]
    %v215 = vld [vmem:[%s1 + $0x538] sm:$0xff]
    %v216 = vld [vmem:[%s1 + $0x540] sm:$0xff]
    %v217 = vld [vmem:[%s1 + $0x548] sm:$0xff]
    %v218 = vld [vmem:[%s1 + $0x550] sm:$0xff]
    %v219 = vld [vmem:[%s1 + $0x558] sm:$0xff]
    %v220 = vld [vmem:[%s1 + $0x560] sm:$0xff]
    %v221 = vld [vmem:[%s1 + $0x568] sm:$0xff]
    %v222 = vld [vmem:[%s1 + $0x570] sm:$0xff]
    %v223 = vld [vmem:[%s1 + $0x578] sm:$0xff]
    %v224 = vld [vmem:[%s1 + $0x580] sm:$0xff]
    %v225 = vld [vmem:[%s1 + $0x588] sm:$0xff]
    %v226 = vld [vmem:[%s1 + $0x590] sm:$0xff]
    %v227 = vld [vmem:[%s1 + $0x598] sm:$0xff]
    %v228 = vld [vmem:[%s1 + $0x5a0] sm:$0xff]
    %v229 = vld [vmem:[%s1 + $0x5a8] sm:$0xff]
    %v230 = vld [vmem:[%s1 + $0x5b0] sm:$0xff]
    %v231 = vld [vmem:[%s1 + $0x5b8] sm:$0xff]
    %v232 = vld [vmem:[%s1 + $0x5c0] sm:$0xff]
    %v233 = vld [vmem:[%s1 + $0x5c8] sm:$0xff]
    %v234 = vld [vmem:[%s1 + $0x5d0] sm:$0xff]
    %v235 = vld [vmem:[%s1 + $0x5d8] sm:$0xff]
    %v236 = vld [vmem:[%s1 + $0x5e0] sm:$0xff]
    %v237 = vld [vmem:[%s1 + $0x5e8] sm:$0xff]
    %v238 = vld [vmem:[%s1 + $0x5f0] sm:$0xff]
    %v239 = vld [vmem:[%s1 + $0x5f8] sm:$0xff]
    %v240 = vld [vmem:[%s1 + $0x600] sm:$0xff]
    %v241 = vld [vmem:[%s1 + $0x608] sm:$0xff]
    %v242 = vld [vmem:[%s1 + $0x610] sm:$0xff]
    %v243 = vld [vmem:[%s1 + $0x618] sm:$0xff]
    %v244 = vld [vmem:[%s2] sm:$0xf]
    %v246 = vlaneseq
    %v247 = vshrl.u32 %v246, 7
    %v248 = vsub.s32 0, %v247
    %v249 = vrot.slane %v244, %v248
    %v250 = vlaneseq
    %v251 = vshrl.u32 %v250, 7
    %v252 = vsub.s32 1, %v251
    %v253 = vrot.slane %v244, %v252
    %v254 = vlaneseq
    %v255 = vshrl.u32 %v254, 7
    %v256 = vsub.s32 2, %v255
    %v257 = vrot.slane %v244, %v256
    %v258 = vlaneseq
    %v259 = vshrl.u32 %v258, 7
    %v260 = vsub.s32 3, %v259
    %v261 = vrot.slane %v244, %v260
    %v462 = vunpack.c.l.b16 %v48
    %v463 = vunpack.c.h.b16 %v48
    %v464 = vunpack.c.l.b16 %v49
    %v465 = vunpack.c.h.b16 %v49
    %v466 = vunpack.c.l.b16 %v50
    %v467 = vunpack.c.h.b16 %v50
    %v468 = vunpack.c.l.b16 %v51
    %v469 = vunpack.c.h.b16 %v51
    %v470 = vunpack.c.l.b16 %v52
    %v471 = vunpack.c.h.b16 %v52
    %v472 = vunpack.c.l.b16 %v53
    %v473 = vunpack.c.h.b16 %v53
    %v474 = vunpack.c.l.b16 %v54
    %v475 = vunpack.c.h.b16 %v54
    %v476 = vunpack.c.l.b16 %v55
    %v477 = vunpack.c.h.b16 %v55
    %v478 = vunpack.c.l.b16 %v56
    %v479 = vunpack.c.h.b16 %v56
    %v480 = vunpack.c.l.b16 %v57
    %v481 = vunpack.c.h.b16 %v57
    %v482 = vunpack.c.l.b16 %v58
    %v483 = vunpack.c.h.b16 %v58
    %v484 = vunpack.c.l.b16 %v59
    %v485 = vunpack.c.h.b16 %v59
    %v486 = vunpack.c.l.b16 %v60
    %v487 = vunpack.c.h.b16 %v60
    %v488 = vunpack.c.l.b16 %v61
    %v489 = vunpack.c.h.b16 %v61
    %v490 = vunpack.c.l.b16 %v62
    %v491 = vunpack.c.h.b16 %v62
    %v492 = vunpack.c.l.b16 %v63
    %v493 = vunpack.c.h.b16 %v63
    %v494 = vunpack.c.l.b16 %v64
    %v495 = vunpack.c.h.b16 %v64
    %v496 = vunpack.c.l.b16 %v65
    %v497 = vunpack.c.h.b16 %v65
    %v498 = vunpack.c.l.b16 %v66
    %v499 = vunpack.c.h.b16 %v66
    %v500 = vunpack.c.l.b16 %v67
    %v501 = vunpack.c.h.b16 %v67
    %v502 = vunpack.c.l.b16 %v68
    %v503 = vunpack.c.h.b16 %v68
    %v504 = vunpack.c.l.b16 %v69
    %v505 = vunpack.c.h.b16 %v69
    %v506 = vunpack.c.l.b16 %v70
    %v507 = vunpack.c.h.b16 %v70
    %v508 = vunpack.c.l.b16 %v71
    %v509 = vunpack.c.h.b16 %v71
    %v510 = vunpack.c.l.b16 %v72
    %v511 = vunpack.c.h.b16 %v72
    %v512 = vunpack.c.l.b16 %v73
    %v513 = vunpack.c.h.b16 %v73
    %v514 = vunpack.c.l.b16 %v74
    %v515 = vunpack.c.h.b16 %v74
    %v516 = vunpack.c.l.b16 %v75
    %v517 = vunpack.c.h.b16 %v75
    %v518 = vunpack.c.l.b16 %v76
    %v519 = vunpack.c.h.b16 %v76
    %v520 = vunpack.c.l.b16 %v77
    %v521 = vunpack.c.h.b16 %v77
    %v522 = vunpack.c.l.b16 %v78
    %v523 = vunpack.c.h.b16 %v78
    %v524 = vunpack.c.l.b16 %v79
    %v525 = vunpack.c.h.b16 %v79
    %v526 = vunpack.c.l.b16 %v80
    %v527 = vunpack.c.h.b16 %v80
    %v528 = vunpack.c.l.b16 %v81
    %v529 = vunpack.c.h.b16 %v81
    %v530 = vunpack.c.l.b16 %v82
    %v531 = vunpack.c.h.b16 %v82
    %v532 = vunpack.c.l.b16 %v83
    %v533 = vunpack.c.h.b16 %v83
    %v534 = vunpack.c.l.b16 %v84
    %v535 = vunpack.c.h.b16 %v84
    %v536 = vunpack.c.l.b16 %v85
    %v537 = vunpack.c.h.b16 %v85
    %v538 = vunpack.c.l.b16 %v86
    %v539 = vunpack.c.h.b16 %v86
    %v540 = vunpack.c.l.b16 %v87
    %v541 = vunpack.c.h.b16 %v87
    %v542 = vunpack.c.l.b16 %v88
    %v543 = vunpack.c.h.b16 %v88
    %v544 = vunpack.c.l.b16 %v89
    %v545 = vunpack.c.h.b16 %v89
    %v546 = vunpack.c.l.b16 %v90
    %v547 = vunpack.c.h.b16 %v90
    %v548 = vunpack.c.l.b16 %v91
    %v549 = vunpack.c.h.b16 %v91
    %v550 = vunpack.c.l.b16 %v92
    %v551 = vunpack.c.h.b16 %v92
    %v552 = vunpack.c.l.b16 %v93
    %v553 = vunpack.c.h.b16 %v93
    %v554 = vunpack.c.l.b16 %v94
    %v555 = vunpack.c.h.b16 %v94
    %v556 = vunpack.c.l.b16 %v95
    %v557 = vunpack.c.h.b16 %v95
    %v558 = vunpack.c.l.b16 %v96
    %v559 = vunpack.c.h.b16 %v96
    %v560 = vunpack.c.l.b16 %v97
    %v561 = vunpack.c.h.b16 %v97
    %v562 = vunpack.c.l.b16 %v98
    %v563 = vunpack.c.h.b16 %v98
    %v564 = vunpack.c.l.b16 %v99
    %v565 = vunpack.c.h.b16 %v99
    %v566 = vunpack.c.l.b16 %v100
    %v567 = vunpack.c.h.b16 %v100
    %v568 = vunpack.c.l.b16 %v101
    %v569 = vunpack.c.h.b16 %v101
    %v570 = vunpack.c.l.b16 %v102
    %v571 = vunpack.c.h.b16 %v102
    %v572 = vunpack.c.l.b16 %v103
    %v573 = vunpack.c.h.b16 %v103
    %v574 = vunpack.c.l.b16 %v104
    %v575 = vunpack.c.h.b16 %v104
    %v576 = vunpack.c.l.b16 %v105
    %v577 = vunpack.c.h.b16 %v105
    %v578 = vunpack.c.l.b16 %v106
    %v579 = vunpack.c.h.b16 %v106
    %v580 = vunpack.c.l.b16 %v107
    %v581 = vunpack.c.h.b16 %v107
    %v582 = vunpack.c.l.b16 %v108
    %v583 = vunpack.c.h.b16 %v108
    %v584 = vunpack.c.l.b16 %v109
    %v585 = vunpack.c.h.b16 %v109
    %v586 = vunpack.c.l.b16 %v110
    %v587 = vunpack.c.h.b16 %v110
    %v588 = vunpack.c.l.b16 %v111
    %v589 = vunpack.c.h.b16 %v111
    %v590 = vunpack.c.l.b16 %v112
    %v591 = vunpack.c.h.b16 %v112
    %v592 = vunpack.c.l.b16 %v113
    %v593 = vunpack.c.h.b16 %v113
    %v594 = vunpack.c.l.b16 %v114
    %v595 = vunpack.c.h.b16 %v114
    %v596 = vunpack.c.l.b16 %v115
    %v597 = vunpack.c.h.b16 %v115
    %v598 = vunpack.c.l.b16 %v116
    %v599 = vunpack.c.h.b16 %v116
    %v600 = vunpack.c.l.b16 %v117
    %v601 = vunpack.c.h.b16 %v117
    %v602 = vunpack.c.l.b16 %v118
    %v603 = vunpack.c.h.b16 %v118
    %v604 = vunpack.c.l.b16 %v119
    %v605 = vunpack.c.h.b16 %v119
    %v606 = vunpack.c.l.b16 %v120
    %v607 = vunpack.c.h.b16 %v120
    %v608 = vunpack.c.l.b16 %v121
    %v609 = vunpack.c.h.b16 %v121
    %v610 = vunpack.c.l.b16 %v122
    %v611 = vunpack.c.h.b16 %v122
    %v612 = vunpack.c.l.b16 %v123
    %v613 = vunpack.c.h.b16 %v123
    %v614 = vunpack.c.l.b16 %v124
    %v615 = vunpack.c.h.b16 %v124
    %v616 = vunpack.c.l.b16 %v125
    %v617 = vunpack.c.h.b16 %v125
    %v618 = vunpack.c.l.b16 %v126
    %v619 = vunpack.c.h.b16 %v126
    %v620 = vunpack.c.l.b16 %v127
    %v621 = vunpack.c.h.b16 %v127
    %v622 = vunpack.c.l.b16 %v128
    %v623 = vunpack.c.h.b16 %v128
    %v624 = vunpack.c.l.b16 %v129
    %v625 = vunpack.c.h.b16 %v129
    %v626 = vunpack.c.l.b16 %v130
    %v627 = vunpack.c.h.b16 %v130
    %v628 = vunpack.c.l.b16 %v131
    %v629 = vunpack.c.h.b16 %v131
    %v630 = vunpack.c.l.b16 %v132
    %v631 = vunpack.c.h.b16 %v132
    %v632 = vunpack.c.l.b16 %v133
    %v633 = vunpack.c.h.b16 %v133
    %v634 = vunpack.c.l.b16 %v134
    %v635 = vunpack.c.h.b16 %v134
    %v636 = vunpack.c.l.b16 %v135
    %v637 = vunpack.c.h.b16 %v135
    %v638 = vunpack.c.l.b16 %v136
    %v639 = vunpack.c.h.b16 %v136
    %v640 = vunpack.c.l.b16 %v137
    %v641 = vunpack.c.h.b16 %v137
    %v642 = vunpack.c.l.b16 %v138
    %v643 = vunpack.c.h.b16 %v138
    %v644 = vunpack.c.l.b16 %v139
    %v645 = vunpack.c.h.b16 %v139
    %v646 = vunpack.c.l.b16 %v140
    %v647 = vunpack.c.h.b16 %v140
    %v648 = vunpack.c.l.b16 %v141
    %v649 = vunpack.c.h.b16 %v141
    %v650 = vunpack.c.l.b16 %v142
    %v651 = vunpack.c.h.b16 %v142
    %v652 = vunpack.c.l.b16 %v143
    %v653 = vunpack.c.h.b16 %v143
    %v654 = vunpack.c.l.b16 %v144
    %v655 = vunpack.c.h.b16 %v144
    %v656 = vunpack.c.l.b16 %v145
    %v657 = vunpack.c.h.b16 %v145
    %v658 = vunpack.c.l.b16 %v146
    %v659 = vunpack.c.h.b16 %v146
    %v660 = vunpack.c.l.b16 %v147
    %v661 = vunpack.c.h.b16 %v147
    %v662 = vunpack.c.l.b16 %v148
    %v663 = vunpack.c.h.b16 %v148
    %v664 = vunpack.c.l.b16 %v149
    %v665 = vunpack.c.h.b16 %v149
    %v666 = vunpack.c.l.b16 %v150
    %v667 = vunpack.c.h.b16 %v150
    %v668 = vunpack.c.l.b16 %v151
    %v669 = vunpack.c.h.b16 %v151
    %v670 = vunpack.c.l.b16 %v152
    %v671 = vunpack.c.h.b16 %v152
    %v672 = vunpack.c.l.b16 %v153
    %v673 = vunpack.c.h.b16 %v153
    %v674 = vunpack.c.l.b16 %v154
    %v675 = vunpack.c.h.b16 %v154
    %v676 = vunpack.c.l.b16 %v155
    %v677 = vunpack.c.h.b16 %v155
    %v678 = vunpack.c.l.b16 %v156
    %v679 = vunpack.c.h.b16 %v156
    %v680 = vunpack.c.l.b16 %v157
    %v681 = vunpack.c.h.b16 %v157
    %v682 = vunpack.c.l.b16 %v158
    %v683 = vunpack.c.h.b16 %v158
    %v684 = vunpack.c.l.b16 %v159
    %v685 = vunpack.c.h.b16 %v159
    %v686 = vunpack.c.l.b16 %v160
    %v687 = vunpack.c.h.b16 %v160
    %v688 = vunpack.c.l.b16 %v161
    %v689 = vunpack.c.h.b16 %v161
    %v690 = vunpack.c.l.b16 %v162
    %v691 = vunpack.c.h.b16 %v162
    %v692 = vunpack.c.l.b16 %v163
    %v693 = vunpack.c.h.b16 %v163
    %v694 = vunpack.c.l.b16 %v164
    %v695 = vunpack.c.h.b16 %v164
    %v696 = vunpack.c.l.b16 %v165
    %v697 = vunpack.c.h.b16 %v165
    %v698 = vunpack.c.l.b16 %v166
    %v699 = vunpack.c.h.b16 %v166
    %v700 = vunpack.c.l.b16 %v167
    %v701 = vunpack.c.h.b16 %v167
    %v702 = vunpack.c.l.b16 %v168
    %v703 = vunpack.c.h.b16 %v168
    %v704 = vunpack.c.l.b16 %v169
    %v705 = vunpack.c.h.b16 %v169
    %v706 = vunpack.c.l.b16 %v170
    %v707 = vunpack.c.h.b16 %v170
    %v708 = vunpack.c.l.b16 %v171
    %v709 = vunpack.c.h.b16 %v171
    %v710 = vunpack.c.l.b16 %v172
    %v711 = vunpack.c.h.b16 %v172
    %v712 = vunpack.c.l.b16 %v173
    %v713 = vunpack.c.h.b16 %v173
    %v714 = vunpack.c.l.b16 %v174
    %v715 = vunpack.c.h.b16 %v174
    %v716 = vunpack.c.l.b16 %v175
    %v717 = vunpack.c.h.b16 %v175
    %v718 = vunpack.c.l.b16 %v176
    %v719 = vunpack.c.h.b16 %v176
    %v720 = vunpack.c.l.b16 %v177
    %v721 = vunpack.c.h.b16 %v177
    %v722 = vunpack.c.l.b16 %v178
    %v723 = vunpack.c.h.b16 %v178
    %v724 = vunpack.c.l.b16 %v179
    %v725 = vunpack.c.h.b16 %v179
    %v726 = vunpack.c.l.b16 %v180
    %v727 = vunpack.c.h.b16 %v180
    %v728 = vunpack.c.l.b16 %v181
    %v729 = vunpack.c.h.b16 %v181
    %v730 = vunpack.c.l.b16 %v182
    %v731 = vunpack.c.h.b16 %v182
    %v732 = vunpack.c.l.b16 %v183
    %v733 = vunpack.c.h.b16 %v183
    %v734 = vunpack.c.l.b16 %v184
    %v735 = vunpack.c.h.b16 %v184
    %v736 = vunpack.c.l.b16 %v185
    %v737 = vunpack.c.h.b16 %v185
    %v738 = vunpack.c.l.b16 %v186
    %v739 = vunpack.c.h.b16 %v186
    %v740 = vunpack.c.l.b16 %v187
    %v741 = vunpack.c.h.b16 %v187
    %v742 = vunpack.c.l.b16 %v188
    %v743 = vunpack.c.h.b16 %v188
    %v744 = vunpack.c.l.b16 %v189
    %v745 = vunpack.c.h.b16 %v189
    %v746 = vunpack.c.l.b16 %v190
    %v747 = vunpack.c.h.b16 %v190
    %v748 = vunpack.c.l.b16 %v191
    %v749 = vunpack.c.h.b16 %v191
    %v750 = vunpack.c.l.b16 %v192
    %v751 = vunpack.c.h.b16 %v192
    %v752 = vunpack.c.l.b16 %v193
    %v753 = vunpack.c.h.b16 %v193
    %v754 = vunpack.c.l.b16 %v194
    %v755 = vunpack.c.h.b16 %v194
    %v756 = vunpack.c.l.b16 %v195
    %v757 = vunpack.c.h.b16 %v195
    %v758 = vunpack.c.l.b16 %v196
    %v759 = vunpack.c.h.b16 %v196
    %v760 = vunpack.c.l.b16 %v197
    %v761 = vunpack.c.h.b16 %v197
    %v762 = vunpack.c.l.b16 %v198
    %v763 = vunpack.c.h.b16 %v198
    %v764 = vunpack.c.l.b16 %v199
    %v765 = vunpack.c.h.b16 %v199
    %v766 = vunpack.c.l.b16 %v200
    %v767 = vunpack.c.h.b16 %v200
    %v768 = vunpack.c.l.b16 %v201
    %v769 = vunpack.c.h.b16 %v201
    %v770 = vunpack.c.l.b16 %v202
    %v771 = vunpack.c.h.b16 %v202
    %v772 = vunpack.c.l.b16 %v203
    %v773 = vunpack.c.h.b16 %v203
    %v774 = vunpack.c.l.b16 %v204
    %v775 = vunpack.c.h.b16 %v204
    %v776 = vunpack.c.l.b16 %v205
    %v777 = vunpack.c.h.b16 %v205
    %v778 = vunpack.c.l.b16 %v206
    %v779 = vunpack.c.h.b16 %v206
    %v780 = vunpack.c.l.b16 %v207
    %v781 = vunpack.c.h.b16 %v207
    %v782 = vunpack.c.l.b16 %v208
    %v783 = vunpack.c.h.b16 %v208
    %v784 = vunpack.c.l.b16 %v209
    %v785 = vunpack.c.h.b16 %v209
    %v786 = vunpack.c.l.b16 %v210
    %v787 = vunpack.c.h.b16 %v210
    %v788 = vunpack.c.l.b16 %v211
    %v789 = vunpack.c.h.b16 %v211
    %v790 = vunpack.c.l.b16 %v212
    %v791 = vunpack.c.h.b16 %v212
    %v792 = vunpack.c.l.b16 %v213
    %v793 = vunpack.c.h.b16 %v213
    %v794 = vunpack.c.l.b16 %v214
    %v795 = vunpack.c.h.b16 %v214
    %v796 = vunpack.c.l.b16 %v215
    %v797 = vunpack.c.h.b16 %v215
    %v798 = vunpack.c.l.b16 %v216
    %v799 = vunpack.c.h.b16 %v216
    %v800 = vunpack.c.l.b16 %v217
    %v801 = vunpack.c.h.b16 %v217
    %v802 = vunpack.c.l.b16 %v218
    %v803 = vunpack.c.h.b16 %v218
    %v804 = vunpack.c.l.b16 %v219
    %v805 = vunpack.c.h.b16 %v219
    %v806 = vunpack.c.l.b16 %v220
    %v807 = vunpack.c.h.b16 %v220
    %v808 = vunpack.c.l.b16 %v221
    %v809 = vunpack.c.h.b16 %v221
    %v810 = vunpack.c.l.b16 %v222
    %v811 = vunpack.c.h.b16 %v222
    %v812 = vunpack.c.l.b16 %v223
    %v813 = vunpack.c.h.b16 %v223
    %v814 = vunpack.c.l.b16 %v224
    %v815 = vunpack.c.h.b16 %v224
    %v816 = vunpack.c.l.b16 %v225
    %v817 = vunpack.c.h.b16 %v225
    %v818 = vunpack.c.l.b16 %v226
    %v819 = vunpack.c.h.b16 %v226
    %v820 = vunpack.c.l.b16 %v227
    %v821 = vunpack.c.h.b16 %v227
    %v822 = vunpack.c.l.b16 %v228
    %v823 = vunpack.c.h.b16 %v228
    %v824 = vunpack.c.l.b16 %v229
    %v825 = vunpack.c.h.b16 %v229
    %v826 = vunpack.c.l.b16 %v230
    %v827 = vunpack.c.h.b16 %v230
    %v828 = vunpack.c.l.b16 %v231
    %v829 = vunpack.c.h.b16 %v231
    %v830 = vunpack.c.l.b16 %v232
    %v831 = vunpack.c.h.b16 %v232
    %v832 = vunpack.c.l.b16 %v233
    %v833 = vunpack.c.h.b16 %v233
    %v834 = vunpack.c.l.b16 %v234
    %v835 = vunpack.c.h.b16 %v234
    %v836 = vunpack.c.l.b16 %v235
    %v837 = vunpack.c.h.b16 %v235
    %v838 = vunpack.c.l.b16 %v236
    %v839 = vunpack.c.h.b16 %v236
    %v840 = vunpack.c.l.b16 %v237
    %v841 = vunpack.c.h.b16 %v237
    %v842 = vunpack.c.l.b16 %v238
    %v843 = vunpack.c.h.b16 %v238
    %v844 = vunpack.c.l.b16 %v239
    %v845 = vunpack.c.h.b16 %v239
    %v846 = vunpack.c.l.b16 %v240
    %v847 = vunpack.c.h.b16 %v240
    %v848 = vunpack.c.l.b16 %v241
    %v849 = vunpack.c.h.b16 %v241
    %v850 = vunpack.c.l.b16 %v242
    %v851 = vunpack.c.h.b16 %v242
    %v852 = vunpack.c.l.b16 %v243
    %v853 = vunpack.c.h.b16 %v243
    %v854 = vpack.c.b16 %v466, %v462
    %v855 = vpack.c.b16 %v467, %v463
    %v856 = vpack.c.b16 %v468, %v464
    %v857 = vpack.c.b16 %v469, %v465
    %v858 = vpack.c.b16 %v474, %v470
    %v859 = vpack.c.b16 %v475, %v471
    %v860 = vpack.c.b16 %v476, %v472
    %v861 = vpack.c.b16 %v477, %v473
    %v862 = vpack.c.b16 %v482, %v478
    %v863 = vpack.c.b16 %v483, %v479
    %v864 = vpack.c.b16 %v484, %v480
    %v865 = vpack.c.b16 %v485, %v481
    %v866 = vpack.c.b16 %v490, %v486
    %v867 = vpack.c.b16 %v491, %v487
    %v868 = vpack.c.b16 %v492, %v488
    %v869 = vpack.c.b16 %v493, %v489
    %v870 = vpack.c.b16 %v498, %v494
    %v871 = vpack.c.b16 %v499, %v495
    %v872 = vpack.c.b16 %v500, %v496
    %v873 = vpack.c.b16 %v501, %v497
    %v874 = vpack.c.b16 %v506, %v502
    %v875 = vpack.c.b16 %v507, %v503
    %v876 = vpack.c.b16 %v508, %v504
    %v877 = vpack.c.b16 %v509, %v505
    %v878 = vpack.c.b16 %v514, %v510
    %v879 = vpack.c.b16 %v515, %v511
    %v880 = vpack.c.b16 %v516, %v512
    %v881 = vpack.c.b16 %v517, %v513
    %v882 = vpack.c.b16 %v522, %v518
    %v883 = vpack.c.b16 %v523, %v519
    %v884 = vpack.c.b16 %v524, %v520
    %v885 = vpack.c.b16 %v525, %v521
    %v886 = vpack.c.b16 %v530, %v526
    %v887 = vpack.c.b16 %v531, %v527
    %v888 = vpack.c.b16 %v532, %v528
    %v889 = vpack.c.b16 %v533, %v529
    %v890 = vpack.c.b16 %v538, %v534
    %v891 = vpack.c.b16 %v539, %v535
    %v892 = vpack.c.b16 %v540, %v536
    %v893 = vpack.c.b16 %v541, %v537
    %v894 = vpack.c.b16 %v546, %v542
    %v895 = vpack.c.b16 %v547, %v543
    %v896 = vpack.c.b16 %v548, %v544
    %v897 = vpack.c.b16 %v549, %v545
    %v898 = vpack.c.b16 %v554, %v550
    %v899 = vpack.c.b16 %v555, %v551
    %v900 = vpack.c.b16 %v556, %v552
    %v901 = vpack.c.b16 %v557, %v553
    %v902 = vpack.c.b16 %v562, %v558
    %v903 = vpack.c.b16 %v563, %v559
    %v904 = vpack.c.b16 %v564, %v560
    %v905 = vpack.c.b16 %v565, %v561
    %v906 = vpack.c.b16 %v570, %v566
    %v907 = vpack.c.b16 %v571, %v567
    %v908 = vpack.c.b16 %v572, %v568
    %v909 = vpack.c.b16 %v573, %v569
    %v910 = vpack.c.b16 %v578, %v574
    %v911 = vpack.c.b16 %v579, %v575
    %v912 = vpack.c.b16 %v580, %v576
    %v913 = vpack.c.b16 %v581, %v577
    %v914 = vpack.c.b16 %v586, %v582
    %v915 = vpack.c.b16 %v587, %v583
    %v916 = vpack.c.b16 %v588, %v584
    %v917 = vpack.c.b16 %v589, %v585
    %v918 = vpack.c.b16 %v594, %v590
    %v919 = vpack.c.b16 %v595, %v591
    %v920 = vpack.c.b16 %v596, %v592
    %v921 = vpack.c.b16 %v597, %v593
    %v922 = vpack.c.b16 %v602, %v598
    %v923 = vpack.c.b16 %v603, %v599
    %v924 = vpack.c.b16 %v604, %v600
    %v925 = vpack.c.b16 %v605, %v601
    %v926 = vpack.c.b16 %v610, %v606
    %v927 = vpack.c.b16 %v611, %v607
    %v928 = vpack.c.b16 %v612, %v608
    %v929 = vpack.c.b16 %v613, %v609
    %v930 = vpack.c.b16 %v618, %v614
    %v931 = vpack.c.b16 %v619, %v615
    %v932 = vpack.c.b16 %v620, %v616
    %v933 = vpack.c.b16 %v621, %v617
    %v934 = vpack.c.b16 %v626, %v622
    %v935 = vpack.c.b16 %v627, %v623
    %v936 = vpack.c.b16 %v628, %v624
    %v937 = vpack.c.b16 %v629, %v625
    %v938 = vpack.c.b16 %v634, %v630
    %v939 = vpack.c.b16 %v635, %v631
    %v940 = vpack.c.b16 %v636, %v632
    %v941 = vpack.c.b16 %v637, %v633
    %v942 = vpack.c.b16 %v642, %v638
    %v943 = vpack.c.b16 %v643, %v639
    %v944 = vpack.c.b16 %v644, %v640
    %v945 = vpack.c.b16 %v645, %v641
    %v946 = vpack.c.b16 %v650, %v646
    %v947 = vpack.c.b16 %v651, %v647
    %v948 = vpack.c.b16 %v652, %v648
    %v949 = vpack.c.b16 %v653, %v649
    %v950 = vpack.c.b16 %v658, %v654
    %v951 = vpack.c.b16 %v659, %v655
    %v952 = vpack.c.b16 %v660, %v656
    %v953 = vpack.c.b16 %v661, %v657
    %v954 = vpack.c.b16 %v666, %v662
    %v955 = vpack.c.b16 %v667, %v663
    %v956 = vpack.c.b16 %v668, %v664
    %v957 = vpack.c.b16 %v669, %v665
    %v958 = vpack.c.b16 %v674, %v670
    %v959 = vpack.c.b16 %v675, %v671
    %v960 = vpack.c.b16 %v676, %v672
    %v961 = vpack.c.b16 %v677, %v673
    %v962 = vpack.c.b16 %v682, %v678
    %v963 = vpack.c.b16 %v683, %v679
    %v964 = vpack.c.b16 %v684, %v680
    %v965 = vpack.c.b16 %v685, %v681
    %v966 = vpack.c.b16 %v690, %v686
    %v967 = vpack.c.b16 %v691, %v687
    %v968 = vpack.c.b16 %v692, %v688
    %v969 = vpack.c.b16 %v693, %v689
    %v970 = vpack.c.b16 %v698, %v694
    %v971 = vpack.c.b16 %v699, %v695
    %v972 = vpack.c.b16 %v700, %v696
    %v973 = vpack.c.b16 %v701, %v697
    %v974 = vpack.c.b16 %v706, %v702
    %v975 = vpack.c.b16 %v707, %v703
    %v976 = vpack.c.b16 %v708, %v704
    %v977 = vpack.c.b16 %v709, %v705
    %v978 = vpack.c.b16 %v714, %v710
    %v979 = vpack.c.b16 %v715, %v711
    %v980 = vpack.c.b16 %v716, %v712
    %v981 = vpack.c.b16 %v717, %v713
    %v982 = vpack.c.b16 %v722, %v718
    %v983 = vpack.c.b16 %v723, %v719
    %v984 = vpack.c.b16 %v724, %v720
    %v985 = vpack.c.b16 %v725, %v721
    %v986 = vpack.c.b16 %v730, %v726
    %v987 = vpack.c.b16 %v731, %v727
    %v988 = vpack.c.b16 %v732, %v728
    %v989 = vpack.c.b16 %v733, %v729
    %v990 = vpack.c.b16 %v738, %v734
    %v991 = vpack.c.b16 %v739, %v735
    %v992 = vpack.c.b16 %v740, %v736
    %v993 = vpack.c.b16 %v741, %v737
    %v994 = vpack.c.b16 %v746, %v742
    %v995 = vpack.c.b16 %v747, %v743
    %v996 = vpack.c.b16 %v748, %v744
    %v997 = vpack.c.b16 %v749, %v745
    %v998 = vpack.c.b16 %v754, %v750
    %v999 = vpack.c.b16 %v755, %v751
    %v1000 = vpack.c.b16 %v756, %v752
    %v1001 = vpack.c.b16 %v757, %v753
    %v1002 = vpack.c.b16 %v762, %v758
    %v1003 = vpack.c.b16 %v763, %v759
    %v1004 = vpack.c.b16 %v764, %v760
    %v1005 = vpack.c.b16 %v765, %v761
    %v1006 = vpack.c.b16 %v770, %v766
    %v1007 = vpack.c.b16 %v771, %v767
    %v1008 = vpack.c.b16 %v772, %v768
    %v1009 = vpack.c.b16 %v773, %v769
    %v1010 = vpack.c.b16 %v778, %v774
    %v1011 = vpack.c.b16 %v779, %v775
    %v1012 = vpack.c.b16 %v780, %v776
    %v1013 = vpack.c.b16 %v781, %v777
    %v1014 = vpack.c.b16 %v786, %v782
    %v1015 = vpack.c.b16 %v787, %v783
    %v1016 = vpack.c.b16 %v788, %v784
    %v1017 = vpack.c.b16 %v789, %v785
    %v1018 = vpack.c.b16 %v794, %v790
    %v1019 = vpack.c.b16 %v795, %v791
    %v1020 = vpack.c.b16 %v796, %v792
    %v1021 = vpack.c.b16 %v797, %v793
    %v1022 = vpack.c.b16 %v802, %v798
    %v1023 = vpack.c.b16 %v803, %v799
    %v1024 = vpack.c.b16 %v804, %v800
    %v1025 = vpack.c.b16 %v805, %v801
    %v1026 = vpack.c.b16 %v810, %v806
    %v1027 = vpack.c.b16 %v811, %v807
    %v1028 = vpack.c.b16 %v812, %v808
    %v1029 = vpack.c.b16 %v813, %v809
    %v1030 = vpack.c.b16 %v818, %v814
    %v1031 = vpack.c.b16 %v819, %v815
    %v1032 = vpack.c.b16 %v820, %v816
    %v1033 = vpack.c.b16 %v821, %v817
    %v1034 = vpack.c.b16 %v826, %v822
    %v1035 = vpack.c.b16 %v827, %v823
    %v1036 = vpack.c.b16 %v828, %v824
    %v1037 = vpack.c.b16 %v829, %v825
    %v1038 = vpack.c.b16 %v834, %v830
    %v1039 = vpack.c.b16 %v835, %v831
    %v1040 = vpack.c.b16 %v836, %v832
    %v1041 = vpack.c.b16 %v837, %v833
    %v1042 = vpack.c.b16 %v842, %v838
    %v1043 = vpack.c.b16 %v843, %v839
    %v1044 = vpack.c.b16 %v844, %v840
    %v1045 = vpack.c.b16 %v845, %v841
    %v1046 = vpack.c.b16 %v850, %v846
    %v1047 = vpack.c.b16 %v851, %v847
    %v1048 = vpack.c.b16 %v852, %v848
    %v1049 = vpack.c.b16 %v853, %v849
    %vm1246 = vcmask 130048
    %v1248 = vsel %vm1246, %v47, 0
    %1250 = vmatprep.subr.bf16.mxu0 %v883
    %1251 = vmatpush1.bf16.msra.mxu0 %v882
    %1252 = vmatprep.subr.bf16.mxu0 %v879
    %1253 = vmatpush1.bf16.msra.mxu0 %v878
    %1254 = vmatprep.subr.bf16.mxu0 %v875
    %1255 = vmatpush1.bf16.msra.mxu0 %v874
    %1256 = vmatprep.subr.bf16.mxu0 %v871
    %1257 = vmatpush1.bf16.msra.mxu0 %v870
    %1258 = vmatprep.subr.bf16.mxu0 %v867
    %1259 = vmatpush1.bf16.msra.mxu0 %v866
    %1260 = vmatprep.subr.bf16.mxu0 %v863
    %1261 = vmatpush1.bf16.msra.mxu0 %v862
    %1262 = vmatprep.subr.bf16.mxu0 %v859
    %1263 = vmatpush1.bf16.msra.mxu0 %v858
    %1264 = vmatprep.subr.bf16.mxu0 %v855
    %1265 = vmatpush1.bf16.msra.mxu0 %v854
    %1266 = vmatprep.subr.bf16.mxu0 %v915
    %1267 = vmatpush2.bf16.msra.mxu0 %v914
    %1268 = vmatprep.subr.bf16.mxu0 %v911
    %1269 = vmatpush2.bf16.msra.mxu0 %v910
    %1270 = vmatprep.subr.bf16.mxu0 %v907
    %1271 = vmatpush2.bf16.msra.mxu0 %v906
    %1272 = vmatprep.subr.bf16.mxu0 %v903
    %1273 = vmatpush2.bf16.msra.mxu0 %v902
    %1274 = vmatprep.subr.bf16.mxu0 %v899
    %1275 = vmatpush2.bf16.msra.mxu0 %v898
    %1276 = vmatprep.subr.bf16.mxu0 %v895
    %1277 = vmatpush2.bf16.msra.mxu0 %v894
    %1278 = vmatprep.subr.bf16.mxu0 %v891
    %1279 = vmatpush2.bf16.msra.mxu0 %v890
    %1280 = vmatprep.subr.bf16.mxu0 %v887
    %1281 = vmatpush2.bf16.msra.mxu0 %v886
    %1282 = vmatprep.mubr.bf16.mxu0 %v42
    %1283 = vmatmul.mubr.bf16.gmra.mxu0 %v41
    %v1284 = vpop.f32.mrf.mxu0
    %v1285 = vadd.f32 %v249, %v1284
    %v1286 = vpop.f32.mrf.mxu0
    %v1287 = vadd.f32 %v253, %v1286
    %v1288 = vpop.f32.mrf.mxu0
    %v1289 = vpop.f32.mrf.mxu0
    %1290 = vdwg.mxu0
    %1291 = vmatprep.subr.bf16.mxu0 %v947
    %1292 = vmatpush1.bf16.msra.mxu0 %v946
    %1293 = vmatprep.subr.bf16.mxu0 %v943
    %1294 = vmatpush1.bf16.msra.mxu0 %v942
    %1295 = vmatprep.subr.bf16.mxu0 %v939
    %1296 = vmatpush1.bf16.msra.mxu0 %v938
    %1297 = vmatprep.subr.bf16.mxu0 %v935
    %1298 = vmatpush1.bf16.msra.mxu0 %v934
    %1299 = vmatprep.subr.bf16.mxu0 %v931
    %1300 = vmatpush1.bf16.msra.mxu0 %v930
    %1301 = vmatprep.subr.bf16.mxu0 %v927
    %1302 = vmatpush1.bf16.msra.mxu0 %v926
    %1303 = vmatprep.subr.bf16.mxu0 %v923
    %1304 = vmatpush1.bf16.msra.mxu0 %v922
    %1305 = vmatprep.subr.bf16.mxu0 %v919
    %1306 = vmatpush1.bf16.msra.mxu0 %v918
    %1307 = vmatprep.subr.bf16.mxu0 %v979
    %1308 = vmatpush2.bf16.msra.mxu0 %v978
    %1309 = vmatprep.subr.bf16.mxu0 %v975
    %1310 = vmatpush2.bf16.msra.mxu0 %v974
    %1311 = vmatprep.subr.bf16.mxu0 %v971
    %1312 = vmatpush2.bf16.msra.mxu0 %v970
    %1313 = vmatprep.subr.bf16.mxu0 %v967
    %1314 = vmatpush2.bf16.msra.mxu0 %v966
    %1315 = vmatprep.subr.bf16.mxu0 %v963
    %1316 = vmatpush2.bf16.msra.mxu0 %v962
    %1317 = vmatprep.subr.bf16.mxu0 %v959
    %1318 = vmatpush2.bf16.msra.mxu0 %v958
    %1319 = vmatprep.subr.bf16.mxu0 %v955
    %1320 = vmatpush2.bf16.msra.mxu0 %v954
    %1321 = vmatprep.subr.bf16.mxu0 %v951
    %1322 = vmatpush2.bf16.msra.mxu0 %v950
    %1323 = vmatprep.mubr.bf16.mxu0 %v44
    %1324 = vmatmul.mubr.bf16.gmra.mxu0 %v43
    %v1325 = vpop.f32.mrf.mxu0
    %v1326 = vadd.f32 %v1285, %v1325
    %v1327 = vpop.f32.mrf.mxu0
    %v1328 = vadd.f32 %v1287, %v1327
    %v1329 = vpop.f32.mrf.mxu0
    %v1330 = vpop.f32.mrf.mxu0
    %1331 = vdwg.mxu0
    %1332 = vmatprep.subr.bf16.mxu0 %v1011
    %1333 = vmatpush1.bf16.msra.mxu0 %v1010
    %1334 = vmatprep.subr.bf16.mxu0 %v1007
    %1335 = vmatpush1.bf16.msra.mxu0 %v1006
    %1336 = vmatprep.subr.bf16.mxu0 %v1003
    %1337 = vmatpush1.bf16.msra.mxu0 %v1002
    %1338 = vmatprep.subr.bf16.mxu0 %v999
    %1339 = vmatpush1.bf16.msra.mxu0 %v998
    %1340 = vmatprep.subr.bf16.mxu0 %v995
    %1341 = vmatpush1.bf16.msra.mxu0 %v994
    %1342 = vmatprep.subr.bf16.mxu0 %v991
    %1343 = vmatpush1.bf16.msra.mxu0 %v990
    %1344 = vmatprep.subr.bf16.mxu0 %v987
    %1345 = vmatpush1.bf16.msra.mxu0 %v986
    %1346 = vmatprep.subr.bf16.mxu0 %v983
    %1347 = vmatpush1.bf16.msra.mxu0 %v982
    %1348 = vmatprep.subr.bf16.mxu0 %v1043
    %1349 = vmatpush2.bf16.msra.mxu0 %v1042
    %1350 = vmatprep.subr.bf16.mxu0 %v1039
    %1351 = vmatpush2.bf16.msra.mxu0 %v1038
    %1352 = vmatprep.subr.bf16.mxu0 %v1035
    %1353 = vmatpush2.bf16.msra.mxu0 %v1034
    %1354 = vmatprep.subr.bf16.mxu0 %v1031
    %1355 = vmatpush2.bf16.msra.mxu0 %v1030
    %1356 = vmatprep.subr.bf16.mxu0 %v1027
    %1357 = vmatpush2.bf16.msra.mxu0 %v1026
    %1358 = vmatprep.subr.bf16.mxu0 %v1023
    %1359 = vmatpush2.bf16.msra.mxu0 %v1022
    %1360 = vmatprep.subr.bf16.mxu0 %v1019
    %1361 = vmatpush2.bf16.msra.mxu0 %v1018
    %1362 = vmatprep.subr.bf16.mxu0 %v1015
    %1363 = vmatpush2.bf16.msra.mxu0 %v1014
    %1364 = vmatprep.mubr.bf16.mxu0 %v46
    %1365 = vmatmul.mubr.bf16.gmra.mxu0 %v45
    %v1366 = vpop.f32.mrf.mxu0
    %v1367 = vadd.f32 %v1326, %v1366
    %v1368 = vpop.f32.mrf.mxu0
    %v1369 = vadd.f32 %v1328, %v1368
    %v1370 = vpop.f32.mrf.mxu0
    %v1371 = vpop.f32.mrf.mxu0
    %1372 = vdwg.mxu0
    %1373 = vmatprep.subr.bf16.mxu0 0
    %1374 = vmatpush1.bf16.msra.mxu0 0
    %1375 = vmatprep.subr.bf16.mxu0 0
    %1376 = vmatpush1.bf16.msra.mxu0 0
    %1377 = vmatprep.subr.bf16.mxu0 0
    %1378 = vmatpush1.bf16.msra.mxu0 0
    %1379 = vmatprep.subr.bf16.mxu0 0
    %1380 = vmatpush1.bf16.msra.mxu0 0
    %1381 = vmatprep.subr.bf16.mxu0 0
    %1382 = vmatpush1.bf16.msra.mxu0 0
    %1383 = vmatprep.subr.bf16.mxu0 0
    %1384 = vmatpush1.bf16.msra.mxu0 0
    %1385 = vmatprep.subr.bf16.mxu0 0
    %1386 = vmatpush1.bf16.msra.mxu0 0
    %1387 = vmatprep.subr.bf16.mxu0 %v1047
    %1388 = vmatpush1.bf16.msra.mxu0 %v1046
    %1389 = vmatprep.subr.bf16.mxu0 0
    %1390 = vmatpush2.bf16.msra.mxu0 0
    %1391 = vmatprep.subr.bf16.mxu0 0
    %1392 = vmatpush2.bf16.msra.mxu0 0
    %1393 = vmatprep.subr.bf16.mxu0 0
    %1394 = vmatpush2.bf16.msra.mxu0 0
    %1395 = vmatprep.subr.bf16.mxu0 0
    %1396 = vmatpush2.bf16.msra.mxu0 0
    %1397 = vmatprep.subr.bf16.mxu0 0
    %1398 = vmatpush2.bf16.msra.mxu0 0
    %1399 = vmatprep.subr.bf16.mxu0 0
    %1400 = vmatpush2.bf16.msra.mxu0 0
    %1401 = vmatprep.subr.bf16.mxu0 0
    %1402 = vmatpush2.bf16.msra.mxu0 0
    %1403 = vmatprep.subr.bf16.mxu0 0
    %1404 = vmatpush2.bf16.msra.mxu0 0
    %1405 = vmatprep.mubr.bf16.mxu0 0
    %1406 = vmatmul.mubr.bf16.gmra.mxu0 %v1248
    %v1407 = vpop.f32.mrf.mxu0
    %v1408 = vadd.f32 %v1367, %v1407
    %v1409 = vpop.f32.mrf.mxu0
    %v1410 = vadd.f32 %v1369, %v1409
    %v1411 = vpop.f32.mrf.mxu0
    %v1412 = vpop.f32.mrf.mxu0
    %1413 = vdwg.mxu0
    %1414 = vmatprep.subr.bf16.mxu0 %v885
    %1415 = vmatpush1.bf16.msra.mxu0 %v884
    %1416 = vmatprep.subr.bf16.mxu0 %v881
    %1417 = vmatpush1.bf16.msra.mxu0 %v880
    %1418 = vmatprep.subr.bf16.mxu0 %v877
    %1419 = vmatpush1.bf16.msra.mxu0 %v876
    %1420 = vmatprep.subr.bf16.mxu0 %v873
    %1421 = vmatpush1.bf16.msra.mxu0 %v872
    %1422 = vmatprep.subr.bf16.mxu0 %v869
    %1423 = vmatpush1.bf16.msra.mxu0 %v868
    %1424 = vmatprep.subr.bf16.mxu0 %v865
    %1425 = vmatpush1.bf16.msra.mxu0 %v864
    %1426 = vmatprep.subr.bf16.mxu0 %v861
    %1427 = vmatpush1.bf16.msra.mxu0 %v860
    %1428 = vmatprep.subr.bf16.mxu0 %v857
    %1429 = vmatpush1.bf16.msra.mxu0 %v856
    %1430 = vmatprep.subr.bf16.mxu0 %v917
    %1431 = vmatpush2.bf16.msra.mxu0 %v916
    %1432 = vmatprep.subr.bf16.mxu0 %v913
    %1433 = vmatpush2.bf16.msra.mxu0 %v912
    %1434 = vmatprep.subr.bf16.mxu0 %v909
    %1435 = vmatpush2.bf16.msra.mxu0 %v908
    %1436 = vmatprep.subr.bf16.mxu0 %v905
    %1437 = vmatpush2.bf16.msra.mxu0 %v904
    %1438 = vmatprep.subr.bf16.mxu0 %v901
    %1439 = vmatpush2.bf16.msra.mxu0 %v900
    %1440 = vmatprep.subr.bf16.mxu0 %v897
    %1441 = vmatpush2.bf16.msra.mxu0 %v896
    %1442 = vmatprep.subr.bf16.mxu0 %v893
    %1443 = vmatpush2.bf16.msra.mxu0 %v892
    %1444 = vmatprep.subr.bf16.mxu0 %v889
    %1445 = vmatpush2.bf16.msra.mxu0 %v888
    %1446 = vmatprep.mubr.bf16.mxu0 %v42
    %1447 = vmatmul.mubr.bf16.gmra.mxu0 %v41
    %v1448 = vpop.f32.mrf.mxu0
    %v1449 = vadd.f32 %v257, %v1448
    %v1450 = vpop.f32.mrf.mxu0
    %v1451 = vadd.f32 %v261, %v1450
    %v1452 = vpop.f32.mrf.mxu0
    %v1453 = vpop.f32.mrf.mxu0
    %1454 = vdwg.mxu0
    %1455 = vmatprep.subr.bf16.mxu0 %v949
    %1456 = vmatpush1.bf16.msra.mxu0 %v948
    %1457 = vmatprep.subr.bf16.mxu0 %v945
    %1458 = vmatpush1.bf16.msra.mxu0 %v944
    %1459 = vmatprep.subr.bf16.mxu0 %v941
    %1460 = vmatpush1.bf16.msra.mxu0 %v940
    %1461 = vmatprep.subr.bf16.mxu0 %v937
    %1462 = vmatpush1.bf16.msra.mxu0 %v936
    %1463 = vmatprep.subr.bf16.mxu0 %v933
    %1464 = vmatpush1.bf16.msra.mxu0 %v932
    %1465 = vmatprep.subr.bf16.mxu0 %v929
    %1466 = vmatpush1.bf16.msra.mxu0 %v928
    %1467 = vmatprep.subr.bf16.mxu0 %v925
    %1468 = vmatpush1.bf16.msra.mxu0 %v924
    %1469 = vmatprep.subr.bf16.mxu0 %v921
    %1470 = vmatpush1.bf16.msra.mxu0 %v920
    %1471 = vmatprep.subr.bf16.mxu0 %v981
    %1472 = vmatpush2.bf16.msra.mxu0 %v980
    %1473 = vmatprep.subr.bf16.mxu0 %v977
    %1474 = vmatpush2.bf16.msra.mxu0 %v976
    %1475 = vmatprep.subr.bf16.mxu0 %v973
    %1476 = vmatpush2.bf16.msra.mxu0 %v972
    %1477 = vmatprep.subr.bf16.mxu0 %v969
    %1478 = vmatpush2.bf16.msra.mxu0 %v968
    %1479 = vmatprep.subr.bf16.mxu0 %v965
    %1480 = vmatpush2.bf16.msra.mxu0 %v964
    %1481 = vmatprep.subr.bf16.mxu0 %v961
    %1482 = vmatpush2.bf16.msra.mxu0 %v960
    %1483 = vmatprep.subr.bf16.mxu0 %v957
    %1484 = vmatpush2.bf16.msra.mxu0 %v956
    %1485 = vmatprep.subr.bf16.mxu0 %v953
    %1486 = vmatpush2.bf16.msra.mxu0 %v952
    %1487 = vmatprep.mubr.bf16.mxu0 %v44
    %1488 = vmatmul.mubr.bf16.gmra.mxu0 %v43
    %v1489 = vpop.f32.mrf.mxu0
    %v1490 = vadd.f32 %v1449, %v1489
    %v1491 = vpop.f32.mrf.mxu0
    %v1492 = vadd.f32 %v1451, %v1491
    %v1493 = vpop.f32.mrf.mxu0
    %v1494 = vpop.f32.mrf.mxu0
    %1495 = vdwg.mxu0
    %1496 = vmatprep.subr.bf16.mxu0 %v1013
    %1497 = vmatpush1.bf16.msra.mxu0 %v1012
    %1498 = vmatprep.subr.bf16.mxu0 %v1009
    %1499 = vmatpush1.bf16.msra.mxu0 %v1008
    %1500 = vmatprep.subr.bf16.mxu0 %v1005
    %1501 = vmatpush1.bf16.msra.mxu0 %v1004
    %1502 = vmatprep.subr.bf16.mxu0 %v1001
    %1503 = vmatpush1.bf16.msra.mxu0 %v1000
    %1504 = vmatprep.subr.bf16.mxu0 %v997
    %1505 = vmatpush1.bf16.msra.mxu0 %v996
    %1506 = vmatprep.subr.bf16.mxu0 %v993
    %1507 = vmatpush1.bf16.msra.mxu0 %v992
    %1508 = vmatprep.subr.bf16.mxu0 %v989
    %1509 = vmatpush1.bf16.msra.mxu0 %v988
    %1510 = vmatprep.subr.bf16.mxu0 %v985
    %1511 = vmatpush1.bf16.msra.mxu0 %v984
    %1512 = vmatprep.subr.bf16.mxu0 %v1045
    %1513 = vmatpush2.bf16.msra.mxu0 %v1044
    %1514 = vmatprep.subr.bf16.mxu0 %v1041
    %1515 = vmatpush2.bf16.msra.mxu0 %v1040
    %1516 = vmatprep.subr.bf16.mxu0 %v1037
    %1517 = vmatpush2.bf16.msra.mxu0 %v1036
    %1518 = vmatprep.subr.bf16.mxu0 %v1033
    %1519 = vmatpush2.bf16.msra.mxu0 %v1032
    %1520 = vmatprep.subr.bf16.mxu0 %v1029
    %1521 = vmatpush2.bf16.msra.mxu0 %v1028
    %1522 = vmatprep.subr.bf16.mxu0 %v1025
    %1523 = vmatpush2.bf16.msra.mxu0 %v1024
    %1524 = vmatprep.subr.bf16.mxu0 %v1021
    %1525 = vmatpush2.bf16.msra.mxu0 %v1020
    %1526 = vmatprep.subr.bf16.mxu0 %v1017
    %1527 = vmatpush2.bf16.msra.mxu0 %v1016
    %1528 = vmatprep.mubr.bf16.mxu0 %v46
    %1529 = vmatmul.mubr.bf16.gmra.mxu0 %v45
    %v1530 = vpop.f32.mrf.mxu0
    %v1531 = vadd.f32 %v1490, %v1530
    %v1532 = vpop.f32.mrf.mxu0
    %v1533 = vadd.f32 %v1492, %v1532
    %v1534 = vpop.f32.mrf.mxu0
    %v1535 = vpop.f32.mrf.mxu0
    %1536 = vdwg.mxu0
    %1537 = vmatprep.subr.bf16.mxu0 0
    %1538 = vmatpush1.bf16.msra.mxu0 0
    %1539 = vmatprep.subr.bf16.mxu0 0
    %1540 = vmatpush1.bf16.msra.mxu0 0
    %1541 = vmatprep.subr.bf16.mxu0 0
    %1542 = vmatpush1.bf16.msra.mxu0 0
    %1543 = vmatprep.subr.bf16.mxu0 0
    %1544 = vmatpush1.bf16.msra.mxu0 0
    %1545 = vmatprep.subr.bf16.mxu0 0
    %1546 = vmatpush1.bf16.msra.mxu0 0
    %1547 = vmatprep.subr.bf16.mxu0 0
    %1548 = vmatpush1.bf16.msra.mxu0 0
    %1549 = vmatprep.subr.bf16.mxu0 0
    %1550 = vmatpush1.bf16.msra.mxu0 0
    %1551 = vmatprep.subr.bf16.mxu0 %v1049
    %1552 = vmatpush1.bf16.msra.mxu0 %v1048
    %1553 = vmatprep.subr.bf16.mxu0 0
    %1554 = vmatpush2.bf16.msra.mxu0 0
    %1555 = vmatprep.subr.bf16.mxu0 0
    %1556 = vmatpush2.bf16.msra.mxu0 0
    %1557 = vmatprep.subr.bf16.mxu0 0
    %1558 = vmatpush2.bf16.msra.mxu0 0
    %1559 = vmatprep.subr.bf16.mxu0 0
    %1560 = vmatpush2.bf16.msra.mxu0 0
    %1561 = vmatprep.subr.bf16.mxu0 0
    %1562 = vmatpush2.bf16.msra.mxu0 0
    %1563 = vmatprep.subr.bf16.mxu0 0
    %1564 = vmatpush2.bf16.msra.mxu0 0
    %1565 = vmatprep.subr.bf16.mxu0 0
    %1566 = vmatpush2.bf16.msra.mxu0 0
    %1567 = vmatprep.subr.bf16.mxu0 0
    %1568 = vmatpush2.bf16.msra.mxu0 0
    %1569 = vmatprep.mubr.bf16.mxu0 0
    %1570 = vmatmul.mubr.bf16.gmra.mxu0 %v1248
    %v1571 = vpop.f32.mrf.mxu0
    %v1572 = vadd.f32 %v1531, %v1571
    %v1573 = vpop.f32.mrf.mxu0
    %v1574 = vadd.f32 %v1533, %v1573
    %v1575 = vpop.f32.mrf.mxu0
    %v1576 = vpop.f32.mrf.mxu0
    %1577 = vdwg.mxu0
    %v1578 = vmax.f32 %v1408, 0.0
    %v1579 = vmax.f32 %v1410, 0.0
    %v1580 = vmax.f32 %v1572, 0.0
    %v1581 = vmax.f32 %v1574, 0.0
    %v1582 = vpack.c.bf16 %v1578, %v1578
    %v1583 = vpack.c.bf16 %v1579, %v1579
    %v1584 = vpack.c.bf16 %v1580, %v1580
    %v1585 = vpack.c.bf16 %v1581, %v1581
    %v1586 = vld [vmem:[%s3] sm:$0xf]
    %v1587 = vld [vmem:[%s3 + $0x4] sm:$0xf]
    %v1588 = vld [vmem:[%s3 + $0x8] sm:$0xf]
    %v1589 = vld [vmem:[%s3 + $0xc] sm:$0xf]
    %v1590 = vld [vmem:[%s3 + $0x10] sm:$0xf]
    %v1591 = vld [vmem:[%s3 + $0x14] sm:$0xf]
    %v1592 = vld [vmem:[%s3 + $0x18] sm:$0xf]
    %v1593 = vld [vmem:[%s3 + $0x1c] sm:$0xf]
    %v1594 = vld [vmem:[%s3 + $0x20] sm:$0xf]
    %v1595 = vld [vmem:[%s3 + $0x24] sm:$0xf]
    %v1596 = vld [vmem:[%s3 + $0x28] sm:$0xf]
    %v1597 = vld [vmem:[%s3 + $0x2c] sm:$0xf]
    %v1598 = vld [vmem:[%s3 + $0x30] sm:$0xf]
    %v1599 = vld [vmem:[%s3 + $0x34] sm:$0xf]
    %v1600 = vld [vmem:[%s3 + $0x38] sm:$0xf]
    %v1601 = vld [vmem:[%s3 + $0x3c] sm:$0xf]
    %v1602 = vld [vmem:[%s3 + $0x40] sm:$0xf]
    %v1603 = vld [vmem:[%s3 + $0x44] sm:$0xf]
    %v1604 = vld [vmem:[%s3 + $0x48] sm:$0xf]
    %v1605 = vld [vmem:[%s3 + $0x4c] sm:$0xf]
    %v1606 = vld [vmem:[%s3 + $0x50] sm:$0xf]
    %v1607 = vld [vmem:[%s3 + $0x54] sm:$0xf]
    %v1608 = vld [vmem:[%s3 + $0x58] sm:$0xf]
    %v1609 = vld [vmem:[%s3 + $0x5c] sm:$0xf]
    %v1610 = vld [vmem:[%s3 + $0x60] sm:$0xf]
    %v1611 = vld [vmem:[%s3 + $0x64] sm:$0xf]
    %v1612 = vld [vmem:[%s3 + $0x68] sm:$0xf]
    %v1613 = vld [vmem:[%s3 + $0x6c] sm:$0xf]
    %v1614 = vld [vmem:[%s3 + $0x70] sm:$0xf]
    %v1615 = vld [vmem:[%s3 + $0x74] sm:$0xf]
    %v1616 = vld [vmem:[%s3 + $0x78] sm:$0xf]
    %v1617 = vld [vmem:[%s3 + $0x7c] sm:$0xf]
    %v1618 = vld [vmem:[%s3 + $0x80] sm:$0xf]
    %v1619 = vld [vmem:[%s3 + $0x84] sm:$0xf]
    %v1620 = vld [vmem:[%s3 + $0x88] sm:$0xf]
    %v1621 = vld [vmem:[%s3 + $0x8c] sm:$0xf]
    %v1622 = vld [vmem:[%s3 + $0x90] sm:$0xf]
    %v1623 = vld [vmem:[%s3 + $0x94] sm:$0xf]
    %v1624 = vld [vmem:[%s3 + $0x98] sm:$0xf]
    %v1625 = vld [vmem:[%s3 + $0x9c] sm:$0xf]
    %v1626 = vld [vmem:[%s3 + $0xa0] sm:$0xf]
    %v1627 = vld [vmem:[%s3 + $0xa4] sm:$0xf]
    %v1628 = vld [vmem:[%s3 + $0xa8] sm:$0xf]
    %v1629 = vld [vmem:[%s3 + $0xac] sm:$0xf]
    %v1630 = vld [vmem:[%s3 + $0xb0] sm:$0xf]
    %v1631 = vld [vmem:[%s3 + $0xb4] sm:$0xf]
    %v1632 = vld [vmem:[%s3 + $0xb8] sm:$0xf]
    %v1633 = vld [vmem:[%s3 + $0xbc] sm:$0xf]
    %v1634 = vld [vmem:[%s3 + $0xc0] sm:$0xf]
    %v1635 = vld [vmem:[%s3 + $0xc4] sm:$0xf]
    %v1636 = vld [vmem:[%s3 + $0xc8] sm:$0xf]
    %v1637 = vld [vmem:[%s3 + $0xcc] sm:$0xf]
    %v1638 = vld [vmem:[%s3 + $0xd0] sm:$0xf]
    %v1639 = vld [vmem:[%s3 + $0xd4] sm:$0xf]
    %v1640 = vld [vmem:[%s3 + $0xd8] sm:$0xf]
    %v1641 = vld [vmem:[%s3 + $0xdc] sm:$0xf]
    %v1642 = vld [vmem:[%s3 + $0xe0] sm:$0xf]
    %v1643 = vld [vmem:[%s3 + $0xe4] sm:$0xf]
    %v1644 = vld [vmem:[%s3 + $0xe8] sm:$0xf]
    %v1645 = vld [vmem:[%s3 + $0xec] sm:$0xf]
    %v1646 = vld [vmem:[%s3 + $0xf0] sm:$0xf]
    %v1647 = vld [vmem:[%s3 + $0xf4] sm:$0xf]
    %v1648 = vld [vmem:[%s3 + $0xf8] sm:$0xf]
    %v1649 = vld [vmem:[%s3 + $0xfc] sm:$0xf]
    %v1650 = vld [vmem:[%s4] sm:$0x1]
    %v1652 = vlaneseq
    %v1653 = vshrl.u32 %v1652, 7
    %v1654 = vsub.s32 0, %v1653
    %v1655 = vrot.slane %v1650, %v1654
    %v1721 = vunpack.c.l.b16 %v1586
    %v1722 = vunpack.c.l.b16 %v1587
    %v1723 = vunpack.c.l.b16 %v1588
    %v1724 = vunpack.c.l.b16 %v1589
    %v1725 = vunpack.c.l.b16 %v1590
    %v1726 = vunpack.c.l.b16 %v1591
    %v1727 = vunpack.c.l.b16 %v1592
    %v1728 = vunpack.c.l.b16 %v1593
    %v1729 = vunpack.c.l.b16 %v1594
    %v1730 = vunpack.c.l.b16 %v1595
    %v1731 = vunpack.c.l.b16 %v1596
    %v1732 = vunpack.c.l.b16 %v1597
    %v1733 = vunpack.c.l.b16 %v1598
    %v1734 = vunpack.c.l.b16 %v1599
    %v1735 = vunpack.c.l.b16 %v1600
    %v1736 = vunpack.c.l.b16 %v1601
    %v1737 = vunpack.c.l.b16 %v1602
    %v1738 = vunpack.c.l.b16 %v1603
    %v1739 = vunpack.c.l.b16 %v1604
    %v1740 = vunpack.c.l.b16 %v1605
    %v1741 = vunpack.c.l.b16 %v1606
    %v1742 = vunpack.c.l.b16 %v1607
    %v1743 = vunpack.c.l.b16 %v1608
    %v1744 = vunpack.c.l.b16 %v1609
    %v1745 = vunpack.c.l.b16 %v1610
    %v1746 = vunpack.c.l.b16 %v1611
    %v1747 = vunpack.c.l.b16 %v1612
    %v1748 = vunpack.c.l.b16 %v1613
    %v1749 = vunpack.c.l.b16 %v1614
    %v1750 = vunpack.c.l.b16 %v1615
    %v1751 = vunpack.c.l.b16 %v1616
    %v1752 = vunpack.c.l.b16 %v1617
    %v1753 = vunpack.c.l.b16 %v1618
    %v1754 = vunpack.c.l.b16 %v1619
    %v1755 = vunpack.c.l.b16 %v1620
    %v1756 = vunpack.c.l.b16 %v1621
    %v1757 = vunpack.c.l.b16 %v1622
    %v1758 = vunpack.c.l.b16 %v1623
    %v1759 = vunpack.c.l.b16 %v1624
    %v1760 = vunpack.c.l.b16 %v1625
    %v1761 = vunpack.c.l.b16 %v1626
    %v1762 = vunpack.c.l.b16 %v1627
    %v1763 = vunpack.c.l.b16 %v1628
    %v1764 = vunpack.c.l.b16 %v1629
    %v1765 = vunpack.c.l.b16 %v1630
    %v1766 = vunpack.c.l.b16 %v1631
    %v1767 = vunpack.c.l.b16 %v1632
    %v1768 = vunpack.c.l.b16 %v1633
    %v1769 = vunpack.c.l.b16 %v1634
    %v1770 = vunpack.c.l.b16 %v1635
    %v1771 = vunpack.c.l.b16 %v1636
    %v1772 = vunpack.c.l.b16 %v1637
    %v1773 = vunpack.c.l.b16 %v1638
    %v1774 = vunpack.c.l.b16 %v1639
    %v1775 = vunpack.c.l.b16 %v1640
    %v1776 = vunpack.c.l.b16 %v1641
    %v1777 = vunpack.c.l.b16 %v1642
    %v1778 = vunpack.c.l.b16 %v1643
    %v1779 = vunpack.c.l.b16 %v1644
    %v1780 = vunpack.c.l.b16 %v1645
    %v1781 = vunpack.c.l.b16 %v1646
    %v1782 = vunpack.c.l.b16 %v1647
    %v1783 = vunpack.c.l.b16 %v1648
    %v1784 = vunpack.c.l.b16 %v1649
    %v1785 = vpack.c.b16 %v1722, %v1721
    %v1786 = vpack.c.b16 %v1724, %v1723
    %v1787 = vpack.c.b16 %v1726, %v1725
    %v1788 = vpack.c.b16 %v1728, %v1727
    %v1789 = vpack.c.b16 %v1730, %v1729
    %v1790 = vpack.c.b16 %v1732, %v1731
    %v1791 = vpack.c.b16 %v1734, %v1733
    %v1792 = vpack.c.b16 %v1736, %v1735
    %v1793 = vpack.c.b16 %v1738, %v1737
    %v1794 = vpack.c.b16 %v1740, %v1739
    %v1795 = vpack.c.b16 %v1742, %v1741
    %v1796 = vpack.c.b16 %v1744, %v1743
    %v1797 = vpack.c.b16 %v1746, %v1745
    %v1798 = vpack.c.b16 %v1748, %v1747
    %v1799 = vpack.c.b16 %v1750, %v1749
    %v1800 = vpack.c.b16 %v1752, %v1751
    %v1801 = vpack.c.b16 %v1754, %v1753
    %v1802 = vpack.c.b16 %v1756, %v1755
    %v1803 = vpack.c.b16 %v1758, %v1757
    %v1804 = vpack.c.b16 %v1760, %v1759
    %v1805 = vpack.c.b16 %v1762, %v1761
    %v1806 = vpack.c.b16 %v1764, %v1763
    %v1807 = vpack.c.b16 %v1766, %v1765
    %v1808 = vpack.c.b16 %v1768, %v1767
    %v1809 = vpack.c.b16 %v1770, %v1769
    %v1810 = vpack.c.b16 %v1772, %v1771
    %v1811 = vpack.c.b16 %v1774, %v1773
    %v1812 = vpack.c.b16 %v1776, %v1775
    %v1813 = vpack.c.b16 %v1778, %v1777
    %v1814 = vpack.c.b16 %v1780, %v1779
    %v1815 = vpack.c.b16 %v1782, %v1781
    %v1816 = vpack.c.b16 %v1784, %v1783
    %1849 = vmatprep.subr.bf16.mxu0 0
    %1850 = vmatpush1.bf16.msra.mxu0 %v1792
    %1851 = vmatprep.subr.bf16.mxu0 0
    %1852 = vmatpush1.bf16.msra.mxu0 %v1791
    %1853 = vmatprep.subr.bf16.mxu0 0
    %1854 = vmatpush1.bf16.msra.mxu0 %v1790
    %1855 = vmatprep.subr.bf16.mxu0 0
    %1856 = vmatpush1.bf16.msra.mxu0 %v1789
    %1857 = vmatprep.subr.bf16.mxu0 0
    %1858 = vmatpush1.bf16.msra.mxu0 %v1788
    %1859 = vmatprep.subr.bf16.mxu0 0
    %1860 = vmatpush1.bf16.msra.mxu0 %v1787
    %1861 = vmatprep.subr.bf16.mxu0 0
    %1862 = vmatpush1.bf16.msra.mxu0 %v1786
    %1863 = vmatprep.subr.bf16.mxu0 0
    %1864 = vmatpush1.bf16.msra.mxu0 %v1785
    %1865 = vmatprep.subr.bf16.mxu0 0
    %1866 = vmatpush2.bf16.msra.mxu0 %v1800
    %1867 = vmatprep.subr.bf16.mxu0 0
    %1868 = vmatpush2.bf16.msra.mxu0 %v1799
    %1869 = vmatprep.subr.bf16.mxu0 0
    %1870 = vmatpush2.bf16.msra.mxu0 %v1798
    %1871 = vmatprep.subr.bf16.mxu0 0
    %1872 = vmatpush2.bf16.msra.mxu0 %v1797
    %1873 = vmatprep.subr.bf16.mxu0 0
    %1874 = vmatpush2.bf16.msra.mxu0 %v1796
    %1875 = vmatprep.subr.bf16.mxu0 0
    %1876 = vmatpush2.bf16.msra.mxu0 %v1795
    %1877 = vmatprep.subr.bf16.mxu0 0
    %1878 = vmatpush2.bf16.msra.mxu0 %v1794
    %1879 = vmatprep.subr.bf16.mxu0 0
    %1880 = vmatpush2.bf16.msra.mxu0 %v1793
    %1881 = vmatprep.mubr.bf16.mxu0 %v1583
    %1882 = vmatmul.mubr.bf16.gmra.mxu0 %v1582
    %v1883 = vpop.f32.mrf.mxu0
    %v1884 = vadd.f32 %v1655, %v1883
    %v1885 = vpop.f32.mrf.mxu0
    %v1886 = vpop.f32.mrf.mxu0
    %v1887 = vpop.f32.mrf.mxu0
    %1888 = vdwg.mxu0
    %1889 = vmatprep.subr.bf16.mxu0 0
    %1890 = vmatpush1.bf16.msra.mxu0 %v1808
    %1891 = vmatprep.subr.bf16.mxu0 0
    %1892 = vmatpush1.bf16.msra.mxu0 %v1807
    %1893 = vmatprep.subr.bf16.mxu0 0
    %1894 = vmatpush1.bf16.msra.mxu0 %v1806
    %1895 = vmatprep.subr.bf16.mxu0 0
    %1896 = vmatpush1.bf16.msra.mxu0 %v1805
    %1897 = vmatprep.subr.bf16.mxu0 0
    %1898 = vmatpush1.bf16.msra.mxu0 %v1804
    %1899 = vmatprep.subr.bf16.mxu0 0
    %1900 = vmatpush1.bf16.msra.mxu0 %v1803
    %1901 = vmatprep.subr.bf16.mxu0 0
    %1902 = vmatpush1.bf16.msra.mxu0 %v1802
    %1903 = vmatprep.subr.bf16.mxu0 0
    %1904 = vmatpush1.bf16.msra.mxu0 %v1801
    %1905 = vmatprep.subr.bf16.mxu0 0
    %1906 = vmatpush2.bf16.msra.mxu0 %v1816
    %1907 = vmatprep.subr.bf16.mxu0 0
    %1908 = vmatpush2.bf16.msra.mxu0 %v1815
    %1909 = vmatprep.subr.bf16.mxu0 0
    %1910 = vmatpush2.bf16.msra.mxu0 %v1814
    %1911 = vmatprep.subr.bf16.mxu0 0
    %1912 = vmatpush2.bf16.msra.mxu0 %v1813
    %1913 = vmatprep.subr.bf16.mxu0 0
    %1914 = vmatpush2.bf16.msra.mxu0 %v1812
    %1915 = vmatprep.subr.bf16.mxu0 0
    %1916 = vmatpush2.bf16.msra.mxu0 %v1811
    %1917 = vmatprep.subr.bf16.mxu0 0
    %1918 = vmatpush2.bf16.msra.mxu0 %v1810
    %1919 = vmatprep.subr.bf16.mxu0 0
    %1920 = vmatpush2.bf16.msra.mxu0 %v1809
    %1921 = vmatprep.mubr.bf16.mxu0 %v1585
    %1922 = vmatmul.mubr.bf16.gmra.mxu0 %v1584
    %v1923 = vpop.f32.mrf.mxu0
    %v1924 = vadd.f32 %v1884, %v1923
    %v1925 = vpop.f32.mrf.mxu0
    %v1926 = vpop.f32.mrf.mxu0
    %v1927 = vpop.f32.mrf.mxu0
    %1928 = vdwg.mxu0
    %v1929 = vmax.f32 %v1924, 0.0
    %v1930 = vpack.c.bf16 %v1929, %v1929
    %v1931 = vld [vmem:[%s5] sm:$0xff]
    %v1932 = vld [vmem:[%s5 + $0x8] sm:$0xff]
    %v1933 = vld [vmem:[%s5 + $0x10] sm:$0xff]
    %v1934 = vld [vmem:[%s5 + $0x18] sm:$0xff]
    %v1935 = vld [vmem:[%s5 + $0x20] sm:$0xff]
    %v1936 = vld [vmem:[%s5 + $0x28] sm:$0xff]
    %v1937 = vld [vmem:[%s5 + $0x30] sm:$0xff]
    %v1938 = vld [vmem:[%s5 + $0x38] sm:$0xff]
    %v1939 = vld [vmem:[%s5 + $0x40] sm:$0xff]
    %v1940 = vld [vmem:[%s5 + $0x48] sm:$0xff]
    %v1941 = vld [vmem:[%s5 + $0x50] sm:$0xff]
    %v1942 = vld [vmem:[%s5 + $0x58] sm:$0xff]
    %v1943 = vld [vmem:[%s5 + $0x60] sm:$0xff]
    %v1944 = vld [vmem:[%s5 + $0x68] sm:$0xff]
    %v1945 = vld [vmem:[%s5 + $0x70] sm:$0xff]
    %v1946 = vld [vmem:[%s5 + $0x78] sm:$0xff]
    %v1947 = vld [vmem:[%s5 + $0x80] sm:$0xff]
    %v1948 = vld [vmem:[%s5 + $0x88] sm:$0xff]
    %v1949 = vld [vmem:[%s5 + $0x90] sm:$0xff]
    %v1950 = vld [vmem:[%s5 + $0x98] sm:$0xff]
    %v1951 = vld [vmem:[%s5 + $0xa0] sm:$0xff]
    %v1952 = vld [vmem:[%s5 + $0xa8] sm:$0xff]
    %v1953 = vld [vmem:[%s5 + $0xb0] sm:$0xff]
    %v1954 = vld [vmem:[%s5 + $0xb8] sm:$0xff]
    %v1955 = vld [vmem:[%s5 + $0xc0] sm:$0xff]
    %v1956 = vld [vmem:[%s5 + $0xc8] sm:$0xff]
    %v1957 = vld [vmem:[%s5 + $0xd0] sm:$0xff]
    %v1958 = vld [vmem:[%s5 + $0xd8] sm:$0xff]
    %v1959 = vld [vmem:[%s5 + $0xe0] sm:$0xff]
    %v1960 = vld [vmem:[%s5 + $0xe8] sm:$0xff]
    %v1961 = vld [vmem:[%s5 + $0xf0] sm:$0xff]
    %v1962 = vld [vmem:[%s5 + $0xf8] sm:$0xff]
    %v1963 = vld [vmem:[%s6] sm:$0xf]
    %v1965 = vlaneseq
    %v1966 = vshrl.u32 %v1965, 7
    %v1967 = vsub.s32 0, %v1966
    %v1968 = vrot.slane %v1963, %v1967
    %v1969 = vlaneseq
    %v1970 = vshrl.u32 %v1969, 7
    %v1971 = vsub.s32 1, %v1970
    %v1972 = vrot.slane %v1963, %v1971
    %v1973 = vlaneseq
    %v1974 = vshrl.u32 %v1973, 7
    %v1975 = vsub.s32 2, %v1974
    %v1976 = vrot.slane %v1963, %v1975
    %v1977 = vlaneseq
    %v1978 = vshrl.u32 %v1977, 7
    %v1979 = vsub.s32 3, %v1978
    %v1980 = vrot.slane %v1963, %v1979
    %v2017 = vunpack.c.l.b16 %v1931
    %v2018 = vunpack.c.h.b16 %v1931
    %v2019 = vunpack.c.l.b16 %v1932
    %v2020 = vunpack.c.h.b16 %v1932
    %v2021 = vunpack.c.l.b16 %v1933
    %v2022 = vunpack.c.h.b16 %v1933
    %v2023 = vunpack.c.l.b16 %v1934
    %v2024 = vunpack.c.h.b16 %v1934
    %v2025 = vunpack.c.l.b16 %v1935
    %v2026 = vunpack.c.h.b16 %v1935
    %v2027 = vunpack.c.l.b16 %v1936
    %v2028 = vunpack.c.h.b16 %v1936
    %v2029 = vunpack.c.l.b16 %v1937
    %v2030 = vunpack.c.h.b16 %v1937
    %v2031 = vunpack.c.l.b16 %v1938
    %v2032 = vunpack.c.h.b16 %v1938
    %v2033 = vunpack.c.l.b16 %v1939
    %v2034 = vunpack.c.h.b16 %v1939
    %v2035 = vunpack.c.l.b16 %v1940
    %v2036 = vunpack.c.h.b16 %v1940
    %v2037 = vunpack.c.l.b16 %v1941
    %v2038 = vunpack.c.h.b16 %v1941
    %v2039 = vunpack.c.l.b16 %v1942
    %v2040 = vunpack.c.h.b16 %v1942
    %v2041 = vunpack.c.l.b16 %v1943
    %v2042 = vunpack.c.h.b16 %v1943
    %v2043 = vunpack.c.l.b16 %v1944
    %v2044 = vunpack.c.h.b16 %v1944
    %v2045 = vunpack.c.l.b16 %v1945
    %v2046 = vunpack.c.h.b16 %v1945
    %v2047 = vunpack.c.l.b16 %v1946
    %v2048 = vunpack.c.h.b16 %v1946
    %v2049 = vunpack.c.l.b16 %v1947
    %v2050 = vunpack.c.h.b16 %v1947
    %v2051 = vunpack.c.l.b16 %v1948
    %v2052 = vunpack.c.h.b16 %v1948
    %v2053 = vunpack.c.l.b16 %v1949
    %v2054 = vunpack.c.h.b16 %v1949
    %v2055 = vunpack.c.l.b16 %v1950
    %v2056 = vunpack.c.h.b16 %v1950
    %v2057 = vunpack.c.l.b16 %v1951
    %v2058 = vunpack.c.h.b16 %v1951
    %v2059 = vunpack.c.l.b16 %v1952
    %v2060 = vunpack.c.h.b16 %v1952
    %v2061 = vunpack.c.l.b16 %v1953
    %v2062 = vunpack.c.h.b16 %v1953
    %v2063 = vunpack.c.l.b16 %v1954
    %v2064 = vunpack.c.h.b16 %v1954
    %v2065 = vunpack.c.l.b16 %v1955
    %v2066 = vunpack.c.h.b16 %v1955
    %v2067 = vunpack.c.l.b16 %v1956
    %v2068 = vunpack.c.h.b16 %v1956
    %v2069 = vunpack.c.l.b16 %v1957
    %v2070 = vunpack.c.h.b16 %v1957
    %v2071 = vunpack.c.l.b16 %v1958
    %v2072 = vunpack.c.h.b16 %v1958
    %v2073 = vunpack.c.l.b16 %v1959
    %v2074 = vunpack.c.h.b16 %v1959
    %v2075 = vunpack.c.l.b16 %v1960
    %v2076 = vunpack.c.h.b16 %v1960
    %v2077 = vunpack.c.l.b16 %v1961
    %v2078 = vunpack.c.h.b16 %v1961
    %v2079 = vunpack.c.l.b16 %v1962
    %v2080 = vunpack.c.h.b16 %v1962
    %v2081 = vpack.c.b16 %v2021, %v2017
    %v2082 = vpack.c.b16 %v2022, %v2018
    %v2083 = vpack.c.b16 %v2023, %v2019
    %v2084 = vpack.c.b16 %v2024, %v2020
    %v2085 = vpack.c.b16 %v2029, %v2025
    %v2086 = vpack.c.b16 %v2030, %v2026
    %v2087 = vpack.c.b16 %v2031, %v2027
    %v2088 = vpack.c.b16 %v2032, %v2028
    %v2089 = vpack.c.b16 %v2037, %v2033
    %v2090 = vpack.c.b16 %v2038, %v2034
    %v2091 = vpack.c.b16 %v2039, %v2035
    %v2092 = vpack.c.b16 %v2040, %v2036
    %v2093 = vpack.c.b16 %v2045, %v2041
    %v2094 = vpack.c.b16 %v2046, %v2042
    %v2095 = vpack.c.b16 %v2047, %v2043
    %v2096 = vpack.c.b16 %v2048, %v2044
    %v2097 = vpack.c.b16 %v2053, %v2049
    %v2098 = vpack.c.b16 %v2054, %v2050
    %v2099 = vpack.c.b16 %v2055, %v2051
    %v2100 = vpack.c.b16 %v2056, %v2052
    %v2101 = vpack.c.b16 %v2061, %v2057
    %v2102 = vpack.c.b16 %v2062, %v2058
    %v2103 = vpack.c.b16 %v2063, %v2059
    %v2104 = vpack.c.b16 %v2064, %v2060
    %v2105 = vpack.c.b16 %v2069, %v2065
    %v2106 = vpack.c.b16 %v2070, %v2066
    %v2107 = vpack.c.b16 %v2071, %v2067
    %v2108 = vpack.c.b16 %v2072, %v2068
    %v2109 = vpack.c.b16 %v2077, %v2073
    %v2110 = vpack.c.b16 %v2078, %v2074
    %v2111 = vpack.c.b16 %v2079, %v2075
    %v2112 = vpack.c.b16 %v2080, %v2076
    %2145 = vmatprep.subr.bf16.mxu0 %v2110
    %2146 = vmatpush1.bf16.msra.mxu0 %v2109
    %2147 = vmatprep.subr.bf16.mxu0 %v2106
    %2148 = vmatpush1.bf16.msra.mxu0 %v2105
    %2149 = vmatprep.subr.bf16.mxu0 %v2102
    %2150 = vmatpush1.bf16.msra.mxu0 %v2101
    %2151 = vmatprep.subr.bf16.mxu0 %v2098
    %2152 = vmatpush1.bf16.msra.mxu0 %v2097
    %2153 = vmatprep.subr.bf16.mxu0 %v2094
    %2154 = vmatpush1.bf16.msra.mxu0 %v2093
    %2155 = vmatprep.subr.bf16.mxu0 %v2090
    %2156 = vmatpush1.bf16.msra.mxu0 %v2089
    %2157 = vmatprep.subr.bf16.mxu0 %v2086
    %2158 = vmatpush1.bf16.msra.mxu0 %v2085
    %2159 = vmatprep.subr.bf16.mxu0 %v2082
    %2160 = vmatpush1.bf16.msra.mxu0 %v2081
    %2161 = vmatprep.subr.bf16.mxu0 0
    %2162 = vmatpush2.bf16.msra.mxu0 0
    %2163 = vmatprep.subr.bf16.mxu0 0
    %2164 = vmatpush2.bf16.msra.mxu0 0
    %2165 = vmatprep.subr.bf16.mxu0 0
    %2166 = vmatpush2.bf16.msra.mxu0 0
    %2167 = vmatprep.subr.bf16.mxu0 0
    %2168 = vmatpush2.bf16.msra.mxu0 0
    %2169 = vmatprep.subr.bf16.mxu0 0
    %2170 = vmatpush2.bf16.msra.mxu0 0
    %2171 = vmatprep.subr.bf16.mxu0 0
    %2172 = vmatpush2.bf16.msra.mxu0 0
    %2173 = vmatprep.subr.bf16.mxu0 0
    %2174 = vmatpush2.bf16.msra.mxu0 0
    %2175 = vmatprep.subr.bf16.mxu0 0
    %2176 = vmatpush2.bf16.msra.mxu0 0
    %2177 = vmatprep.mubr.bf16.mxu0 0
    %2178 = vmatmul.mubr.bf16.gmra.mxu0 %v1930
    %v2179 = vpop.f32.mrf.mxu0
    %v2180 = vadd.f32 %v1968, %v2179
    %v2181 = vpop.f32.mrf.mxu0
    %v2182 = vadd.f32 %v1972, %v2181
    %v2183 = vpop.f32.mrf.mxu0
    %v2184 = vpop.f32.mrf.mxu0
    %2185 = vdwg.mxu0
    %2186 = vmatprep.subr.bf16.mxu0 %v2112
    %2187 = vmatpush1.bf16.msra.mxu0 %v2111
    %2188 = vmatprep.subr.bf16.mxu0 %v2108
    %2189 = vmatpush1.bf16.msra.mxu0 %v2107
    %2190 = vmatprep.subr.bf16.mxu0 %v2104
    %2191 = vmatpush1.bf16.msra.mxu0 %v2103
    %2192 = vmatprep.subr.bf16.mxu0 %v2100
    %2193 = vmatpush1.bf16.msra.mxu0 %v2099
    %2194 = vmatprep.subr.bf16.mxu0 %v2096
    %2195 = vmatpush1.bf16.msra.mxu0 %v2095
    %2196 = vmatprep.subr.bf16.mxu0 %v2092
    %2197 = vmatpush1.bf16.msra.mxu0 %v2091
    %2198 = vmatprep.subr.bf16.mxu0 %v2088
    %2199 = vmatpush1.bf16.msra.mxu0 %v2087
    %2200 = vmatprep.subr.bf16.mxu0 %v2084
    %2201 = vmatpush1.bf16.msra.mxu0 %v2083
    %2202 = vmatprep.subr.bf16.mxu0 0
    %2203 = vmatpush2.bf16.msra.mxu0 0
    %2204 = vmatprep.subr.bf16.mxu0 0
    %2205 = vmatpush2.bf16.msra.mxu0 0
    %2206 = vmatprep.subr.bf16.mxu0 0
    %2207 = vmatpush2.bf16.msra.mxu0 0
    %2208 = vmatprep.subr.bf16.mxu0 0
    %2209 = vmatpush2.bf16.msra.mxu0 0
    %2210 = vmatprep.subr.bf16.mxu0 0
    %2211 = vmatpush2.bf16.msra.mxu0 0
    %2212 = vmatprep.subr.bf16.mxu0 0
    %2213 = vmatpush2.bf16.msra.mxu0 0
    %2214 = vmatprep.subr.bf16.mxu0 0
    %2215 = vmatpush2.bf16.msra.mxu0 0
    %2216 = vmatprep.subr.bf16.mxu0 0
    %2217 = vmatpush2.bf16.msra.mxu0 0
    %2218 = vmatprep.mubr.bf16.mxu0 0
    %2219 = vmatmul.mubr.bf16.gmra.mxu0 %v1930
    %v2220 = vpop.f32.mrf.mxu0
    %v2221 = vadd.f32 %v1976, %v2220
    %v2222 = vpop.f32.mrf.mxu0
    %v2223 = vadd.f32 %v1980, %v2222
    %v2224 = vpop.f32.mrf.mxu0
    %v2225 = vpop.f32.mrf.mxu0
    %2226 = vdwg.mxu0
    %v2227 = vmax.f32 %v2180, 0.0
    %v2228 = vmax.f32 %v2182, 0.0
    %v2229 = vmax.f32 %v2221, 0.0
    %v2230 = vmax.f32 %v2223, 0.0
    %v2231 = vpack.c.bf16 %v2227, %v2227
    %v2232 = vpack.c.bf16 %v2228, %v2228
    %v2233 = vpack.c.bf16 %v2229, %v2229
    %v2234 = vpack.c.bf16 %v2230, %v2230
    %v2235 = vld [vmem:[%s7] sm:$0xff]
    %v2236 = vld [vmem:[%s7 + $0x8] sm:$0xff]
    %v2237 = vld [vmem:[%s7 + $0x10] sm:$0xff]
    %v2238 = vld [vmem:[%s7 + $0x18] sm:$0xf]
    %v2239 = vld [vmem:[%s7 + $0x1c] sm:$0xff]
    %v2240 = vld [vmem:[%s7 + $0x24] sm:$0xff]
    %v2241 = vld [vmem:[%s7 + $0x2c] sm:$0xff]
    %v2242 = vld [vmem:[%s7 + $0x34] sm:$0xf]
    %v2243 = vld [vmem:[%s7 + $0x38] sm:$0xff]
    %v2244 = vld [vmem:[%s7 + $0x40] sm:$0xff]
    %v2245 = vld [vmem:[%s7 + $0x48] sm:$0xff]
    %v2246 = vld [vmem:[%s7 + $0x50] sm:$0xf]
    %v2247 = vld [vmem:[%s7 + $0x54] sm:$0xff]
    %v2248 = vld [vmem:[%s7 + $0x5c] sm:$0xff]
    %v2249 = vld [vmem:[%s7 + $0x64] sm:$0xff]
    %v2250 = vld [vmem:[%s7 + $0x6c] sm:$0xf]
    %v2251 = vld [vmem:[%s7 + $0x70] sm:$0xff]
    %v2252 = vld [vmem:[%s7 + $0x78] sm:$0xff]
    %v2253 = vld [vmem:[%s7 + $0x80] sm:$0xff]
    %v2254 = vld [vmem:[%s7 + $0x88] sm:$0xf]
    %v2255 = vld [vmem:[%s7 + $0x8c] sm:$0xff]
    %v2256 = vld [vmem:[%s7 + $0x94] sm:$0xff]
    %v2257 = vld [vmem:[%s7 + $0x9c] sm:$0xff]
    %v2258 = vld [vmem:[%s7 + $0xa4] sm:$0xf]
    %v2259 = vld [vmem:[%s7 + $0xa8] sm:$0xff]
    %v2260 = vld [vmem:[%s7 + $0xb0] sm:$0xff]
    %v2261 = vld [vmem:[%s7 + $0xb8] sm:$0xff]
    %v2262 = vld [vmem:[%s7 + $0xc0] sm:$0xf]
    %v2263 = vld [vmem:[%s7 + $0xc4] sm:$0xff]
    %v2264 = vld [vmem:[%s7 + $0xcc] sm:$0xff]
    %v2265 = vld [vmem:[%s7 + $0xd4] sm:$0xff]
    %v2266 = vld [vmem:[%s7 + $0xdc] sm:$0xf]
    %v2267 = vld [vmem:[%s7 + $0xe0] sm:$0xff]
    %v2268 = vld [vmem:[%s7 + $0xe8] sm:$0xff]
    %v2269 = vld [vmem:[%s7 + $0xf0] sm:$0xff]
    %v2270 = vld [vmem:[%s7 + $0xf8] sm:$0xf]
    %v2271 = vld [vmem:[%s7 + $0xfc] sm:$0xff]
    %v2272 = vld [vmem:[%s7 + $0x104] sm:$0xff]
    %v2273 = vld [vmem:[%s7 + $0x10c] sm:$0xff]
    %v2274 = vld [vmem:[%s7 + $0x114] sm:$0xf]
    %v2275 = vld [vmem:[%s7 + $0x118] sm:$0xff]
    %v2276 = vld [vmem:[%s7 + $0x120] sm:$0xff]
    %v2277 = vld [vmem:[%s7 + $0x128] sm:$0xff]
    %v2278 = vld [vmem:[%s7 + $0x130] sm:$0xf]
    %v2279 = vld [vmem:[%s7 + $0x134] sm:$0xff]
    %v2280 = vld [vmem:[%s7 + $0x13c] sm:$0xff]
    %v2281 = vld [vmem:[%s7 + $0x144] sm:$0xff]
    %v2282 = vld [vmem:[%s7 + $0x14c] sm:$0xf]
    %v2283 = vld [vmem:[%s7 + $0x150] sm:$0xff]
    %v2284 = vld [vmem:[%s7 + $0x158] sm:$0xff]
    %v2285 = vld [vmem:[%s7 + $0x160] sm:$0xff]
    %v2286 = vld [vmem:[%s7 + $0x168] sm:$0xf]
    %v2287 = vld [vmem:[%s7 + $0x16c] sm:$0xff]
    %v2288 = vld [vmem:[%s7 + $0x174] sm:$0xff]
    %v2289 = vld [vmem:[%s7 + $0x17c] sm:$0xff]
    %v2290 = vld [vmem:[%s7 + $0x184] sm:$0xf]
    %v2291 = vld [vmem:[%s7 + $0x188] sm:$0xff]
    %v2292 = vld [vmem:[%s7 + $0x190] sm:$0xff]
    %v2293 = vld [vmem:[%s7 + $0x198] sm:$0xff]
    %v2294 = vld [vmem:[%s7 + $0x1a0] sm:$0xf]
    %v2295 = vld [vmem:[%s7 + $0x1a4] sm:$0xff]
    %v2296 = vld [vmem:[%s7 + $0x1ac] sm:$0xff]
    %v2297 = vld [vmem:[%s7 + $0x1b4] sm:$0xff]
    %v2298 = vld [vmem:[%s7 + $0x1bc] sm:$0xf]
    %v2299 = vld [vmem:[%s7 + $0x1c0] sm:$0xff]
    %v2300 = vld [vmem:[%s7 + $0x1c8] sm:$0xff]
    %v2301 = vld [vmem:[%s7 + $0x1d0] sm:$0xff]
    %v2302 = vld [vmem:[%s7 + $0x1d8] sm:$0xf]
    %v2303 = vld [vmem:[%s7 + $0x1dc] sm:$0xff]
    %v2304 = vld [vmem:[%s7 + $0x1e4] sm:$0xff]
    %v2305 = vld [vmem:[%s7 + $0x1ec] sm:$0xff]
    %v2306 = vld [vmem:[%s7 + $0x1f4] sm:$0xf]
    %v2307 = vld [vmem:[%s7 + $0x1f8] sm:$0xff]
    %v2308 = vld [vmem:[%s7 + $0x200] sm:$0xff]
    %v2309 = vld [vmem:[%s7 + $0x208] sm:$0xff]
    %v2310 = vld [vmem:[%s7 + $0x210] sm:$0xf]
    %v2311 = vld [vmem:[%s7 + $0x214] sm:$0xff]
    %v2312 = vld [vmem:[%s7 + $0x21c] sm:$0xff]
    %v2313 = vld [vmem:[%s7 + $0x224] sm:$0xff]
    %v2314 = vld [vmem:[%s7 + $0x22c] sm:$0xf]
    %v2315 = vld [vmem:[%s7 + $0x230] sm:$0xff]
    %v2316 = vld [vmem:[%s7 + $0x238] sm:$0xff]
    %v2317 = vld [vmem:[%s7 + $0x240] sm:$0xff]
    %v2318 = vld [vmem:[%s7 + $0x248] sm:$0xf]
    %v2319 = vld [vmem:[%s7 + $0x24c] sm:$0xff]
    %v2320 = vld [vmem:[%s7 + $0x254] sm:$0xff]
    %v2321 = vld [vmem:[%s7 + $0x25c] sm:$0xff]
    %v2322 = vld [vmem:[%s7 + $0x264] sm:$0xf]
    %v2323 = vld [vmem:[%s7 + $0x268] sm:$0xff]
    %v2324 = vld [vmem:[%s7 + $0x270] sm:$0xff]
    %v2325 = vld [vmem:[%s7 + $0x278] sm:$0xff]
    %v2326 = vld [vmem:[%s7 + $0x280] sm:$0xf]
    %v2327 = vld [vmem:[%s7 + $0x284] sm:$0xff]
    %v2328 = vld [vmem:[%s7 + $0x28c] sm:$0xff]
    %v2329 = vld [vmem:[%s7 + $0x294] sm:$0xff]
    %v2330 = vld [vmem:[%s7 + $0x29c] sm:$0xf]
    %v2331 = vld [vmem:[%s7 + $0x2a0] sm:$0xff]
    %v2332 = vld [vmem:[%s7 + $0x2a8] sm:$0xff]
    %v2333 = vld [vmem:[%s7 + $0x2b0] sm:$0xff]
    %v2334 = vld [vmem:[%s7 + $0x2b8] sm:$0xf]
    %v2335 = vld [vmem:[%s7 + $0x2bc] sm:$0xff]
    %v2336 = vld [vmem:[%s7 + $0x2c4] sm:$0xff]
    %v2337 = vld [vmem:[%s7 + $0x2cc] sm:$0xff]
    %v2338 = vld [vmem:[%s7 + $0x2d4] sm:$0xf]
    %v2339 = vld [vmem:[%s7 + $0x2d8] sm:$0xff]
    %v2340 = vld [vmem:[%s7 + $0x2e0] sm:$0xff]
    %v2341 = vld [vmem:[%s7 + $0x2e8] sm:$0xff]
    %v2342 = vld [vmem:[%s7 + $0x2f0] sm:$0xf]
    %v2343 = vld [vmem:[%s7 + $0x2f4] sm:$0xff]
    %v2344 = vld [vmem:[%s7 + $0x2fc] sm:$0xff]
    %v2345 = vld [vmem:[%s7 + $0x304] sm:$0xff]
    %v2346 = vld [vmem:[%s7 + $0x30c] sm:$0xf]
    %v2347 = vld [vmem:[%s7 + $0x310] sm:$0xff]
    %v2348 = vld [vmem:[%s7 + $0x318] sm:$0xff]
    %v2349 = vld [vmem:[%s7 + $0x320] sm:$0xff]
    %v2350 = vld [vmem:[%s7 + $0x328] sm:$0xf]
    %v2351 = vld [vmem:[%s7 + $0x32c] sm:$0xff]
    %v2352 = vld [vmem:[%s7 + $0x334] sm:$0xff]
    %v2353 = vld [vmem:[%s7 + $0x33c] sm:$0xff]
    %v2354 = vld [vmem:[%s7 + $0x344] sm:$0xf]
    %v2355 = vld [vmem:[%s7 + $0x348] sm:$0xff]
    %v2356 = vld [vmem:[%s7 + $0x350] sm:$0xff]
    %v2357 = vld [vmem:[%s7 + $0x358] sm:$0xff]
    %v2358 = vld [vmem:[%s7 + $0x360] sm:$0xf]
    %v2359 = vld [vmem:[%s7 + $0x364] sm:$0xff]
    %v2360 = vld [vmem:[%s7 + $0x36c] sm:$0xff]
    %v2361 = vld [vmem:[%s7 + $0x374] sm:$0xff]
    %v2362 = vld [vmem:[%s7 + $0x37c] sm:$0xf]
    %v2363 = vld [vmem:[%s7 + $0x380] sm:$0xff]
    %v2364 = vld [vmem:[%s7 + $0x388] sm:$0xff]
    %v2365 = vld [vmem:[%s7 + $0x390] sm:$0xff]
    %v2366 = vld [vmem:[%s7 + $0x398] sm:$0xf]
    %v2367 = vld [vmem:[%s7 + $0x39c] sm:$0xff]
    %v2368 = vld [vmem:[%s7 + $0x3a4] sm:$0xff]
    %v2369 = vld [vmem:[%s7 + $0x3ac] sm:$0xff]
    %v2370 = vld [vmem:[%s7 + $0x3b4] sm:$0xf]
    %v2371 = vld [vmem:[%s7 + $0x3b8] sm:$0xff]
    %v2372 = vld [vmem:[%s7 + $0x3c0] sm:$0xff]
    %v2373 = vld [vmem:[%s7 + $0x3c8] sm:$0xff]
    %v2374 = vld [vmem:[%s7 + $0x3d0] sm:$0xf]
    %v2375 = vld [vmem:[%s7 + $0x3d4] sm:$0xff]
    %v2376 = vld [vmem:[%s7 + $0x3dc] sm:$0xff]
    %v2377 = vld [vmem:[%s7 + $0x3e4] sm:$0xff]
    %v2378 = vld [vmem:[%s7 + $0x3ec] sm:$0xf]
    %v2379 = vld [vmem:[%s7 + $0x3f0] sm:$0xff]
    %v2380 = vld [vmem:[%s7 + $0x3f8] sm:$0xff]
    %v2381 = vld [vmem:[%s7 + $0x400] sm:$0xff]
    %v2382 = vld [vmem:[%s7 + $0x408] sm:$0xf]
    %v2383 = vld [vmem:[%s7 + $0x40c] sm:$0xff]
    %v2384 = vld [vmem:[%s7 + $0x414] sm:$0xff]
    %v2385 = vld [vmem:[%s7 + $0x41c] sm:$0xff]
    %v2386 = vld [vmem:[%s7 + $0x424] sm:$0xf]
    %v2387 = vld [vmem:[%s7 + $0x428] sm:$0xff]
    %v2388 = vld [vmem:[%s7 + $0x430] sm:$0xff]
    %v2389 = vld [vmem:[%s7 + $0x438] sm:$0xff]
    %v2390 = vld [vmem:[%s7 + $0x440] sm:$0xf]
    %v2391 = vld [vmem:[%s7 + $0x444] sm:$0xff]
    %v2392 = vld [vmem:[%s7 + $0x44c] sm:$0xff]
    %v2393 = vld [vmem:[%s7 + $0x454] sm:$0xff]
    %v2394 = vld [vmem:[%s7 + $0x45c] sm:$0xf]
    %v2395 = vld [vmem:[%s7 + $0x460] sm:$0xff]
    %v2396 = vld [vmem:[%s7 + $0x468] sm:$0xff]
    %v2397 = vld [vmem:[%s7 + $0x470] sm:$0xff]
    %v2398 = vld [vmem:[%s7 + $0x478] sm:$0xf]
    %v2399 = vld [vmem:[%s7 + $0x47c] sm:$0xff]
    %v2400 = vld [vmem:[%s7 + $0x484] sm:$0xff]
    %v2401 = vld [vmem:[%s7 + $0x48c] sm:$0xff]
    %v2402 = vld [vmem:[%s7 + $0x494] sm:$0xf]
    %v2403 = vld [vmem:[%s7 + $0x498] sm:$0xff]
    %v2404 = vld [vmem:[%s7 + $0x4a0] sm:$0xff]
    %v2405 = vld [vmem:[%s7 + $0x4a8] sm:$0xff]
    %v2406 = vld [vmem:[%s7 + $0x4b0] sm:$0xf]
    %v2407 = vld [vmem:[%s7 + $0x4b4] sm:$0xff]
    %v2408 = vld [vmem:[%s7 + $0x4bc] sm:$0xff]
    %v2409 = vld [vmem:[%s7 + $0x4c4] sm:$0xff]
    %v2410 = vld [vmem:[%s7 + $0x4cc] sm:$0xf]
    %v2411 = vld [vmem:[%s7 + $0x4d0] sm:$0xff]
    %v2412 = vld [vmem:[%s7 + $0x4d8] sm:$0xff]
    %v2413 = vld [vmem:[%s7 + $0x4e0] sm:$0xff]
    %v2414 = vld [vmem:[%s7 + $0x4e8] sm:$0xf]
    %v2415 = vld [vmem:[%s7 + $0x4ec] sm:$0xff]
    %v2416 = vld [vmem:[%s7 + $0x4f4] sm:$0xff]
    %v2417 = vld [vmem:[%s7 + $0x4fc] sm:$0xff]
    %v2418 = vld [vmem:[%s7 + $0x504] sm:$0xf]
    %v2419 = vld [vmem:[%s7 + $0x508] sm:$0xff]
    %v2420 = vld [vmem:[%s7 + $0x510] sm:$0xff]
    %v2421 = vld [vmem:[%s7 + $0x518] sm:$0xff]
    %v2422 = vld [vmem:[%s7 + $0x520] sm:$0xf]
    %v2423 = vld [vmem:[%s7 + $0x524] sm:$0xff]
    %v2424 = vld [vmem:[%s7 + $0x52c] sm:$0xff]
    %v2425 = vld [vmem:[%s7 + $0x534] sm:$0xff]
    %v2426 = vld [vmem:[%s7 + $0x53c] sm:$0xf]
    %v2427 = vld [vmem:[%s7 + $0x540] sm:$0xff]
    %v2428 = vld [vmem:[%s7 + $0x548] sm:$0xff]
    %v2429 = vld [vmem:[%s7 + $0x550] sm:$0xff]
    %v2430 = vld [vmem:[%s7 + $0x558] sm:$0xf]
    %v2431 = vld [vmem:[%s7 + $0x55c] sm:$0xff]
    %v2432 = vld [vmem:[%s7 + $0x564] sm:$0xff]
    %v2433 = vld [vmem:[%s7 + $0x56c] sm:$0xff]
    %v2434 = vld [vmem:[%s7 + $0x574] sm:$0xf]
    %v2435 = vld [vmem:[%s7 + $0x578] sm:$0xff]
    %v2436 = vld [vmem:[%s7 + $0x580] sm:$0xff]
    %v2437 = vld [vmem:[%s7 + $0x588] sm:$0xff]
    %v2438 = vld [vmem:[%s7 + $0x590] sm:$0xf]
    %v2439 = vld [vmem:[%s7 + $0x594] sm:$0xff]
    %v2440 = vld [vmem:[%s7 + $0x59c] sm:$0xff]
    %v2441 = vld [vmem:[%s7 + $0x5a4] sm:$0xff]
    %v2442 = vld [vmem:[%s7 + $0x5ac] sm:$0xf]
    %v2443 = vld [vmem:[%s7 + $0x5b0] sm:$0xff]
    %v2444 = vld [vmem:[%s7 + $0x5b8] sm:$0xff]
    %v2445 = vld [vmem:[%s7 + $0x5c0] sm:$0xff]
    %v2446 = vld [vmem:[%s7 + $0x5c8] sm:$0xf]
    %v2447 = vld [vmem:[%s7 + $0x5cc] sm:$0xff]
    %v2448 = vld [vmem:[%s7 + $0x5d4] sm:$0xff]
    %v2449 = vld [vmem:[%s7 + $0x5dc] sm:$0xff]
    %v2450 = vld [vmem:[%s7 + $0x5e4] sm:$0xf]
    %v2451 = vld [vmem:[%s7 + $0x5e8] sm:$0xff]
    %v2452 = vld [vmem:[%s7 + $0x5f0] sm:$0xff]
    %v2453 = vld [vmem:[%s7 + $0x5f8] sm:$0xff]
    %v2454 = vld [vmem:[%s7 + $0x600] sm:$0xf]
    %v2455 = vld [vmem:[%s7 + $0x604] sm:$0xff]
    %v2456 = vld [vmem:[%s7 + $0x60c] sm:$0xff]
    %v2457 = vld [vmem:[%s7 + $0x614] sm:$0xff]
    %v2458 = vld [vmem:[%s7 + $0x61c] sm:$0xf]
    %v2459 = vld [vmem:[%s7 + $0x620] sm:$0xff]
    %v2460 = vld [vmem:[%s7 + $0x628] sm:$0xff]
    %v2461 = vld [vmem:[%s7 + $0x630] sm:$0xff]
    %v2462 = vld [vmem:[%s7 + $0x638] sm:$0xf]
    %v2463 = vld [vmem:[%s7 + $0x63c] sm:$0xff]
    %v2464 = vld [vmem:[%s7 + $0x644] sm:$0xff]
    %v2465 = vld [vmem:[%s7 + $0x64c] sm:$0xff]
    %v2466 = vld [vmem:[%s7 + $0x654] sm:$0xf]
    %v2467 = vld [vmem:[%s7 + $0x658] sm:$0xff]
    %v2468 = vld [vmem:[%s7 + $0x660] sm:$0xff]
    %v2469 = vld [vmem:[%s7 + $0x668] sm:$0xff]
    %v2470 = vld [vmem:[%s7 + $0x670] sm:$0xf]
    %v2471 = vld [vmem:[%s7 + $0x674] sm:$0xff]
    %v2472 = vld [vmem:[%s7 + $0x67c] sm:$0xff]
    %v2473 = vld [vmem:[%s7 + $0x684] sm:$0xff]
    %v2474 = vld [vmem:[%s7 + $0x68c] sm:$0xf]
    %v2475 = vld [vmem:[%s7 + $0x690] sm:$0xff]
    %v2476 = vld [vmem:[%s7 + $0x698] sm:$0xff]
    %v2477 = vld [vmem:[%s7 + $0x6a0] sm:$0xff]
    %v2478 = vld [vmem:[%s7 + $0x6a8] sm:$0xf]
    %v2479 = vld [vmem:[%s7 + $0x6ac] sm:$0xff]
    %v2480 = vld [vmem:[%s7 + $0x6b4] sm:$0xff]
    %v2481 = vld [vmem:[%s7 + $0x6bc] sm:$0xff]
    %v2482 = vld [vmem:[%s7 + $0x6c4] sm:$0xf]
    %v2483 = vld [vmem:[%s7 + $0x6c8] sm:$0xff]
    %v2484 = vld [vmem:[%s7 + $0x6d0] sm:$0xff]
    %v2485 = vld [vmem:[%s7 + $0x6d8] sm:$0xff]
    %v2486 = vld [vmem:[%s7 + $0x6e0] sm:$0xf]
    %v2487 = vld [vmem:[%s7 + $0x6e4] sm:$0xff]
    %v2488 = vld [vmem:[%s7 + $0x6ec] sm:$0xff]
    %v2489 = vld [vmem:[%s7 + $0x6f4] sm:$0xff]
    %v2490 = vld [vmem:[%s7 + $0x6fc] sm:$0xf]
    %v2491 = vld [vmem:[%s8] sm:$0x7f]
    %v2493 = vlaneseq
    %v2494 = vshrl.u32 %v2493, 7
    %v2495 = vsub.s32 0, %v2494
    %v2496 = vrot.slane %v2491, %v2495
    %v2497 = vlaneseq
    %v2498 = vshrl.u32 %v2497, 7
    %v2499 = vsub.s32 1, %v2498
    %v2500 = vrot.slane %v2491, %v2499
    %v2501 = vlaneseq
    %v2502 = vshrl.u32 %v2501, 7
    %v2503 = vsub.s32 2, %v2502
    %v2504 = vrot.slane %v2491, %v2503
    %v2505 = vlaneseq
    %v2506 = vshrl.u32 %v2505, 7
    %v2507 = vsub.s32 3, %v2506
    %v2508 = vrot.slane %v2491, %v2507
    %v2509 = vlaneseq
    %v2510 = vshrl.u32 %v2509, 7
    %v2511 = vsub.s32 4, %v2510
    %v2512 = vrot.slane %v2491, %v2511
    %v2513 = vlaneseq
    %v2514 = vshrl.u32 %v2513, 7
    %v2515 = vsub.s32 5, %v2514
    %v2516 = vrot.slane %v2491, %v2515
    %v2517 = vlaneseq
    %v2518 = vshrl.u32 %v2517, 7
    %v2519 = vsub.s32 6, %v2518
    %v2520 = vrot.slane %v2491, %v2519
    %v2784 = vunpack.c.l.b16 %v2235
    %v2785 = vunpack.c.h.b16 %v2235
    %v2786 = vunpack.c.l.b16 %v2236
    %v2787 = vunpack.c.h.b16 %v2236
    %v2788 = vunpack.c.l.b16 %v2237
    %v2789 = vunpack.c.h.b16 %v2237
    %v2790 = vunpack.c.l.b16 %v2238
    %v2791 = vunpack.c.l.b16 %v2239
    %v2792 = vunpack.c.h.b16 %v2239
    %v2793 = vunpack.c.l.b16 %v2240
    %v2794 = vunpack.c.h.b16 %v2240
    %v2795 = vunpack.c.l.b16 %v2241
    %v2796 = vunpack.c.h.b16 %v2241
    %v2797 = vunpack.c.l.b16 %v2242
    %v2798 = vunpack.c.l.b16 %v2243
    %v2799 = vunpack.c.h.b16 %v2243
    %v2800 = vunpack.c.l.b16 %v2244
    %v2801 = vunpack.c.h.b16 %v2244
    %v2802 = vunpack.c.l.b16 %v2245
    %v2803 = vunpack.c.h.b16 %v2245
    %v2804 = vunpack.c.l.b16 %v2246
    %v2805 = vunpack.c.l.b16 %v2247
    %v2806 = vunpack.c.h.b16 %v2247
    %v2807 = vunpack.c.l.b16 %v2248
    %v2808 = vunpack.c.h.b16 %v2248
    %v2809 = vunpack.c.l.b16 %v2249
    %v2810 = vunpack.c.h.b16 %v2249
    %v2811 = vunpack.c.l.b16 %v2250
    %v2812 = vunpack.c.l.b16 %v2251
    %v2813 = vunpack.c.h.b16 %v2251
    %v2814 = vunpack.c.l.b16 %v2252
    %v2815 = vunpack.c.h.b16 %v2252
    %v2816 = vunpack.c.l.b16 %v2253
    %v2817 = vunpack.c.h.b16 %v2253
    %v2818 = vunpack.c.l.b16 %v2254
    %v2819 = vunpack.c.l.b16 %v2255
    %v2820 = vunpack.c.h.b16 %v2255
    %v2821 = vunpack.c.l.b16 %v2256
    %v2822 = vunpack.c.h.b16 %v2256
    %v2823 = vunpack.c.l.b16 %v2257
    %v2824 = vunpack.c.h.b16 %v2257
    %v2825 = vunpack.c.l.b16 %v2258
    %v2826 = vunpack.c.l.b16 %v2259
    %v2827 = vunpack.c.h.b16 %v2259
    %v2828 = vunpack.c.l.b16 %v2260
    %v2829 = vunpack.c.h.b16 %v2260
    %v2830 = vunpack.c.l.b16 %v2261
    %v2831 = vunpack.c.h.b16 %v2261
    %v2832 = vunpack.c.l.b16 %v2262
    %v2833 = vunpack.c.l.b16 %v2263
    %v2834 = vunpack.c.h.b16 %v2263
    %v2835 = vunpack.c.l.b16 %v2264
    %v2836 = vunpack.c.h.b16 %v2264
    %v2837 = vunpack.c.l.b16 %v2265
    %v2838 = vunpack.c.h.b16 %v2265
    %v2839 = vunpack.c.l.b16 %v2266
    %v2840 = vunpack.c.l.b16 %v2267
    %v2841 = vunpack.c.h.b16 %v2267
    %v2842 = vunpack.c.l.b16 %v2268
    %v2843 = vunpack.c.h.b16 %v2268
    %v2844 = vunpack.c.l.b16 %v2269
    %v2845 = vunpack.c.h.b16 %v2269
    %v2846 = vunpack.c.l.b16 %v2270
    %v2847 = vunpack.c.l.b16 %v2271
    %v2848 = vunpack.c.h.b16 %v2271
    %v2849 = vunpack.c.l.b16 %v2272
    %v2850 = vunpack.c.h.b16 %v2272
    %v2851 = vunpack.c.l.b16 %v2273
    %v2852 = vunpack.c.h.b16 %v2273
    %v2853 = vunpack.c.l.b16 %v2274
    %v2854 = vunpack.c.l.b16 %v2275
    %v2855 = vunpack.c.h.b16 %v2275
    %v2856 = vunpack.c.l.b16 %v2276
    %v2857 = vunpack.c.h.b16 %v2276
    %v2858 = vunpack.c.l.b16 %v2277
    %v2859 = vunpack.c.h.b16 %v2277
    %v2860 = vunpack.c.l.b16 %v2278
    %v2861 = vunpack.c.l.b16 %v2279
    %v2862 = vunpack.c.h.b16 %v2279
    %v2863 = vunpack.c.l.b16 %v2280
    %v2864 = vunpack.c.h.b16 %v2280
    %v2865 = vunpack.c.l.b16 %v2281
    %v2866 = vunpack.c.h.b16 %v2281
    %v2867 = vunpack.c.l.b16 %v2282
    %v2868 = vunpack.c.l.b16 %v2283
    %v2869 = vunpack.c.h.b16 %v2283
    %v2870 = vunpack.c.l.b16 %v2284
    %v2871 = vunpack.c.h.b16 %v2284
    %v2872 = vunpack.c.l.b16 %v2285
    %v2873 = vunpack.c.h.b16 %v2285
    %v2874 = vunpack.c.l.b16 %v2286
    %v2875 = vunpack.c.l.b16 %v2287
    %v2876 = vunpack.c.h.b16 %v2287
    %v2877 = vunpack.c.l.b16 %v2288
    %v2878 = vunpack.c.h.b16 %v2288
    %v2879 = vunpack.c.l.b16 %v2289
    %v2880 = vunpack.c.h.b16 %v2289
    %v2881 = vunpack.c.l.b16 %v2290
    %v2882 = vunpack.c.l.b16 %v2291
    %v2883 = vunpack.c.h.b16 %v2291
    %v2884 = vunpack.c.l.b16 %v2292
    %v2885 = vunpack.c.h.b16 %v2292
    %v2886 = vunpack.c.l.b16 %v2293
    %v2887 = vunpack.c.h.b16 %v2293
    %v2888 = vunpack.c.l.b16 %v2294
    %v2889 = vunpack.c.l.b16 %v2295
    %v2890 = vunpack.c.h.b16 %v2295
    %v2891 = vunpack.c.l.b16 %v2296
    %v2892 = vunpack.c.h.b16 %v2296
    %v2893 = vunpack.c.l.b16 %v2297
    %v2894 = vunpack.c.h.b16 %v2297
    %v2895 = vunpack.c.l.b16 %v2298
    %v2896 = vunpack.c.l.b16 %v2299
    %v2897 = vunpack.c.h.b16 %v2299
    %v2898 = vunpack.c.l.b16 %v2300
    %v2899 = vunpack.c.h.b16 %v2300
    %v2900 = vunpack.c.l.b16 %v2301
    %v2901 = vunpack.c.h.b16 %v2301
    %v2902 = vunpack.c.l.b16 %v2302
    %v2903 = vunpack.c.l.b16 %v2303
    %v2904 = vunpack.c.h.b16 %v2303
    %v2905 = vunpack.c.l.b16 %v2304
    %v2906 = vunpack.c.h.b16 %v2304
    %v2907 = vunpack.c.l.b16 %v2305
    %v2908 = vunpack.c.h.b16 %v2305
    %v2909 = vunpack.c.l.b16 %v2306
    %v2910 = vunpack.c.l.b16 %v2307
    %v2911 = vunpack.c.h.b16 %v2307
    %v2912 = vunpack.c.l.b16 %v2308
    %v2913 = vunpack.c.h.b16 %v2308
    %v2914 = vunpack.c.l.b16 %v2309
    %v2915 = vunpack.c.h.b16 %v2309
    %v2916 = vunpack.c.l.b16 %v2310
    %v2917 = vunpack.c.l.b16 %v2311
    %v2918 = vunpack.c.h.b16 %v2311
    %v2919 = vunpack.c.l.b16 %v2312
    %v2920 = vunpack.c.h.b16 %v2312
    %v2921 = vunpack.c.l.b16 %v2313
    %v2922 = vunpack.c.h.b16 %v2313
    %v2923 = vunpack.c.l.b16 %v2314
    %v2924 = vunpack.c.l.b16 %v2315
    %v2925 = vunpack.c.h.b16 %v2315
    %v2926 = vunpack.c.l.b16 %v2316
    %v2927 = vunpack.c.h.b16 %v2316
    %v2928 = vunpack.c.l.b16 %v2317
    %v2929 = vunpack.c.h.b16 %v2317
    %v2930 = vunpack.c.l.b16 %v2318
    %v2931 = vunpack.c.l.b16 %v2319
    %v2932 = vunpack.c.h.b16 %v2319
    %v2933 = vunpack.c.l.b16 %v2320
    %v2934 = vunpack.c.h.b16 %v2320
    %v2935 = vunpack.c.l.b16 %v2321
    %v2936 = vunpack.c.h.b16 %v2321
    %v2937 = vunpack.c.l.b16 %v2322
    %v2938 = vunpack.c.l.b16 %v2323
    %v2939 = vunpack.c.h.b16 %v2323
    %v2940 = vunpack.c.l.b16 %v2324
    %v2941 = vunpack.c.h.b16 %v2324
    %v2942 = vunpack.c.l.b16 %v2325
    %v2943 = vunpack.c.h.b16 %v2325
    %v2944 = vunpack.c.l.b16 %v2326
    %v2945 = vunpack.c.l.b16 %v2327
    %v2946 = vunpack.c.h.b16 %v2327
    %v2947 = vunpack.c.l.b16 %v2328
    %v2948 = vunpack.c.h.b16 %v2328
    %v2949 = vunpack.c.l.b16 %v2329
    %v2950 = vunpack.c.h.b16 %v2329
    %v2951 = vunpack.c.l.b16 %v2330
    %v2952 = vunpack.c.l.b16 %v2331
    %v2953 = vunpack.c.h.b16 %v2331
    %v2954 = vunpack.c.l.b16 %v2332
    %v2955 = vunpack.c.h.b16 %v2332
    %v2956 = vunpack.c.l.b16 %v2333
    %v2957 = vunpack.c.h.b16 %v2333
    %v2958 = vunpack.c.l.b16 %v2334
    %v2959 = vunpack.c.l.b16 %v2335
    %v2960 = vunpack.c.h.b16 %v2335
    %v2961 = vunpack.c.l.b16 %v2336
    %v2962 = vunpack.c.h.b16 %v2336
    %v2963 = vunpack.c.l.b16 %v2337
    %v2964 = vunpack.c.h.b16 %v2337
    %v2965 = vunpack.c.l.b16 %v2338
    %v2966 = vunpack.c.l.b16 %v2339
    %v2967 = vunpack.c.h.b16 %v2339
    %v2968 = vunpack.c.l.b16 %v2340
    %v2969 = vunpack.c.h.b16 %v2340
    %v2970 = vunpack.c.l.b16 %v2341
    %v2971 = vunpack.c.h.b16 %v2341
    %v2972 = vunpack.c.l.b16 %v2342
    %v2973 = vunpack.c.l.b16 %v2343
    %v2974 = vunpack.c.h.b16 %v2343
    %v2975 = vunpack.c.l.b16 %v2344
    %v2976 = vunpack.c.h.b16 %v2344
    %v2977 = vunpack.c.l.b16 %v2345
    %v2978 = vunpack.c.h.b16 %v2345
    %v2979 = vunpack.c.l.b16 %v2346
    %v2980 = vunpack.c.l.b16 %v2347
    %v2981 = vunpack.c.h.b16 %v2347
    %v2982 = vunpack.c.l.b16 %v2348
    %v2983 = vunpack.c.h.b16 %v2348
    %v2984 = vunpack.c.l.b16 %v2349
    %v2985 = vunpack.c.h.b16 %v2349
    %v2986 = vunpack.c.l.b16 %v2350
    %v2987 = vunpack.c.l.b16 %v2351
    %v2988 = vunpack.c.h.b16 %v2351
    %v2989 = vunpack.c.l.b16 %v2352
    %v2990 = vunpack.c.h.b16 %v2352
    %v2991 = vunpack.c.l.b16 %v2353
    %v2992 = vunpack.c.h.b16 %v2353
    %v2993 = vunpack.c.l.b16 %v2354
    %v2994 = vunpack.c.l.b16 %v2355
    %v2995 = vunpack.c.h.b16 %v2355
    %v2996 = vunpack.c.l.b16 %v2356
    %v2997 = vunpack.c.h.b16 %v2356
    %v2998 = vunpack.c.l.b16 %v2357
    %v2999 = vunpack.c.h.b16 %v2357
    %v3000 = vunpack.c.l.b16 %v2358
    %v3001 = vunpack.c.l.b16 %v2359
    %v3002 = vunpack.c.h.b16 %v2359
    %v3003 = vunpack.c.l.b16 %v2360
    %v3004 = vunpack.c.h.b16 %v2360
    %v3005 = vunpack.c.l.b16 %v2361
    %v3006 = vunpack.c.h.b16 %v2361
    %v3007 = vunpack.c.l.b16 %v2362
    %v3008 = vunpack.c.l.b16 %v2363
    %v3009 = vunpack.c.h.b16 %v2363
    %v3010 = vunpack.c.l.b16 %v2364
    %v3011 = vunpack.c.h.b16 %v2364
    %v3012 = vunpack.c.l.b16 %v2365
    %v3013 = vunpack.c.h.b16 %v2365
    %v3014 = vunpack.c.l.b16 %v2366
    %v3015 = vunpack.c.l.b16 %v2367
    %v3016 = vunpack.c.h.b16 %v2367
    %v3017 = vunpack.c.l.b16 %v2368
    %v3018 = vunpack.c.h.b16 %v2368
    %v3019 = vunpack.c.l.b16 %v2369
    %v3020 = vunpack.c.h.b16 %v2369
    %v3021 = vunpack.c.l.b16 %v2370
    %v3022 = vunpack.c.l.b16 %v2371
    %v3023 = vunpack.c.h.b16 %v2371
    %v3024 = vunpack.c.l.b16 %v2372
    %v3025 = vunpack.c.h.b16 %v2372
    %v3026 = vunpack.c.l.b16 %v2373
    %v3027 = vunpack.c.h.b16 %v2373
    %v3028 = vunpack.c.l.b16 %v2374
    %v3029 = vunpack.c.l.b16 %v2375
    %v3030 = vunpack.c.h.b16 %v2375
    %v3031 = vunpack.c.l.b16 %v2376
    %v3032 = vunpack.c.h.b16 %v2376
    %v3033 = vunpack.c.l.b16 %v2377
    %v3034 = vunpack.c.h.b16 %v2377
    %v3035 = vunpack.c.l.b16 %v2378
    %v3036 = vunpack.c.l.b16 %v2379
    %v3037 = vunpack.c.h.b16 %v2379
    %v3038 = vunpack.c.l.b16 %v2380
    %v3039 = vunpack.c.h.b16 %v2380
    %v3040 = vunpack.c.l.b16 %v2381
    %v3041 = vunpack.c.h.b16 %v2381
    %v3042 = vunpack.c.l.b16 %v2382
    %v3043 = vunpack.c.l.b16 %v2383
    %v3044 = vunpack.c.h.b16 %v2383
    %v3045 = vunpack.c.l.b16 %v2384
    %v3046 = vunpack.c.h.b16 %v2384
    %v3047 = vunpack.c.l.b16 %v2385
    %v3048 = vunpack.c.h.b16 %v2385
    %v3049 = vunpack.c.l.b16 %v2386
    %v3050 = vunpack.c.l.b16 %v2387
    %v3051 = vunpack.c.h.b16 %v2387
    %v3052 = vunpack.c.l.b16 %v2388
    %v3053 = vunpack.c.h.b16 %v2388
    %v3054 = vunpack.c.l.b16 %v2389
    %v3055 = vunpack.c.h.b16 %v2389
    %v3056 = vunpack.c.l.b16 %v2390
    %v3057 = vunpack.c.l.b16 %v2391
    %v3058 = vunpack.c.h.b16 %v2391
    %v3059 = vunpack.c.l.b16 %v2392
    %v3060 = vunpack.c.h.b16 %v2392
    %v3061 = vunpack.c.l.b16 %v2393
    %v3062 = vunpack.c.h.b16 %v2393
    %v3063 = vunpack.c.l.b16 %v2394
    %v3064 = vunpack.c.l.b16 %v2395
    %v3065 = vunpack.c.h.b16 %v2395
    %v3066 = vunpack.c.l.b16 %v2396
    %v3067 = vunpack.c.h.b16 %v2396
    %v3068 = vunpack.c.l.b16 %v2397
    %v3069 = vunpack.c.h.b16 %v2397
    %v3070 = vunpack.c.l.b16 %v2398
    %v3071 = vunpack.c.l.b16 %v2399
    %v3072 = vunpack.c.h.b16 %v2399
    %v3073 = vunpack.c.l.b16 %v2400
    %v3074 = vunpack.c.h.b16 %v2400
    %v3075 = vunpack.c.l.b16 %v2401
    %v3076 = vunpack.c.h.b16 %v2401
    %v3077 = vunpack.c.l.b16 %v2402
    %v3078 = vunpack.c.l.b16 %v2403
    %v3079 = vunpack.c.h.b16 %v2403
    %v3080 = vunpack.c.l.b16 %v2404
    %v3081 = vunpack.c.h.b16 %v2404
    %v3082 = vunpack.c.l.b16 %v2405
    %v3083 = vunpack.c.h.b16 %v2405
    %v3084 = vunpack.c.l.b16 %v2406
    %v3085 = vunpack.c.l.b16 %v2407
    %v3086 = vunpack.c.h.b16 %v2407
    %v3087 = vunpack.c.l.b16 %v2408
    %v3088 = vunpack.c.h.b16 %v2408
    %v3089 = vunpack.c.l.b16 %v2409
    %v3090 = vunpack.c.h.b16 %v2409
    %v3091 = vunpack.c.l.b16 %v2410
    %v3092 = vunpack.c.l.b16 %v2411
    %v3093 = vunpack.c.h.b16 %v2411
    %v3094 = vunpack.c.l.b16 %v2412
    %v3095 = vunpack.c.h.b16 %v2412
    %v3096 = vunpack.c.l.b16 %v2413
    %v3097 = vunpack.c.h.b16 %v2413
    %v3098 = vunpack.c.l.b16 %v2414
    %v3099 = vunpack.c.l.b16 %v2415
    %v3100 = vunpack.c.h.b16 %v2415
    %v3101 = vunpack.c.l.b16 %v2416
    %v3102 = vunpack.c.h.b16 %v2416
    %v3103 = vunpack.c.l.b16 %v2417
    %v3104 = vunpack.c.h.b16 %v2417
    %v3105 = vunpack.c.l.b16 %v2418
    %v3106 = vunpack.c.l.b16 %v2419
    %v3107 = vunpack.c.h.b16 %v2419
    %v3108 = vunpack.c.l.b16 %v2420
    %v3109 = vunpack.c.h.b16 %v2420
    %v3110 = vunpack.c.l.b16 %v2421
    %v3111 = vunpack.c.h.b16 %v2421
    %v3112 = vunpack.c.l.b16 %v2422
    %v3113 = vunpack.c.l.b16 %v2423
    %v3114 = vunpack.c.h.b16 %v2423
    %v3115 = vunpack.c.l.b16 %v2424
    %v3116 = vunpack.c.h.b16 %v2424
    %v3117 = vunpack.c.l.b16 %v2425
    %v3118 = vunpack.c.h.b16 %v2425
    %v3119 = vunpack.c.l.b16 %v2426
    %v3120 = vunpack.c.l.b16 %v2427
    %v3121 = vunpack.c.h.b16 %v2427
    %v3122 = vunpack.c.l.b16 %v2428
    %v3123 = vunpack.c.h.b16 %v2428
    %v3124 = vunpack.c.l.b16 %v2429
    %v3125 = vunpack.c.h.b16 %v2429
    %v3126 = vunpack.c.l.b16 %v2430
    %v3127 = vunpack.c.l.b16 %v2431
    %v3128 = vunpack.c.h.b16 %v2431
    %v3129 = vunpack.c.l.b16 %v2432
    %v3130 = vunpack.c.h.b16 %v2432
    %v3131 = vunpack.c.l.b16 %v2433
    %v3132 = vunpack.c.h.b16 %v2433
    %v3133 = vunpack.c.l.b16 %v2434
    %v3134 = vunpack.c.l.b16 %v2435
    %v3135 = vunpack.c.h.b16 %v2435
    %v3136 = vunpack.c.l.b16 %v2436
    %v3137 = vunpack.c.h.b16 %v2436
    %v3138 = vunpack.c.l.b16 %v2437
    %v3139 = vunpack.c.h.b16 %v2437
    %v3140 = vunpack.c.l.b16 %v2438
    %v3141 = vunpack.c.l.b16 %v2439
    %v3142 = vunpack.c.h.b16 %v2439
    %v3143 = vunpack.c.l.b16 %v2440
    %v3144 = vunpack.c.h.b16 %v2440
    %v3145 = vunpack.c.l.b16 %v2441
    %v3146 = vunpack.c.h.b16 %v2441
    %v3147 = vunpack.c.l.b16 %v2442
    %v3148 = vunpack.c.l.b16 %v2443
    %v3149 = vunpack.c.h.b16 %v2443
    %v3150 = vunpack.c.l.b16 %v2444
    %v3151 = vunpack.c.h.b16 %v2444
    %v3152 = vunpack.c.l.b16 %v2445
    %v3153 = vunpack.c.h.b16 %v2445
    %v3154 = vunpack.c.l.b16 %v2446
    %v3155 = vunpack.c.l.b16 %v2447
    %v3156 = vunpack.c.h.b16 %v2447
    %v3157 = vunpack.c.l.b16 %v2448
    %v3158 = vunpack.c.h.b16 %v2448
    %v3159 = vunpack.c.l.b16 %v2449
    %v3160 = vunpack.c.h.b16 %v2449
    %v3161 = vunpack.c.l.b16 %v2450
    %v3162 = vunpack.c.l.b16 %v2451
    %v3163 = vunpack.c.h.b16 %v2451
    %v3164 = vunpack.c.l.b16 %v2452
    %v3165 = vunpack.c.h.b16 %v2452
    %v3166 = vunpack.c.l.b16 %v2453
    %v3167 = vunpack.c.h.b16 %v2453
    %v3168 = vunpack.c.l.b16 %v2454
    %v3169 = vunpack.c.l.b16 %v2455
    %v3170 = vunpack.c.h.b16 %v2455
    %v3171 = vunpack.c.l.b16 %v2456
    %v3172 = vunpack.c.h.b16 %v2456
    %v3173 = vunpack.c.l.b16 %v2457
    %v3174 = vunpack.c.h.b16 %v2457
    %v3175 = vunpack.c.l.b16 %v2458
    %v3176 = vunpack.c.l.b16 %v2459
    %v3177 = vunpack.c.h.b16 %v2459
    %v3178 = vunpack.c.l.b16 %v2460
    %v3179 = vunpack.c.h.b16 %v2460
    %v3180 = vunpack.c.l.b16 %v2461
    %v3181 = vunpack.c.h.b16 %v2461
    %v3182 = vunpack.c.l.b16 %v2462
    %v3183 = vunpack.c.l.b16 %v2463
    %v3184 = vunpack.c.h.b16 %v2463
    %v3185 = vunpack.c.l.b16 %v2464
    %v3186 = vunpack.c.h.b16 %v2464
    %v3187 = vunpack.c.l.b16 %v2465
    %v3188 = vunpack.c.h.b16 %v2465
    %v3189 = vunpack.c.l.b16 %v2466
    %v3190 = vunpack.c.l.b16 %v2467
    %v3191 = vunpack.c.h.b16 %v2467
    %v3192 = vunpack.c.l.b16 %v2468
    %v3193 = vunpack.c.h.b16 %v2468
    %v3194 = vunpack.c.l.b16 %v2469
    %v3195 = vunpack.c.h.b16 %v2469
    %v3196 = vunpack.c.l.b16 %v2470
    %v3197 = vunpack.c.l.b16 %v2471
    %v3198 = vunpack.c.h.b16 %v2471
    %v3199 = vunpack.c.l.b16 %v2472
    %v3200 = vunpack.c.h.b16 %v2472
    %v3201 = vunpack.c.l.b16 %v2473
    %v3202 = vunpack.c.h.b16 %v2473
    %v3203 = vunpack.c.l.b16 %v2474
    %v3204 = vunpack.c.l.b16 %v2475
    %v3205 = vunpack.c.h.b16 %v2475
    %v3206 = vunpack.c.l.b16 %v2476
    %v3207 = vunpack.c.h.b16 %v2476
    %v3208 = vunpack.c.l.b16 %v2477
    %v3209 = vunpack.c.h.b16 %v2477
    %v3210 = vunpack.c.l.b16 %v2478
    %v3211 = vunpack.c.l.b16 %v2479
    %v3212 = vunpack.c.h.b16 %v2479
    %v3213 = vunpack.c.l.b16 %v2480
    %v3214 = vunpack.c.h.b16 %v2480
    %v3215 = vunpack.c.l.b16 %v2481
    %v3216 = vunpack.c.h.b16 %v2481
    %v3217 = vunpack.c.l.b16 %v2482
    %v3218 = vunpack.c.l.b16 %v2483
    %v3219 = vunpack.c.h.b16 %v2483
    %v3220 = vunpack.c.l.b16 %v2484
    %v3221 = vunpack.c.h.b16 %v2484
    %v3222 = vunpack.c.l.b16 %v2485
    %v3223 = vunpack.c.h.b16 %v2485
    %v3224 = vunpack.c.l.b16 %v2486
    %v3225 = vunpack.c.l.b16 %v2487
    %v3226 = vunpack.c.h.b16 %v2487
    %v3227 = vunpack.c.l.b16 %v2488
    %v3228 = vunpack.c.h.b16 %v2488
    %v3229 = vunpack.c.l.b16 %v2489
    %v3230 = vunpack.c.h.b16 %v2489
    %v3231 = vunpack.c.l.b16 %v2490
    %v3232 = vpack.c.b16 %v2791, %v2784
    %v3233 = vpack.c.b16 %v2792, %v2785
    %v3234 = vpack.c.b16 %v2793, %v2786
    %v3235 = vpack.c.b16 %v2794, %v2787
    %v3236 = vpack.c.b16 %v2795, %v2788
    %v3237 = vpack.c.b16 %v2796, %v2789
    %v3238 = vpack.c.b16 %v2797, %v2790
    %v3239 = vpack.c.b16 %v2805, %v2798
    %v3240 = vpack.c.b16 %v2806, %v2799
    %v3241 = vpack.c.b16 %v2807, %v2800
    %v3242 = vpack.c.b16 %v2808, %v2801
    %v3243 = vpack.c.b16 %v2809, %v2802
    %v3244 = vpack.c.b16 %v2810, %v2803
    %v3245 = vpack.c.b16 %v2811, %v2804
    %v3246 = vpack.c.b16 %v2819, %v2812
    %v3247 = vpack.c.b16 %v2820, %v2813
    %v3248 = vpack.c.b16 %v2821, %v2814
    %v3249 = vpack.c.b16 %v2822, %v2815
    %v3250 = vpack.c.b16 %v2823, %v2816
    %v3251 = vpack.c.b16 %v2824, %v2817
    %v3252 = vpack.c.b16 %v2825, %v2818
    %v3253 = vpack.c.b16 %v2833, %v2826
    %v3254 = vpack.c.b16 %v2834, %v2827
    %v3255 = vpack.c.b16 %v2835, %v2828
    %v3256 = vpack.c.b16 %v2836, %v2829
    %v3257 = vpack.c.b16 %v2837, %v2830
    %v3258 = vpack.c.b16 %v2838, %v2831
    %v3259 = vpack.c.b16 %v2839, %v2832
    %v3260 = vpack.c.b16 %v2847, %v2840
    %v3261 = vpack.c.b16 %v2848, %v2841
    %v3262 = vpack.c.b16 %v2849, %v2842
    %v3263 = vpack.c.b16 %v2850, %v2843
    %v3264 = vpack.c.b16 %v2851, %v2844
    %v3265 = vpack.c.b16 %v2852, %v2845
    %v3266 = vpack.c.b16 %v2853, %v2846
    %v3267 = vpack.c.b16 %v2861, %v2854
    %v3268 = vpack.c.b16 %v2862, %v2855
    %v3269 = vpack.c.b16 %v2863, %v2856
    %v3270 = vpack.c.b16 %v2864, %v2857
    %v3271 = vpack.c.b16 %v2865, %v2858
    %v3272 = vpack.c.b16 %v2866, %v2859
    %v3273 = vpack.c.b16 %v2867, %v2860
    %v3274 = vpack.c.b16 %v2875, %v2868
    %v3275 = vpack.c.b16 %v2876, %v2869
    %v3276 = vpack.c.b16 %v2877, %v2870
    %v3277 = vpack.c.b16 %v2878, %v2871
    %v3278 = vpack.c.b16 %v2879, %v2872
    %v3279 = vpack.c.b16 %v2880, %v2873
    %v3280 = vpack.c.b16 %v2881, %v2874
    %v3281 = vpack.c.b16 %v2889, %v2882
    %v3282 = vpack.c.b16 %v2890, %v2883
    %v3283 = vpack.c.b16 %v2891, %v2884
    %v3284 = vpack.c.b16 %v2892, %v2885
    %v3285 = vpack.c.b16 %v2893, %v2886
    %v3286 = vpack.c.b16 %v2894, %v2887
    %v3287 = vpack.c.b16 %v2895, %v2888
    %v3288 = vpack.c.b16 %v2903, %v2896
    %v3289 = vpack.c.b16 %v2904, %v2897
    %v3290 = vpack.c.b16 %v2905, %v2898
    %v3291 = vpack.c.b16 %v2906, %v2899
    %v3292 = vpack.c.b16 %v2907, %v2900
    %v3293 = vpack.c.b16 %v2908, %v2901
    %v3294 = vpack.c.b16 %v2909, %v2902
    %v3295 = vpack.c.b16 %v2917, %v2910
    %v3296 = vpack.c.b16 %v2918, %v2911
    %v3297 = vpack.c.b16 %v2919, %v2912
    %v3298 = vpack.c.b16 %v2920, %v2913
    %v3299 = vpack.c.b16 %v2921, %v2914
    %v3300 = vpack.c.b16 %v2922, %v2915
    %v3301 = vpack.c.b16 %v2923, %v2916
    %v3302 = vpack.c.b16 %v2931, %v2924
    %v3303 = vpack.c.b16 %v2932, %v2925
    %v3304 = vpack.c.b16 %v2933, %v2926
    %v3305 = vpack.c.b16 %v2934, %v2927
    %v3306 = vpack.c.b16 %v2935, %v2928
    %v3307 = vpack.c.b16 %v2936, %v2929
    %v3308 = vpack.c.b16 %v2937, %v2930
    %v3309 = vpack.c.b16 %v2945, %v2938
    %v3310 = vpack.c.b16 %v2946, %v2939
    %v3311 = vpack.c.b16 %v2947, %v2940
    %v3312 = vpack.c.b16 %v2948, %v2941
    %v3313 = vpack.c.b16 %v2949, %v2942
    %v3314 = vpack.c.b16 %v2950, %v2943
    %v3315 = vpack.c.b16 %v2951, %v2944
    %v3316 = vpack.c.b16 %v2959, %v2952
    %v3317 = vpack.c.b16 %v2960, %v2953
    %v3318 = vpack.c.b16 %v2961, %v2954
    %v3319 = vpack.c.b16 %v2962, %v2955
    %v3320 = vpack.c.b16 %v2963, %v2956
    %v3321 = vpack.c.b16 %v2964, %v2957
    %v3322 = vpack.c.b16 %v2965, %v2958
    %v3323 = vpack.c.b16 %v2973, %v2966
    %v3324 = vpack.c.b16 %v2974, %v2967
    %v3325 = vpack.c.b16 %v2975, %v2968
    %v3326 = vpack.c.b16 %v2976, %v2969
    %v3327 = vpack.c.b16 %v2977, %v2970
    %v3328 = vpack.c.b16 %v2978, %v2971
    %v3329 = vpack.c.b16 %v2979, %v2972
    %v3330 = vpack.c.b16 %v2987, %v2980
    %v3331 = vpack.c.b16 %v2988, %v2981
    %v3332 = vpack.c.b16 %v2989, %v2982
    %v3333 = vpack.c.b16 %v2990, %v2983
    %v3334 = vpack.c.b16 %v2991, %v2984
    %v3335 = vpack.c.b16 %v2992, %v2985
    %v3336 = vpack.c.b16 %v2993, %v2986
    %v3337 = vpack.c.b16 %v3001, %v2994
    %v3338 = vpack.c.b16 %v3002, %v2995
    %v3339 = vpack.c.b16 %v3003, %v2996
    %v3340 = vpack.c.b16 %v3004, %v2997
    %v3341 = vpack.c.b16 %v3005, %v2998
    %v3342 = vpack.c.b16 %v3006, %v2999
    %v3343 = vpack.c.b16 %v3007, %v3000
    %v3344 = vpack.c.b16 %v3015, %v3008
    %v3345 = vpack.c.b16 %v3016, %v3009
    %v3346 = vpack.c.b16 %v3017, %v3010
    %v3347 = vpack.c.b16 %v3018, %v3011
    %v3348 = vpack.c.b16 %v3019, %v3012
    %v3349 = vpack.c.b16 %v3020, %v3013
    %v3350 = vpack.c.b16 %v3021, %v3014
    %v3351 = vpack.c.b16 %v3029, %v3022
    %v3352 = vpack.c.b16 %v3030, %v3023
    %v3353 = vpack.c.b16 %v3031, %v3024
    %v3354 = vpack.c.b16 %v3032, %v3025
    %v3355 = vpack.c.b16 %v3033, %v3026
    %v3356 = vpack.c.b16 %v3034, %v3027
    %v3357 = vpack.c.b16 %v3035, %v3028
    %v3358 = vpack.c.b16 %v3043, %v3036
    %v3359 = vpack.c.b16 %v3044, %v3037
    %v3360 = vpack.c.b16 %v3045, %v3038
    %v3361 = vpack.c.b16 %v3046, %v3039
    %v3362 = vpack.c.b16 %v3047, %v3040
    %v3363 = vpack.c.b16 %v3048, %v3041
    %v3364 = vpack.c.b16 %v3049, %v3042
    %v3365 = vpack.c.b16 %v3057, %v3050
    %v3366 = vpack.c.b16 %v3058, %v3051
    %v3367 = vpack.c.b16 %v3059, %v3052
    %v3368 = vpack.c.b16 %v3060, %v3053
    %v3369 = vpack.c.b16 %v3061, %v3054
    %v3370 = vpack.c.b16 %v3062, %v3055
    %v3371 = vpack.c.b16 %v3063, %v3056
    %v3372 = vpack.c.b16 %v3071, %v3064
    %v3373 = vpack.c.b16 %v3072, %v3065
    %v3374 = vpack.c.b16 %v3073, %v3066
    %v3375 = vpack.c.b16 %v3074, %v3067
    %v3376 = vpack.c.b16 %v3075, %v3068
    %v3377 = vpack.c.b16 %v3076, %v3069
    %v3378 = vpack.c.b16 %v3077, %v3070
    %v3379 = vpack.c.b16 %v3085, %v3078
    %v3380 = vpack.c.b16 %v3086, %v3079
    %v3381 = vpack.c.b16 %v3087, %v3080
    %v3382 = vpack.c.b16 %v3088, %v3081
    %v3383 = vpack.c.b16 %v3089, %v3082
    %v3384 = vpack.c.b16 %v3090, %v3083
    %v3385 = vpack.c.b16 %v3091, %v3084
    %v3386 = vpack.c.b16 %v3099, %v3092
    %v3387 = vpack.c.b16 %v3100, %v3093
    %v3388 = vpack.c.b16 %v3101, %v3094
    %v3389 = vpack.c.b16 %v3102, %v3095
    %v3390 = vpack.c.b16 %v3103, %v3096
    %v3391 = vpack.c.b16 %v3104, %v3097
    %v3392 = vpack.c.b16 %v3105, %v3098
    %v3393 = vpack.c.b16 %v3113, %v3106
    %v3394 = vpack.c.b16 %v3114, %v3107
    %v3395 = vpack.c.b16 %v3115, %v3108
    %v3396 = vpack.c.b16 %v3116, %v3109
    %v3397 = vpack.c.b16 %v3117, %v3110
    %v3398 = vpack.c.b16 %v3118, %v3111
    %v3399 = vpack.c.b16 %v3119, %v3112
    %v3400 = vpack.c.b16 %v3127, %v3120
    %v3401 = vpack.c.b16 %v3128, %v3121
    %v3402 = vpack.c.b16 %v3129, %v3122
    %v3403 = vpack.c.b16 %v3130, %v3123
    %v3404 = vpack.c.b16 %v3131, %v3124
    %v3405 = vpack.c.b16 %v3132, %v3125
    %v3406 = vpack.c.b16 %v3133, %v3126
    %v3407 = vpack.c.b16 %v3141, %v3134
    %v3408 = vpack.c.b16 %v3142, %v3135
    %v3409 = vpack.c.b16 %v3143, %v3136
    %v3410 = vpack.c.b16 %v3144, %v3137
    %v3411 = vpack.c.b16 %v3145, %v3138
    %v3412 = vpack.c.b16 %v3146, %v3139
    %v3413 = vpack.c.b16 %v3147, %v3140
    %v3414 = vpack.c.b16 %v3155, %v3148
    %v3415 = vpack.c.b16 %v3156, %v3149
    %v3416 = vpack.c.b16 %v3157, %v3150
    %v3417 = vpack.c.b16 %v3158, %v3151
    %v3418 = vpack.c.b16 %v3159, %v3152
    %v3419 = vpack.c.b16 %v3160, %v3153
    %v3420 = vpack.c.b16 %v3161, %v3154
    %v3421 = vpack.c.b16 %v3169, %v3162
    %v3422 = vpack.c.b16 %v3170, %v3163
    %v3423 = vpack.c.b16 %v3171, %v3164
    %v3424 = vpack.c.b16 %v3172, %v3165
    %v3425 = vpack.c.b16 %v3173, %v3166
    %v3426 = vpack.c.b16 %v3174, %v3167
    %v3427 = vpack.c.b16 %v3175, %v3168
    %v3428 = vpack.c.b16 %v3183, %v3176
    %v3429 = vpack.c.b16 %v3184, %v3177
    %v3430 = vpack.c.b16 %v3185, %v3178
    %v3431 = vpack.c.b16 %v3186, %v3179
    %v3432 = vpack.c.b16 %v3187, %v3180
    %v3433 = vpack.c.b16 %v3188, %v3181
    %v3434 = vpack.c.b16 %v3189, %v3182
    %v3435 = vpack.c.b16 %v3197, %v3190
    %v3436 = vpack.c.b16 %v3198, %v3191
    %v3437 = vpack.c.b16 %v3199, %v3192
    %v3438 = vpack.c.b16 %v3200, %v3193
    %v3439 = vpack.c.b16 %v3201, %v3194
    %v3440 = vpack.c.b16 %v3202, %v3195
    %v3441 = vpack.c.b16 %v3203, %v3196
    %v3442 = vpack.c.b16 %v3211, %v3204
    %v3443 = vpack.c.b16 %v3212, %v3205
    %v3444 = vpack.c.b16 %v3213, %v3206
    %v3445 = vpack.c.b16 %v3214, %v3207
    %v3446 = vpack.c.b16 %v3215, %v3208
    %v3447 = vpack.c.b16 %v3216, %v3209
    %v3448 = vpack.c.b16 %v3217, %v3210
    %v3449 = vpack.c.b16 %v3225, %v3218
    %v3450 = vpack.c.b16 %v3226, %v3219
    %v3451 = vpack.c.b16 %v3227, %v3220
    %v3452 = vpack.c.b16 %v3228, %v3221
    %v3453 = vpack.c.b16 %v3229, %v3222
    %v3454 = vpack.c.b16 %v3230, %v3223
    %v3455 = vpack.c.b16 %v3231, %v3224
    %3680 = vmatprep.subr.bf16.mxu0 %v3282
    %3681 = vmatpush1.bf16.msra.mxu0 %v3281
    %3682 = vmatprep.subr.bf16.mxu0 %v3275
    %3683 = vmatpush1.bf16.msra.mxu0 %v3274
    %3684 = vmatprep.subr.bf16.mxu0 %v3268
    %3685 = vmatpush1.bf16.msra.mxu0 %v3267
    %3686 = vmatprep.subr.bf16.mxu0 %v3261
    %3687 = vmatpush1.bf16.msra.mxu0 %v3260
    %3688 = vmatprep.subr.bf16.mxu0 %v3254
    %3689 = vmatpush1.bf16.msra.mxu0 %v3253
    %3690 = vmatprep.subr.bf16.mxu0 %v3247
    %3691 = vmatpush1.bf16.msra.mxu0 %v3246
    %3692 = vmatprep.subr.bf16.mxu0 %v3240
    %3693 = vmatpush1.bf16.msra.mxu0 %v3239
    %3694 = vmatprep.subr.bf16.mxu0 %v3233
    %3695 = vmatpush1.bf16.msra.mxu0 %v3232
    %3696 = vmatprep.subr.bf16.mxu0 %v3338
    %3697 = vmatpush2.bf16.msra.mxu0 %v3337
    %3698 = vmatprep.subr.bf16.mxu0 %v3331
    %3699 = vmatpush2.bf16.msra.mxu0 %v3330
    %3700 = vmatprep.subr.bf16.mxu0 %v3324
    %3701 = vmatpush2.bf16.msra.mxu0 %v3323
    %3702 = vmatprep.subr.bf16.mxu0 %v3317
    %3703 = vmatpush2.bf16.msra.mxu0 %v3316
    %3704 = vmatprep.subr.bf16.mxu0 %v3310
    %3705 = vmatpush2.bf16.msra.mxu0 %v3309
    %3706 = vmatprep.subr.bf16.mxu0 %v3303
    %3707 = vmatpush2.bf16.msra.mxu0 %v3302
    %3708 = vmatprep.subr.bf16.mxu0 %v3296
    %3709 = vmatpush2.bf16.msra.mxu0 %v3295
    %3710 = vmatprep.subr.bf16.mxu0 %v3289
    %3711 = vmatpush2.bf16.msra.mxu0 %v3288
    %3712 = vmatprep.mubr.bf16.mxu0 %v2232
    %3713 = vmatmul.mubr.bf16.gmra.mxu0 %v2231
    %v3714 = vpop.f32.mrf.mxu0
    %v3715 = vadd.f32 %v2496, %v3714
    %v3716 = vpop.f32.mrf.mxu0
    %v3717 = vadd.f32 %v2500, %v3716
    %v3718 = vpop.f32.mrf.mxu0
    %v3719 = vpop.f32.mrf.mxu0
    %3720 = vdwg.mxu0
    %3721 = vmatprep.subr.bf16.mxu0 %v3394
    %3722 = vmatpush1.bf16.msra.mxu0 %v3393
    %3723 = vmatprep.subr.bf16.mxu0 %v3387
    %3724 = vmatpush1.bf16.msra.mxu0 %v3386
    %3725 = vmatprep.subr.bf16.mxu0 %v3380
    %3726 = vmatpush1.bf16.msra.mxu0 %v3379
    %3727 = vmatprep.subr.bf16.mxu0 %v3373
    %3728 = vmatpush1.bf16.msra.mxu0 %v3372
    %3729 = vmatprep.subr.bf16.mxu0 %v3366
    %3730 = vmatpush1.bf16.msra.mxu0 %v3365
    %3731 = vmatprep.subr.bf16.mxu0 %v3359
    %3732 = vmatpush1.bf16.msra.mxu0 %v3358
    %3733 = vmatprep.subr.bf16.mxu0 %v3352
    %3734 = vmatpush1.bf16.msra.mxu0 %v3351
    %3735 = vmatprep.subr.bf16.mxu0 %v3345
    %3736 = vmatpush1.bf16.msra.mxu0 %v3344
    %3737 = vmatprep.subr.bf16.mxu0 %v3450
    %3738 = vmatpush2.bf16.msra.mxu0 %v3449
    %3739 = vmatprep.subr.bf16.mxu0 %v3443
    %3740 = vmatpush2.bf16.msra.mxu0 %v3442
    %3741 = vmatprep.subr.bf16.mxu0 %v3436
    %3742 = vmatpush2.bf16.msra.mxu0 %v3435
    %3743 = vmatprep.subr.bf16.mxu0 %v3429
    %3744 = vmatpush2.bf16.msra.mxu0 %v3428
    %3745 = vmatprep.subr.bf16.mxu0 %v3422
    %3746 = vmatpush2.bf16.msra.mxu0 %v3421
    %3747 = vmatprep.subr.bf16.mxu0 %v3415
    %3748 = vmatpush2.bf16.msra.mxu0 %v3414
    %3749 = vmatprep.subr.bf16.mxu0 %v3408
    %3750 = vmatpush2.bf16.msra.mxu0 %v3407
    %3751 = vmatprep.subr.bf16.mxu0 %v3401
    %3752 = vmatpush2.bf16.msra.mxu0 %v3400
    %3753 = vmatprep.mubr.bf16.mxu0 %v2234
    %3754 = vmatmul.mubr.bf16.gmra.mxu0 %v2233
    %v3755 = vpop.f32.mrf.mxu0
    %v3756 = vadd.f32 %v3715, %v3755
    %v3757 = vpop.f32.mrf.mxu0
    %v3758 = vadd.f32 %v3717, %v3757
    %v3759 = vpop.f32.mrf.mxu0
    %v3760 = vpop.f32.mrf.mxu0
    %3761 = vdwg.mxu0
    %3762 = vmatprep.subr.bf16.mxu0 %v3284
    %3763 = vmatpush1.bf16.msra.mxu0 %v3283
    %3764 = vmatprep.subr.bf16.mxu0 %v3277
    %3765 = vmatpush1.bf16.msra.mxu0 %v3276
    %3766 = vmatprep.subr.bf16.mxu0 %v3270
    %3767 = vmatpush1.bf16.msra.mxu0 %v3269
    %3768 = vmatprep.subr.bf16.mxu0 %v3263
    %3769 = vmatpush1.bf16.msra.mxu0 %v3262
    %3770 = vmatprep.subr.bf16.mxu0 %v3256
    %3771 = vmatpush1.bf16.msra.mxu0 %v3255
    %3772 = vmatprep.subr.bf16.mxu0 %v3249
    %3773 = vmatpush1.bf16.msra.mxu0 %v3248
    %3774 = vmatprep.subr.bf16.mxu0 %v3242
    %3775 = vmatpush1.bf16.msra.mxu0 %v3241
    %3776 = vmatprep.subr.bf16.mxu0 %v3235
    %3777 = vmatpush1.bf16.msra.mxu0 %v3234
    %3778 = vmatprep.subr.bf16.mxu0 %v3340
    %3779 = vmatpush2.bf16.msra.mxu0 %v3339
    %3780 = vmatprep.subr.bf16.mxu0 %v3333
    %3781 = vmatpush2.bf16.msra.mxu0 %v3332
    %3782 = vmatprep.subr.bf16.mxu0 %v3326
    %3783 = vmatpush2.bf16.msra.mxu0 %v3325
    %3784 = vmatprep.subr.bf16.mxu0 %v3319
    %3785 = vmatpush2.bf16.msra.mxu0 %v3318
    %3786 = vmatprep.subr.bf16.mxu0 %v3312
    %3787 = vmatpush2.bf16.msra.mxu0 %v3311
    %3788 = vmatprep.subr.bf16.mxu0 %v3305
    %3789 = vmatpush2.bf16.msra.mxu0 %v3304
    %3790 = vmatprep.subr.bf16.mxu0 %v3298
    %3791 = vmatpush2.bf16.msra.mxu0 %v3297
    %3792 = vmatprep.subr.bf16.mxu0 %v3291
    %3793 = vmatpush2.bf16.msra.mxu0 %v3290
    %3794 = vmatprep.mubr.bf16.mxu0 %v2232
    %3795 = vmatmul.mubr.bf16.gmra.mxu0 %v2231
    %v3796 = vpop.f32.mrf.mxu0
    %v3797 = vadd.f32 %v2504, %v3796
    %v3798 = vpop.f32.mrf.mxu0
    %v3799 = vadd.f32 %v2508, %v3798
    %v3800 = vpop.f32.mrf.mxu0
    %v3801 = vpop.f32.mrf.mxu0
    %3802 = vdwg.mxu0
    %3803 = vmatprep.subr.bf16.mxu0 %v3396
    %3804 = vmatpush1.bf16.msra.mxu0 %v3395
    %3805 = vmatprep.subr.bf16.mxu0 %v3389
    %3806 = vmatpush1.bf16.msra.mxu0 %v3388
    %3807 = vmatprep.subr.bf16.mxu0 %v3382
    %3808 = vmatpush1.bf16.msra.mxu0 %v3381
    %3809 = vmatprep.subr.bf16.mxu0 %v3375
    %3810 = vmatpush1.bf16.msra.mxu0 %v3374
    %3811 = vmatprep.subr.bf16.mxu0 %v3368
    %3812 = vmatpush1.bf16.msra.mxu0 %v3367
    %3813 = vmatprep.subr.bf16.mxu0 %v3361
    %3814 = vmatpush1.bf16.msra.mxu0 %v3360
    %3815 = vmatprep.subr.bf16.mxu0 %v3354
    %3816 = vmatpush1.bf16.msra.mxu0 %v3353
    %3817 = vmatprep.subr.bf16.mxu0 %v3347
    %3818 = vmatpush1.bf16.msra.mxu0 %v3346
    %3819 = vmatprep.subr.bf16.mxu0 %v3452
    %3820 = vmatpush2.bf16.msra.mxu0 %v3451
    %3821 = vmatprep.subr.bf16.mxu0 %v3445
    %3822 = vmatpush2.bf16.msra.mxu0 %v3444
    %3823 = vmatprep.subr.bf16.mxu0 %v3438
    %3824 = vmatpush2.bf16.msra.mxu0 %v3437
    %3825 = vmatprep.subr.bf16.mxu0 %v3431
    %3826 = vmatpush2.bf16.msra.mxu0 %v3430
    %3827 = vmatprep.subr.bf16.mxu0 %v3424
    %3828 = vmatpush2.bf16.msra.mxu0 %v3423
    %3829 = vmatprep.subr.bf16.mxu0 %v3417
    %3830 = vmatpush2.bf16.msra.mxu0 %v3416
    %3831 = vmatprep.subr.bf16.mxu0 %v3410
    %3832 = vmatpush2.bf16.msra.mxu0 %v3409
    %3833 = vmatprep.subr.bf16.mxu0 %v3403
    %3834 = vmatpush2.bf16.msra.mxu0 %v3402
    %3835 = vmatprep.mubr.bf16.mxu0 %v2234
    %3836 = vmatmul.mubr.bf16.gmra.mxu0 %v2233
    %v3837 = vpop.f32.mrf.mxu0
    %v3838 = vadd.f32 %v3797, %v3837
    %v3839 = vpop.f32.mrf.mxu0
    %v3840 = vadd.f32 %v3799, %v3839
    %v3841 = vpop.f32.mrf.mxu0
    %v3842 = vpop.f32.mrf.mxu0
    %3843 = vdwg.mxu0
    %3844 = vmatprep.subr.bf16.mxu0 %v3286
    %3845 = vmatpush1.bf16.msra.mxu0 %v3285
    %3846 = vmatprep.subr.bf16.mxu0 %v3279
    %3847 = vmatpush1.bf16.msra.mxu0 %v3278
    %3848 = vmatprep.subr.bf16.mxu0 %v3272
    %3849 = vmatpush1.bf16.msra.mxu0 %v3271
    %3850 = vmatprep.subr.bf16.mxu0 %v3265
    %3851 = vmatpush1.bf16.msra.mxu0 %v3264
    %3852 = vmatprep.subr.bf16.mxu0 %v3258
    %3853 = vmatpush1.bf16.msra.mxu0 %v3257
    %3854 = vmatprep.subr.bf16.mxu0 %v3251
    %3855 = vmatpush1.bf16.msra.mxu0 %v3250
    %3856 = vmatprep.subr.bf16.mxu0 %v3244
    %3857 = vmatpush1.bf16.msra.mxu0 %v3243
    %3858 = vmatprep.subr.bf16.mxu0 %v3237
    %3859 = vmatpush1.bf16.msra.mxu0 %v3236
    %3860 = vmatprep.subr.bf16.mxu0 %v3342
    %3861 = vmatpush2.bf16.msra.mxu0 %v3341
    %3862 = vmatprep.subr.bf16.mxu0 %v3335
    %3863 = vmatpush2.bf16.msra.mxu0 %v3334
    %3864 = vmatprep.subr.bf16.mxu0 %v3328
    %3865 = vmatpush2.bf16.msra.mxu0 %v3327
    %3866 = vmatprep.subr.bf16.mxu0 %v3321
    %3867 = vmatpush2.bf16.msra.mxu0 %v3320
    %3868 = vmatprep.subr.bf16.mxu0 %v3314
    %3869 = vmatpush2.bf16.msra.mxu0 %v3313
    %3870 = vmatprep.subr.bf16.mxu0 %v3307
    %3871 = vmatpush2.bf16.msra.mxu0 %v3306
    %3872 = vmatprep.subr.bf16.mxu0 %v3300
    %3873 = vmatpush2.bf16.msra.mxu0 %v3299
    %3874 = vmatprep.subr.bf16.mxu0 %v3293
    %3875 = vmatpush2.bf16.msra.mxu0 %v3292
    %3876 = vmatprep.mubr.bf16.mxu0 %v2232
    %3877 = vmatmul.mubr.bf16.gmra.mxu0 %v2231
    %v3878 = vpop.f32.mrf.mxu0
    %v3879 = vadd.f32 %v2512, %v3878
    %v3880 = vpop.f32.mrf.mxu0
    %v3881 = vadd.f32 %v2516, %v3880
    %v3882 = vpop.f32.mrf.mxu0
    %v3883 = vpop.f32.mrf.mxu0
    %3884 = vdwg.mxu0
    %3885 = vmatprep.subr.bf16.mxu0 %v3398
    %3886 = vmatpush1.bf16.msra.mxu0 %v3397
    %3887 = vmatprep.subr.bf16.mxu0 %v3391
    %3888 = vmatpush1.bf16.msra.mxu0 %v3390
    %3889 = vmatprep.subr.bf16.mxu0 %v3384
    %3890 = vmatpush1.bf16.msra.mxu0 %v3383
    %3891 = vmatprep.subr.bf16.mxu0 %v3377
    %3892 = vmatpush1.bf16.msra.mxu0 %v3376
    %3893 = vmatprep.subr.bf16.mxu0 %v3370
    %3894 = vmatpush1.bf16.msra.mxu0 %v3369
    %3895 = vmatprep.subr.bf16.mxu0 %v3363
    %3896 = vmatpush1.bf16.msra.mxu0 %v3362
    %3897 = vmatprep.subr.bf16.mxu0 %v3356
    %3898 = vmatpush1.bf16.msra.mxu0 %v3355
    %3899 = vmatprep.subr.bf16.mxu0 %v3349
    %3900 = vmatpush1.bf16.msra.mxu0 %v3348
    %3901 = vmatprep.subr.bf16.mxu0 %v3454
    %3902 = vmatpush2.bf16.msra.mxu0 %v3453
    %3903 = vmatprep.subr.bf16.mxu0 %v3447
    %3904 = vmatpush2.bf16.msra.mxu0 %v3446
    %3905 = vmatprep.subr.bf16.mxu0 %v3440
    %3906 = vmatpush2.bf16.msra.mxu0 %v3439
    %3907 = vmatprep.subr.bf16.mxu0 %v3433
    %3908 = vmatpush2.bf16.msra.mxu0 %v3432
    %3909 = vmatprep.subr.bf16.mxu0 %v3426
    %3910 = vmatpush2.bf16.msra.mxu0 %v3425
    %3911 = vmatprep.subr.bf16.mxu0 %v3419
    %3912 = vmatpush2.bf16.msra.mxu0 %v3418
    %3913 = vmatprep.subr.bf16.mxu0 %v3412
    %3914 = vmatpush2.bf16.msra.mxu0 %v3411
    %3915 = vmatprep.subr.bf16.mxu0 %v3405
    %3916 = vmatpush2.bf16.msra.mxu0 %v3404
    %3917 = vmatprep.mubr.bf16.mxu0 %v2234
    %3918 = vmatmul.mubr.bf16.gmra.mxu0 %v2233
    %v3919 = vpop.f32.mrf.mxu0
    %v3920 = vadd.f32 %v3879, %v3919
    %v3921 = vpop.f32.mrf.mxu0
    %v3922 = vadd.f32 %v3881, %v3921
    %v3923 = vpop.f32.mrf.mxu0
    %v3924 = vpop.f32.mrf.mxu0
    %3925 = vdwg.mxu0
    %3926 = vmatprep.subr.bf16.mxu0 0
    %3927 = vmatpush1.bf16.msra.mxu0 %v3287
    %3928 = vmatprep.subr.bf16.mxu0 0
    %3929 = vmatpush1.bf16.msra.mxu0 %v3280
    %3930 = vmatprep.subr.bf16.mxu0 0
    %3931 = vmatpush1.bf16.msra.mxu0 %v3273
    %3932 = vmatprep.subr.bf16.mxu0 0
    %3933 = vmatpush1.bf16.msra.mxu0 %v3266
    %3934 = vmatprep.subr.bf16.mxu0 0
    %3935 = vmatpush1.bf16.msra.mxu0 %v3259
    %3936 = vmatprep.subr.bf16.mxu0 0
    %3937 = vmatpush1.bf16.msra.mxu0 %v3252
    %3938 = vmatprep.subr.bf16.mxu0 0
    %3939 = vmatpush1.bf16.msra.mxu0 %v3245
    %3940 = vmatprep.subr.bf16.mxu0 0
    %3941 = vmatpush1.bf16.msra.mxu0 %v3238
    %3942 = vmatprep.subr.bf16.mxu0 0
    %3943 = vmatpush2.bf16.msra.mxu0 %v3343
    %3944 = vmatprep.subr.bf16.mxu0 0
    %3945 = vmatpush2.bf16.msra.mxu0 %v3336
    %3946 = vmatprep.subr.bf16.mxu0 0
    %3947 = vmatpush2.bf16.msra.mxu0 %v3329
    %3948 = vmatprep.subr.bf16.mxu0 0
    %3949 = vmatpush2.bf16.msra.mxu0 %v3322
    %3950 = vmatprep.subr.bf16.mxu0 0
    %3951 = vmatpush2.bf16.msra.mxu0 %v3315
    %3952 = vmatprep.subr.bf16.mxu0 0
    %3953 = vmatpush2.bf16.msra.mxu0 %v3308
    %3954 = vmatprep.subr.bf16.mxu0 0
    %3955 = vmatpush2.bf16.msra.mxu0 %v3301
    %3956 = vmatprep.subr.bf16.mxu0 0
    %3957 = vmatpush2.bf16.msra.mxu0 %v3294
    %3958 = vmatprep.mubr.bf16.mxu0 %v2232
    %3959 = vmatmul.mubr.bf16.gmra.mxu0 %v2231
    %v3960 = vpop.f32.mrf.mxu0
    %v3961 = vadd.f32 %v2520, %v3960
    %v3962 = vpop.f32.mrf.mxu0
    %v3963 = vpop.f32.mrf.mxu0
    %v3964 = vpop.f32.mrf.mxu0
    %3965 = vdwg.mxu0
    %3966 = vmatprep.subr.bf16.mxu0 0
    %3967 = vmatpush1.bf16.msra.mxu0 %v3399
    %3968 = vmatprep.subr.bf16.mxu0 0
    %3969 = vmatpush1.bf16.msra.mxu0 %v3392
    %3970 = vmatprep.subr.bf16.mxu0 0
    %3971 = vmatpush1.bf16.msra.mxu0 %v3385
    %3972 = vmatprep.subr.bf16.mxu0 0
    %3973 = vmatpush1.bf16.msra.mxu0 %v3378
    %3974 = vmatprep.subr.bf16.mxu0 0
    %3975 = vmatpush1.bf16.msra.mxu0 %v3371
    %3976 = vmatprep.subr.bf16.mxu0 0
    %3977 = vmatpush1.bf16.msra.mxu0 %v3364
    %3978 = vmatprep.subr.bf16.mxu0 0
    %3979 = vmatpush1.bf16.msra.mxu0 %v3357
    %3980 = vmatprep.subr.bf16.mxu0 0
    %3981 = vmatpush1.bf16.msra.mxu0 %v3350
    %3982 = vmatprep.subr.bf16.mxu0 0
    %3983 = vmatpush2.bf16.msra.mxu0 %v3455
    %3984 = vmatprep.subr.bf16.mxu0 0
    %3985 = vmatpush2.bf16.msra.mxu0 %v3448
    %3986 = vmatprep.subr.bf16.mxu0 0
    %3987 = vmatpush2.bf16.msra.mxu0 %v3441
    %3988 = vmatprep.subr.bf16.mxu0 0
    %3989 = vmatpush2.bf16.msra.mxu0 %v3434
    %3990 = vmatprep.subr.bf16.mxu0 0
    %3991 = vmatpush2.bf16.msra.mxu0 %v3427
    %3992 = vmatprep.subr.bf16.mxu0 0
    %3993 = vmatpush2.bf16.msra.mxu0 %v3420
    %3994 = vmatprep.subr.bf16.mxu0 0
    %3995 = vmatpush2.bf16.msra.mxu0 %v3413
    %3996 = vmatprep.subr.bf16.mxu0 0
    %3997 = vmatpush2.bf16.msra.mxu0 %v3406
    %3998 = vmatprep.mubr.bf16.mxu0 %v2234
    %3999 = vmatmul.mubr.bf16.gmra.mxu0 %v2233
    %v4000 = vpop.f32.mrf.mxu0
    %v4001 = vadd.f32 %v3961, %v4000
    %v4002 = vpop.f32.mrf.mxu0
    %v4003 = vpop.f32.mrf.mxu0
    %v4004 = vpop.f32.mrf.mxu0
    %4005 = vdwg.mxu0
    %v4006 = vmul.f32 %v3756, 0.5
    %v4007 = vmul.f32 %v3758, 0.5
    %v4008 = vmul.f32 %v3838, 0.5
    %v4009 = vmul.f32 %v3840, 0.5
    %v4010 = vmul.f32 %v3920, 0.5
    %v4011 = vmul.f32 %v3922, 0.5
    %v4012 = vmul.f32 %v4001, 0.5
    %v4013 = vtanh.pop %v4006
    %v4014 = vtanh.pop %v4007
    %v4015 = vtanh.pop %v4008
    %v4016 = vtanh.pop %v4009
    %v4017 = vtanh.pop %v4010
    %v4018 = vtanh.pop %v4011
    %v4019 = vtanh.pop %v4012
    %v4020 = vmul.f32 %v4013, 0.5
    %v4021 = vmul.f32 %v4014, 0.5
    %v4022 = vmul.f32 %v4015, 0.5
    %v4023 = vmul.f32 %v4016, 0.5
    %v4024 = vmul.f32 %v4017, 0.5
    %v4025 = vmul.f32 %v4018, 0.5
    %v4026 = vmul.f32 %v4019, 0.5
    %v4027 = vadd.f32 %v4020, 0.5
    %v4028 = vadd.f32 %v4021, 0.5
    %v4029 = vadd.f32 %v4022, 0.5
    %v4030 = vadd.f32 %v4023, 0.5
    %v4031 = vadd.f32 %v4024, 0.5
    %v4032 = vadd.f32 %v4025, 0.5
    %v4033 = vadd.f32 %v4026, 0.5
    %v4034 = vpack.c.bf16 %v4027, %v4027
    %v4035 = vpack.c.bf16 %v4028, %v4028
    %v4036 = vpack.c.bf16 %v4029, %v4029
    %v4037 = vpack.c.bf16 %v4030, %v4030
    %v4038 = vpack.c.bf16 %v4031, %v4031
    %v4039 = vpack.c.bf16 %v4032, %v4032
    %v4040 = vpack.c.bf16 %v4033, %v4033
    %v4048 = vunpack.c.l.b16 %v4034
    %v4049 = vunpack.c.l.b16 %v4035
    %v4050 = vunpack.c.l.b16 %v4036
    %v4051 = vunpack.c.l.b16 %v4037
    %v4052 = vunpack.c.l.b16 %v4038
    %v4053 = vunpack.c.l.b16 %v4039
    %v4054 = vunpack.c.l.b16 %v4040
    %v4055 = vpack.c.b16 %v4049, %v4048
    %v4056 = vpack.c.b16 %v4051, %v4050
    %v4057 = vpack.c.b16 %v4053, %v4052
    %v4058 = vpack.c.b16 %v4054, %v4054
    %4063 = vst [vmem:[#allocation2] sm:$0xff] %v4055
    %4064 = vst [vmem:[#allocation2 + $0x8] sm:$0xff] %v4056
    %4065 = vst [vmem:[#allocation2 + $0x10] sm:$0xff] %v4057
    %vm4066 = vcmask 125952
    %4067 = vst.msk [vmem:[#allocation2 + $0x18] sm:$0xf] %vm4066, %v4058
    // Predicated region
    $region38: #{tpu_custom_call.1} parent=1 // pred_check
      _
    $region39: #{tpu_custom_call.1} parent=1 // pred_check_branch
      %4069 = sbr.rel (0) target = $region41
    $region40: #{tpu_custom_call.1} parent=1 // pred_region
      %s4071 = ssub.s32 448, 448
      %4072 = vsyncadd [#allocation3], %s4071
      %s4074 = sshll.u32 [#allocation2], 4
      %s4075 = int_to_ptr.vmem [resolvable:$true] %s4074
      %4077 = dma.vmem_to_hbm [thread:$0]  %s4075, 448, %s9, [#allocation3]
    $region41: #{tpu_custom_call.1} parent=1 // pred_fallthru
      _
    // Predicated region
    $region42: #{tpu_custom_call.1} parent=1 // pred_check
      _
    $region43: #{tpu_custom_call.1} parent=1 // pred_check_branch
      %4079 = sbr.rel (0) target = $region45
    $region44: #{tpu_custom_call.1} parent=1 // pred_region
      %4080 = dma.done [#allocation3], 448
    $region45: #{tpu_custom_call.1} parent=1 // pred_fallthru
      _
    %4081 = vsyncpa [#allocation3], 1

// kernel: tpu_custom_call.1
$region0: #{tpu_custom_call.1}
  #allocation0 [shape = 'u32[]', space=smem, size = 0x4, offset = 0x4, fixed_abs, tag = 'smem constant byte address 0x4 - core index']
  #allocation1 [shape = 'u32[144,128]{1,0:T(1,128)}', space=vmem, size = 0x12000, scoped, tag = 'internal scratch']
  %s0 = inlined_call_operand.vmem [shape: f32[8,784], index: 0, kind: input, shape index: {}]
  %s1 = inlined_call_operand.vmem [shape: bf16[784,512], index: 1, kind: input, shape index: {}]
  %s2 = inlined_call_operand.vmem [shape: f32[1,512], index: 2, kind: input, shape index: {}]
  %s3 = inlined_call_operand.vmem [shape: bf16[512,128], index: 3, kind: input, shape index: {}]
  %s4 = inlined_call_operand.vmem [shape: f32[1,128], index: 4, kind: input, shape index: {}]
  %s5 = inlined_call_operand.vmem [shape: bf16[128,512], index: 5, kind: input, shape index: {}]
  %s6 = inlined_call_operand.vmem [shape: f32[1,512], index: 6, kind: input, shape index: {}]
  %s7 = inlined_call_operand.vmem [shape: bf16[512,784], index: 7, kind: input, shape index: {}]
  %s8 = inlined_call_operand.vmem [shape: f32[1,784], index: 8, kind: input, shape index: {}]
  %s9 = inlined_call_operand.hbm [shape: bf16[8,784], index: 9, kind: output, shape index: {}]
  %s10 = sld [smem:[#allocation0]]
  $region46: #{tpu_custom_call.1} parent=0
    _
  %s12 = ssub.s32 1, %s10
  %s13 = scalar_select 0, %s12, %s10
  $region1: #{tpu_custom_call.1} parent=0
    #allocation2 [shape = 'u8[14336]{0}', space=vmem, size = 0x3800, scoped, tag = 'output window, operand 0, single buffered']
    #allocation3 [shape = 's32[1]{0}', space=sflag, size = 0x4, scoped, tag = 'scoped memory for tpu_custom_call.1']
    %14 = vsyncpa [#allocation3], 0
    // Predicated region
    $region2: #{tpu_custom_call.1} parent=1 // pred_check
      _
    $region3: #{tpu_custom_call.1} parent=1 // pred_check_branch
      %16 = sbr.rel (0) target = $region5
    $region4: #{tpu_custom_call.1} parent=1 // pred_region
      _
    $region5: #{tpu_custom_call.1} parent=1 // pred_fallthru
      _
    // Predicated region
    $region6: #{tpu_custom_call.1} parent=1 // pred_check
      _
    $region7: #{tpu_custom_call.1} parent=1 // pred_check_branch
      %18 = sbr.rel (0) target = $region9
    $region8: #{tpu_custom_call.1} parent=1 // pred_region
      _
    $region9: #{tpu_custom_call.1} parent=1 // pred_fallthru
      _
    // Predicated region
    $region10: #{tpu_custom_call.1} parent=1 // pred_check
      _
    $region11: #{tpu_custom_call.1} parent=1 // pred_check_branch
      %20 = sbr.rel (0) target = $region13
    $region12: #{tpu_custom_call.1} parent=1 // pred_region
      _
    $region13: #{tpu_custom_call.1} parent=1 // pred_fallthru
      _
    // Predicated region
    $region14: #{tpu_custom_call.1} parent=1 // pred_check
      _
    $region15: #{tpu_custom_call.1} parent=1 // pred_check_branch
      %22 = sbr.rel (0) target = $region17
    $region16: #{tpu_custom_call.1} parent=1 // pred_region
      _
    $region17: #{tpu_custom_call.1} parent=1 // pred_fallthru
      _
    // Predicated region
    $region18: #{tpu_custom_call.1} parent=1 // pred_check
      _
    $region19: #{tpu_custom_call.1} parent=1 // pred_check_branch
      %24 = sbr.rel (0) target = $region21
    $region20: #{tpu_custom_call.1} parent=1 // pred_region
      _
    $region21: #{tpu_custom_call.1} parent=1 // pred_fallthru
      _
    // Predicated region
    $region22: #{tpu_custom_call.1} parent=1 // pred_check
      _
    $region23: #{tpu_custom_call.1} parent=1 // pred_check_branch
      %26 = sbr.rel (0) target = $region25
    $region24: #{tpu_custom_call.1} parent=1 // pred_region
      _
    $region25: #{tpu_custom_call.1} parent=1 // pred_fallthru
      _
    // Predicated region
    $region26: #{tpu_custom_call.1} parent=1 // pred_check
      _
    $region27: #{tpu_custom_call.1} parent=1 // pred_check_branch
      %28 = sbr.rel (0) target = $region29
    $region28: #{tpu_custom_call.1} parent=1 // pred_region
      _
    $region29: #{tpu_custom_call.1} parent=1 // pred_fallthru
      _
    // Predicated region
    $region30: #{tpu_custom_call.1} parent=1 // pred_check
      _
    $region31: #{tpu_custom_call.1} parent=1 // pred_check_branch
      %30 = sbr.rel (0) target = $region33
    $region32: #{tpu_custom_call.1} parent=1 // pred_region
      _
    $region33: #{tpu_custom_call.1} parent=1 // pred_fallthru
      _
    // Predicated region
    $region34: #{tpu_custom_call.1} parent=1 // pred_check
      _
    $region35: #{tpu_custom_call.1} parent=1 // pred_check_branch
      %32 = sbr.rel (0) target = $region37
    $region36: #{tpu_custom_call.1} parent=1 // pred_region
      _
    $region37: #{tpu_custom_call.1} parent=1 // pred_fallthru
      _
    %v34 = vld [vmem:[%s0] sm:$0xff]
    %v35 = vld [vmem:[%s0 + $0x8] sm:$0xff]
    %v36 = vld [vmem:[%s0 + $0x10] sm:$0xff]
    %v37 = vld [vmem:[%s0 + $0x18] sm:$0xff]
    %v38 = vld [vmem:[%s0 + $0x20] sm:$0xff]
    %v39 = vld [vmem:[%s0 + $0x28] sm:$0xff]
    %v40 = vld [vmem:[%s0 + $0x30] sm:$0xff]
    %v41 = vpack.c.bf16 %v34, %v34
    %v42 = vpack.c.bf16 %v35, %v35
    %v43 = vpack.c.bf16 %v36, %v36
    %v44 = vpack.c.bf16 %v37, %v37
    %v45 = vpack.c.bf16 %v38, %v38
    %v46 = vpack.c.bf16 %v39, %v39
    %v47 = vpack.c.bf16 %v40, %v40
    %v48 = vld [vmem:[%s1] sm:$0xff]
    %v49 = vld [vmem:[%s1 + $0x8] sm:$0xff]
    %v50 = vld [vmem:[%s1 + $0x10] sm:$0xff]
    %v51 = vld [vmem:[%s1 + $0x18] sm:$0xff]
    %v52 = vld [vmem:[%s1 + $0x20] sm:$0xff]
    %v53 = vld [vmem:[%s1 + $0x28] sm:$0xff]
    %v54 = vld [vmem:[%s1 + $0x30] sm:$0xff]
    %v55 = vld [vmem:[%s1 + $0x38] sm:$0xff]
    %v56 = vld [vmem:[%s1 + $0x40] sm:$0xff]
    %v57 = vld [vmem:[%s1 + $0x48] sm:$0xff]
    %v58 = vld [vmem:[%s1 + $0x50] sm:$0xff]
    %v59 = vld [vmem:[%s1 + $0x58] sm:$0xff]
    %v60 = vld [vmem:[%s1 + $0x60] sm:$0xff]
    %v61 = vld [vmem:[%s1 + $0x68] sm:$0xff]
    %v62 = vld [vmem:[%s1 + $0x70] sm:$0xff]
    %v63 = vld [vmem:[%s1 + $0x78] sm:$0xff]
    %v64 = vld [vmem:[%s1 + $0x80] sm:$0xff]
    %v65 = vld [vmem:[%s1 + $0x88] sm:$0xff]
    %v66 = vld [vmem:[%s1 + $0x90] sm:$0xff]
    %v67 = vld [vmem:[%s1 + $0x98] sm:$0xff]
    %v68 = vld [vmem:[%s1 + $0xa0] sm:$0xff]
    %v69 = vld [vmem:[%s1 + $0xa8] sm:$0xff]
    %v70 = vld [vmem:[%s1 + $0xb0] sm:$0xff]
    %v71 = vld [vmem:[%s1 + $0xb8] sm:$0xff]
    %v72 = vld [vmem:[%s1 + $0xc0] sm:$0xff]
    %v73 = vld [vmem:[%s1 + $0xc8] sm:$0xff]
    %v74 = vld [vmem:[%s1 + $0xd0] sm:$0xff]
    %v75 = vld [vmem:[%s1 + $0xd8] sm:$0xff]
    %v76 = vld [vmem:[%s1 + $0xe0] sm:$0xff]
    %v77 = vld [vmem:[%s1 + $0xe8] sm:$0xff]
    %v78 = vld [vmem:[%s1 + $0xf0] sm:$0xff]
    %v79 = vld [vmem:[%s1 + $0xf8] sm:$0xff]
    %v80 = vld [vmem:[%s1 + $0x100] sm:$0xff]
    %v81 = vld [vmem:[%s1 + $0x108] sm:$0xff]
    %v82 = vld [vmem:[%s1 + $0x110] sm:$0xff]
    %v83 = vld [vmem:[%s1 + $0x118] sm:$0xff]
    %v84 = vld [vmem:[%s1 + $0x120] sm:$0xff]
    %v85 = vld [vmem:[%s1 + $0x128] sm:$0xff]
    %v86 = vld [vmem:[%s1 + $0x130] sm:$0xff]
    %v87 = vld [vmem:[%s1 + $0x138] sm:$0xff]
    %v88 = vld [vmem:[%s1 + $0x140] sm:$0xff]
    %v89 = vld [vmem:[%s1 + $0x148] sm:$0xff]
    %v90 = vld [vmem:[%s1 + $0x150] sm:$0xff]
    %v91 = vld [vmem:[%s1 + $0x158] sm:$0xff]
    %v92 = vld [vmem:[%s1 + $0x160] sm:$0xff]
    %v93 = vld [vmem:[%s1 + $0x168] sm:$0xff]
    %v94 = vld [vmem:[%s1 + $0x170] sm:$0xff]
    %v95 = vld [vmem:[%s1 + $0x178] sm:$0xff]
    %v96 = vld [vmem:[%s1 + $0x180] sm:$0xff]
    %v97 = vld [vmem:[%s1 + $0x188] sm:$0xff]
    %v98 = vld [vmem:[%s1 + $0x190] sm:$0xff]
    %v99 = vld [vmem:[%s1 + $0x198] sm:$0xff]
    %v100 = vld [vmem:[%s1 + $0x1a0] sm:$0xff]
    %v101 = vld [vmem:[%s1 + $0x1a8] sm:$0xff]
    %v102 = vld [vmem:[%s1 + $0x1b0] sm:$0xff]
    %v103 = vld [vmem:[%s1 + $0x1b8] sm:$0xff]
    %v104 = vld [vmem:[%s1 + $0x1c0] sm:$0xff]
    %v105 = vld [vmem:[%s1 + $0x1c8] sm:$0xff]
    %v106 = vld [vmem:[%s1 + $0x1d0] sm:$0xff]
    %v107 = vld [vmem:[%s1 + $0x1d8] sm:$0xff]
    %v108 = vld [vmem:[%s1 + $0x1e0] sm:$0xff]
    %v109 = vld [vmem:[%s1 + $0x1e8] sm:$0xff]
    %v110 = vld [vmem:[%s1 + $0x1f0] sm:$0xff]
    %v111 = vld [vmem:[%s1 + $0x1f8] sm:$0xff]
    %v112 = vld [vmem:[%s1 + $0x200] sm:$0xff]
    %v113 = vld [vmem:[%s1 + $0x208] sm:$0xff]
    %v114 = vld [vmem:[%s1 + $0x210] sm:$0xff]
    %v115 = vld [vmem:[%s1 + $0x218] sm:$0xff]
    %v116 = vld [vmem:[%s1 + $0x220] sm:$0xff]
    %v117 = vld [vmem:[%s1 + $0x228] sm:$0xff]
    %v118 = vld [vmem:[%s1 + $0x230] sm:$0xff]
    %v119 = vld [vmem:[%s1 + $0x238] sm:$0xff]
    %v120 = vld [vmem:[%s1 + $0x240] sm:$0xff]
    %v121 = vld [vmem:[%s1 + $0x248] sm:$0xff]
    %v122 = vld [vmem:[%s1 + $0x250] sm:$0xff]
    %v123 = vld [vmem:[%s1 + $0x258] sm:$0xff]
    %v124 = vld [vmem:[%s1 + $0x260] sm:$0xff]
    %v125 = vld [vmem:[%s1 + $0x268] sm:$0xff]
    %v126 = vld [vmem:[%s1 + $0x270] sm:$0xff]
    %v127 = vld [vmem:[%s1 + $0x278] sm:$0xff]
    %v128 = vld [vmem:[%s1 + $0x280] sm:$0xff]
    %v129 = vld [vmem:[%s1 + $0x288] sm:$0xff]
    %v130 = vld [vmem:[%s1 + $0x290] sm:$0xff]
    %v131 = vld [vmem:[%s1 + $0x298] sm:$0xff]
    %v132 = vld [vmem:[%s1 + $0x2a0] sm:$0xff]
    %v133 = vld [vmem:[%s1 + $0x2a8] sm:$0xff]
    %v134 = vld [vmem:[%s1 + $0x2b0] sm:$0xff]
    %v135 = vld [vmem:[%s1 + $0x2b8] sm:$0xff]
    %v136 = vld [vmem:[%s1 + $0x2c0] sm:$0xff]
    %v137 = vld [vmem:[%s1 + $0x2c8] sm:$0xff]
    %v138 = vld [vmem:[%s1 + $0x2d0] sm:$0xff]
    %v139 = vld [vmem:[%s1 + $0x2d8] sm:$0xff]
    %v140 = vld [vmem:[%s1 + $0x2e0] sm:$0xff]
    %v141 = vld [vmem:[%s1 + $0x2e8] sm:$0xff]
    %v142 = vld [vmem:[%s1 + $0x2f0] sm:$0xff]
    %v143 = vld [vmem:[%s1 + $0x2f8] sm:$0xff]
    %v144 = vld [vmem:[%s1 + $0x300] sm:$0xff]
    %v145 = vld [vmem:[%s1 + $0x308] sm:$0xff]
    %v146 = vld [vmem:[%s1 + $0x310] sm:$0xff]
    %v147 = vld [vmem:[%s1 + $0x318] sm:$0xff]
    %v148 = vld [vmem:[%s1 + $0x320] sm:$0xff]
    %v149 = vld [vmem:[%s1 + $0x328] sm:$0xff]
    %v150 = vld [vmem:[%s1 + $0x330] sm:$0xff]
    %v151 = vld [vmem:[%s1 + $0x338] sm:$0xff]
    %v152 = vld [vmem:[%s1 + $0x340] sm:$0xff]
    %v153 = vld [vmem:[%s1 + $0x348] sm:$0xff]
    %v154 = vld [vmem:[%s1 + $0x350] sm:$0xff]
    %v155 = vld [vmem:[%s1 + $0x358] sm:$0xff]
    %v156 = vld [vmem:[%s1 + $0x360] sm:$0xff]
    %v157 = vld [vmem:[%s1 + $0x368] sm:$0xff]
    %v158 = vld [vmem:[%s1 + $0x370] sm:$0xff]
    %v159 = vld [vmem:[%s1 + $0x378] sm:$0xff]
    %v160 = vld [vmem:[%s1 + $0x380] sm:$0xff]
    %v161 = vld [vmem:[%s1 + $0x388] sm:$0xff]
    %v162 = vld [vmem:[%s1 + $0x390] sm:$0xff]
    %v163 = vld [vmem:[%s1 + $0x398] sm:$0xff]
    %v164 = vld [vmem:[%s1 + $0x3a0] sm:$0xff]
    %v165 = vld [vmem:[%s1 + $0x3a8] sm:$0xff]
    %v166 = vld [vmem:[%s1 + $0x3b0] sm:$0xff]
    %v167 = vld [vmem:[%s1 + $0x3b8] sm:$0xff]
    %v168 = vld [vmem:[%s1 + $0x3c0] sm:$0xff]
    %v169 = vld [vmem:[%s1 + $0x3c8] sm:$0xff]
    %v170 = vld [vmem:[%s1 + $0x3d0] sm:$0xff]
    %v171 = vld [vmem:[%s1 + $0x3d8] sm:$0xff]
    %v172 = vld [vmem:[%s1 + $0x3e0] sm:$0xff]
    %v173 = vld [vmem:[%s1 + $0x3e8] sm:$0xff]
    %v174 = vld [vmem:[%s1 + $0x3f0] sm:$0xff]
    %v175 = vld [vmem:[%s1 + $0x3f8] sm:$0xff]
    %v176 = vld [vmem:[%s1 + $0x400] sm:$0xff]
    %v177 = vld [vmem:[%s1 + $0x408] sm:$0xff]
    %v178 = vld [vmem:[%s1 + $0x410] sm:$0xff]
    %v179 = vld [vmem:[%s1 + $0x418] sm:$0xff]
    %v180 = vld [vmem:[%s1 + $0x420] sm:$0xff]
    %v181 = vld [vmem:[%s1 + $0x428] sm:$0xff]
    %v182 = vld [vmem:[%s1 + $0x430] sm:$0xff]
    %v183 = vld [vmem:[%s1 + $0x438] sm:$0xff]
    %v184 = vld [vmem:[%s1 + $0x440] sm:$0xff]
    %v185 = vld [vmem:[%s1 + $0x448] sm:$0xff]
    %v186 = vld [vmem:[%s1 + $0x450] sm:$0xff]
    %v187 = vld [vmem:[%s1 + $0x458] sm:$0xff]
    %v188 = vld [vmem:[%s1 + $0x460] sm:$0xff]
    %v189 = vld [vmem:[%s1 + $0x468] sm:$0xff]
    %v190 = vld [vmem:[%s1 + $0x470] sm:$0xff]
    %v191 = vld [vmem:[%s1 + $0x478] sm:$0xff]
    %v192 = vld [vmem:[%s1 + $0x480] sm:$0xff]
    %v193 = vld [vmem:[%s1 + $0x488] sm:$0xff]
    %v194 = vld [vmem:[%s1 + $0x490] sm:$0xff]
    %v195 = vld [vmem:[%s1 + $0x498] sm:$0xff]
    %v196 = vld [vmem:[%s1 + $0x4a0] sm:$0xff]
    %v197 = vld [vmem:[%s1 + $0x4a8] sm:$0xff]
    %v198 = vld [vmem:[%s1 + $0x4b0] sm:$0xff]
    %v199 = vld [vmem:[%s1 + $0x4b8] sm:$0xff]
    %v200 = vld [vmem:[%s1 + $0x4c0] sm:$0xff]
    %v201 = vld [vmem:[%s1 + $0x4c8] sm:$0xff]
    %v202 = vld [vmem:[%s1 + $0x4d0] sm:$0xff]
    %v203 = vld [vmem:[%s1 + $0x4d8] sm:$0xff]
    %v204 = vld [vmem:[%s1 + $0x4e0] sm:$0xff]
    %v205 = vld [vmem:[%s1 + $0x4e8] sm:$0xff]
    %v206 = vld [vmem:[%s1 + $0x4f0] sm:$0xff]
    %v207 = vld [vmem:[%s1 + $0x4f8] sm:$0xff]
    %v208 = vld [vmem:[%s1 + $0x500] sm:$0xff]
    %v209 = vld [vmem:[%s1 + $0x508] sm:$0xff]
    %v210 = vld [vmem:[%s1 + $0x510] sm:$0xff]
    %v211 = vld [vmem:[%s1 + $0x518] sm:$0xff]
    %v212 = vld [vmem:[%s1 + $0x520] sm:$0xff]
    %v213 = vld [vmem:[%s1 + $0x528] sm:$0xff]
    %v214 = vld [vmem:[%s1 + $0x530] sm:$0xff]
    %v215 = vld [vmem:[%s1 + $0x538] sm:$0xff]
    %v216 = vld [vmem:[%s1 + $0x540] sm:$0xff]
    %v217 = vld [vmem:[%s1 + $0x548] sm:$0xff]
    %v218 = vld [vmem:[%s1 + $0x550] sm:$0xff]
    %v219 = vld [vmem:[%s1 + $0x558] sm:$0xff]
    %v220 = vld [vmem:[%s1 + $0x560] sm:$0xff]
    %v221 = vld [vmem:[%s1 + $0x568] sm:$0xff]
    %v222 = vld [vmem:[%s1 + $0x570] sm:$0xff]
    %v223 = vld [vmem:[%s1 + $0x578] sm:$0xff]
    %v224 = vld [vmem:[%s1 + $0x580] sm:$0xff]
    %v225 = vld [vmem:[%s1 + $0x588] sm:$0xff]
    %v226 = vld [vmem:[%s1 + $0x590] sm:$0xff]
    %v227 = vld [vmem:[%s1 + $0x598] sm:$0xff]
    %v228 = vld [vmem:[%s1 + $0x5a0] sm:$0xff]
    %v229 = vld [vmem:[%s1 + $0x5a8] sm:$0xff]
    %v230 = vld [vmem:[%s1 + $0x5b0] sm:$0xff]
    %v231 = vld [vmem:[%s1 + $0x5b8] sm:$0xff]
    %v232 = vld [vmem:[%s1 + $0x5c0] sm:$0xff]
    %v233 = vld [vmem:[%s1 + $0x5c8] sm:$0xff]
    %v234 = vld [vmem:[%s1 + $0x5d0] sm:$0xff]
    %v235 = vld [vmem:[%s1 + $0x5d8] sm:$0xff]
    %v236 = vld [vmem:[%s1 + $0x5e0] sm:$0xff]
    %v237 = vld [vmem:[%s1 + $0x5e8] sm:$0xff]
    %v238 = vld [vmem:[%s1 + $0x5f0] sm:$0xff]
    %v239 = vld [vmem:[%s1 + $0x5f8] sm:$0xff]
    %v240 = vld [vmem:[%s1 + $0x600] sm:$0xff]
    %v241 = vld [vmem:[%s1 + $0x608] sm:$0xff]
    %v242 = vld [vmem:[%s1 + $0x610] sm:$0xff]
    %v243 = vld [vmem:[%s1 + $0x618] sm:$0xff]
    %v244 = vld [vmem:[%s2] sm:$0xf]
    %v246 = vlaneseq
    %v247 = vshrl.u32 %v246, 7
    %v248 = vsub.s32 0, %v247
    %v249 = vrot.slane %v244, %v248
    %v250 = vlaneseq
    %v251 = vshrl.u32 %v250, 7
    %v252 = vsub.s32 1, %v251
    %v253 = vrot.slane %v244, %v252
    %v254 = vlaneseq
    %v255 = vshrl.u32 %v254, 7
    %v256 = vsub.s32 2, %v255
    %v257 = vrot.slane %v244, %v256
    %v258 = vlaneseq
    %v259 = vshrl.u32 %v258, 7
    %v260 = vsub.s32 3, %v259
    %v261 = vrot.slane %v244, %v260
    %v462 = vunpack.c.l.b16 %v48
    %v463 = vunpack.c.h.b16 %v48
    %v464 = vunpack.c.l.b16 %v49
    %v465 = vunpack.c.h.b16 %v49
    %v466 = vunpack.c.l.b16 %v50
    %v467 = vunpack.c.h.b16 %v50
    %v468 = vunpack.c.l.b16 %v51
    %v469 = vunpack.c.h.b16 %v51
    %v470 = vunpack.c.l.b16 %v52
    %v471 = vunpack.c.h.b16 %v52
    %v472 = vunpack.c.l.b16 %v53
    %v473 = vunpack.c.h.b16 %v53
    %v474 = vunpack.c.l.b16 %v54
    %v475 = vunpack.c.h.b16 %v54
    %v476 = vunpack.c.l.b16 %v55
    %v477 = vunpack.c.h.b16 %v55
    %v478 = vunpack.c.l.b16 %v56
    %v479 = vunpack.c.h.b16 %v56
    %v480 = vunpack.c.l.b16 %v57
    %v481 = vunpack.c.h.b16 %v57
    %v482 = vunpack.c.l.b16 %v58
    %v483 = vunpack.c.h.b16 %v58
    %v484 = vunpack.c.l.b16 %v59
    %v485 = vunpack.c.h.b16 %v59
    %v486 = vunpack.c.l.b16 %v60
    %v487 = vunpack.c.h.b16 %v60
    %v488 = vunpack.c.l.b16 %v61
    %v489 = vunpack.c.h.b16 %v61
    %v490 = vunpack.c.l.b16 %v62
    %v491 = vunpack.c.h.b16 %v62
    %v492 = vunpack.c.l.b16 %v63
    %v493 = vunpack.c.h.b16 %v63
    %v494 = vunpack.c.l.b16 %v64
    %v495 = vunpack.c.h.b16 %v64
    %v496 = vunpack.c.l.b16 %v65
    %v497 = vunpack.c.h.b16 %v65
    %v498 = vunpack.c.l.b16 %v66
    %v499 = vunpack.c.h.b16 %v66
    %v500 = vunpack.c.l.b16 %v67
    %v501 = vunpack.c.h.b16 %v67
    %v502 = vunpack.c.l.b16 %v68
    %v503 = vunpack.c.h.b16 %v68
    %v504 = vunpack.c.l.b16 %v69
    %v505 = vunpack.c.h.b16 %v69
    %v506 = vunpack.c.l.b16 %v70
    %v507 = vunpack.c.h.b16 %v70
    %v508 = vunpack.c.l.b16 %v71
    %v509 = vunpack.c.h.b16 %v71
    %v510 = vunpack.c.l.b16 %v72
    %v511 = vunpack.c.h.b16 %v72
    %v512 = vunpack.c.l.b16 %v73
    %v513 = vunpack.c.h.b16 %v73
    %v514 = vunpack.c.l.b16 %v74
    %v515 = vunpack.c.h.b16 %v74
    %v516 = vunpack.c.l.b16 %v75
    %v517 = vunpack.c.h.b16 %v75
    %v518 = vunpack.c.l.b16 %v76
    %v519 = vunpack.c.h.b16 %v76
    %v520 = vunpack.c.l.b16 %v77
    %v521 = vunpack.c.h.b16 %v77
    %v522 = vunpack.c.l.b16 %v78
    %v523 = vunpack.c.h.b16 %v78
    %v524 = vunpack.c.l.b16 %v79
    %v525 = vunpack.c.h.b16 %v79
    %v526 = vunpack.c.l.b16 %v80
    %v527 = vunpack.c.h.b16 %v80
    %v528 = vunpack.c.l.b16 %v81
    %v529 = vunpack.c.h.b16 %v81
    %v530 = vunpack.c.l.b16 %v82
    %v531 = vunpack.c.h.b16 %v82
    %v532 = vunpack.c.l.b16 %v83
    %v533 = vunpack.c.h.b16 %v83
    %v534 = vunpack.c.l.b16 %v84
    %v535 = vunpack.c.h.b16 %v84
    %v536 = vunpack.c.l.b16 %v85
    %v537 = vunpack.c.h.b16 %v85
    %v538 = vunpack.c.l.b16 %v86
    %v539 = vunpack.c.h.b16 %v86
    %v540 = vunpack.c.l.b16 %v87
    %v541 = vunpack.c.h.b16 %v87
    %v542 = vunpack.c.l.b16 %v88
    %v543 = vunpack.c.h.b16 %v88
    %v544 = vunpack.c.l.b16 %v89
    %v545 = vunpack.c.h.b16 %v89
    %v546 = vunpack.c.l.b16 %v90
    %v547 = vunpack.c.h.b16 %v90
    %v548 = vunpack.c.l.b16 %v91
    %v549 = vunpack.c.h.b16 %v91
    %v550 = vunpack.c.l.b16 %v92
    %v551 = vunpack.c.h.b16 %v92
    %v552 = vunpack.c.l.b16 %v93
    %v553 = vunpack.c.h.b16 %v93
    %v554 = vunpack.c.l.b16 %v94
    %v555 = vunpack.c.h.b16 %v94
    %v556 = vunpack.c.l.b16 %v95
    %v557 = vunpack.c.h.b16 %v95
    %v558 = vunpack.c.l.b16 %v96
    %v559 = vunpack.c.h.b16 %v96
    %v560 = vunpack.c.l.b16 %v97
    %v561 = vunpack.c.h.b16 %v97
    %v562 = vunpack.c.l.b16 %v98
    %v563 = vunpack.c.h.b16 %v98
    %v564 = vunpack.c.l.b16 %v99
    %v565 = vunpack.c.h.b16 %v99
    %v566 = vunpack.c.l.b16 %v100
    %v567 = vunpack.c.h.b16 %v100
    %v568 = vunpack.c.l.b16 %v101
    %v569 = vunpack.c.h.b16 %v101
    %v570 = vunpack.c.l.b16 %v102
    %v571 = vunpack.c.h.b16 %v102
    %v572 = vunpack.c.l.b16 %v103
    %v573 = vunpack.c.h.b16 %v103
    %v574 = vunpack.c.l.b16 %v104
    %v575 = vunpack.c.h.b16 %v104
    %v576 = vunpack.c.l.b16 %v105
    %v577 = vunpack.c.h.b16 %v105
    %v578 = vunpack.c.l.b16 %v106
    %v579 = vunpack.c.h.b16 %v106
    %v580 = vunpack.c.l.b16 %v107
    %v581 = vunpack.c.h.b16 %v107
    %v582 = vunpack.c.l.b16 %v108
    %v583 = vunpack.c.h.b16 %v108
    %v584 = vunpack.c.l.b16 %v109
    %v585 = vunpack.c.h.b16 %v109
    %v586 = vunpack.c.l.b16 %v110
    %v587 = vunpack.c.h.b16 %v110
    %v588 = vunpack.c.l.b16 %v111
    %v589 = vunpack.c.h.b16 %v111
    %v590 = vunpack.c.l.b16 %v112
    %v591 = vunpack.c.h.b16 %v112
    %v592 = vunpack.c.l.b16 %v113
    %v593 = vunpack.c.h.b16 %v113
    %v594 = vunpack.c.l.b16 %v114
    %v595 = vunpack.c.h.b16 %v114
    %v596 = vunpack.c.l.b16 %v115
    %v597 = vunpack.c.h.b16 %v115
    %v598 = vunpack.c.l.b16 %v116
    %v599 = vunpack.c.h.b16 %v116
    %v600 = vunpack.c.l.b16 %v117
    %v601 = vunpack.c.h.b16 %v117
    %v602 = vunpack.c.l.b16 %v118
    %v603 = vunpack.c.h.b16 %v118
    %v604 = vunpack.c.l.b16 %v119
    %v605 = vunpack.c.h.b16 %v119
    %v606 = vunpack.c.l.b16 %v120
    %v607 = vunpack.c.h.b16 %v120
    %v608 = vunpack.c.l.b16 %v121
    %v609 = vunpack.c.h.b16 %v121
    %v610 = vunpack.c.l.b16 %v122
    %v611 = vunpack.c.h.b16 %v122
    %v612 = vunpack.c.l.b16 %v123
    %v613 = vunpack.c.h.b16 %v123
    %v614 = vunpack.c.l.b16 %v124
    %v615 = vunpack.c.h.b16 %v124
    %v616 = vunpack.c.l.b16 %v125
    %v617 = vunpack.c.h.b16 %v125
    %v618 = vunpack.c.l.b16 %v126
    %v619 = vunpack.c.h.b16 %v126
    %v620 = vunpack.c.l.b16 %v127
    %v621 = vunpack.c.h.b16 %v127
    %v622 = vunpack.c.l.b16 %v128
    %v623 = vunpack.c.h.b16 %v128
    %v624 = vunpack.c.l.b16 %v129
    %v625 = vunpack.c.h.b16 %v129
    %v626 = vunpack.c.l.b16 %v130
    %v627 = vunpack.c.h.b16 %v130
    %v628 = vunpack.c.l.b16 %v131
    %v629 = vunpack.c.h.b16 %v131
    %v630 = vunpack.c.l.b16 %v132
    %v631 = vunpack.c.h.b16 %v132
    %v632 = vunpack.c.l.b16 %v133
    %v633 = vunpack.c.h.b16 %v133
    %v634 = vunpack.c.l.b16 %v134
    %v635 = vunpack.c.h.b16 %v134
    %v636 = vunpack.c.l.b16 %v135
    %v637 = vunpack.c.h.b16 %v135
    %v638 = vunpack.c.l.b16 %v136
    %v639 = vunpack.c.h.b16 %v136
    %v640 = vunpack.c.l.b16 %v137
    %v641 = vunpack.c.h.b16 %v137
    %v642 = vunpack.c.l.b16 %v138
    %v643 = vunpack.c.h.b16 %v138
    %v644 = vunpack.c.l.b16 %v139
    %v645 = vunpack.c.h.b16 %v139
    %v646 = vunpack.c.l.b16 %v140
    %v647 = vunpack.c.h.b16 %v140
    %v648 = vunpack.c.l.b16 %v141
    %v649 = vunpack.c.h.b16 %v141
    %v650 = vunpack.c.l.b16 %v142
    %v651 = vunpack.c.h.b16 %v142
    %v652 = vunpack.c.l.b16 %v143
    %v653 = vunpack.c.h.b16 %v143
    %v654 = vunpack.c.l.b16 %v144
    %v655 = vunpack.c.h.b16 %v144
    %v656 = vunpack.c.l.b16 %v145
    %v657 = vunpack.c.h.b16 %v145
    %v658 = vunpack.c.l.b16 %v146
    %v659 = vunpack.c.h.b16 %v146
    %v660 = vunpack.c.l.b16 %v147
    %v661 = vunpack.c.h.b16 %v147
    %v662 = vunpack.c.l.b16 %v148
    %v663 = vunpack.c.h.b16 %v148
    %v664 = vunpack.c.l.b16 %v149
    %v665 = vunpack.c.h.b16 %v149
    %v666 = vunpack.c.l.b16 %v150
    %v667 = vunpack.c.h.b16 %v150
    %v668 = vunpack.c.l.b16 %v151
    %v669 = vunpack.c.h.b16 %v151
    %v670 = vunpack.c.l.b16 %v152
    %v671 = vunpack.c.h.b16 %v152
    %v672 = vunpack.c.l.b16 %v153
    %v673 = vunpack.c.h.b16 %v153
    %v674 = vunpack.c.l.b16 %v154
    %v675 = vunpack.c.h.b16 %v154
    %v676 = vunpack.c.l.b16 %v155
    %v677 = vunpack.c.h.b16 %v155
    %v678 = vunpack.c.l.b16 %v156
    %v679 = vunpack.c.h.b16 %v156
    %v680 = vunpack.c.l.b16 %v157
    %v681 = vunpack.c.h.b16 %v157
    %v682 = vunpack.c.l.b16 %v158
    %v683 = vunpack.c.h.b16 %v158
    %v684 = vunpack.c.l.b16 %v159
    %v685 = vunpack.c.h.b16 %v159
    %v686 = vunpack.c.l.b16 %v160
    %v687 = vunpack.c.h.b16 %v160
    %v688 = vunpack.c.l.b16 %v161
    %v689 = vunpack.c.h.b16 %v161
    %v690 = vunpack.c.l.b16 %v162
    %v691 = vunpack.c.h.b16 %v162
    %v692 = vunpack.c.l.b16 %v163
    %v693 = vunpack.c.h.b16 %v163
    %v694 = vunpack.c.l.b16 %v164
    %v695 = vunpack.c.h.b16 %v164
    %v696 = vunpack.c.l.b16 %v165
    %v697 = vunpack.c.h.b16 %v165
    %v698 = vunpack.c.l.b16 %v166
    %v699 = vunpack.c.h.b16 %v166
    %v700 = vunpack.c.l.b16 %v167
    %v701 = vunpack.c.h.b16 %v167
    %v702 = vunpack.c.l.b16 %v168
    %v703 = vunpack.c.h.b16 %v168
    %v704 = vunpack.c.l.b16 %v169
    %v705 = vunpack.c.h.b16 %v169
    %v706 = vunpack.c.l.b16 %v170
    %v707 = vunpack.c.h.b16 %v170
    %v708 = vunpack.c.l.b16 %v171
    %v709 = vunpack.c.h.b16 %v171
    %v710 = vunpack.c.l.b16 %v172
    %v711 = vunpack.c.h.b16 %v172
    %v712 = vunpack.c.l.b16 %v173
    %v713 = vunpack.c.h.b16 %v173
    %v714 = vunpack.c.l.b16 %v174
    %v715 = vunpack.c.h.b16 %v174
    %v716 = vunpack.c.l.b16 %v175
    %v717 = vunpack.c.h.b16 %v175
    %v718 = vunpack.c.l.b16 %v176
    %v719 = vunpack.c.h.b16 %v176
    %v720 = vunpack.c.l.b16 %v177
    %v721 = vunpack.c.h.b16 %v177
    %v722 = vunpack.c.l.b16 %v178
    %v723 = vunpack.c.h.b16 %v178
    %v724 = vunpack.c.l.b16 %v179
    %v725 = vunpack.c.h.b16 %v179
    %v726 = vunpack.c.l.b16 %v180
    %v727 = vunpack.c.h.b16 %v180
    %v728 = vunpack.c.l.b16 %v181
    %v729 = vunpack.c.h.b16 %v181
    %v730 = vunpack.c.l.b16 %v182
    %v731 = vunpack.c.h.b16 %v182
    %v732 = vunpack.c.l.b16 %v183
    %v733 = vunpack.c.h.b16 %v183
    %v734 = vunpack.c.l.b16 %v184
    %v735 = vunpack.c.h.b16 %v184
    %v736 = vunpack.c.l.b16 %v185
    %v737 = vunpack.c.h.b16 %v185
    %v738 = vunpack.c.l.b16 %v186
    %v739 = vunpack.c.h.b16 %v186
    %v740 = vunpack.c.l.b16 %v187
    %v741 = vunpack.c.h.b16 %v187
    %v742 = vunpack.c.l.b16 %v188
    %v743 = vunpack.c.h.b16 %v188
    %v744 = vunpack.c.l.b16 %v189
    %v745 = vunpack.c.h.b16 %v189
    %v746 = vunpack.c.l.b16 %v190
    %v747 = vunpack.c.h.b16 %v190
    %v748 = vunpack.c.l.b16 %v191
    %v749 = vunpack.c.h.b16 %v191
    %v750 = vunpack.c.l.b16 %v192
    %v751 = vunpack.c.h.b16 %v192
    %v752 = vunpack.c.l.b16 %v193
    %v753 = vunpack.c.h.b16 %v193
    %v754 = vunpack.c.l.b16 %v194
    %v755 = vunpack.c.h.b16 %v194
    %v756 = vunpack.c.l.b16 %v195
    %v757 = vunpack.c.h.b16 %v195
    %v758 = vunpack.c.l.b16 %v196
    %v759 = vunpack.c.h.b16 %v196
    %v760 = vunpack.c.l.b16 %v197
    %v761 = vunpack.c.h.b16 %v197
    %v762 = vunpack.c.l.b16 %v198
    %v763 = vunpack.c.h.b16 %v198
    %v764 = vunpack.c.l.b16 %v199
    %v765 = vunpack.c.h.b16 %v199
    %v766 = vunpack.c.l.b16 %v200
    %v767 = vunpack.c.h.b16 %v200
    %v768 = vunpack.c.l.b16 %v201
    %v769 = vunpack.c.h.b16 %v201
    %v770 = vunpack.c.l.b16 %v202
    %v771 = vunpack.c.h.b16 %v202
    %v772 = vunpack.c.l.b16 %v203
    %v773 = vunpack.c.h.b16 %v203
    %v774 = vunpack.c.l.b16 %v204
    %v775 = vunpack.c.h.b16 %v204
    %v776 = vunpack.c.l.b16 %v205
    %v777 = vunpack.c.h.b16 %v205
    %v778 = vunpack.c.l.b16 %v206
    %v779 = vunpack.c.h.b16 %v206
    %v780 = vunpack.c.l.b16 %v207
    %v781 = vunpack.c.h.b16 %v207
    %v782 = vunpack.c.l.b16 %v208
    %v783 = vunpack.c.h.b16 %v208
    %v784 = vunpack.c.l.b16 %v209
    %v785 = vunpack.c.h.b16 %v209
    %v786 = vunpack.c.l.b16 %v210
    %v787 = vunpack.c.h.b16 %v210
    %v788 = vunpack.c.l.b16 %v211
    %v789 = vunpack.c.h.b16 %v211
    %v790 = vunpack.c.l.b16 %v212
    %v791 = vunpack.c.h.b16 %v212
    %v792 = vunpack.c.l.b16 %v213
    %v793 = vunpack.c.h.b16 %v213
    %v794 = vunpack.c.l.b16 %v214
    %v795 = vunpack.c.h.b16 %v214
    %v796 = vunpack.c.l.b16 %v215
    %v797 = vunpack.c.h.b16 %v215
    %v798 = vunpack.c.l.b16 %v216
    %v799 = vunpack.c.h.b16 %v216
    %v800 = vunpack.c.l.b16 %v217
    %v801 = vunpack.c.h.b16 %v217
    %v802 = vunpack.c.l.b16 %v218
    %v803 = vunpack.c.h.b16 %v218
    %v804 = vunpack.c.l.b16 %v219
    %v805 = vunpack.c.h.b16 %v219
    %v806 = vunpack.c.l.b16 %v220
    %v807 = vunpack.c.h.b16 %v220
    %v808 = vunpack.c.l.b16 %v221
    %v809 = vunpack.c.h.b16 %v221
    %v810 = vunpack.c.l.b16 %v222
    %v811 = vunpack.c.h.b16 %v222
    %v812 = vunpack.c.l.b16 %v223
    %v813 = vunpack.c.h.b16 %v223
    %v814 = vunpack.c.l.b16 %v224
    %v815 = vunpack.c.h.b16 %v224
    %v816 = vunpack.c.l.b16 %v225
    %v817 = vunpack.c.h.b16 %v225
    %v818 = vunpack.c.l.b16 %v226
    %v819 = vunpack.c.h.b16 %v226
    %v820 = vunpack.c.l.b16 %v227
    %v821 = vunpack.c.h.b16 %v227
    %v822 = vunpack.c.l.b16 %v228
    %v823 = vunpack.c.h.b16 %v228
    %v824 = vunpack.c.l.b16 %v229
    %v825 = vunpack.c.h.b16 %v229
    %v826 = vunpack.c.l.b16 %v230
    %v827 = vunpack.c.h.b16 %v230
    %v828 = vunpack.c.l.b16 %v231
    %v829 = vunpack.c.h.b16 %v231
    %v830 = vunpack.c.l.b16 %v232
    %v831 = vunpack.c.h.b16 %v232
    %v832 = vunpack.c.l.b16 %v233
    %v833 = vunpack.c.h.b16 %v233
    %v834 = vunpack.c.l.b16 %v234
    %v835 = vunpack.c.h.b16 %v234
    %v836 = vunpack.c.l.b16 %v235
    %v837 = vunpack.c.h.b16 %v235
    %v838 = vunpack.c.l.b16 %v236
    %v839 = vunpack.c.h.b16 %v236
    %v840 = vunpack.c.l.b16 %v237
    %v841 = vunpack.c.h.b16 %v237
    %v842 = vunpack.c.l.b16 %v238
    %v843 = vunpack.c.h.b16 %v238
    %v844 = vunpack.c.l.b16 %v239
    %v845 = vunpack.c.h.b16 %v239
    %v846 = vunpack.c.l.b16 %v240
    %v847 = vunpack.c.h.b16 %v240
    %v848 = vunpack.c.l.b16 %v241
    %v849 = vunpack.c.h.b16 %v241
    %v850 = vunpack.c.l.b16 %v242
    %v851 = vunpack.c.h.b16 %v242
    %v852 = vunpack.c.l.b16 %v243
    %v853 = vunpack.c.h.b16 %v243
    %v854 = vpack.c.b16 %v466, %v462
    %v855 = vpack.c.b16 %v467, %v463
    %v856 = vpack.c.b16 %v468, %v464
    %v857 = vpack.c.b16 %v469, %v465
    %v858 = vpack.c.b16 %v474, %v470
    %v859 = vpack.c.b16 %v475, %v471
    %v860 = vpack.c.b16 %v476, %v472
    %v861 = vpack.c.b16 %v477, %v473
    %v862 = vpack.c.b16 %v482, %v478
    %v863 = vpack.c.b16 %v483, %v479
    %v864 = vpack.c.b16 %v484, %v480
    %v865 = vpack.c.b16 %v485, %v481
    %v866 = vpack.c.b16 %v490, %v486
    %v867 = vpack.c.b16 %v491, %v487
    %v868 = vpack.c.b16 %v492, %v488
    %v869 = vpack.c.b16 %v493, %v489
    %v870 = vpack.c.b16 %v498, %v494
    %v871 = vpack.c.b16 %v499, %v495
    %v872 = vpack.c.b16 %v500, %v496
    %v873 = vpack.c.b16 %v501, %v497
    %v874 = vpack.c.b16 %v506, %v502
    %v875 = vpack.c.b16 %v507, %v503
    %v876 = vpack.c.b16 %v508, %v504
    %v877 = vpack.c.b16 %v509, %v505
    %v878 = vpack.c.b16 %v514, %v510
    %v879 = vpack.c.b16 %v515, %v511
    %v880 = vpack.c.b16 %v516, %v512
    %v881 = vpack.c.b16 %v517, %v513
    %v882 = vpack.c.b16 %v522, %v518
    %v883 = vpack.c.b16 %v523, %v519
    %v884 = vpack.c.b16 %v524, %v520
    %v885 = vpack.c.b16 %v525, %v521
    %v886 = vpack.c.b16 %v530, %v526
    %v887 = vpack.c.b16 %v531, %v527
    %v888 = vpack.c.b16 %v532, %v528
    %v889 = vpack.c.b16 %v533, %v529
    %v890 = vpack.c.b16 %v538, %v534
    %v891 = vpack.c.b16 %v539, %v535
    %v892 = vpack.c.b16 %v540, %v536
    %v893 = vpack.c.b16 %v541, %v537
    %v894 = vpack.c.b16 %v546, %v542
    %v895 = vpack.c.b16 %v547, %v543
    %v896 = vpack.c.b16 %v548, %v544
    %v897 = vpack.c.b16 %v549, %v545
    %v898 = vpack.c.b16 %v554, %v550
    %v899 = vpack.c.b16 %v555, %v551
    %v900 = vpack.c.b16 %v556, %v552
    %v901 = vpack.c.b16 %v557, %v553
    %v902 = vpack.c.b16 %v562, %v558
    %v903 = vpack.c.b16 %v563, %v559
    %v904 = vpack.c.b16 %v564, %v560
    %v905 = vpack.c.b16 %v565, %v561
    %v906 = vpack.c.b16 %v570, %v566
    %v907 = vpack.c.b16 %v571, %v567
    %v908 = vpack.c.b16 %v572, %v568
    %v909 = vpack.c.b16 %v573, %v569
    %v910 = vpack.c.b16 %v578, %v574
    %v911 = vpack.c.b16 %v579, %v575
    %v912 = vpack.c.b16 %v580, %v576
    %v913 = vpack.c.b16 %v581, %v577
    %v914 = vpack.c.b16 %v586, %v582
    %v915 = vpack.c.b16 %v587, %v583
    %v916 = vpack.c.b16 %v588, %v584
    %v917 = vpack.c.b16 %v589, %v585
    %v918 = vpack.c.b16 %v594, %v590
    %v919 = vpack.c.b16 %v595, %v591
    %v920 = vpack.c.b16 %v596, %v592
    %v921 = vpack.c.b16 %v597, %v593
    %v922 = vpack.c.b16 %v602, %v598
    %v923 = vpack.c.b16 %v603, %v599
    %v924 = vpack.c.b16 %v604, %v600
    %v925 = vpack.c.b16 %v605, %v601
    %v926 = vpack.c.b16 %v610, %v606
    %v927 = vpack.c.b16 %v611, %v607
    %v928 = vpack.c.b16 %v612, %v608
    %v929 = vpack.c.b16 %v613, %v609
    %v930 = vpack.c.b16 %v618, %v614
    %v931 = vpack.c.b16 %v619, %v615
    %v932 = vpack.c.b16 %v620, %v616
    %v933 = vpack.c.b16 %v621, %v617
    %v934 = vpack.c.b16 %v626, %v622
    %v935 = vpack.c.b16 %v627, %v623
    %v936 = vpack.c.b16 %v628, %v624
    %v937 = vpack.c.b16 %v629, %v625
    %v938 = vpack.c.b16 %v634, %v630
    %v939 = vpack.c.b16 %v635, %v631
    %v940 = vpack.c.b16 %v636, %v632
    %v941 = vpack.c.b16 %v637, %v633
    %v942 = vpack.c.b16 %v642, %v638
    %v943 = vpack.c.b16 %v643, %v639
    %v944 = vpack.c.b16 %v644, %v640
    %v945 = vpack.c.b16 %v645, %v641
    %v946 = vpack.c.b16 %v650, %v646
    %v947 = vpack.c.b16 %v651, %v647
    %v948 = vpack.c.b16 %v652, %v648
    %v949 = vpack.c.b16 %v653, %v649
    %v950 = vpack.c.b16 %v658, %v654
    %v951 = vpack.c.b16 %v659, %v655
    %v952 = vpack.c.b16 %v660, %v656
    %v953 = vpack.c.b16 %v661, %v657
    %v954 = vpack.c.b16 %v666, %v662
    %v955 = vpack.c.b16 %v667, %v663
    %v956 = vpack.c.b16 %v668, %v664
    %v957 = vpack.c.b16 %v669, %v665
    %v958 = vpack.c.b16 %v674, %v670
    %v959 = vpack.c.b16 %v675, %v671
    %v960 = vpack.c.b16 %v676, %v672
    %v961 = vpack.c.b16 %v677, %v673
    %v962 = vpack.c.b16 %v682, %v678
    %v963 = vpack.c.b16 %v683, %v679
    %v964 = vpack.c.b16 %v684, %v680
    %v965 = vpack.c.b16 %v685, %v681
    %v966 = vpack.c.b16 %v690, %v686
    %v967 = vpack.c.b16 %v691, %v687
    %v968 = vpack.c.b16 %v692, %v688
    %v969 = vpack.c.b16 %v693, %v689
    %v970 = vpack.c.b16 %v698, %v694
    %v971 = vpack.c.b16 %v699, %v695
    %v972 = vpack.c.b16 %v700, %v696
    %v973 = vpack.c.b16 %v701, %v697
    %v974 = vpack.c.b16 %v706, %v702
    %v975 = vpack.c.b16 %v707, %v703
    %v976 = vpack.c.b16 %v708, %v704
    %v977 = vpack.c.b16 %v709, %v705
    %v978 = vpack.c.b16 %v714, %v710
    %v979 = vpack.c.b16 %v715, %v711
    %v980 = vpack.c.b16 %v716, %v712
    %v981 = vpack.c.b16 %v717, %v713
    %v982 = vpack.c.b16 %v722, %v718
    %v983 = vpack.c.b16 %v723, %v719
    %v984 = vpack.c.b16 %v724, %v720
    %v985 = vpack.c.b16 %v725, %v721
    %v986 = vpack.c.b16 %v730, %v726
    %v987 = vpack.c.b16 %v731, %v727
    %v988 = vpack.c.b16 %v732, %v728
    %v989 = vpack.c.b16 %v733, %v729
    %v990 = vpack.c.b16 %v738, %v734
    %v991 = vpack.c.b16 %v739, %v735
    %v992 = vpack.c.b16 %v740, %v736
    %v993 = vpack.c.b16 %v741, %v737
    %v994 = vpack.c.b16 %v746, %v742
    %v995 = vpack.c.b16 %v747, %v743
    %v996 = vpack.c.b16 %v748, %v744
    %v997 = vpack.c.b16 %v749, %v745
    %v998 = vpack.c.b16 %v754, %v750
    %v999 = vpack.c.b16 %v755, %v751
    %v1000 = vpack.c.b16 %v756, %v752
    %v1001 = vpack.c.b16 %v757, %v753
    %v1002 = vpack.c.b16 %v762, %v758
    %v1003 = vpack.c.b16 %v763, %v759
    %v1004 = vpack.c.b16 %v764, %v760
    %v1005 = vpack.c.b16 %v765, %v761
    %v1006 = vpack.c.b16 %v770, %v766
    %v1007 = vpack.c.b16 %v771, %v767
    %v1008 = vpack.c.b16 %v772, %v768
    %v1009 = vpack.c.b16 %v773, %v769
    %v1010 = vpack.c.b16 %v778, %v774
    %v1011 = vpack.c.b16 %v779, %v775
    %v1012 = vpack.c.b16 %v780, %v776
    %v1013 = vpack.c.b16 %v781, %v777
    %v1014 = vpack.c.b16 %v786, %v782
    %v1015 = vpack.c.b16 %v787, %v783
    %v1016 = vpack.c.b16 %v788, %v784
    %v1017 = vpack.c.b16 %v789, %v785
    %v1018 = vpack.c.b16 %v794, %v790
    %v1019 = vpack.c.b16 %v795, %v791
    %v1020 = vpack.c.b16 %v796, %v792
    %v1021 = vpack.c.b16 %v797, %v793
    %v1022 = vpack.c.b16 %v802, %v798
    %v1023 = vpack.c.b16 %v803, %v799
    %v1024 = vpack.c.b16 %v804, %v800
    %v1025 = vpack.c.b16 %v805, %v801
    %v1026 = vpack.c.b16 %v810, %v806
    %v1027 = vpack.c.b16 %v811, %v807
    %v1028 = vpack.c.b16 %v812, %v808
    %v1029 = vpack.c.b16 %v813, %v809
    %v1030 = vpack.c.b16 %v818, %v814
    %v1031 = vpack.c.b16 %v819, %v815
    %v1032 = vpack.c.b16 %v820, %v816
    %v1033 = vpack.c.b16 %v821, %v817
    %v1034 = vpack.c.b16 %v826, %v822
    %v1035 = vpack.c.b16 %v827, %v823
    %v1036 = vpack.c.b16 %v828, %v824
    %v1037 = vpack.c.b16 %v829, %v825
    %v1038 = vpack.c.b16 %v834, %v830
    %v1039 = vpack.c.b16 %v835, %v831
    %v1040 = vpack.c.b16 %v836, %v832
    %v1041 = vpack.c.b16 %v837, %v833
    %v1042 = vpack.c.b16 %v842, %v838
    %v1043 = vpack.c.b16 %v843, %v839
    %v1044 = vpack.c.b16 %v844, %v840
    %v1045 = vpack.c.b16 %v845, %v841
    %v1046 = vpack.c.b16 %v850, %v846
    %v1047 = vpack.c.b16 %v851, %v847
    %v1048 = vpack.c.b16 %v852, %v848
    %v1049 = vpack.c.b16 %v853, %v849
    %vm1246 = vcmask 130048
    %v1248 = vsel %vm1246, %v47, 0
    %1250 = vmatprep.subr.bf16.mxu0 %v883
    %1251 = vmatpush1.bf16.msra.mxu0 %v882
    %1252 = vmatprep.subr.bf16.mxu0 %v879
    %1253 = vmatpush1.bf16.msra.mxu0 %v878
    %1254 = vmatprep.subr.bf16.mxu0 %v875
    %1255 = vmatpush1.bf16.msra.mxu0 %v874
    %1256 = vmatprep.subr.bf16.mxu0 %v871
    %1257 = vmatpush1.bf16.msra.mxu0 %v870
    %1258 = vmatprep.subr.bf16.mxu0 %v867
    %1259 = vmatpush1.bf16.msra.mxu0 %v866
    %1260 = vmatprep.subr.bf16.mxu0 %v863
    %1261 = vmatpush1.bf16.msra.mxu0 %v862
    %1262 = vmatprep.subr.bf16.mxu0 %v859
    %1263 = vmatpush1.bf16.msra.mxu0 %v858
    %1264 = vmatprep.subr.bf16.mxu0 %v855
    %1265 = vmatpush1.bf16.msra.mxu0 %v854
    %1266 = vmatprep.subr.bf16.mxu0 %v915
    %1267 = vmatpush2.bf16.msra.mxu0 %v914
    %1268 = vmatprep.subr.bf16.mxu0 %v911
    %1269 = vmatpush2.bf16.msra.mxu0 %v910
    %1270 = vmatprep.subr.bf16.mxu0 %v907
    %1271 = vmatpush2.bf16.msra.mxu0 %v906
    %1272 = vmatprep.subr.bf16.mxu0 %v903
    %1273 = vmatpush2.bf16.msra.mxu0 %v902
    %1274 = vmatprep.subr.bf16.mxu0 %v899
    %1275 = vmatpush2.bf16.msra.mxu0 %v898
    %1276 = vmatprep.subr.bf16.mxu0 %v895
    %1277 = vmatpush2.bf16.msra.mxu0 %v894
    %1278 = vmatprep.subr.bf16.mxu0 %v891
    %1279 = vmatpush2.bf16.msra.mxu0 %v890
    %1280 = vmatprep.subr.bf16.mxu0 %v887
    %1281 = vmatpush2.bf16.msra.mxu0 %v886
    %1282 = vmatprep.mubr.bf16.mxu0 %v42
    %1283 = vmatmul.mubr.bf16.gmra.mxu0 %v41
    %v1284 = vpop.f32.mrf.mxu0
    %v1285 = vadd.f32 %v249, %v1284
    %v1286 = vpop.f32.mrf.mxu0
    %v1287 = vadd.f32 %v253, %v1286
    %v1288 = vpop.f32.mrf.mxu0
    %v1289 = vpop.f32.mrf.mxu0
    %1290 = vdwg.mxu0
    %1291 = vmatprep.subr.bf16.mxu0 %v947
    %1292 = vmatpush1.bf16.msra.mxu0 %v946
    %1293 = vmatprep.subr.bf16.mxu0 %v943
    %1294 = vmatpush1.bf16.msra.mxu0 %v942
    %1295 = vmatprep.subr.bf16.mxu0 %v939
    %1296 = vmatpush1.bf16.msra.mxu0 %v938
    %1297 = vmatprep.subr.bf16.mxu0 %v935
    %1298 = vmatpush1.bf16.msra.mxu0 %v934
    %1299 = vmatprep.subr.bf16.mxu0 %v931
    %1300 = vmatpush1.bf16.msra.mxu0 %v930
    %1301 = vmatprep.subr.bf16.mxu0 %v927
    %1302 = vmatpush1.bf16.msra.mxu0 %v926
    %1303 = vmatprep.subr.bf16.mxu0 %v923
    %1304 = vmatpush1.bf16.msra.mxu0 %v922
    %1305 = vmatprep.subr.bf16.mxu0 %v919
    %1306 = vmatpush1.bf16.msra.mxu0 %v918
    %1307 = vmatprep.subr.bf16.mxu0 %v979
    %1308 = vmatpush2.bf16.msra.mxu0 %v978
    %1309 = vmatprep.subr.bf16.mxu0 %v975
    %1310 = vmatpush2.bf16.msra.mxu0 %v974
    %1311 = vmatprep.subr.bf16.mxu0 %v971
    %1312 = vmatpush2.bf16.msra.mxu0 %v970
    %1313 = vmatprep.subr.bf16.mxu0 %v967
    %1314 = vmatpush2.bf16.msra.mxu0 %v966
    %1315 = vmatprep.subr.bf16.mxu0 %v963
    %1316 = vmatpush2.bf16.msra.mxu0 %v962
    %1317 = vmatprep.subr.bf16.mxu0 %v959
    %1318 = vmatpush2.bf16.msra.mxu0 %v958
    %1319 = vmatprep.subr.bf16.mxu0 %v955
    %1320 = vmatpush2.bf16.msra.mxu0 %v954
    %1321 = vmatprep.subr.bf16.mxu0 %v951
    %1322 = vmatpush2.bf16.msra.mxu0 %v950
    %1323 = vmatprep.mubr.bf16.mxu0 %v44
    %1324 = vmatmul.mubr.bf16.gmra.mxu0 %v43
    %v1325 = vpop.f32.mrf.mxu0
    %v1326 = vadd.f32 %v1285, %v1325
    %v1327 = vpop.f32.mrf.mxu0
    %v1328 = vadd.f32 %v1287, %v1327
    %v1329 = vpop.f32.mrf.mxu0
    %v1330 = vpop.f32.mrf.mxu0
    %1331 = vdwg.mxu0
    %1332 = vmatprep.subr.bf16.mxu0 %v1011
    %1333 = vmatpush1.bf16.msra.mxu0 %v1010
    %1334 = vmatprep.subr.bf16.mxu0 %v1007
    %1335 = vmatpush1.bf16.msra.mxu0 %v1006
    %1336 = vmatprep.subr.bf16.mxu0 %v1003
    %1337 = vmatpush1.bf16.msra.mxu0 %v1002
    %1338 = vmatprep.subr.bf16.mxu0 %v999
    %1339 = vmatpush1.bf16.msra.mxu0 %v998
    %1340 = vmatprep.subr.bf16.mxu0 %v995
    %1341 = vmatpush1.bf16.msra.mxu0 %v994
    %1342 = vmatprep.subr.bf16.mxu0 %v991
    %1343 = vmatpush1.bf16.msra.mxu0 %v990
    %1344 = vmatprep.subr.bf16.mxu0 %v987
    %1345 = vmatpush1.bf16.msra.mxu0 %v986
    %1346 = vmatprep.subr.bf16.mxu0 %v983
    %1347 = vmatpush1.bf16.msra.mxu0 %v982
    %1348 = vmatprep.subr.bf16.mxu0 %v1043
    %1349 = vmatpush2.bf16.msra.mxu0 %v1042
    %1350 = vmatprep.subr.bf16.mxu0 %v1039
    %1351 = vmatpush2.bf16.msra.mxu0 %v1038
    %1352 = vmatprep.subr.bf16.mxu0 %v1035
    %1353 = vmatpush2.bf16.msra.mxu0 %v1034
    %1354 = vmatprep.subr.bf16.mxu0 %v1031
    %1355 = vmatpush2.bf16.msra.mxu0 %v1030
    %1356 = vmatprep.subr.bf16.mxu0 %v1027
    %1357 = vmatpush2.bf16.msra.mxu0 %v1026
    %1358 = vmatprep.subr.bf16.mxu0 %v1023
    %1359 = vmatpush2.bf16.msra.mxu0 %v1022
    %1360 = vmatprep.subr.bf16.mxu0 %v1019
    %1361 = vmatpush2.bf16.msra.mxu0 %v1018
    %1362 = vmatprep.subr.bf16.mxu0 %v1015
    %1363 = vmatpush2.bf16.msra.mxu0 %v1014
    %1364 = vmatprep.mubr.bf16.mxu0 %v46
    %1365 = vmatmul.mubr.bf16.gmra.mxu0 %v45
    %v1366 = vpop.f32.mrf.mxu0
    %v1367 = vadd.f32 %v1326, %v1366
    %v1368 = vpop.f32.mrf.mxu0
    %v1369 = vadd.f32 %v1328, %v1368
    %v1370 = vpop.f32.mrf.mxu0
    %v1371 = vpop.f32.mrf.mxu0
    %1372 = vdwg.mxu0
    %1373 = vmatprep.subr.bf16.mxu0 0
    %1374 = vmatpush1.bf16.msra.mxu0 0
    %1375 = vmatprep.subr.bf16.mxu0 0
    %1376 = vmatpush1.bf16.msra.mxu0 0
    %1377 = vmatprep.subr.bf16.mxu0 0
    %1378 = vmatpush1.bf16.msra.mxu0 0
    %1379 = vmatprep.subr.bf16.mxu0 0
    %1380 = vmatpush1.bf16.msra.mxu0 0
    %1381 = vmatprep.subr.bf16.mxu0 0
    %1382 = vmatpush1.bf16.msra.mxu0 0
    %1383 = vmatprep.subr.bf16.mxu0 0
    %1384 = vmatpush1.bf16.msra.mxu0 0
    %1385 = vmatprep.subr.bf16.mxu0 0
    %1386 = vmatpush1.bf16.msra.mxu0 0
    %1387 = vmatprep.subr.bf16.mxu0 %v1047
    %1388 = vmatpush1.bf16.msra.mxu0 %v1046
    %1389 = vmatprep.subr.bf16.mxu0 0
    %1390 = vmatpush2.bf16.msra.mxu0 0
    %1391 = vmatprep.subr.bf16.mxu0 0
    %1392 = vmatpush2.bf16.msra.mxu0 0
    %1393 = vmatprep.subr.bf16.mxu0 0
    %1394 = vmatpush2.bf16.msra.mxu0 0
    %1395 = vmatprep.subr.bf16.mxu0 0
    %1396 = vmatpush2.bf16.msra.mxu0 0
    %1397 = vmatprep.subr.bf16.mxu0 0
    %1398 = vmatpush2.bf16.msra.mxu0 0
    %1399 = vmatprep.subr.bf16.mxu0 0
    %1400 = vmatpush2.bf16.msra.mxu0 0
    %1401 = vmatprep.subr.bf16.mxu0 0
    %1402 = vmatpush2.bf16.msra.mxu0 0
    %1403 = vmatprep.subr.bf16.mxu0 0
    %1404 = vmatpush2.bf16.msra.mxu0 0
    %1405 = vmatprep.mubr.bf16.mxu0 0
    %1406 = vmatmul.mubr.bf16.gmra.mxu0 %v1248
    %v1407 = vpop.f32.mrf.mxu0
    %v1408 = vadd.f32 %v1367, %v1407
    %v1409 = vpop.f32.mrf.mxu0
    %v1410 = vadd.f32 %v1369, %v1409
    %v1411 = vpop.f32.mrf.mxu0
    %v1412 = vpop.f32.mrf.mxu0
    %1413 = vdwg.mxu0
    %1414 = vmatprep.subr.bf16.mxu0 %v885
    %1415 = vmatpush1.bf16.msra.mxu0 %v884
    %1416 = vmatprep.subr.bf16.mxu0 %v881
    %1417 = vmatpush1.bf16.msra.mxu0 %v880
    %1418 = vmatprep.subr.bf16.mxu0 %v877
    %1419 = vmatpush1.bf16.msra.mxu0 %v876
    %1420 = vmatprep.subr.bf16.mxu0 %v873
    %1421 = vmatpush1.bf16.msra.mxu0 %v872
    %1422 = vmatprep.subr.bf16.mxu0 %v869
    %1423 = vmatpush1.bf16.msra.mxu0 %v868
    %1424 = vmatprep.subr.bf16.mxu0 %v865
    %1425 = vmatpush1.bf16.msra.mxu0 %v864
    %1426 = vmatprep.subr.bf16.mxu0 %v861
    %1427 = vmatpush1.bf16.msra.mxu0 %v860
    %1428 = vmatprep.subr.bf16.mxu0 %v857
    %1429 = vmatpush1.bf16.msra.mxu0 %v856
    %1430 = vmatprep.subr.bf16.mxu0 %v917
    %1431 = vmatpush2.bf16.msra.mxu0 %v916
    %1432 = vmatprep.subr.bf16.mxu0 %v913
    %1433 = vmatpush2.bf16.msra.mxu0 %v912
    %1434 = vmatprep.subr.bf16.mxu0 %v909
    %1435 = vmatpush2.bf16.msra.mxu0 %v908
    %1436 = vmatprep.subr.bf16.mxu0 %v905
    %1437 = vmatpush2.bf16.msra.mxu0 %v904
    %1438 = vmatprep.subr.bf16.mxu0 %v901
    %1439 = vmatpush2.bf16.msra.mxu0 %v900
    %1440 = vmatprep.subr.bf16.mxu0 %v897
    %1441 = vmatpush2.bf16.msra.mxu0 %v896
    %1442 = vmatprep.subr.bf16.mxu0 %v893
    %1443 = vmatpush2.bf16.msra.mxu0 %v892
    %1444 = vmatprep.subr.bf16.mxu0 %v889
    %1445 = vmatpush2.bf16.msra.mxu0 %v888
    %1446 = vmatprep.mubr.bf16.mxu0 %v42
    %1447 = vmatmul.mubr.bf16.gmra.mxu0 %v41
    %v1448 = vpop.f32.mrf.mxu0
    %v1449 = vadd.f32 %v257, %v1448
    %v1450 = vpop.f32.mrf.mxu0
    %v1451 = vadd.f32 %v261, %v1450
    %v1452 = vpop.f32.mrf.mxu0
    %v1453 = vpop.f32.mrf.mxu0
    %1454 = vdwg.mxu0
    %1455 = vmatprep.subr.bf16.mxu0 %v949
    %1456 = vmatpush1.bf16.msra.mxu0 %v948
    %1457 = vmatprep.subr.bf16.mxu0 %v945
    %1458 = vmatpush1.bf16.msra.mxu0 %v944
    %1459 = vmatprep.subr.bf16.mxu0 %v941
    %1460 = vmatpush1.bf16.msra.mxu0 %v940
    %1461 = vmatprep.subr.bf16.mxu0 %v937
    %1462 = vmatpush1.bf16.msra.mxu0 %v936
    %1463 = vmatprep.subr.bf16.mxu0 %v933
    %1464 = vmatpush1.bf16.msra.mxu0 %v932
    %1465 = vmatprep.subr.bf16.mxu0 %v929
    %1466 = vmatpush1.bf16.msra.mxu0 %v928
    %1467 = vmatprep.subr.bf16.mxu0 %v925
    %1468 = vmatpush1.bf16.msra.mxu0 %v924
    %1469 = vmatprep.subr.bf16.mxu0 %v921
    %1470 = vmatpush1.bf16.msra.mxu0 %v920
    %1471 = vmatprep.subr.bf16.mxu0 %v981
    %1472 = vmatpush2.bf16.msra.mxu0 %v980
    %1473 = vmatprep.subr.bf16.mxu0 %v977
    %1474 = vmatpush2.bf16.msra.mxu0 %v976
    %1475 = vmatprep.subr.bf16.mxu0 %v973
    %1476 = vmatpush2.bf16.msra.mxu0 %v972
    %1477 = vmatprep.subr.bf16.mxu0 %v969
    %1478 = vmatpush2.bf16.msra.mxu0 %v968
    %1479 = vmatprep.subr.bf16.mxu0 %v965
    %1480 = vmatpush2.bf16.msra.mxu0 %v964
    %1481 = vmatprep.subr.bf16.mxu0 %v961
    %1482 = vmatpush2.bf16.msra.mxu0 %v960
    %1483 = vmatprep.subr.bf16.mxu0 %v957
    %1484 = vmatpush2.bf16.msra.mxu0 %v956
    %1485 = vmatprep.subr.bf16.mxu0 %v953
    %1486 = vmatpush2.bf16.msra.mxu0 %v952
    %1487 = vmatprep.mubr.bf16.mxu0 %v44
    %1488 = vmatmul.mubr.bf16.gmra.mxu0 %v43
    %v1489 = vpop.f32.mrf.mxu0
    %v1490 = vadd.f32 %v1449, %v1489
    %v1491 = vpop.f32.mrf.mxu0
    %v1492 = vadd.f32 %v1451, %v1491
    %v1493 = vpop.f32.mrf.mxu0
    %v1494 = vpop.f32.mrf.mxu0
    %1495 = vdwg.mxu0
    %1496 = vmatprep.subr.bf16.mxu0 %v1013
    %1497 = vmatpush1.bf16.msra.mxu0 %v1012
    %1498 = vmatprep.subr.bf16.mxu0 %v1009
    %1499 = vmatpush1.bf16.msra.mxu0 %v1008
    %1500 = vmatprep.subr.bf16.mxu0 %v1005
    %1501 = vmatpush1.bf16.msra.mxu0 %v1004
    %1502 = vmatprep.subr.bf16.mxu0 %v1001
    %1503 = vmatpush1.bf16.msra.mxu0 %v1000
    %1504 = vmatprep.subr.bf16.mxu0 %v997
    %1505 = vmatpush1.bf16.msra.mxu0 %v996
    %1506 = vmatprep.subr.bf16.mxu0 %v993
    %1507 = vmatpush1.bf16.msra.mxu0 %v992
    %1508 = vmatprep.subr.bf16.mxu0 %v989
    %1509 = vmatpush1.bf16.msra.mxu0 %v988
    %1510 = vmatprep.subr.bf16.mxu0 %v985
    %1511 = vmatpush1.bf16.msra.mxu0 %v984
    %1512 = vmatprep.subr.bf16.mxu0 %v1045
    %1513 = vmatpush2.bf16.msra.mxu0 %v1044
    %1514 = vmatprep.subr.bf16.mxu0 %v1041
    %1515 = vmatpush2.bf16.msra.mxu0 %v1040
    %1516 = vmatprep.subr.bf16.mxu0 %v1037
    %1517 = vmatpush2.bf16.msra.mxu0 %v1036
    %1518 = vmatprep.subr.bf16.mxu0 %v1033
    %1519 = vmatpush2.bf16.msra.mxu0 %v1032
    %1520 = vmatprep.subr.bf16.mxu0 %v1029
    %1521 = vmatpush2.bf16.msra.mxu0 %v1028
    %1522 = vmatprep.subr.bf16.mxu0 %v1025
    %1523 = vmatpush2.bf16.msra.mxu0 %v1024
    %1524 = vmatprep.subr.bf16.mxu0 %v1021
    %1525 = vmatpush2.bf16.msra.mxu0 %v1020
    %1526 = vmatprep.subr.bf16.mxu0 %v1017
    %1527 = vmatpush2.bf16.msra.mxu0 %v1016
    %1528 = vmatprep.mubr.bf16.mxu0 %v46
    %1529 = vmatmul.mubr.bf16.gmra.mxu0 %v45
    %v1530 = vpop.f32.mrf.mxu0
    %v1531 = vadd.f32 %v1490, %v1530
    %v1532 = vpop.f32.mrf.mxu0
    %v1533 = vadd.f32 %v1492, %v1532
    %v1534 = vpop.f32.mrf.mxu0
    %v1535 = vpop.f32.mrf.mxu0
    %1536 = vdwg.mxu0
    %1537 = vmatprep.subr.bf16.mxu0 0
    %1538 = vmatpush1.bf16.msra.mxu0 0
    %1539 = vmatprep.subr.bf16.mxu0 0
    %1540 = vmatpush1.bf16.msra.mxu0 0
    %1541 = vmatprep.subr.bf16.mxu0 0
    %1542 = vmatpush1.bf16.msra.mxu0 0
    %1543 = vmatprep.subr.bf16.mxu0 0
    %1544 = vmatpush1.bf16.msra.mxu0 0
    %1545 = vmatprep.subr.bf16.mxu0 0
    %1546 = vmatpush1.bf16.msra.mxu0 0
    %1547 = vmatprep.subr.bf16.mxu0 0
    %1548 = vmatpush1.bf16.msra.mxu0 0
    %1549 = vmatprep.subr.bf16.mxu0 0
    %1550 = vmatpush1.bf16.msra.mxu0 0
    %1551 = vmatprep.subr.bf16.mxu0 %v1049
    %1552 = vmatpush1.bf16.msra.mxu0 %v1048
    %1553 = vmatprep.subr.bf16.mxu0 0
    %1554 = vmatpush2.bf16.msra.mxu0 0
    %1555 = vmatprep.subr.bf16.mxu0 0
    %1556 = vmatpush2.bf16.msra.mxu0 0
    %1557 = vmatprep.subr.bf16.mxu0 0
    %1558 = vmatpush2.bf16.msra.mxu0 0
    %1559 = vmatprep.subr.bf16.mxu0 0
    %1560 = vmatpush2.bf16.msra.mxu0 0
    %1561 = vmatprep.subr.bf16.mxu0 0
    %1562 = vmatpush2.bf16.msra.mxu0 0
    %1563 = vmatprep.subr.bf16.mxu0 0
    %1564 = vmatpush2.bf16.msra.mxu0 0
    %1565 = vmatprep.subr.bf16.mxu0 0
    %1566 = vmatpush2.bf16.msra.mxu0 0
    %1567 = vmatprep.subr.bf16.mxu0 0
    %1568 = vmatpush2.bf16.msra.mxu0 0
    %1569 = vmatprep.mubr.bf16.mxu0 0
    %1570 = vmatmul.mubr.bf16.gmra.mxu0 %v1248
    %v1571 = vpop.f32.mrf.mxu0
    %v1572 = vadd.f32 %v1531, %v1571
    %v1573 = vpop.f32.mrf.mxu0
    %v1574 = vadd.f32 %v1533, %v1573
    %v1575 = vpop.f32.mrf.mxu0
    %v1576 = vpop.f32.mrf.mxu0
    %1577 = vdwg.mxu0
    %v1578 = vmax.f32 %v1408, 0.0
    %v1579 = vmax.f32 %v1410, 0.0
    %v1580 = vmax.f32 %v1572, 0.0
    %v1581 = vmax.f32 %v1574, 0.0
    %v1582 = vpack.c.bf16 %v1578, %v1578
    %v1583 = vpack.c.bf16 %v1579, %v1579
    %v1584 = vpack.c.bf16 %v1580, %v1580
    %v1585 = vpack.c.bf16 %v1581, %v1581
    %v1586 = vld [vmem:[%s3] sm:$0xf]
    %v1587 = vld [vmem:[%s3 + $0x4] sm:$0xf]
    %v1588 = vld [vmem:[%s3 + $0x8] sm:$0xf]
    %v1589 = vld [vmem:[%s3 + $0xc] sm:$0xf]
    %v1590 = vld [vmem:[%s3 + $0x10] sm:$0xf]
    %v1591 = vld [vmem:[%s3 + $0x14] sm:$0xf]
    %v1592 = vld [vmem:[%s3 + $0x18] sm:$0xf]
    %v1593 = vld [vmem:[%s3 + $0x1c] sm:$0xf]
    %v1594 = vld [vmem:[%s3 + $0x20] sm:$0xf]
    %v1595 = vld [vmem:[%s3 + $0x24] sm:$0xf]
    %v1596 = vld [vmem:[%s3 + $0x28] sm:$0xf]
    %v1597 = vld [vmem:[%s3 + $0x2c] sm:$0xf]
    %v1598 = vld [vmem:[%s3 + $0x30] sm:$0xf]
    %v1599 = vld [vmem:[%s3 + $0x34] sm:$0xf]
    %v1600 = vld [vmem:[%s3 + $0x38] sm:$0xf]
    %v1601 = vld [vmem:[%s3 + $0x3c] sm:$0xf]
    %v1602 = vld [vmem:[%s3 + $0x40] sm:$0xf]
    %v1603 = vld [vmem:[%s3 + $0x44] sm:$0xf]
    %v1604 = vld [vmem:[%s3 + $0x48] sm:$0xf]
    %v1605 = vld [vmem:[%s3 + $0x4c] sm:$0xf]
    %v1606 = vld [vmem:[%s3 + $0x50] sm:$0xf]
    %v1607 = vld [vmem:[%s3 + $0x54] sm:$0xf]
    %v1608 = vld [vmem:[%s3 + $0x58] sm:$0xf]
    %v1609 = vld [vmem:[%s3 + $0x5c] sm:$0xf]
    %v1610 = vld [vmem:[%s3 + $0x60] sm:$0xf]
    %v1611 = vld [vmem:[%s3 + $0x64] sm:$0xf]
    %v1612 = vld [vmem:[%s3 + $0x68] sm:$0xf]
    %v1613 = vld [vmem:[%s3 + $0x6c] sm:$0xf]
    %v1614 = vld [vmem:[%s3 + $0x70] sm:$0xf]
    %v1615 = vld [vmem:[%s3 + $0x74] sm:$0xf]
    %v1616 = vld [vmem:[%s3 + $0x78] sm:$0xf]
    %v1617 = vld [vmem:[%s3 + $0x7c] sm:$0xf]
    %v1618 = vld [vmem:[%s3 + $0x80] sm:$0xf]
    %v1619 = vld [vmem:[%s3 + $0x84] sm:$0xf]
    %v1620 = vld [vmem:[%s3 + $0x88] sm:$0xf]
    %v1621 = vld [vmem:[%s3 + $0x8c] sm:$0xf]
    %v1622 = vld [vmem:[%s3 + $0x90] sm:$0xf]
    %v1623 = vld [vmem:[%s3 + $0x94] sm:$0xf]
    %v1624 = vld [vmem:[%s3 + $0x98] sm:$0xf]
    %v1625 = vld [vmem:[%s3 + $0x9c] sm:$0xf]
    %v1626 = vld [vmem:[%s3 + $0xa0] sm:$0xf]
    %v1627 = vld [vmem:[%s3 + $0xa4] sm:$0xf]
    %v1628 = vld [vmem:[%s3 + $0xa8] sm:$0xf]
    %v1629 = vld [vmem:[%s3 + $0xac] sm:$0xf]
    %v1630 = vld [vmem:[%s3 + $0xb0] sm:$0xf]
    %v1631 = vld [vmem:[%s3 + $0xb4] sm:$0xf]
    %v1632 = vld [vmem:[%s3 + $0xb8] sm:$0xf]
    %v1633 = vld [vmem:[%s3 + $0xbc] sm:$0xf]
    %v1634 = vld [vmem:[%s3 + $0xc0] sm:$0xf]
    %v1635 = vld [vmem:[%s3 + $0xc4] sm:$0xf]
    %v1636 = vld [vmem:[%s3 + $0xc8] sm:$0xf]
    %v1637 = vld [vmem:[%s3 + $0xcc] sm:$0xf]
    %v1638 = vld [vmem:[%s3 + $0xd0] sm:$0xf]
    %v1639 = vld [vmem:[%s3 + $0xd4] sm:$0xf]
    %v1640 = vld [vmem:[%s3 + $0xd8] sm:$0xf]
    %v1641 = vld [vmem:[%s3 + $0xdc] sm:$0xf]
    %v1642 = vld [vmem:[%s3 + $0xe0] sm:$0xf]
    %v1643 = vld [vmem:[%s3 + $0xe4] sm:$0xf]
    %v1644 = vld [vmem:[%s3 + $0xe8] sm:$0xf]
    %v1645 = vld [vmem:[%s3 + $0xec] sm:$0xf]
    %v1646 = vld [vmem:[%s3 + $0xf0] sm:$0xf]
    %v1647 = vld [vmem:[%s3 + $0xf4] sm:$0xf]
    %v1648 = vld [vmem:[%s3 + $0xf8] sm:$0xf]
    %v1649 = vld [vmem:[%s3 + $0xfc] sm:$0xf]
    %v1650 = vld [vmem:[%s4] sm:$0x1]
    %v1652 = vlaneseq
    %v1653 = vshrl.u32 %v1652, 7
    %v1654 = vsub.s32 0, %v1653
    %v1655 = vrot.slane %v1650, %v1654
    %v1721 = vunpack.c.l.b16 %v1586
    %v1722 = vunpack.c.l.b16 %v1587
    %v1723 = vunpack.c.l.b16 %v1588
    %v1724 = vunpack.c.l.b16 %v1589
    %v1725 = vunpack.c.l.b16 %v1590
    %v1726 = vunpack.c.l.b16 %v1591
    %v1727 = vunpack.c.l.b16 %v1592
    %v1728 = vunpack.c.l.b16 %v1593
    %v1729 = vunpack.c.l.b16 %v1594
    %v1730 = vunpack.c.l.b16 %v1595
    %v1731 = vunpack.c.l.b16 %v1596
    %v1732 = vunpack.c.l.b16 %v1597
    %v1733 = vunpack.c.l.b16 %v1598
    %v1734 = vunpack.c.l.b16 %v1599
    %v1735 = vunpack.c.l.b16 %v1600
    %v1736 = vunpack.c.l.b16 %v1601
    %v1737 = vunpack.c.l.b16 %v1602
    %v1738 = vunpack.c.l.b16 %v1603
    %v1739 = vunpack.c.l.b16 %v1604
    %v1740 = vunpack.c.l.b16 %v1605
    %v1741 = vunpack.c.l.b16 %v1606
    %v1742 = vunpack.c.l.b16 %v1607
    %v1743 = vunpack.c.l.b16 %v1608
    %v1744 = vunpack.c.l.b16 %v1609
    %v1745 = vunpack.c.l.b16 %v1610
    %v1746 = vunpack.c.l.b16 %v1611
    %v1747 = vunpack.c.l.b16 %v1612
    %v1748 = vunpack.c.l.b16 %v1613
    %v1749 = vunpack.c.l.b16 %v1614
    %v1750 = vunpack.c.l.b16 %v1615
    %v1751 = vunpack.c.l.b16 %v1616
    %v1752 = vunpack.c.l.b16 %v1617
    %v1753 = vunpack.c.l.b16 %v1618
    %v1754 = vunpack.c.l.b16 %v1619
    %v1755 = vunpack.c.l.b16 %v1620
    %v1756 = vunpack.c.l.b16 %v1621
    %v1757 = vunpack.c.l.b16 %v1622
    %v1758 = vunpack.c.l.b16 %v1623
    %v1759 = vunpack.c.l.b16 %v1624
    %v1760 = vunpack.c.l.b16 %v1625
    %v1761 = vunpack.c.l.b16 %v1626
    %v1762 = vunpack.c.l.b16 %v1627
    %v1763 = vunpack.c.l.b16 %v1628
    %v1764 = vunpack.c.l.b16 %v1629
    %v1765 = vunpack.c.l.b16 %v1630
    %v1766 = vunpack.c.l.b16 %v1631
    %v1767 = vunpack.c.l.b16 %v1632
    %v1768 = vunpack.c.l.b16 %v1633
    %v1769 = vunpack.c.l.b16 %v1634
    %v1770 = vunpack.c.l.b16 %v1635
    %v1771 = vunpack.c.l.b16 %v1636
    %v1772 = vunpack.c.l.b16 %v1637
    %v1773 = vunpack.c.l.b16 %v1638
    %v1774 = vunpack.c.l.b16 %v1639
    %v1775 = vunpack.c.l.b16 %v1640
    %v1776 = vunpack.c.l.b16 %v1641
    %v1777 = vunpack.c.l.b16 %v1642
    %v1778 = vunpack.c.l.b16 %v1643
    %v1779 = vunpack.c.l.b16 %v1644
    %v1780 = vunpack.c.l.b16 %v1645
    %v1781 = vunpack.c.l.b16 %v1646
    %v1782 = vunpack.c.l.b16 %v1647
    %v1783 = vunpack.c.l.b16 %v1648
    %v1784 = vunpack.c.l.b16 %v1649
    %v1785 = vpack.c.b16 %v1722, %v1721
    %v1786 = vpack.c.b16 %v1724, %v1723
    %v1787 = vpack.c.b16 %v1726, %v1725
    %v1788 = vpack.c.b16 %v1728, %v1727
    %v1789 = vpack.c.b16 %v1730, %v1729
    %v1790 = vpack.c.b16 %v1732, %v1731
    %v1791 = vpack.c.b16 %v1734, %v1733
    %v1792 = vpack.c.b16 %v1736, %v1735
    %v1793 = vpack.c.b16 %v1738, %v1737
    %v1794 = vpack.c.b16 %v1740, %v1739
    %v1795 = vpack.c.b16 %v1742, %v1741
    %v1796 = vpack.c.b16 %v1744, %v1743
    %v1797 = vpack.c.b16 %v1746, %v1745
    %v1798 = vpack.c.b16 %v1748, %v1747
    %v1799 = vpack.c.b16 %v1750, %v1749
    %v1800 = vpack.c.b16 %v1752, %v1751
    %v1801 = vpack.c.b16 %v1754, %v1753
    %v1802 = vpack.c.b16 %v1756, %v1755
    %v1803 = vpack.c.b16 %v1758, %v1757
    %v1804 = vpack.c.b16 %v1760, %v1759
    %v1805 = vpack.c.b16 %v1762, %v1761
    %v1806 = vpack.c.b16 %v1764, %v1763
    %v1807 = vpack.c.b16 %v1766, %v1765
    %v1808 = vpack.c.b16 %v1768, %v1767
    %v1809 = vpack.c.b16 %v1770, %v1769
    %v1810 = vpack.c.b16 %v1772, %v1771
    %v1811 = vpack.c.b16 %v1774, %v1773
    %v1812 = vpack.c.b16 %v1776, %v1775
    %v1813 = vpack.c.b16 %v1778, %v1777
    %v1814 = vpack.c.b16 %v1780, %v1779
    %v1815 = vpack.c.b16 %v1782, %v1781
    %v1816 = vpack.c.b16 %v1784, %v1783
    %1849 = vmatprep.subr.bf16.mxu0 0
    %1850 = vmatpush1.bf16.msra.mxu0 %v1792
    %1851 = vmatprep.subr.bf16.mxu0 0
    %1852 = vmatpush1.bf16.msra.mxu0 %v1791
    %1853 = vmatprep.subr.bf16.mxu0 0
    %1854 = vmatpush1.bf16.msra.mxu0 %v1790
    %1855 = vmatprep.subr.bf16.mxu0 0
    %1856 = vmatpush1.bf16.msra.mxu0 %v1789
    %1857 = vmatprep.subr.bf16.mxu0 0
    %1858 = vmatpush1.bf16.msra.mxu0 %v1788
    %1859 = vmatprep.subr.bf16.mxu0 0
    %1860 = vmatpush1.bf16.msra.mxu0 %v1787
    %1861 = vmatprep.subr.bf16.mxu0 0
    %1862 = vmatpush1.bf16.msra.mxu0 %v1786
    %1863 = vmatprep.subr.bf16.mxu0 0
    %1864 = vmatpush1.bf16.msra.mxu0 %v1785
    %1865 = vmatprep.subr.bf16.mxu0 0
    %1866 = vmatpush2.bf16.msra.mxu0 %v1800
    %1867 = vmatprep.subr.bf16.mxu0 0
    %1868 = vmatpush2.bf16.msra.mxu0 %v1799
    %1869 = vmatprep.subr.bf16.mxu0 0
    %1870 = vmatpush2.bf16.msra.mxu0 %v1798
    %1871 = vmatprep.subr.bf16.mxu0 0
    %1872 = vmatpush2.bf16.msra.mxu0 %v1797
    %1873 = vmatprep.subr.bf16.mxu0 0
    %1874 = vmatpush2.bf16.msra.mxu0 %v1796
    %1875 = vmatprep.subr.bf16.mxu0 0
    %1876 = vmatpush2.bf16.msra.mxu0 %v1795
    %1877 = vmatprep.subr.bf16.mxu0 0
    %1878 = vmatpush2.bf16.msra.mxu0 %v1794
    %1879 = vmatprep.subr.bf16.mxu0 0
    %1880 = vmatpush2.bf16.msra.mxu0 %v1793
    %1881 = vmatprep.mubr.bf16.mxu0 %v1583
    %1882 = vmatmul.mubr.bf16.gmra.mxu0 %v1582
    %v1883 = vpop.f32.mrf.mxu0
    %v1884 = vadd.f32 %v1655, %v1883
    %v1885 = vpop.f32.mrf.mxu0
    %v1886 = vpop.f32.mrf.mxu0
    %v1887 = vpop.f32.mrf.mxu0
    %1888 = vdwg.mxu0
    %1889 = vmatprep.subr.bf16.mxu0 0
    %1890 = vmatpush1.bf16.msra.mxu0 %v1808
    %1891 = vmatprep.subr.bf16.mxu0 0
    %1892 = vmatpush1.bf16.msra.mxu0 %v1807
    %1893 = vmatprep.subr.bf16.mxu0 0
    %1894 = vmatpush1.bf16.msra.mxu0 %v1806
    %1895 = vmatprep.subr.bf16.mxu0 0
    %1896 = vmatpush1.bf16.msra.mxu0 %v1805
    %1897 = vmatprep.subr.bf16.mxu0 0
    %1898 = vmatpush1.bf16.msra.mxu0 %v1804
    %1899 = vmatprep.subr.bf16.mxu0 0
    %1900 = vmatpush1.bf16.msra.mxu0 %v1803
    %1901 = vmatprep.subr.bf16.mxu0 0
    %1902 = vmatpush1.bf16.msra.mxu0 %v1802
    %1903 = vmatprep.subr.bf16.mxu0 0
    %1904 = vmatpush1.bf16.msra.mxu0 %v1801
    %1905 = vmatprep.subr.bf16.mxu0 0
    %1906 = vmatpush2.bf16.msra.mxu0 %v1816
    %1907 = vmatprep.subr.bf16.mxu0 0
    %1908 = vmatpush2.bf16.msra.mxu0 %v1815
    %1909 = vmatprep.subr.bf16.mxu0 0
    %1910 = vmatpush2.bf16.msra.mxu0 %v1814
    %1911 = vmatprep.subr.bf16.mxu0 0
    %1912 = vmatpush2.bf16.msra.mxu0 %v1813
    %1913 = vmatprep.subr.bf16.mxu0 0
    %1914 = vmatpush2.bf16.msra.mxu0 %v1812
    %1915 = vmatprep.subr.bf16.mxu0 0
    %1916 = vmatpush2.bf16.msra.mxu0 %v1811
    %1917 = vmatprep.subr.bf16.mxu0 0
    %1918 = vmatpush2.bf16.msra.mxu0 %v1810
    %1919 = vmatprep.subr.bf16.mxu0 0
    %1920 = vmatpush2.bf16.msra.mxu0 %v1809
    %1921 = vmatprep.mubr.bf16.mxu0 %v1585
    %1922 = vmatmul.mubr.bf16.gmra.mxu0 %v1584
    %v1923 = vpop.f32.mrf.mxu0
    %v1924 = vadd.f32 %v1884, %v1923
    %v1925 = vpop.f32.mrf.mxu0
    %v1926 = vpop.f32.mrf.mxu0
    %v1927 = vpop.f32.mrf.mxu0
    %1928 = vdwg.mxu0
    %v1929 = vmax.f32 %v1924, 0.0
    %v1930 = vpack.c.bf16 %v1929, %v1929
    %v1931 = vld [vmem:[%s5] sm:$0xff]
    %v1932 = vld [vmem:[%s5 + $0x8] sm:$0xff]
    %v1933 = vld [vmem:[%s5 + $0x10] sm:$0xff]
    %v1934 = vld [vmem:[%s5 + $0x18] sm:$0xff]
    %v1935 = vld [vmem:[%s5 + $0x20] sm:$0xff]
    %v1936 = vld [vmem:[%s5 + $0x28] sm:$0xff]
    %v1937 = vld [vmem:[%s5 + $0x30] sm:$0xff]
    %v1938 = vld [vmem:[%s5 + $0x38] sm:$0xff]
    %v1939 = vld [vmem:[%s5 + $0x40] sm:$0xff]
    %v1940 = vld [vmem:[%s5 + $0x48] sm:$0xff]
    %v1941 = vld [vmem:[%s5 + $0x50] sm:$0xff]
    %v1942 = vld [vmem:[%s5 + $0x58] sm:$0xff]
    %v1943 = vld [vmem:[%s5 + $0x60] sm:$0xff]
    %v1944 = vld [vmem:[%s5 + $0x68] sm:$0xff]
    %v1945 = vld [vmem:[%s5 + $0x70] sm:$0xff]
    %v1946 = vld [vmem:[%s5 + $0x78] sm:$0xff]
    %v1947 = vld [vmem:[%s5 + $0x80] sm:$0xff]
    %v1948 = vld [vmem:[%s5 + $0x88] sm:$0xff]
    %v1949 = vld [vmem:[%s5 + $0x90] sm:$0xff]
    %v1950 = vld [vmem:[%s5 + $0x98] sm:$0xff]
    %v1951 = vld [vmem:[%s5 + $0xa0] sm:$0xff]
    %v1952 = vld [vmem:[%s5 + $0xa8] sm:$0xff]
    %v1953 = vld [vmem:[%s5 + $0xb0] sm:$0xff]
    %v1954 = vld [vmem:[%s5 + $0xb8] sm:$0xff]
    %v1955 = vld [vmem:[%s5 + $0xc0] sm:$0xff]
    %v1956 = vld [vmem:[%s5 + $0xc8] sm:$0xff]
    %v1957 = vld [vmem:[%s5 + $0xd0] sm:$0xff]
    %v1958 = vld [vmem:[%s5 + $0xd8] sm:$0xff]
    %v1959 = vld [vmem:[%s5 + $0xe0] sm:$0xff]
    %v1960 = vld [vmem:[%s5 + $0xe8] sm:$0xff]
    %v1961 = vld [vmem:[%s5 + $0xf0] sm:$0xff]
    %v1962 = vld [vmem:[%s5 + $0xf8] sm:$0xff]
    %v1963 = vld [vmem:[%s6] sm:$0xf]
    %v1965 = vlaneseq
    %v1966 = vshrl.u32 %v1965, 7
    %v1967 = vsub.s32 0, %v1966
    %v1968 = vrot.slane %v1963, %v1967
    %v1969 = vlaneseq
    %v1970 = vshrl.u32 %v1969, 7
    %v1971 = vsub.s32 1, %v1970
    %v1972 = vrot.slane %v1963, %v1971
    %v1973 = vlaneseq
    %v1974 = vshrl.u32 %v1973, 7
    %v1975 = vsub.s32 2, %v1974
    %v1976 = vrot.slane %v1963, %v1975
    %v1977 = vlaneseq
    %v1978 = vshrl.u32 %v1977, 7
    %v1979 = vsub.s32 3, %v1978
    %v1980 = vrot.slane %v1963, %v1979
    %v2017 = vunpack.c.l.b16 %v1931
    %v2018 = vunpack.c.h.b16 %v1931
    %v2019 = vunpack.c.l.b16 %v1932
    %v2020 = vunpack.c.h.b16 %v1932
    %v2021 = vunpack.c.l.b16 %v1933
    %v2022 = vunpack.c.h.b16 %v1933
    %v2023 = vunpack.c.l.b16 %v1934
    %v2024 = vunpack.c.h.b16 %v1934
    %v2025 = vunpack.c.l.b16 %v1935
    %v2026 = vunpack.c.h.b16 %v1935
    %v2027 = vunpack.c.l.b16 %v1936
    %v2028 = vunpack.c.h.b16 %v1936
    %v2029 = vunpack.c.l.b16 %v1937
    %v2030 = vunpack.c.h.b16 %v1937
    %v2031 = vunpack.c.l.b16 %v1938
    %v2032 = vunpack.c.h.b16 %v1938
    %v2033 = vunpack.c.l.b16 %v1939
    %v2034 = vunpack.c.h.b16 %v1939
    %v2035 = vunpack.c.l.b16 %v1940
    %v2036 = vunpack.c.h.b16 %v1940
    %v2037 = vunpack.c.l.b16 %v1941
    %v2038 = vunpack.c.h.b16 %v1941
    %v2039 = vunpack.c.l.b16 %v1942
    %v2040 = vunpack.c.h.b16 %v1942
    %v2041 = vunpack.c.l.b16 %v1943
    %v2042 = vunpack.c.h.b16 %v1943
    %v2043 = vunpack.c.l.b16 %v1944
    %v2044 = vunpack.c.h.b16 %v1944
    %v2045 = vunpack.c.l.b16 %v1945
    %v2046 = vunpack.c.h.b16 %v1945
    %v2047 = vunpack.c.l.b16 %v1946
    %v2048 = vunpack.c.h.b16 %v1946
    %v2049 = vunpack.c.l.b16 %v1947
    %v2050 = vunpack.c.h.b16 %v1947
    %v2051 = vunpack.c.l.b16 %v1948
    %v2052 = vunpack.c.h.b16 %v1948
    %v2053 = vunpack.c.l.b16 %v1949
    %v2054 = vunpack.c.h.b16 %v1949
    %v2055 = vunpack.c.l.b16 %v1950
    %v2056 = vunpack.c.h.b16 %v1950
    %v2057 = vunpack.c.l.b16 %v1951
    %v2058 = vunpack.c.h.b16 %v1951
    %v2059 = vunpack.c.l.b16 %v1952
    %v2060 = vunpack.c.h.b16 %v1952
    %v2061 = vunpack.c.l.b16 %v1953
    %v2062 = vunpack.c.h.b16 %v1953
    %v2063 = vunpack.c.l.b16 %v1954
    %v2064 = vunpack.c.h.b16 %v1954
    %v2065 = vunpack.c.l.b16 %v1955
    %v2066 = vunpack.c.h.b16 %v1955
    %v2067 = vunpack.c.l.b16 %v1956
    %v2068 = vunpack.c.h.b16 %v1956
    %v2069 = vunpack.c.l.b16 %v1957
    %v2070 = vunpack.c.h.b16 %v1957
    %v2071 = vunpack.c.l.b16 %v1958
    %v2072 = vunpack.c.h.b16 %v1958
    %v2073 = vunpack.c.l.b16 %v1959
    %v2074 = vunpack.c.h.b16 %v1959
    %v2075 = vunpack.c.l.b16 %v1960
    %v2076 = vunpack.c.h.b16 %v1960
    %v2077 = vunpack.c.l.b16 %v1961
    %v2078 = vunpack.c.h.b16 %v1961
    %v2079 = vunpack.c.l.b16 %v1962
    %v2080 = vunpack.c.h.b16 %v1962
    %v2081 = vpack.c.b16 %v2021, %v2017
    %v2082 = vpack.c.b16 %v2022, %v2018
    %v2083 = vpack.c.b16 %v2023, %v2019
    %v2084 = vpack.c.b16 %v2024, %v2020
    %v2085 = vpack.c.b16 %v2029, %v2025
    %v2086 = vpack.c.b16 %v2030, %v2026
    %v2087 = vpack.c.b16 %v2031, %v2027
    %v2088 = vpack.c.b16 %v2032, %v2028
    %v2089 = vpack.c.b16 %v2037, %v2033
    %v2090 = vpack.c.b16 %v2038, %v2034
    %v2091 = vpack.c.b16 %v2039, %v2035
    %v2092 = vpack.c.b16 %v2040, %v2036
    %v2093 = vpack.c.b16 %v2045, %v2041
    %v2094 = vpack.c.b16 %v2046, %v2042
    %v2095 = vpack.c.b16 %v2047, %v2043
    %v2096 = vpack.c.b16 %v2048, %v2044
    %v2097 = vpack.c.b16 %v2053, %v2049
    %v2098 = vpack.c.b16 %v2054, %v2050
    %v2099 = vpack.c.b16 %v2055, %v2051
    %v2100 = vpack.c.b16 %v2056, %v2052
    %v2101 = vpack.c.b16 %v2061, %v2057
    %v2102 = vpack.c.b16 %v2062, %v2058
    %v2103 = vpack.c.b16 %v2063, %v2059
    %v2104 = vpack.c.b16 %v2064, %v2060
    %v2105 = vpack.c.b16 %v2069, %v2065
    %v2106 = vpack.c.b16 %v2070, %v2066
    %v2107 = vpack.c.b16 %v2071, %v2067
    %v2108 = vpack.c.b16 %v2072, %v2068
    %v2109 = vpack.c.b16 %v2077, %v2073
    %v2110 = vpack.c.b16 %v2078, %v2074
    %v2111 = vpack.c.b16 %v2079, %v2075
    %v2112 = vpack.c.b16 %v2080, %v2076
    %2145 = vmatprep.subr.bf16.mxu0 %v2110
    %2146 = vmatpush1.bf16.msra.mxu0 %v2109
    %2147 = vmatprep.subr.bf16.mxu0 %v2106
    %2148 = vmatpush1.bf16.msra.mxu0 %v2105
    %2149 = vmatprep.subr.bf16.mxu0 %v2102
    %2150 = vmatpush1.bf16.msra.mxu0 %v2101
    %2151 = vmatprep.subr.bf16.mxu0 %v2098
    %2152 = vmatpush1.bf16.msra.mxu0 %v2097
    %2153 = vmatprep.subr.bf16.mxu0 %v2094
    %2154 = vmatpush1.bf16.msra.mxu0 %v2093
    %2155 = vmatprep.subr.bf16.mxu0 %v2090
    %2156 = vmatpush1.bf16.msra.mxu0 %v2089
    %2157 = vmatprep.subr.bf16.mxu0 %v2086
    %2158 = vmatpush1.bf16.msra.mxu0 %v2085
    %2159 = vmatprep.subr.bf16.mxu0 %v2082
    %2160 = vmatpush1.bf16.msra.mxu0 %v2081
    %2161 = vmatprep.subr.bf16.mxu0 0
    %2162 = vmatpush2.bf16.msra.mxu0 0
    %2163 = vmatprep.subr.bf16.mxu0 0
    %2164 = vmatpush2.bf16.msra.mxu0 0
    %2165 = vmatprep.subr.bf16.mxu0 0
    %2166 = vmatpush2.bf16.msra.mxu0 0
    %2167 = vmatprep.subr.bf16.mxu0 0
    %2168 = vmatpush2.bf16.msra.mxu0 0
    %2169 = vmatprep.subr.bf16.mxu0 0
    %2170 = vmatpush2.bf16.msra.mxu0 0
    %2171 = vmatprep.subr.bf16.mxu0 0
    %2172 = vmatpush2.bf16.msra.mxu0 0
    %2173 = vmatprep.subr.bf16.mxu0 0
    %2174 = vmatpush2.bf16.msra.mxu0 0
    %2175 = vmatprep.subr.bf16.mxu0 0
    %2176 = vmatpush2.bf16.msra.mxu0 0
    %2177 = vmatprep.mubr.bf16.mxu0 0
    %2178 = vmatmul.mubr.bf16.gmra.mxu0 %v1930
    %v2179 = vpop.f32.mrf.mxu0
    %v2180 = vadd.f32 %v1968, %v2179
    %v2181 = vpop.f32.mrf.mxu0
    %v2182 = vadd.f32 %v1972, %v2181
    %v2183 = vpop.f32.mrf.mxu0
    %v2184 = vpop.f32.mrf.mxu0
    %2185 = vdwg.mxu0
    %2186 = vmatprep.subr.bf16.mxu0 %v2112
    %2187 = vmatpush1.bf16.msra.mxu0 %v2111
    %2188 = vmatprep.subr.bf16.mxu0 %v2108
    %2189 = vmatpush1.bf16.msra.mxu0 %v2107
    %2190 = vmatprep.subr.bf16.mxu0 %v2104
    %2191 = vmatpush1.bf16.msra.mxu0 %v2103
    %2192 = vmatprep.subr.bf16.mxu0 %v2100
    %2193 = vmatpush1.bf16.msra.mxu0 %v2099
    %2194 = vmatprep.subr.bf16.mxu0 %v2096
    %2195 = vmatpush1.bf16.msra.mxu0 %v2095
    %2196 = vmatprep.subr.bf16.mxu0 %v2092
    %2197 = vmatpush1.bf16.msra.mxu0 %v2091
    %2198 = vmatprep.subr.bf16.mxu0 %v2088
    %2199 = vmatpush1.bf16.msra.mxu0 %v2087
    %2200 = vmatprep.subr.bf16.mxu0 %v2084
    %2201 = vmatpush1.bf16.msra.mxu0 %v2083
    %2202 = vmatprep.subr.bf16.mxu0 0
    %2203 = vmatpush2.bf16.msra.mxu0 0
    %2204 = vmatprep.subr.bf16.mxu0 0
    %2205 = vmatpush2.bf16.msra.mxu0 0
    %2206 = vmatprep.subr.bf16.mxu0 0
    %2207 = vmatpush2.bf16.msra.mxu0 0
    %2208 = vmatprep.subr.bf16.mxu0 0
    %2209 = vmatpush2.bf16.msra.mxu0 0
    %2210 = vmatprep.subr.bf16.mxu0 0
    %2211 = vmatpush2.bf16.msra.mxu0 0
    %2212 = vmatprep.subr.bf16.mxu0 0
    %2213 = vmatpush2.bf16.msra.mxu0 0
    %2214 = vmatprep.subr.bf16.mxu0 0
    %2215 = vmatpush2.bf16.msra.mxu0 0
    %2216 = vmatprep.subr.bf16.mxu0 0
    %2217 = vmatpush2.bf16.msra.mxu0 0
    %2218 = vmatprep.mubr.bf16.mxu0 0
    %2219 = vmatmul.mubr.bf16.gmra.mxu0 %v1930
    %v2220 = vpop.f32.mrf.mxu0
    %v2221 = vadd.f32 %v1976, %v2220
    %v2222 = vpop.f32.mrf.mxu0
    %v2223 = vadd.f32 %v1980, %v2222
    %v2224 = vpop.f32.mrf.mxu0
    %v2225 = vpop.f32.mrf.mxu0
    %2226 = vdwg.mxu0
    %v2227 = vmax.f32 %v2180, 0.0
    %v2228 = vmax.f32 %v2182, 0.0
    %v2229 = vmax.f32 %v2221, 0.0
    %v2230 = vmax.f32 %v2223, 0.0
    %v2231 = vpack.c.bf16 %v2227, %v2227
    %v2232 = vpack.c.bf16 %v2228, %v2228
    %v2233 = vpack.c.bf16 %v2229, %v2229
    %v2234 = vpack.c.bf16 %v2230, %v2230
    %v2235 = vld [vmem:[%s7] sm:$0xff]
    %v2236 = vld [vmem:[%s7 + $0x8] sm:$0xff]
    %v2237 = vld [vmem:[%s7 + $0x10] sm:$0xff]
    %v2238 = vld [vmem:[%s7 + $0x18] sm:$0xf]
    %v2239 = vld [vmem:[%s7 + $0x1c] sm:$0xff]
    %v2240 = vld [vmem:[%s7 + $0x24] sm:$0xff]
    %v2241 = vld [vmem:[%s7 + $0x2c] sm:$0xff]
    %v2242 = vld [vmem:[%s7 + $0x34] sm:$0xf]
    %v2243 = vld [vmem:[%s7 + $0x38] sm:$0xff]
    %v2244 = vld [vmem:[%s7 + $0x40] sm:$0xff]
    %v2245 = vld [vmem:[%s7 + $0x48] sm:$0xff]
    %v2246 = vld [vmem:[%s7 + $0x50] sm:$0xf]
    %v2247 = vld [vmem:[%s7 + $0x54] sm:$0xff]
    %v2248 = vld [vmem:[%s7 + $0x5c] sm:$0xff]
    %v2249 = vld [vmem:[%s7 + $0x64] sm:$0xff]
    %v2250 = vld [vmem:[%s7 + $0x6c] sm:$0xf]
    %v2251 = vld [vmem:[%s7 + $0x70] sm:$0xff]
    %v2252 = vld [vmem:[%s7 + $0x78] sm:$0xff]
    %v2253 = vld [vmem:[%s7 + $0x80] sm:$0xff]
    %v2254 = vld [vmem:[%s7 + $0x88] sm:$0xf]
    %v2255 = vld [vmem:[%s7 + $0x8c] sm:$0xff]
    %v2256 = vld [vmem:[%s7 + $0x94] sm:$0xff]
    %v2257 = vld [vmem:[%s7 + $0x9c] sm:$0xff]
    %v2258 = vld [vmem:[%s7 + $0xa4] sm:$0xf]
    %v2259 = vld [vmem:[%s7 + $0xa8] sm:$0xff]
    %v2260 = vld [vmem:[%s7 + $0xb0] sm:$0xff]
    %v2261 = vld [vmem:[%s7 + $0xb8] sm:$0xff]
    %v2262 = vld [vmem:[%s7 + $0xc0] sm:$0xf]
    %v2263 = vld [vmem:[%s7 + $0xc4] sm:$0xff]
    %v2264 = vld [vmem:[%s7 + $0xcc] sm:$0xff]
    %v2265 = vld [vmem:[%s7 + $0xd4] sm:$0xff]
    %v2266 = vld [vmem:[%s7 + $0xdc] sm:$0xf]
    %v2267 = vld [vmem:[%s7 + $0xe0] sm:$0xff]
    %v2268 = vld [vmem:[%s7 + $0xe8] sm:$0xff]
    %v2269 = vld [vmem:[%s7 + $0xf0] sm:$0xff]
    %v2270 = vld [vmem:[%s7 + $0xf8] sm:$0xf]
    %v2271 = vld [vmem:[%s7 + $0xfc] sm:$0xff]
    %v2272 = vld [vmem:[%s7 + $0x104] sm:$0xff]
    %v2273 = vld [vmem:[%s7 + $0x10c] sm:$0xff]
    %v2274 = vld [vmem:[%s7 + $0x114] sm:$0xf]
    %v2275 = vld [vmem:[%s7 + $0x118] sm:$0xff]
    %v2276 = vld [vmem:[%s7 + $0x120] sm:$0xff]
    %v2277 = vld [vmem:[%s7 + $0x128] sm:$0xff]
    %v2278 = vld [vmem:[%s7 + $0x130] sm:$0xf]
    %v2279 = vld [vmem:[%s7 + $0x134] sm:$0xff]
    %v2280 = vld [vmem:[%s7 + $0x13c] sm:$0xff]
    %v2281 = vld [vmem:[%s7 + $0x144] sm:$0xff]
    %v2282 = vld [vmem:[%s7 + $0x14c] sm:$0xf]
    %v2283 = vld [vmem:[%s7 + $0x150] sm:$0xff]
    %v2284 = vld [vmem:[%s7 + $0x158] sm:$0xff]
    %v2285 = vld [vmem:[%s7 + $0x160] sm:$0xff]
    %v2286 = vld [vmem:[%s7 + $0x168] sm:$0xf]
    %v2287 = vld [vmem:[%s7 + $0x16c] sm:$0xff]
    %v2288 = vld [vmem:[%s7 + $0x174] sm:$0xff]
    %v2289 = vld [vmem:[%s7 + $0x17c] sm:$0xff]
    %v2290 = vld [vmem:[%s7 + $0x184] sm:$0xf]
    %v2291 = vld [vmem:[%s7 + $0x188] sm:$0xff]
    %v2292 = vld [vmem:[%s7 + $0x190] sm:$0xff]
    %v2293 = vld [vmem:[%s7 + $0x198] sm:$0xff]
    %v2294 = vld [vmem:[%s7 + $0x1a0] sm:$0xf]
    %v2295 = vld [vmem:[%s7 + $0x1a4] sm:$0xff]
    %v2296 = vld [vmem:[%s7 + $0x1ac] sm:$0xff]
    %v2297 = vld [vmem:[%s7 + $0x1b4] sm:$0xff]
    %v2298 = vld [vmem:[%s7 + $0x1bc] sm:$0xf]
    %v2299 = vld [vmem:[%s7 + $0x1c0] sm:$0xff]
    %v2300 = vld [vmem:[%s7 + $0x1c8] sm:$0xff]
    %v2301 = vld [vmem:[%s7 + $0x1d0] sm:$0xff]
    %v2302 = vld [vmem:[%s7 + $0x1d8] sm:$0xf]
    %v2303 = vld [vmem:[%s7 + $0x1dc] sm:$0xff]
    %v2304 = vld [vmem:[%s7 + $0x1e4] sm:$0xff]
    %v2305 = vld [vmem:[%s7 + $0x1ec] sm:$0xff]
    %v2306 = vld [vmem:[%s7 + $0x1f4] sm:$0xf]
    %v2307 = vld [vmem:[%s7 + $0x1f8] sm:$0xff]
    %v2308 = vld [vmem:[%s7 + $0x200] sm:$0xff]
    %v2309 = vld [vmem:[%s7 + $0x208] sm:$0xff]
    %v2310 = vld [vmem:[%s7 + $0x210] sm:$0xf]
    %v2311 = vld [vmem:[%s7 + $0x214] sm:$0xff]
    %v2312 = vld [vmem:[%s7 + $0x21c] sm:$0xff]
    %v2313 = vld [vmem:[%s7 + $0x224] sm:$0xff]
    %v2314 = vld [vmem:[%s7 + $0x22c] sm:$0xf]
    %v2315 = vld [vmem:[%s7 + $0x230] sm:$0xff]
    %v2316 = vld [vmem:[%s7 + $0x238] sm:$0xff]
    %v2317 = vld [vmem:[%s7 + $0x240] sm:$0xff]
    %v2318 = vld [vmem:[%s7 + $0x248] sm:$0xf]
    %v2319 = vld [vmem:[%s7 + $0x24c] sm:$0xff]
    %v2320 = vld [vmem:[%s7 + $0x254] sm:$0xff]
    %v2321 = vld [vmem:[%s7 + $0x25c] sm:$0xff]
    %v2322 = vld [vmem:[%s7 + $0x264] sm:$0xf]
    %v2323 = vld [vmem:[%s7 + $0x268] sm:$0xff]
    %v2324 = vld [vmem:[%s7 + $0x270] sm:$0xff]
    %v2325 = vld [vmem:[%s7 + $0x278] sm:$0xff]
    %v2326 = vld [vmem:[%s7 + $0x280] sm:$0xf]
    %v2327 = vld [vmem:[%s7 + $0x284] sm:$0xff]
    %v2328 = vld [vmem:[%s7 + $0x28c] sm:$0xff]
    %v2329 = vld [vmem:[%s7 + $0x294] sm:$0xff]
    %v2330 = vld [vmem:[%s7 + $0x29c] sm:$0xf]
    %v2331 = vld [vmem:[%s7 + $0x2a0] sm:$0xff]
    %v2332 = vld [vmem:[%s7 + $0x2a8] sm:$0xff]
    %v2333 = vld [vmem:[%s7 + $0x2b0] sm:$0xff]
    %v2334 = vld [vmem:[%s7 + $0x2b8] sm:$0xf]
    %v2335 = vld [vmem:[%s7 + $0x2bc] sm:$0xff]
    %v2336 = vld [vmem:[%s7 + $0x2c4] sm:$0xff]
    %v2337 = vld [vmem:[%s7 + $0x2cc] sm:$0xff]
    %v2338 = vld [vmem:[%s7 + $0x2d4] sm:$0xf]
    %v2339 = vld [vmem:[%s7 + $0x2d8] sm:$0xff]
    %v2340 = vld [vmem:[%s7 + $0x2e0] sm:$0xff]
    %v2341 = vld [vmem:[%s7 + $0x2e8] sm:$0xff]
    %v2342 = vld [vmem:[%s7 + $0x2f0] sm:$0xf]
    %v2343 = vld [vmem:[%s7 + $0x2f4] sm:$0xff]
    %v2344 = vld [vmem:[%s7 + $0x2fc] sm:$0xff]
    %v2345 = vld [vmem:[%s7 + $0x304] sm:$0xff]
    %v2346 = vld [vmem:[%s7 + $0x30c] sm:$0xf]
    %v2347 = vld [vmem:[%s7 + $0x310] sm:$0xff]
    %v2348 = vld [vmem:[%s7 + $0x318] sm:$0xff]
    %v2349 = vld [vmem:[%s7 + $0x320] sm:$0xff]
    %v2350 = vld [vmem:[%s7 + $0x328] sm:$0xf]
    %v2351 = vld [vmem:[%s7 + $0x32c] sm:$0xff]
    %v2352 = vld [vmem:[%s7 + $0x334] sm:$0xff]
    %v2353 = vld [vmem:[%s7 + $0x33c] sm:$0xff]
    %v2354 = vld [vmem:[%s7 + $0x344] sm:$0xf]
    %v2355 = vld [vmem:[%s7 + $0x348] sm:$0xff]
    %v2356 = vld [vmem:[%s7 + $0x350] sm:$0xff]
    %v2357 = vld [vmem:[%s7 + $0x358] sm:$0xff]
    %v2358 = vld [vmem:[%s7 + $0x360] sm:$0xf]
    %v2359 = vld [vmem:[%s7 + $0x364] sm:$0xff]
    %v2360 = vld [vmem:[%s7 + $0x36c] sm:$0xff]
    %v2361 = vld [vmem:[%s7 + $0x374] sm:$0xff]
    %v2362 = vld [vmem:[%s7 + $0x37c] sm:$0xf]
    %v2363 = vld [vmem:[%s7 + $0x380] sm:$0xff]
    %v2364 = vld [vmem:[%s7 + $0x388] sm:$0xff]
    %v2365 = vld [vmem:[%s7 + $0x390] sm:$0xff]
    %v2366 = vld [vmem:[%s7 + $0x398] sm:$0xf]
    %v2367 = vld [vmem:[%s7 + $0x39c] sm:$0xff]
    %v2368 = vld [vmem:[%s7 + $0x3a4] sm:$0xff]
    %v2369 = vld [vmem:[%s7 + $0x3ac] sm:$0xff]
    %v2370 = vld [vmem:[%s7 + $0x3b4] sm:$0xf]
    %v2371 = vld [vmem:[%s7 + $0x3b8] sm:$0xff]
    %v2372 = vld [vmem:[%s7 + $0x3c0] sm:$0xff]
    %v2373 = vld [vmem:[%s7 + $0x3c8] sm:$0xff]
    %v2374 = vld [vmem:[%s7 + $0x3d0] sm:$0xf]
    %v2375 = vld [vmem:[%s7 + $0x3d4] sm:$0xff]
    %v2376 = vld [vmem:[%s7 + $0x3dc] sm:$0xff]
    %v2377 = vld [vmem:[%s7 + $0x3e4] sm:$0xff]
    %v2378 = vld [vmem:[%s7 + $0x3ec] sm:$0xf]
    %v2379 = vld [vmem:[%s7 + $0x3f0] sm:$0xff]
    %v2380 = vld [vmem:[%s7 + $0x3f8] sm:$0xff]
    %v2381 = vld [vmem:[%s7 + $0x400] sm:$0xff]
    %v2382 = vld [vmem:[%s7 + $0x408] sm:$0xf]
    %v2383 = vld [vmem:[%s7 + $0x40c] sm:$0xff]
    %v2384 = vld [vmem:[%s7 + $0x414] sm:$0xff]
    %v2385 = vld [vmem:[%s7 + $0x41c] sm:$0xff]
    %v2386 = vld [vmem:[%s7 + $0x424] sm:$0xf]
    %v2387 = vld [vmem:[%s7 + $0x428] sm:$0xff]
    %v2388 = vld [vmem:[%s7 + $0x430] sm:$0xff]
    %v2389 = vld [vmem:[%s7 + $0x438] sm:$0xff]
    %v2390 = vld [vmem:[%s7 + $0x440] sm:$0xf]
    %v2391 = vld [vmem:[%s7 + $0x444] sm:$0xff]
    %v2392 = vld [vmem:[%s7 + $0x44c] sm:$0xff]
    %v2393 = vld [vmem:[%s7 + $0x454] sm:$0xff]
    %v2394 = vld [vmem:[%s7 + $0x45c] sm:$0xf]
    %v2395 = vld [vmem:[%s7 + $0x460] sm:$0xff]
    %v2396 = vld [vmem:[%s7 + $0x468] sm:$0xff]
    %v2397 = vld [vmem:[%s7 + $0x470] sm:$0xff]
    %v2398 = vld [vmem:[%s7 + $0x478] sm:$0xf]
    %v2399 = vld [vmem:[%s7 + $0x47c] sm:$0xff]
    %v2400 = vld [vmem:[%s7 + $0x484] sm:$0xff]
    %v2401 = vld [vmem:[%s7 + $0x48c] sm:$0xff]
    %v2402 = vld [vmem:[%s7 + $0x494] sm:$0xf]
    %v2403 = vld [vmem:[%s7 + $0x498] sm:$0xff]
    %v2404 = vld [vmem:[%s7 + $0x4a0] sm:$0xff]
    %v2405 = vld [vmem:[%s7 + $0x4a8] sm:$0xff]
    %v2406 = vld [vmem:[%s7 + $0x4b0] sm:$0xf]
    %v2407 = vld [vmem:[%s7 + $0x4b4] sm:$0xff]
    %v2408 = vld [vmem:[%s7 + $0x4bc] sm:$0xff]
    %v2409 = vld [vmem:[%s7 + $0x4c4] sm:$0xff]
    %v2410 = vld [vmem:[%s7 + $0x4cc] sm:$0xf]
    %v2411 = vld [vmem:[%s7 + $0x4d0] sm:$0xff]
    %v2412 = vld [vmem:[%s7 + $0x4d8] sm:$0xff]
    %v2413 = vld [vmem:[%s7 + $0x4e0] sm:$0xff]
    %v2414 = vld [vmem:[%s7 + $0x4e8] sm:$0xf]
    %v2415 = vld [vmem:[%s7 + $0x4ec] sm:$0xff]
    %v2416 = vld [vmem:[%s7 + $0x4f4] sm:$0xff]
    %v2417 = vld [vmem:[%s7 + $0x4fc] sm:$0xff]
    %v2418 = vld [vmem:[%s7 + $0x504] sm:$0xf]
    %v2419 = vld [vmem:[%s7 + $0x508] sm:$0xff]
    %v2420 = vld [vmem:[%s7 + $0x510] sm:$0xff]
    %v2421 = vld [vmem:[%s7 + $0x518] sm:$0xff]
    %v2422 = vld [vmem:[%s7 + $0x520] sm:$0xf]
    %v2423 = vld [vmem:[%s7 + $0x524] sm:$0xff]
    %v2424 = vld [vmem:[%s7 + $0x52c] sm:$0xff]
    %v2425 = vld [vmem:[%s7 + $0x534] sm:$0xff]
    %v2426 = vld [vmem:[%s7 + $0x53c] sm:$0xf]
    %v2427 = vld [vmem:[%s7 + $0x540] sm:$0xff]
    %v2428 = vld [vmem:[%s7 + $0x548] sm:$0xff]
    %v2429 = vld [vmem:[%s7 + $0x550] sm:$0xff]
    %v2430 = vld [vmem:[%s7 + $0x558] sm:$0xf]
    %v2431 = vld [vmem:[%s7 + $0x55c] sm:$0xff]
    %v2432 = vld [vmem:[%s7 + $0x564] sm:$0xff]
    %v2433 = vld [vmem:[%s7 + $0x56c] sm:$0xff]
    %v2434 = vld [vmem:[%s7 + $0x574] sm:$0xf]
    %v2435 = vld [vmem:[%s7 + $0x578] sm:$0xff]
    %v2436 = vld [vmem:[%s7 + $0x580] sm:$0xff]
    %v2437 = vld [vmem:[%s7 + $0x588] sm:$0xff]
    %v2438 = vld [vmem:[%s7 + $0x590] sm:$0xf]
    %v2439 = vld [vmem:[%s7 + $0x594] sm:$0xff]
    %v2440 = vld [vmem:[%s7 + $0x59c] sm:$0xff]
    %v2441 = vld [vmem:[%s7 + $0x5a4] sm:$0xff]
    %v2442 = vld [vmem:[%s7 + $0x5ac] sm:$0xf]
    %v2443 = vld [vmem:[%s7 + $0x5b0] sm:$0xff]
    %v2444 = vld [vmem:[%s7 + $0x5b8] sm:$0xff]
    %v2445 = vld [vmem:[%s7 + $0x5c0] sm:$0xff]
    %v2446 = vld [vmem:[%s7 + $0x5c8] sm:$0xf]
    %v2447 = vld [vmem:[%s7 + $0x5cc] sm:$0xff]
    %v2448 = vld [vmem:[%s7 + $0x5d4] sm:$0xff]
    %v2449 = vld [vmem:[%s7 + $0x5dc] sm:$0xff]
    %v2450 = vld [vmem:[%s7 + $0x5e4] sm:$0xf]
    %v2451 = vld [vmem:[%s7 + $0x5e8] sm:$0xff]
    %v2452 = vld [vmem:[%s7 + $0x5f0] sm:$0xff]
    %v2453 = vld [vmem:[%s7 + $0x5f8] sm:$0xff]
    %v2454 = vld [vmem:[%s7 + $0x600] sm:$0xf]
    %v2455 = vld [vmem:[%s7 + $0x604] sm:$0xff]
    %v2456 = vld [vmem:[%s7 + $0x60c] sm:$0xff]
    %v2457 = vld [vmem:[%s7 + $0x614] sm:$0xff]
    %v2458 = vld [vmem:[%s7 + $0x61c] sm:$0xf]
    %v2459 = vld [vmem:[%s7 + $0x620] sm:$0xff]
    %v2460 = vld [vmem:[%s7 + $0x628] sm:$0xff]
    %v2461 = vld [vmem:[%s7 + $0x630] sm:$0xff]
    %v2462 = vld [vmem:[%s7 + $0x638] sm:$0xf]
    %v2463 = vld [vmem:[%s7 + $0x63c] sm:$0xff]
    %v2464 = vld [vmem:[%s7 + $0x644] sm:$0xff]
    %v2465 = vld [vmem:[%s7 + $0x64c] sm:$0xff]
    %v2466 = vld [vmem:[%s7 + $0x654] sm:$0xf]
    %v2467 = vld [vmem:[%s7 + $0x658] sm:$0xff]
    %v2468 = vld [vmem:[%s7 + $0x660] sm:$0xff]
    %v2469 = vld [vmem:[%s7 + $0x668] sm:$0xff]
    %v2470 = vld [vmem:[%s7 + $0x670] sm:$0xf]
    %v2471 = vld [vmem:[%s7 + $0x674] sm:$0xff]
    %v2472 = vld [vmem:[%s7 + $0x67c] sm:$0xff]
    %v2473 = vld [vmem:[%s7 + $0x684] sm:$0xff]
    %v2474 = vld [vmem:[%s7 + $0x68c] sm:$0xf]
    %v2475 = vld [vmem:[%s7 + $0x690] sm:$0xff]
    %v2476 = vld [vmem:[%s7 + $0x698] sm:$0xff]
    %v2477 = vld [vmem:[%s7 + $0x6a0] sm:$0xff]
    %v2478 = vld [vmem:[%s7 + $0x6a8] sm:$0xf]
    %v2479 = vld [vmem:[%s7 + $0x6ac] sm:$0xff]
    %v2480 = vld [vmem:[%s7 + $0x6b4] sm:$0xff]
    %v2481 = vld [vmem:[%s7 + $0x6bc] sm:$0xff]
    %v2482 = vld [vmem:[%s7 + $0x6c4] sm:$0xf]
    %v2483 = vld [vmem:[%s7 + $0x6c8] sm:$0xff]
    %v2484 = vld [vmem:[%s7 + $0x6d0] sm:$0xff]
    %v2485 = vld [vmem:[%s7 + $0x6d8] sm:$0xff]
    %v2486 = vld [vmem:[%s7 + $0x6e0] sm:$0xf]
    %v2487 = vld [vmem:[%s7 + $0x6e4] sm:$0xff]
    %v2488 = vld [vmem:[%s7 + $0x6ec] sm:$0xff]
    %v2489 = vld [vmem:[%s7 + $0x6f4] sm:$0xff]
    %v2490 = vld [vmem:[%s7 + $0x6fc] sm:$0xf]
    %v2491 = vld [vmem:[%s8] sm:$0x7f]
    %v2493 = vlaneseq
    %v2494 = vshrl.u32 %v2493, 7
    %v2495 = vsub.s32 0, %v2494
    %v2496 = vrot.slane %v2491, %v2495
    %v2497 = vlaneseq
    %v2498 = vshrl.u32 %v2497, 7
    %v2499 = vsub.s32 1, %v2498
    %v2500 = vrot.slane %v2491, %v2499
    %v2501 = vlaneseq
    %v2502 = vshrl.u32 %v2501, 7
    %v2503 = vsub.s32 2, %v2502
    %v2504 = vrot.slane %v2491, %v2503
    %v2505 = vlaneseq
    %v2506 = vshrl.u32 %v2505, 7
    %v2507 = vsub.s32 3, %v2506
    %v2508 = vrot.slane %v2491, %v2507
    %v2509 = vlaneseq
    %v2510 = vshrl.u32 %v2509, 7
    %v2511 = vsub.s32 4, %v2510
    %v2512 = vrot.slane %v2491, %v2511
    %v2513 = vlaneseq
    %v2514 = vshrl.u32 %v2513, 7
    %v2515 = vsub.s32 5, %v2514
    %v2516 = vrot.slane %v2491, %v2515
    %v2517 = vlaneseq
    %v2518 = vshrl.u32 %v2517, 7
    %v2519 = vsub.s32 6, %v2518
    %v2520 = vrot.slane %v2491, %v2519
    %v2784 = vunpack.c.l.b16 %v2235
    %v2785 = vunpack.c.h.b16 %v2235
    %v2786 = vunpack.c.l.b16 %v2236
    %v2787 = vunpack.c.h.b16 %v2236
    %v2788 = vunpack.c.l.b16 %v2237
    %v2789 = vunpack.c.h.b16 %v2237
    %v2790 = vunpack.c.l.b16 %v2238
    %v2791 = vunpack.c.l.b16 %v2239
    %v2792 = vunpack.c.h.b16 %v2239
    %v2793 = vunpack.c.l.b16 %v2240
    %v2794 = vunpack.c.h.b16 %v2240
    %v2795 = vunpack.c.l.b16 %v2241
    %v2796 = vunpack.c.h.b16 %v2241
    %v2797 = vunpack.c.l.b16 %v2242
    %v2798 = vunpack.c.l.b16 %v2243
    %v2799 = vunpack.c.h.b16 %v2243
    %v2800 = vunpack.c.l.b16 %v2244
    %v2801 = vunpack.c.h.b16 %v2244
    %v2802 = vunpack.c.l.b16 %v2245
    %v2803 = vunpack.c.h.b16 %v2245
    %v2804 = vunpack.c.l.b16 %v2246
    %v2805 = vunpack.c.l.b16 %v2247
    %v2806 = vunpack.c.h.b16 %v2247
    %v2807 = vunpack.c.l.b16 %v2248
    %v2808 = vunpack.c.h.b16 %v2248
    %v2809 = vunpack.c.l.b16 %v2249
    %v2810 = vunpack.c.h.b16 %v2249
    %v2811 = vunpack.c.l.b16 %v2250
    %v2812 = vunpack.c.l.b16 %v2251
    %v2813 = vunpack.c.h.b16 %v2251
    %v2814 = vunpack.c.l.b16 %v2252
    %v2815 = vunpack.c.h.b16 %v2252
    %v2816 = vunpack.c.l.b16 %v2253
    %v2817 = vunpack.c.h.b16 %v2253
    %v2818 = vunpack.c.l.b16 %v2254
    %v2819 = vunpack.c.l.b16 %v2255
    %v2820 = vunpack.c.h.b16 %v2255
    %v2821 = vunpack.c.l.b16 %v2256
    %v2822 = vunpack.c.h.b16 %v2256
    %v2823 = vunpack.c.l.b16 %v2257
    %v2824 = vunpack.c.h.b16 %v2257
    %v2825 = vunpack.c.l.b16 %v2258
    %v2826 = vunpack.c.l.b16 %v2259
    %v2827 = vunpack.c.h.b16 %v2259
    %v2828 = vunpack.c.l.b16 %v2260
    %v2829 = vunpack.c.h.b16 %v2260
    %v2830 = vunpack.c.l.b16 %v2261
    %v2831 = vunpack.c.h.b16 %v2261
    %v2832 = vunpack.c.l.b16 %v2262
    %v2833 = vunpack.c.l.b16 %v2263
    %v2834 = vunpack.c.h.b16 %v2263
    %v2835 = vunpack.c.l.b16 %v2264
    %v2836 = vunpack.c.h.b16 %v2264
    %v2837 = vunpack.c.l.b16 %v2265
    %v2838 = vunpack.c.h.b16 %v2265
    %v2839 = vunpack.c.l.b16 %v2266
    %v2840 = vunpack.c.l.b16 %v2267
    %v2841 = vunpack.c.h.b16 %v2267
    %v2842 = vunpack.c.l.b16 %v2268
    %v2843 = vunpack.c.h.b16 %v2268
    %v2844 = vunpack.c.l.b16 %v2269
    %v2845 = vunpack.c.h.b16 %v2269
    %v2846 = vunpack.c.l.b16 %v2270
    %v2847 = vunpack.c.l.b16 %v2271
    %v2848 = vunpack.c.h.b16 %v2271
    %v2849 = vunpack.c.l.b16 %v2272
    %v2850 = vunpack.c.h.b16 %v2272
    %v2851 = vunpack.c.l.b16 %v2273
    %v2852 = vunpack.c.h.b16 %v2273
    %v2853 = vunpack.c.l.b16 %v2274
    %v2854 = vunpack.c.l.b16 %v2275
    %v2855 = vunpack.c.h.b16 %v2275
    %v2856 = vunpack.c.l.b16 %v2276
    %v2857 = vunpack.c.h.b16 %v2276
    %v2858 = vunpack.c.l.b16 %v2277
    %v2859 = vunpack.c.h.b16 %v2277
    %v2860 = vunpack.c.l.b16 %v2278
    %v2861 = vunpack.c.l.b16 %v2279
    %v2862 = vunpack.c.h.b16 %v2279
    %v2863 = vunpack.c.l.b16 %v2280
    %v2864 = vunpack.c.h.b16 %v2280
    %v2865 = vunpack.c.l.b16 %v2281
    %v2866 = vunpack.c.h.b16 %v2281
    %v2867 = vunpack.c.l.b16 %v2282
    %v2868 = vunpack.c.l.b16 %v2283
    %v2869 = vunpack.c.h.b16 %v2283
    %v2870 = vunpack.c.l.b16 %v2284
    %v2871 = vunpack.c.h.b16 %v2284
    %v2872 = vunpack.c.l.b16 %v2285
    %v2873 = vunpack.c.h.b16 %v2285
    %v2874 = vunpack.c.l.b16 %v2286
    %v2875 = vunpack.c.l.b16 %v2287
    %v2876 = vunpack.c.h.b16 %v2287
    %v2877 = vunpack.c.l.b16 %v2288
    %v2878 = vunpack.c.h.b16 %v2288
    %v2879 = vunpack.c.l.b16 %v2289
    %v2880 = vunpack.c.h.b16 %v2289
    %v2881 = vunpack.c.l.b16 %v2290
    %v2882 = vunpack.c.l.b16 %v2291
    %v2883 = vunpack.c.h.b16 %v2291
    %v2884 = vunpack.c.l.b16 %v2292
    %v2885 = vunpack.c.h.b16 %v2292
    %v2886 = vunpack.c.l.b16 %v2293
    %v2887 = vunpack.c.h.b16 %v2293
    %v2888 = vunpack.c.l.b16 %v2294
    %v2889 = vunpack.c.l.b16 %v2295
    %v2890 = vunpack.c.h.b16 %v2295
    %v2891 = vunpack.c.l.b16 %v2296
    %v2892 = vunpack.c.h.b16 %v2296
    %v2893 = vunpack.c.l.b16 %v2297
    %v2894 = vunpack.c.h.b16 %v2297
    %v2895 = vunpack.c.l.b16 %v2298
    %v2896 = vunpack.c.l.b16 %v2299
    %v2897 = vunpack.c.h.b16 %v2299
    %v2898 = vunpack.c.l.b16 %v2300
    %v2899 = vunpack.c.h.b16 %v2300
    %v2900 = vunpack.c.l.b16 %v2301
    %v2901 = vunpack.c.h.b16 %v2301
    %v2902 = vunpack.c.l.b16 %v2302
    %v2903 = vunpack.c.l.b16 %v2303
    %v2904 = vunpack.c.h.b16 %v2303
    %v2905 = vunpack.c.l.b16 %v2304
    %v2906 = vunpack.c.h.b16 %v2304
    %v2907 = vunpack.c.l.b16 %v2305
    %v2908 = vunpack.c.h.b16 %v2305
    %v2909 = vunpack.c.l.b16 %v2306
    %v2910 = vunpack.c.l.b16 %v2307
    %v2911 = vunpack.c.h.b16 %v2307
    %v2912 = vunpack.c.l.b16 %v2308
    %v2913 = vunpack.c.h.b16 %v2308
    %v2914 = vunpack.c.l.b16 %v2309
    %v2915 = vunpack.c.h.b16 %v2309
    %v2916 = vunpack.c.l.b16 %v2310
    %v2917 = vunpack.c.l.b16 %v2311
    %v2918 = vunpack.c.h.b16 %v2311
    %v2919 = vunpack.c.l.b16 %v2312
    %v2920 = vunpack.c.h.b16 %v2312
    %v2921 = vunpack.c.l.b16 %v2313
    %v2922 = vunpack.c.h.b16 %v2313
    %v2923 = vunpack.c.l.b16 %v2314
    %v2924 = vunpack.c.l.b16 %v2315
    %v2925 = vunpack.c.h.b16 %v2315
    %v2926 = vunpack.c.l.b16 %v2316
    %v2927 = vunpack.c.h.b16 %v2316
    %v2928 = vunpack.c.l.b16 %v2317
    %v2929 = vunpack.c.h.b16 %v2317
    %v2930 = vunpack.c.l.b16 %v2318
    %v2931 = vunpack.c.l.b16 %v2319
    %v2932 = vunpack.c.h.b16 %v2319
    %v2933 = vunpack.c.l.b16 %v2320
    %v2934 = vunpack.c.h.b16 %v2320
    %v2935 = vunpack.c.l.b16 %v2321
    %v2936 = vunpack.c.h.b16 %v2321
    %v2937 = vunpack.c.l.b16 %v2322
    %v2938 = vunpack.c.l.b16 %v2323
    %v2939 = vunpack.c.h.b16 %v2323
    %v2940 = vunpack.c.l.b16 %v2324
    %v2941 = vunpack.c.h.b16 %v2324
    %v2942 = vunpack.c.l.b16 %v2325
    %v2943 = vunpack.c.h.b16 %v2325
    %v2944 = vunpack.c.l.b16 %v2326
    %v2945 = vunpack.c.l.b16 %v2327
    %v2946 = vunpack.c.h.b16 %v2327
    %v2947 = vunpack.c.l.b16 %v2328
    %v2948 = vunpack.c.h.b16 %v2328
    %v2949 = vunpack.c.l.b16 %v2329
    %v2950 = vunpack.c.h.b16 %v2329
    %v2951 = vunpack.c.l.b16 %v2330
    %v2952 = vunpack.c.l.b16 %v2331
    %v2953 = vunpack.c.h.b16 %v2331
    %v2954 = vunpack.c.l.b16 %v2332
    %v2955 = vunpack.c.h.b16 %v2332
    %v2956 = vunpack.c.l.b16 %v2333
    %v2957 = vunpack.c.h.b16 %v2333
    %v2958 = vunpack.c.l.b16 %v2334
    %v2959 = vunpack.c.l.b16 %v2335
    %v2960 = vunpack.c.h.b16 %v2335
    %v2961 = vunpack.c.l.b16 %v2336
    %v2962 = vunpack.c.h.b16 %v2336
    %v2963 = vunpack.c.l.b16 %v2337
    %v2964 = vunpack.c.h.b16 %v2337
    %v2965 = vunpack.c.l.b16 %v2338
    %v2966 = vunpack.c.l.b16 %v2339
    %v2967 = vunpack.c.h.b16 %v2339
    %v2968 = vunpack.c.l.b16 %v2340
    %v2969 = vunpack.c.h.b16 %v2340
    %v2970 = vunpack.c.l.b16 %v2341
    %v2971 = vunpack.c.h.b16 %v2341
    %v2972 = vunpack.c.l.b16 %v2342
    %v2973 = vunpack.c.l.b16 %v2343
    %v2974 = vunpack.c.h.b16 %v2343
    %v2975 = vunpack.c.l.b16 %v2344
    %v2976 = vunpack.c.h.b16 %v2344
    %v2977 = vunpack.c.l.b16 %v2345
    %v2978 = vunpack.c.h.b16 %v2345
    %v2979 = vunpack.c.l.b16 %v2346
    %v2980 = vunpack.c.l.b16 %v2347
    %v2981 = vunpack.c.h.b16 %v2347
    %v2982 = vunpack.c.l.b16 %v2348
    %v2983 = vunpack.c.h.b16 %v2348
    %v2984 = vunpack.c.l.b16 %v2349
    %v2985 = vunpack.c.h.b16 %v2349
    %v2986 = vunpack.c.l.b16 %v2350
    %v2987 = vunpack.c.l.b16 %v2351
    %v2988 = vunpack.c.h.b16 %v2351
    %v2989 = vunpack.c.l.b16 %v2352
    %v2990 = vunpack.c.h.b16 %v2352
    %v2991 = vunpack.c.l.b16 %v2353
    %v2992 = vunpack.c.h.b16 %v2353
    %v2993 = vunpack.c.l.b16 %v2354
    %v2994 = vunpack.c.l.b16 %v2355
    %v2995 = vunpack.c.h.b16 %v2355
    %v2996 = vunpack.c.l.b16 %v2356
    %v2997 = vunpack.c.h.b16 %v2356
    %v2998 = vunpack.c.l.b16 %v2357
    %v2999 = vunpack.c.h.b16 %v2357
    %v3000 = vunpack.c.l.b16 %v2358
    %v3001 = vunpack.c.l.b16 %v2359
    %v3002 = vunpack.c.h.b16 %v2359
    %v3003 = vunpack.c.l.b16 %v2360
    %v3004 = vunpack.c.h.b16 %v2360
    %v3005 = vunpack.c.l.b16 %v2361
    %v3006 = vunpack.c.h.b16 %v2361
    %v3007 = vunpack.c.l.b16 %v2362
    %v3008 = vunpack.c.l.b16 %v2363
    %v3009 = vunpack.c.h.b16 %v2363
    %v3010 = vunpack.c.l.b16 %v2364
    %v3011 = vunpack.c.h.b16 %v2364
    %v3012 = vunpack.c.l.b16 %v2365
    %v3013 = vunpack.c.h.b16 %v2365
    %v3014 = vunpack.c.l.b16 %v2366
    %v3015 = vunpack.c.l.b16 %v2367
    %v3016 = vunpack.c.h.b16 %v2367
    %v3017 = vunpack.c.l.b16 %v2368
    %v3018 = vunpack.c.h.b16 %v2368
    %v3019 = vunpack.c.l.b16 %v2369
    %v3020 = vunpack.c.h.b16 %v2369
    %v3021 = vunpack.c.l.b16 %v2370
    %v3022 = vunpack.c.l.b16 %v2371
    %v3023 = vunpack.c.h.b16 %v2371
    %v3024 = vunpack.c.l.b16 %v2372
    %v3025 = vunpack.c.h.b16 %v2372
    %v3026 = vunpack.c.l.b16 %v2373
    %v3027 = vunpack.c.h.b16 %v2373
    %v3028 = vunpack.c.l.b16 %v2374
    %v3029 = vunpack.c.l.b16 %v2375
    %v3030 = vunpack.c.h.b16 %v2375
    %v3031 = vunpack.c.l.b16 %v2376
    %v3032 = vunpack.c.h.b16 %v2376
    %v3033 = vunpack.c.l.b16 %v2377
    %v3034 = vunpack.c.h.b16 %v2377
    %v3035 = vunpack.c.l.b16 %v2378
    %v3036 = vunpack.c.l.b16 %v2379
    %v3037 = vunpack.c.h.b16 %v2379
    %v3038 = vunpack.c.l.b16 %v2380
    %v3039 = vunpack.c.h.b16 %v2380
    %v3040 = vunpack.c.l.b16 %v2381
    %v3041 = vunpack.c.h.b16 %v2381
    %v3042 = vunpack.c.l.b16 %v2382
    %v3043 = vunpack.c.l.b16 %v2383
    %v3044 = vunpack.c.h.b16 %v2383
    %v3045 = vunpack.c.l.b16 %v2384
    %v3046 = vunpack.c.h.b16 %v2384
    %v3047 = vunpack.c.l.b16 %v2385
    %v3048 = vunpack.c.h.b16 %v2385
    %v3049 = vunpack.c.l.b16 %v2386
    %v3050 = vunpack.c.l.b16 %v2387
    %v3051 = vunpack.c.h.b16 %v2387
    %v3052 = vunpack.c.l.b16 %v2388
    %v3053 = vunpack.c.h.b16 %v2388
    %v3054 = vunpack.c.l.b16 %v2389
    %v3055 = vunpack.c.h.b16 %v2389
    %v3056 = vunpack.c.l.b16 %v2390
    %v3057 = vunpack.c.l.b16 %v2391
    %v3058 = vunpack.c.h.b16 %v2391
    %v3059 = vunpack.c.l.b16 %v2392
    %v3060 = vunpack.c.h.b16 %v2392
    %v3061 = vunpack.c.l.b16 %v2393
    %v3062 = vunpack.c.h.b16 %v2393
    %v3063 = vunpack.c.l.b16 %v2394
    %v3064 = vunpack.c.l.b16 %v2395
    %v3065 = vunpack.c.h.b16 %v2395
    %v3066 = vunpack.c.l.b16 %v2396
    %v3067 = vunpack.c.h.b16 %v2396
    %v3068 = vunpack.c.l.b16 %v2397
    %v3069 = vunpack.c.h.b16 %v2397
    %v3070 = vunpack.c.l.b16 %v2398
    %v3071 = vunpack.c.l.b16 %v2399
    %v3072 = vunpack.c.h.b16 %v2399
    %v3073 = vunpack.c.l.b16 %v2400
    %v3074 = vunpack.c.h.b16 %v2400
    %v3075 = vunpack.c.l.b16 %v2401
    %v3076 = vunpack.c.h.b16 %v2401
    %v3077 = vunpack.c.l.b16 %v2402
    %v3078 = vunpack.c.l.b16 %v2403
    %v3079 = vunpack.c.h.b16 %v2403
    %v3080 = vunpack.c.l.b16 %v2404
    %v3081 = vunpack.c.h.b16 %v2404
    %v3082 = vunpack.c.l.b16 %v2405
    %v3083 = vunpack.c.h.b16 %v2405
    %v3084 = vunpack.c.l.b16 %v2406
    %v3085 = vunpack.c.l.b16 %v2407
    %v3086 = vunpack.c.h.b16 %v2407
    %v3087 = vunpack.c.l.b16 %v2408
    %v3088 = vunpack.c.h.b16 %v2408
    %v3089 = vunpack.c.l.b16 %v2409
    %v3090 = vunpack.c.h.b16 %v2409
    %v3091 = vunpack.c.l.b16 %v2410
    %v3092 = vunpack.c.l.b16 %v2411
    %v3093 = vunpack.c.h.b16 %v2411
    %v3094 = vunpack.c.l.b16 %v2412
    %v3095 = vunpack.c.h.b16 %v2412
    %v3096 = vunpack.c.l.b16 %v2413
    %v3097 = vunpack.c.h.b16 %v2413
    %v3098 = vunpack.c.l.b16 %v2414
    %v3099 = vunpack.c.l.b16 %v2415
    %v3100 = vunpack.c.h.b16 %v2415
    %v3101 = vunpack.c.l.b16 %v2416
    %v3102 = vunpack.c.h.b16 %v2416
    %v3103 = vunpack.c.l.b16 %v2417
    %v3104 = vunpack.c.h.b16 %v2417
    %v3105 = vunpack.c.l.b16 %v2418
    %v3106 = vunpack.c.l.b16 %v2419
    %v3107 = vunpack.c.h.b16 %v2419
    %v3108 = vunpack.c.l.b16 %v2420
    %v3109 = vunpack.c.h.b16 %v2420
    %v3110 = vunpack.c.l.b16 %v2421
    %v3111 = vunpack.c.h.b16 %v2421
    %v3112 = vunpack.c.l.b16 %v2422
    %v3113 = vunpack.c.l.b16 %v2423
    %v3114 = vunpack.c.h.b16 %v2423
    %v3115 = vunpack.c.l.b16 %v2424
    %v3116 = vunpack.c.h.b16 %v2424
    %v3117 = vunpack.c.l.b16 %v2425
    %v3118 = vunpack.c.h.b16 %v2425
    %v3119 = vunpack.c.l.b16 %v2426
    %v3120 = vunpack.c.l.b16 %v2427
    %v3121 = vunpack.c.h.b16 %v2427
    %v3122 = vunpack.c.l.b16 %v2428
    %v3123 = vunpack.c.h.b16 %v2428
    %v3124 = vunpack.c.l.b16 %v2429
    %v3125 = vunpack.c.h.b16 %v2429
    %v3126 = vunpack.c.l.b16 %v2430
    %v3127 = vunpack.c.l.b16 %v2431
    %v3128 = vunpack.c.h.b16 %v2431
    %v3129 = vunpack.c.l.b16 %v2432
    %v3130 = vunpack.c.h.b16 %v2432
    %v3131 = vunpack.c.l.b16 %v2433
    %v3132 = vunpack.c.h.b16 %v2433
    %v3133 = vunpack.c.l.b16 %v2434
    %v3134 = vunpack.c.l.b16 %v2435
    %v3135 = vunpack.c.h.b16 %v2435
    %v3136 = vunpack.c.l.b16 %v2436
    %v3137 = vunpack.c.h.b16 %v2436
    %v3138 = vunpack.c.l.b16 %v2437
    %v3139 = vunpack.c.h.b16 %v2437
    %v3140 = vunpack.c.l.b16 %v2438
    %v3141 = vunpack.c.l.b16 %v2439
    %v3142 = vunpack.c.h.b16 %v2439
    %v3143 = vunpack.c.l.b16 %v2440
    %v3144 = vunpack.c.h.b16 %v2440
    %v3145 = vunpack.c.l.b16 %v2441
    %v3146 = vunpack.c.h.b16 %v2441
    %v3147 = vunpack.c.l.b16 %v2442
    %v3148 = vunpack.c.l.b16 %v2443
    %v3149 = vunpack.c.h.b16 %v2443
    %v3150 = vunpack.c.l.b16 %v2444
    %v3151 = vunpack.c.h.b16 %v2444
    %v3152 = vunpack.c.l.b16 %v2445
    %v3153 = vunpack.c.h.b16 %v2445
    %v3154 = vunpack.c.l.b16 %v2446
    %v3155 = vunpack.c.l.b16 %v2447
    %v3156 = vunpack.c.h.b16 %v2447
    %v3157 = vunpack.c.l.b16 %v2448
    %v3158 = vunpack.c.h.b16 %v2448
    %v3159 = vunpack.c.l.b16 %v2449
    %v3160 = vunpack.c.h.b16 %v2449
    %v3161 = vunpack.c.l.b16 %v2450
    %v3162 = vunpack.c.l.b16 %v2451
    %v3163 = vunpack.c.h.b16 %v2451
    %v3164 = vunpack.c.l.b16 %v2452
    %v3165 = vunpack.c.h.b16 %v2452
    %v3166 = vunpack.c.l.b16 %v2453
    %v3167 = vunpack.c.h.b16 %v2453
    %v3168 = vunpack.c.l.b16 %v2454
    %v3169 = vunpack.c.l.b16 %v2455
    %v3170 = vunpack.c.h.b16 %v2455
    %v3171 = vunpack.c.l.b16 %v2456
    %v3172 = vunpack.c.h.b16 %v2456
    %v3173 = vunpack.c.l.b16 %v2457
    %v3174 = vunpack.c.h.b16 %v2457
    %v3175 = vunpack.c.l.b16 %v2458
    %v3176 = vunpack.c.l.b16 %v2459
    %v3177 = vunpack.c.h.b16 %v2459
    %v3178 = vunpack.c.l.b16 %v2460
    %v3179 = vunpack.c.h.b16 %v2460
    %v3180 = vunpack.c.l.b16 %v2461
    %v3181 = vunpack.c.h.b16 %v2461
    %v3182 = vunpack.c.l.b16 %v2462
    %v3183 = vunpack.c.l.b16 %v2463
    %v3184 = vunpack.c.h.b16 %v2463
    %v3185 = vunpack.c.l.b16 %v2464
    %v3186 = vunpack.c.h.b16 %v2464
    %v3187 = vunpack.c.l.b16 %v2465
    %v3188 = vunpack.c.h.b16 %v2465
    %v3189 = vunpack.c.l.b16 %v2466
    %v3190 = vunpack.c.l.b16 %v2467
    %v3191 = vunpack.c.h.b16 %v2467
    %v3192 = vunpack.c.l.b16 %v2468
    %v3193 = vunpack.c.h.b16 %v2468
    %v3194 = vunpack.c.l.b16 %v2469
    %v3195 = vunpack.c.h.b16 %v2469
    %v3196 = vunpack.c.l.b16 %v2470
    %v3197 = vunpack.c.l.b16 %v2471
    %v3198 = vunpack.c.h.b16 %v2471
    %v3199 = vunpack.c.l.b16 %v2472
    %v3200 = vunpack.c.h.b16 %v2472
    %v3201 = vunpack.c.l.b16 %v2473
    %v3202 = vunpack.c.h.b16 %v2473
    %v3203 = vunpack.c.l.b16 %v2474
    %v3204 = vunpack.c.l.b16 %v2475
    %v3205 = vunpack.c.h.b16 %v2475
    %v3206 = vunpack.c.l.b16 %v2476
    %v3207 = vunpack.c.h.b16 %v2476
    %v3208 = vunpack.c.l.b16 %v2477
    %v3209 = vunpack.c.h.b16 %v2477
    %v3210 = vunpack.c.l.b16 %v2478
    %v3211 = vunpack.c.l.b16 %v2479
    %v3212 = vunpack.c.h.b16 %v2479
    %v3213 = vunpack.c.l.b16 %v2480
    %v3214 = vunpack.c.h.b16 %v2480
    %v3215 = vunpack.c.l.b16 %v2481
    %v3216 = vunpack.c.h.b16 %v2481
    %v3217 = vunpack.c.l.b16 %v2482
    %v3218 = vunpack.c.l.b16 %v2483
    %v3219 = vunpack.c.h.b16 %v2483
    %v3220 = vunpack.c.l.b16 %v2484
    %v3221 = vunpack.c.h.b16 %v2484
    %v3222 = vunpack.c.l.b16 %v2485
    %v3223 = vunpack.c.h.b16 %v2485
    %v3224 = vunpack.c.l.b16 %v2486
    %v3225 = vunpack.c.l.b16 %v2487
    %v3226 = vunpack.c.h.b16 %v2487
    %v3227 = vunpack.c.l.b16 %v2488
    %v3228 = vunpack.c.h.b16 %v2488
    %v3229 = vunpack.c.l.b16 %v2489
    %v3230 = vunpack.c.h.b16 %v2489
    %v3231 = vunpack.c.l.b16 %v2490
    %v3232 = vpack.c.b16 %v2791, %v2784
    %v3233 = vpack.c.b16 %v2792, %v2785
    %v3234 = vpack.c.b16 %v2793, %v2786
    %v3235 = vpack.c.b16 %v2794, %v2787
    %v3236 = vpack.c.b16 %v2795, %v2788
    %v3237 = vpack.c.b16 %v2796, %v2789
    %v3238 = vpack.c.b16 %v2797, %v2790
    %v3239 = vpack.c.b16 %v2805, %v2798
    %v3240 = vpack.c.b16 %v2806, %v2799
    %v3241 = vpack.c.b16 %v2807, %v2800
    %v3242 = vpack.c.b16 %v2808, %v2801
    %v3243 = vpack.c.b16 %v2809, %v2802
    %v3244 = vpack.c.b16 %v2810, %v2803
    %v3245 = vpack.c.b16 %v2811, %v2804
    %v3246 = vpack.c.b16 %v2819, %v2812
    %v3247 = vpack.c.b16 %v2820, %v2813
    %v3248 = vpack.c.b16 %v2821, %v2814
    %v3249 = vpack.c.b16 %v2822, %v2815
    %v3250 = vpack.c.b16 %v2823, %v2816
    %v3251 = vpack.c.b16 %v2824, %v2817
    %v3252 = vpack.c.b16 %v2825, %v2818
    %v3253 = vpack.c.b16 %v2833, %v2826
    %v3254 = vpack.c.b16 %v2834, %v2827
    %v3255 = vpack.c.b16 %v2835, %v2828
    %v3256 = vpack.c.b16 %v2836, %v2829
    %v3257 = vpack.c.b16 %v2837, %v2830
    %v3258 = vpack.c.b16 %v2838, %v2831
    %v3259 = vpack.c.b16 %v2839, %v2832
    %v3260 = vpack.c.b16 %v2847, %v2840
    %v3261 = vpack.c.b16 %v2848, %v2841
    %v3262 = vpack.c.b16 %v2849, %v2842
    %v3263 = vpack.c.b16 %v2850, %v2843
    %v3264 = vpack.c.b16 %v2851, %v2844
    %v3265 = vpack.c.b16 %v2852, %v2845
    %v3266 = vpack.c.b16 %v2853, %v2846
    %v3267 = vpack.c.b16 %v2861, %v2854
    %v3268 = vpack.c.b16 %v2862, %v2855
    %v3269 = vpack.c.b16 %v2863, %v2856
    %v3270 = vpack.c.b16 %v2864, %v2857
    %v3271 = vpack.c.b16 %v2865, %v2858
    %v3272 = vpack.c.b16 %v2866, %v2859
    %v3273 = vpack.c.b16 %v2867, %v2860
    %v3274 = vpack.c.b16 %v2875, %v2868
    %v3275 = vpack.c.b16 %v2876, %v2869
    %v3276 = vpack.c.b16 %v2877, %v2870
    %v3277 = vpack.c.b16 %v2878, %v2871
    %v3278 = vpack.c.b16 %v2879, %v2872
    %v3279 = vpack.c.b16 %v2880, %v2873
    %v3280 = vpack.c.b16 %v2881, %v2874
    %v3281 = vpack.c.b16 %v2889, %v2882
    %v3282 = vpack.c.b16 %v2890, %v2883
    %v3283 = vpack.c.b16 %v2891, %v2884
    %v3284 = vpack.c.b16 %v2892, %v2885
    %v3285 = vpack.c.b16 %v2893, %v2886
    %v3286 = vpack.c.b16 %v2894, %v2887
    %v3287 = vpack.c.b16 %v2895, %v2888
    %v3288 = vpack.c.b16 %v2903, %v2896
    %v3289 = vpack.c.b16 %v2904, %v2897
    %v3290 = vpack.c.b16 %v2905, %v2898
    %v3291 = vpack.c.b16 %v2906, %v2899
    %v3292 = vpack.c.b16 %v2907, %v2900
    %v3293 = vpack.c.b16 %v2908, %v2901
    %v3294 = vpack.c.b16 %v2909, %v2902
    %v3295 = vpack.c.b16 %v2917, %v2910
    %v3296 = vpack.c.b16 %v2918, %v2911
    %v3297 = vpack.c.b16 %v2919, %v2912
    %v3298 = vpack.c.b16 %v2920, %v2913
    %v3299 = vpack.c.b16 %v2921, %v2914
    %v3300 = vpack.c.b16 %v2922, %v2915
    %v3301 = vpack.c.b16 %v2923, %v2916
    %v3302 = vpack.c.b16 %v2931, %v2924
    %v3303 = vpack.c.b16 %v2932, %v2925
    %v3304 = vpack.c.b16 %v2933, %v2926
    %v3305 = vpack.c.b16 %v2934, %v2927
    %v3306 = vpack.c.b16 %v2935, %v2928
    %v3307 = vpack.c.b16 %v2936, %v2929
    %v3308 = vpack.c.b16 %v2937, %v2930
    %v3309 = vpack.c.b16 %v2945, %v2938
    %v3310 = vpack.c.b16 %v2946, %v2939
    %v3311 = vpack.c.b16 %v2947, %v2940
    %v3312 = vpack.c.b16 %v2948, %v2941
    %v3313 = vpack.c.b16 %v2949, %v2942
    %v3314 = vpack.c.b16 %v2950, %v2943
    %v3315 = vpack.c.b16 %v2951, %v2944
    %v3316 = vpack.c.b16 %v2959, %v2952
    %v3317 = vpack.c.b16 %v2960, %v2953
    %v3318 = vpack.c.b16 %v2961, %v2954
    %v3319 = vpack.c.b16 %v2962, %v2955
    %v3320 = vpack.c.b16 %v2963, %v2956
    %v3321 = vpack.c.b16 %v2964, %v2957
    %v3322 = vpack.c.b16 %v2965, %v2958
    %v3323 = vpack.c.b16 %v2973, %v2966
    %v3324 = vpack.c.b16 %v2974, %v2967
    %v3325 = vpack.c.b16 %v2975, %v2968
    %v3326 = vpack.c.b16 %v2976, %v2969
    %v3327 = vpack.c.b16 %v2977, %v2970
    %v3328 = vpack.c.b16 %v2978, %v2971
    %v3329 = vpack.c.b16 %v2979, %v2972
    %v3330 = vpack.c.b16 %v2987, %v2980
    %v3331 = vpack.c.b16 %v2988, %v2981
    %v3332 = vpack.c.b16 %v2989, %v2982
    %v3333 = vpack.c.b16 %v2990, %v2983
    %v3334 = vpack.c.b16 %v2991, %v2984
    %v3335 = vpack.c.b16 %v2992, %v2985
    %v3336 = vpack.c.b16 %v2993, %v2986
    %v3337 = vpack.c.b16 %v3001, %v2994
    %v3338 = vpack.c.b16 %v3002, %v2995
    %v3339 = vpack.c.b16 %v3003, %v2996
    %v3340 = vpack.c.b16 %v3004, %v2997
    %v3341 = vpack.c.b16 %v3005, %v2998
    %v3342 = vpack.c.b16 %v3006, %v2999
    %v3343 = vpack.c.b16 %v3007, %v3000
    %v3344 = vpack.c.b16 %v3015, %v3008
    %v3345 = vpack.c.b16 %v3016, %v3009
    %v3346 = vpack.c.b16 %v3017, %v3010
    %v3347 = vpack.c.b16 %v3018, %v3011
    %v3348 = vpack.c.b16 %v3019, %v3012
    %v3349 = vpack.c.b16 %v3020, %v3013
    %v3350 = vpack.c.b16 %v3021, %v3014
    %v3351 = vpack.c.b16 %v3029, %v3022
    %v3352 = vpack.c.b16 %v3030, %v3023
    %v3353 = vpack.c.b16 %v3031, %v3024
    %v3354 = vpack.c.b16 %v3032, %v3025
    %v3355 = vpack.c.b16 %v3033, %v3026
    %v3356 = vpack.c.b16 %v3034, %v3027
    %v3357 = vpack.c.b16 %v3035, %v3028
    %v3358 = vpack.c.b16 %v3043, %v3036
    %v3359 = vpack.c.b16 %v3044, %v3037
    %v3360 = vpack.c.b16 %v3045, %v3038
    %v3361 = vpack.c.b16 %v3046, %v3039
    %v3362 = vpack.c.b16 %v3047, %v3040
    %v3363 = vpack.c.b16 %v3048, %v3041
    %v3364 = vpack.c.b16 %v3049, %v3042
    %v3365 = vpack.c.b16 %v3057, %v3050
    %v3366 = vpack.c.b16 %v3058, %v3051
    %v3367 = vpack.c.b16 %v3059, %v3052
    %v3368 = vpack.c.b16 %v3060, %v3053
    %v3369 = vpack.c.b16 %v3061, %v3054
    %v3370 = vpack.c.b16 %v3062, %v3055
    %v3371 = vpack.c.b16 %v3063, %v3056
    %v3372 = vpack.c.b16 %v3071, %v3064
    %v3373 = vpack.c.b16 %v3072, %v3065
    %v3374 = vpack.c.b16 %v3073, %v3066
    %v3375 = vpack.c.b16 %v3074, %v3067
    %v3376 = vpack.c.b16 %v3075, %v3068
    %v3377 = vpack.c.b16 %v3076, %v3069
    %v3378 = vpack.c.b16 %v3077, %v3070
    %v3379 = vpack.c.b16 %v3085, %v3078
    %v3380 = vpack.c.b16 %v3086, %v3079
    %v3381 = vpack.c.b16 %v3087, %v3080
    %v3382 = vpack.c.b16 %v3088, %v3081
    %v3383 = vpack.c.b16 %v3089, %v3082
    %v3384 = vpack.c.b16 %v3090, %v3083
    %v3385 = vpack.c.b16 %v3091, %v3084
    %v3386 = vpack.c.b16 %v3099, %v3092
    %v3387 = vpack.c.b16 %v3100, %v3093
    %v3388 = vpack.c.b16 %v3101, %v3094
    %v3389 = vpack.c.b16 %v3102, %v3095
    %v3390 = vpack.c.b16 %v3103, %v3096
    %v3391 = vpack.c.b16 %v3104, %v3097
    %v3392 = vpack.c.b16 %v3105, %v3098
    %v3393 = vpack.c.b16 %v3113, %v3106
    %v3394 = vpack.c.b16 %v3114, %v3107
    %v3395 = vpack.c.b16 %v3115, %v3108
    %v3396 = vpack.c.b16 %v3116, %v3109
    %v3397 = vpack.c.b16 %v3117, %v3110
    %v3398 = vpack.c.b16 %v3118, %v3111
    %v3399 = vpack.c.b16 %v3119, %v3112
    %v3400 = vpack.c.b16 %v3127, %v3120
    %v3401 = vpack.c.b16 %v3128, %v3121
    %v3402 = vpack.c.b16 %v3129, %v3122
    %v3403 = vpack.c.b16 %v3130, %v3123
    %v3404 = vpack.c.b16 %v3131, %v3124
    %v3405 = vpack.c.b16 %v3132, %v3125
    %v3406 = vpack.c.b16 %v3133, %v3126
    %v3407 = vpack.c.b16 %v3141, %v3134
    %v3408 = vpack.c.b16 %v3142, %v3135
    %v3409 = vpack.c.b16 %v3143, %v3136
    %v3410 = vpack.c.b16 %v3144, %v3137
    %v3411 = vpack.c.b16 %v3145, %v3138
    %v3412 = vpack.c.b16 %v3146, %v3139
    %v3413 = vpack.c.b16 %v3147, %v3140
    %v3414 = vpack.c.b16 %v3155, %v3148
    %v3415 = vpack.c.b16 %v3156, %v3149
    %v3416 = vpack.c.b16 %v3157, %v3150
    %v3417 = vpack.c.b16 %v3158, %v3151
    %v3418 = vpack.c.b16 %v3159, %v3152
    %v3419 = vpack.c.b16 %v3160, %v3153
    %v3420 = vpack.c.b16 %v3161, %v3154
    %v3421 = vpack.c.b16 %v3169, %v3162
    %v3422 = vpack.c.b16 %v3170, %v3163
    %v3423 = vpack.c.b16 %v3171, %v3164
    %v3424 = vpack.c.b16 %v3172, %v3165
    %v3425 = vpack.c.b16 %v3173, %v3166
    %v3426 = vpack.c.b16 %v3174, %v3167
    %v3427 = vpack.c.b16 %v3175, %v3168
    %v3428 = vpack.c.b16 %v3183, %v3176
    %v3429 = vpack.c.b16 %v3184, %v3177
    %v3430 = vpack.c.b16 %v3185, %v3178
    %v3431 = vpack.c.b16 %v3186, %v3179
    %v3432 = vpack.c.b16 %v3187, %v3180
    %v3433 = vpack.c.b16 %v3188, %v3181
    %v3434 = vpack.c.b16 %v3189, %v3182
    %v3435 = vpack.c.b16 %v3197, %v3190
    %v3436 = vpack.c.b16 %v3198, %v3191
    %v3437 = vpack.c.b16 %v3199, %v3192
    %v3438 = vpack.c.b16 %v3200, %v3193
    %v3439 = vpack.c.b16 %v3201, %v3194
    %v3440 = vpack.c.b16 %v3202, %v3195
    %v3441 = vpack.c.b16 %v3203, %v3196
    %v3442 = vpack.c.b16 %v3211, %v3204
    %v3443 = vpack.c.b16 %v3212, %v3205
    %v3444 = vpack.c.b16 %v3213, %v3206
    %v3445 = vpack.c.b16 %v3214, %v3207
    %v3446 = vpack.c.b16 %v3215, %v3208
    %v3447 = vpack.c.b16 %v3216, %v3209
    %v3448 = vpack.c.b16 %v3217, %v3210
    %v3449 = vpack.c.b16 %v3225, %v3218
    %v3450 = vpack.c.b16 %v3226, %v3219
    %v3451 = vpack.c.b16 %v3227, %v3220
    %v3452 = vpack.c.b16 %v3228, %v3221
    %v3453 = vpack.c.b16 %v3229, %v3222
    %v3454 = vpack.c.b16 %v3230, %v3223
    %v3455 = vpack.c.b16 %v3231, %v3224
    %3680 = vmatprep.subr.bf16.mxu0 %v3282
    %3681 = vmatpush1.bf16.msra.mxu0 %v3281
    %3682 = vmatprep.subr.bf16.mxu0 %v3275
    %3683 = vmatpush1.bf16.msra.mxu0 %v3274
    %3684 = vmatprep.subr.bf16.mxu0 %v3268
    %3685 = vmatpush1.bf16.msra.mxu0 %v3267
    %3686 = vmatprep.subr.bf16.mxu0 %v3261
    %3687 = vmatpush1.bf16.msra.mxu0 %v3260
    %3688 = vmatprep.subr.bf16.mxu0 %v3254
    %3689 = vmatpush1.bf16.msra.mxu0 %v3253
    %3690 = vmatprep.subr.bf16.mxu0 %v3247
    %3691 = vmatpush1.bf16.msra.mxu0 %v3246
    %3692 = vmatprep.subr.bf16.mxu0 %v3240
    %3693 = vmatpush1.bf16.msra.mxu0 %v3239
    %3694 = vmatprep.subr.bf16.mxu0 %v3233
    %3695 = vmatpush1.bf16.msra.mxu0 %v3232
    %3696 = vmatprep.subr.bf16.mxu0 %v3338
    %3697 = vmatpush2.bf16.msra.mxu0 %v3337
    %3698 = vmatprep.subr.bf16.mxu0 %v3331
    %3699 = vmatpush2.bf16.msra.mxu0 %v3330
    %3700 = vmatprep.subr.bf16.mxu0 %v3324
    %3701 = vmatpush2.bf16.msra.mxu0 %v3323
    %3702 = vmatprep.subr.bf16.mxu0 %v3317
    %3703 = vmatpush2.bf16.msra.mxu0 %v3316
    %3704 = vmatprep.subr.bf16.mxu0 %v3310
    %3705 = vmatpush2.bf16.msra.mxu0 %v3309
    %3706 = vmatprep.subr.bf16.mxu0 %v3303
    %3707 = vmatpush2.bf16.msra.mxu0 %v3302
    %3708 = vmatprep.subr.bf16.mxu0 %v3296
    %3709 = vmatpush2.bf16.msra.mxu0 %v3295
    %3710 = vmatprep.subr.bf16.mxu0 %v3289
    %3711 = vmatpush2.bf16.msra.mxu0 %v3288
    %3712 = vmatprep.mubr.bf16.mxu0 %v2232
    %3713 = vmatmul.mubr.bf16.gmra.mxu0 %v2231
    %v3714 = vpop.f32.mrf.mxu0
    %v3715 = vadd.f32 %v2496, %v3714
    %v3716 = vpop.f32.mrf.mxu0
    %v3717 = vadd.f32 %v2500, %v3716
    %v3718 = vpop.f32.mrf.mxu0
    %v3719 = vpop.f32.mrf.mxu0
    %3720 = vdwg.mxu0
    %3721 = vmatprep.subr.bf16.mxu0 %v3394
    %3722 = vmatpush1.bf16.msra.mxu0 %v3393
    %3723 = vmatprep.subr.bf16.mxu0 %v3387
    %3724 = vmatpush1.bf16.msra.mxu0 %v3386
    %3725 = vmatprep.subr.bf16.mxu0 %v3380
    %3726 = vmatpush1.bf16.msra.mxu0 %v3379
    %3727 = vmatprep.subr.bf16.mxu0 %v3373
    %3728 = vmatpush1.bf16.msra.mxu0 %v3372
    %3729 = vmatprep.subr.bf16.mxu0 %v3366
    %3730 = vmatpush1.bf16.msra.mxu0 %v3365
    %3731 = vmatprep.subr.bf16.mxu0 %v3359
    %3732 = vmatpush1.bf16.msra.mxu0 %v3358
    %3733 = vmatprep.subr.bf16.mxu0 %v3352
    %3734 = vmatpush1.bf16.msra.mxu0 %v3351
    %3735 = vmatprep.subr.bf16.mxu0 %v3345
    %3736 = vmatpush1.bf16.msra.mxu0 %v3344
    %3737 = vmatprep.subr.bf16.mxu0 %v3450
    %3738 = vmatpush2.bf16.msra.mxu0 %v3449
    %3739 = vmatprep.subr.bf16.mxu0 %v3443
    %3740 = vmatpush2.bf16.msra.mxu0 %v3442
    %3741 = vmatprep.subr.bf16.mxu0 %v3436
    %3742 = vmatpush2.bf16.msra.mxu0 %v3435
    %3743 = vmatprep.subr.bf16.mxu0 %v3429
    %3744 = vmatpush2.bf16.msra.mxu0 %v3428
    %3745 = vmatprep.subr.bf16.mxu0 %v3422
    %3746 = vmatpush2.bf16.msra.mxu0 %v3421
    %3747 = vmatprep.subr.bf16.mxu0 %v3415
    %3748 = vmatpush2.bf16.msra.mxu0 %v3414
    %3749 = vmatprep.subr.bf16.mxu0 %v3408
    %3750 = vmatpush2.bf16.msra.mxu0 %v3407
    %3751 = vmatprep.subr.bf16.mxu0 %v3401
    %3752 = vmatpush2.bf16.msra.mxu0 %v3400
    %3753 = vmatprep.mubr.bf16.mxu0 %v2234
    %3754 = vmatmul.mubr.bf16.gmra.mxu0 %v2233
    %v3755 = vpop.f32.mrf.mxu0
    %v3756 = vadd.f32 %v3715, %v3755
    %v3757 = vpop.f32.mrf.mxu0
    %v3758 = vadd.f32 %v3717, %v3757
    %v3759 = vpop.f32.mrf.mxu0
    %v3760 = vpop.f32.mrf.mxu0
    %3761 = vdwg.mxu0
    %3762 = vmatprep.subr.bf16.mxu0 %v3284
    %3763 = vmatpush1.bf16.msra.mxu0 %v3283
    %3764 = vmatprep.subr.bf16.mxu0 %v3277
    %3765 = vmatpush1.bf16.msra.mxu0 %v3276
    %3766 = vmatprep.subr.bf16.mxu0 %v3270
    %3767 = vmatpush1.bf16.msra.mxu0 %v3269
    %3768 = vmatprep.subr.bf16.mxu0 %v3263
    %3769 = vmatpush1.bf16.msra.mxu0 %v3262
    %3770 = vmatprep.subr.bf16.mxu0 %v3256
    %3771 = vmatpush1.bf16.msra.mxu0 %v3255
    %3772 = vmatprep.subr.bf16.mxu0 %v3249
    %3773 = vmatpush1.bf16.msra.mxu0 %v3248
    %3774 = vmatprep.subr.bf16.mxu0 %v3242
    %3775 = vmatpush1.bf16.msra.mxu0 %v3241
    %3776 = vmatprep.subr.bf16.mxu0 %v3235
    %3777 = vmatpush1.bf16.msra.mxu0 %v3234
    %3778 = vmatprep.subr.bf16.mxu0 %v3340
    %3779 = vmatpush2.bf16.msra.mxu0 %v3339
    %3780 = vmatprep.subr.bf16.mxu0 %v3333
    %3781 = vmatpush2.bf16.msra.mxu0 %v3332
    %3782 = vmatprep.subr.bf16.mxu0 %v3326
    %3783 = vmatpush2.bf16.msra.mxu0 %v3325
    %3784 = vmatprep.subr.bf16.mxu0 %v3319
    %3785 = vmatpush2.bf16.msra.mxu0 %v3318
    %3786 = vmatprep.subr.bf16.mxu0 %v3312
    %3787 = vmatpush2.bf16.msra.mxu0 %v3311
    %3788 = vmatprep.subr.bf16.mxu0 %v3305
    %3789 = vmatpush2.bf16.msra.mxu0 %v3304
    %3790 = vmatprep.subr.bf16.mxu0 %v3298
    %3791 = vmatpush2.bf16.msra.mxu0 %v3297
    %3792 = vmatprep.subr.bf16.mxu0 %v3291
    %3793 = vmatpush2.bf16.msra.mxu0 %v3290
    %3794 = vmatprep.mubr.bf16.mxu0 %v2232
    %3795 = vmatmul.mubr.bf16.gmra.mxu0 %v2231
    %v3796 = vpop.f32.mrf.mxu0
    %v3797 = vadd.f32 %v2504, %v3796
    %v3798 = vpop.f32.mrf.mxu0
    %v3799 = vadd.f32 %v2508, %v3798
    %v3800 = vpop.f32.mrf.mxu0
    %v3801 = vpop.f32.mrf.mxu0
    %3802 = vdwg.mxu0
    %3803 = vmatprep.subr.bf16.mxu0 %v3396
    %3804 = vmatpush1.bf16.msra.mxu0 %v3395
    %3805 = vmatprep.subr.bf16.mxu0 %v3389
    %3806 = vmatpush1.bf16.msra.mxu0 %v3388
    %3807 = vmatprep.subr.bf16.mxu0 %v3382
    %3808 = vmatpush1.bf16.msra.mxu0 %v3381
    %3809 = vmatprep.subr.bf16.mxu0 %v3375
    %3810 = vmatpush1.bf16.msra.mxu0 %v3374
    %3811 = vmatprep.subr.bf16.mxu0 %v3368
    %3812 = vmatpush1.bf16.msra.mxu0 %v3367
    %3813 = vmatprep.subr.bf16.mxu0 %v3361
    %3814 = vmatpush1.bf16.msra.mxu0 %v3360
    %3815 = vmatprep.subr.bf16.mxu0 %v3354
    %3816 = vmatpush1.bf16.msra.mxu0 %v3353
    %3817 = vmatprep.subr.bf16.mxu0 %v3347
    %3818 = vmatpush1.bf16.msra.mxu0 %v3346
    %3819 = vmatprep.subr.bf16.mxu0 %v3452
    %3820 = vmatpush2.bf16.msra.mxu0 %v3451
    %3821 = vmatprep.subr.bf16.mxu0 %v3445
    %3822 = vmatpush2.bf16.msra.mxu0 %v3444
    %3823 = vmatprep.subr.bf16.mxu0 %v3438
    %3824 = vmatpush2.bf16.msra.mxu0 %v3437
    %3825 = vmatprep.subr.bf16.mxu0 %v3431
    %3826 = vmatpush2.bf16.msra.mxu0 %v3430
    %3827 = vmatprep.subr.bf16.mxu0 %v3424
    %3828 = vmatpush2.bf16.msra.mxu0 %v3423
    %3829 = vmatprep.subr.bf16.mxu0 %v3417
    %3830 = vmatpush2.bf16.msra.mxu0 %v3416
    %3831 = vmatprep.subr.bf16.mxu0 %v3410
    %3832 = vmatpush2.bf16.msra.mxu0 %v3409
    %3833 = vmatprep.subr.bf16.mxu0 %v3403
    %3834 = vmatpush2.bf16.msra.mxu0 %v3402
    %3835 = vmatprep.mubr.bf16.mxu0 %v2234
    %3836 = vmatmul.mubr.bf16.gmra.mxu0 %v2233
    %v3837 = vpop.f32.mrf.mxu0
    %v3838 = vadd.f32 %v3797, %v3837
    %v3839 = vpop.f32.mrf.mxu0
    %v3840 = vadd.f32 %v3799, %v3839
    %v3841 = vpop.f32.mrf.mxu0
    %v3842 = vpop.f32.mrf.mxu0
    %3843 = vdwg.mxu0
    %3844 = vmatprep.subr.bf16.mxu0 %v3286
    %3845 = vmatpush1.bf16.msra.mxu0 %v3285
    %3846 = vmatprep.subr.bf16.mxu0 %v3279
    %3847 = vmatpush1.bf16.msra.mxu0 %v3278
    %3848 = vmatprep.subr.bf16.mxu0 %v3272
    %3849 = vmatpush1.bf16.msra.mxu0 %v3271
    %3850 = vmatprep.subr.bf16.mxu0 %v3265
    %3851 = vmatpush1.bf16.msra.mxu0 %v3264
    %3852 = vmatprep.subr.bf16.mxu0 %v3258
    %3853 = vmatpush1.bf16.msra.mxu0 %v3257
    %3854 = vmatprep.subr.bf16.mxu0 %v3251
    %3855 = vmatpush1.bf16.msra.mxu0 %v3250
    %3856 = vmatprep.subr.bf16.mxu0 %v3244
    %3857 = vmatpush1.bf16.msra.mxu0 %v3243
    %3858 = vmatprep.subr.bf16.mxu0 %v3237
    %3859 = vmatpush1.bf16.msra.mxu0 %v3236
    %3860 = vmatprep.subr.bf16.mxu0 %v3342
    %3861 = vmatpush2.bf16.msra.mxu0 %v3341
    %3862 = vmatprep.subr.bf16.mxu0 %v3335
    %3863 = vmatpush2.bf16.msra.mxu0 %v3334
    %3864 = vmatprep.subr.bf16.mxu0 %v3328
    %3865 = vmatpush2.bf16.msra.mxu0 %v3327
    %3866 = vmatprep.subr.bf16.mxu0 %v3321
    %3867 = vmatpush2.bf16.msra.mxu0 %v3320
    %3868 = vmatprep.subr.bf16.mxu0 %v3314
    %3869 = vmatpush2.bf16.msra.mxu0 %v3313
    %3870 = vmatprep.subr.bf16.mxu0 %v3307
    %3871 = vmatpush2.bf16.msra.mxu0 %v3306
    %3872 = vmatprep.subr.bf16.mxu0 %v3300
    %3873 = vmatpush2.bf16.msra.mxu0 %v3299
    %3874 = vmatprep.subr.bf16.mxu0 %v3293
    %3875 = vmatpush2.bf16.msra.mxu0 %v3292
    %3876 = vmatprep.mubr.bf16.mxu0 %v2232
    %3877 = vmatmul.mubr.bf16.gmra.mxu0 %v2231
    %v3878 = vpop.f32.mrf.mxu0
    %v3879 = vadd.f32 %v2512, %v3878
    %v3880 = vpop.f32.mrf.mxu0
    %v3881 = vadd.f32 %v2516, %v3880
    %v3882 = vpop.f32.mrf.mxu0
    %v3883 = vpop.f32.mrf.mxu0
    %3884 = vdwg.mxu0
    %3885 = vmatprep.subr.bf16.mxu0 %v3398
    %3886 = vmatpush1.bf16.msra.mxu0 %v3397
    %3887 = vmatprep.subr.bf16.mxu0 %v3391
    %3888 = vmatpush1.bf16.msra.mxu0 %v3390
    %3889 = vmatprep.subr.bf16.mxu0 %v3384
    %3890 = vmatpush1.bf16.msra.mxu0 %v3383
    %3891 = vmatprep.subr.bf16.mxu0 %v3377
    %3892 = vmatpush1.bf16.msra.mxu0 %v3376
    %3893 = vmatprep.subr.bf16.mxu0 %v3370
    %3894 = vmatpush1.bf16.msra.mxu0 %v3369
    %3895 = vmatprep.subr.bf16.mxu0 %v3363
    %3896 = vmatpush1.bf16.msra.mxu0 %v3362
    %3897 = vmatprep.subr.bf16.mxu0 %v3356
    %3898 = vmatpush1.bf16.msra.mxu0 %v3355
    %3899 = vmatprep.subr.bf16.mxu0 %v3349
    %3900 = vmatpush1.bf16.msra.mxu0 %v3348
    %3901 = vmatprep.subr.bf16.mxu0 %v3454
    %3902 = vmatpush2.bf16.msra.mxu0 %v3453
    %3903 = vmatprep.subr.bf16.mxu0 %v3447
    %3904 = vmatpush2.bf16.msra.mxu0 %v3446
    %3905 = vmatprep.subr.bf16.mxu0 %v3440
    %3906 = vmatpush2.bf16.msra.mxu0 %v3439
    %3907 = vmatprep.subr.bf16.mxu0 %v3433
    %3908 = vmatpush2.bf16.msra.mxu0 %v3432
    %3909 = vmatprep.subr.bf16.mxu0 %v3426
    %3910 = vmatpush2.bf16.msra.mxu0 %v3425
    %3911 = vmatprep.subr.bf16.mxu0 %v3419
    %3912 = vmatpush2.bf16.msra.mxu0 %v3418
    %3913 = vmatprep.subr.bf16.mxu0 %v3412
    %3914 = vmatpush2.bf16.msra.mxu0 %v3411
    %3915 = vmatprep.subr.bf16.mxu0 %v3405
    %3916 = vmatpush2.bf16.msra.mxu0 %v3404
    %3917 = vmatprep.mubr.bf16.mxu0 %v2234
    %3918 = vmatmul.mubr.bf16.gmra.mxu0 %v2233
    %v3919 = vpop.f32.mrf.mxu0
    %v3920 = vadd.f32 %v3879, %v3919
    %v3921 = vpop.f32.mrf.mxu0
    %v3922 = vadd.f32 %v3881, %v3921
    %v3923 = vpop.f32.mrf.mxu0
    %v3924 = vpop.f32.mrf.mxu0
    %3925 = vdwg.mxu0
    %3926 = vmatprep.subr.bf16.mxu0 0
    %3927 = vmatpush1.bf16.msra.mxu0 %v3287
    %3928 = vmatprep.subr.bf16.mxu0 0
    %3929 = vmatpush1.bf16.msra.mxu0 %v3280
    %3930 = vmatprep.subr.bf16.mxu0 0
    %3931 = vmatpush1.bf16.msra.mxu0 %v3273
    %3932 = vmatprep.subr.bf16.mxu0 0
    %3933 = vmatpush1.bf16.msra.mxu0 %v3266
    %3934 = vmatprep.subr.bf16.mxu0 0
    %3935 = vmatpush1.bf16.msra.mxu0 %v3259
    %3936 = vmatprep.subr.bf16.mxu0 0
    %3937 = vmatpush1.bf16.msra.mxu0 %v3252
    %3938 = vmatprep.subr.bf16.mxu0 0
    %3939 = vmatpush1.bf16.msra.mxu0 %v3245
    %3940 = vmatprep.subr.bf16.mxu0 0
    %3941 = vmatpush1.bf16.msra.mxu0 %v3238
    %3942 = vmatprep.subr.bf16.mxu0 0
    %3943 = vmatpush2.bf16.msra.mxu0 %v3343
    %3944 = vmatprep.subr.bf16.mxu0 0
    %3945 = vmatpush2.bf16.msra.mxu0 %v3336
    %3946 = vmatprep.subr.bf16.mxu0 0
    %3947 = vmatpush2.bf16.msra.mxu0 %v3329
    %3948 = vmatprep.subr.bf16.mxu0 0
    %3949 = vmatpush2.bf16.msra.mxu0 %v3322
    %3950 = vmatprep.subr.bf16.mxu0 0
    %3951 = vmatpush2.bf16.msra.mxu0 %v3315
    %3952 = vmatprep.subr.bf16.mxu0 0
    %3953 = vmatpush2.bf16.msra.mxu0 %v3308
    %3954 = vmatprep.subr.bf16.mxu0 0
    %3955 = vmatpush2.bf16.msra.mxu0 %v3301
    %3956 = vmatprep.subr.bf16.mxu0 0
    %3957 = vmatpush2.bf16.msra.mxu0 %v3294
    %3958 = vmatprep.mubr.bf16.mxu0 %v2232
    %3959 = vmatmul.mubr.bf16.gmra.mxu0 %v2231
    %v3960 = vpop.f32.mrf.mxu0
    %v3961 = vadd.f32 %v2520, %v3960
    %v3962 = vpop.f32.mrf.mxu0
    %v3963 = vpop.f32.mrf.mxu0
    %v3964 = vpop.f32.mrf.mxu0
    %3965 = vdwg.mxu0
    %3966 = vmatprep.subr.bf16.mxu0 0
    %3967 = vmatpush1.bf16.msra.mxu0 %v3399
    %3968 = vmatprep.subr.bf16.mxu0 0
    %3969 = vmatpush1.bf16.msra.mxu0 %v3392
    %3970 = vmatprep.subr.bf16.mxu0 0
    %3971 = vmatpush1.bf16.msra.mxu0 %v3385
    %3972 = vmatprep.subr.bf16.mxu0 0
    %3973 = vmatpush1.bf16.msra.mxu0 %v3378
    %3974 = vmatprep.subr.bf16.mxu0 0
    %3975 = vmatpush1.bf16.msra.mxu0 %v3371
    %3976 = vmatprep.subr.bf16.mxu0 0
    %3977 = vmatpush1.bf16.msra.mxu0 %v3364
    %3978 = vmatprep.subr.bf16.mxu0 0
    %3979 = vmatpush1.bf16.msra.mxu0 %v3357
    %3980 = vmatprep.subr.bf16.mxu0 0
    %3981 = vmatpush1.bf16.msra.mxu0 %v3350
    %3982 = vmatprep.subr.bf16.mxu0 0
    %3983 = vmatpush2.bf16.msra.mxu0 %v3455
    %3984 = vmatprep.subr.bf16.mxu0 0
    %3985 = vmatpush2.bf16.msra.mxu0 %v3448
    %3986 = vmatprep.subr.bf16.mxu0 0
    %3987 = vmatpush2.bf16.msra.mxu0 %v3441
    %3988 = vmatprep.subr.bf16.mxu0 0
    %3989 = vmatpush2.bf16.msra.mxu0 %v3434
    %3990 = vmatprep.subr.bf16.mxu0 0
    %3991 = vmatpush2.bf16.msra.mxu0 %v3427
    %3992 = vmatprep.subr.bf16.mxu0 0
    %3993 = vmatpush2.bf16.msra.mxu0 %v3420
    %3994 = vmatprep.subr.bf16.mxu0 0
    %3995 = vmatpush2.bf16.msra.mxu0 %v3413
    %3996 = vmatprep.subr.bf16.mxu0 0
    %3997 = vmatpush2.bf16.msra.mxu0 %v3406
    %3998 = vmatprep.mubr.bf16.mxu0 %v2234
    %3999 = vmatmul.mubr.bf16.gmra.mxu0 %v2233
    %v4000 = vpop.f32.mrf.mxu0
    %v4001 = vadd.f32 %v3961, %v4000
    %v4002 = vpop.f32.mrf.mxu0
    %v4003 = vpop.f32.mrf.mxu0
    %v4004 = vpop.f32.mrf.mxu0
    %4005 = vdwg.mxu0
    %v4006 = vmul.f32 %v3756, 0.5
    %v4007 = vmul.f32 %v3758, 0.5
    %v4008 = vmul.f32 %v3838, 0.5
    %v4009 = vmul.f32 %v3840, 0.5
    %v4010 = vmul.f32 %v3920, 0.5
    %v4011 = vmul.f32 %v3922, 0.5
    %v4012 = vmul.f32 %v4001, 0.5
    %v4013 = vtanh.pop %v4006
    %v4014 = vtanh.pop %v4007
    %v4015 = vtanh.pop %v4008
    %v4016 = vtanh.pop %v4009
    %v4017 = vtanh.pop %v4010
    %v4018 = vtanh.pop %v4011
    %v4019 = vtanh.pop %v4012
    %v4020 = vmul.f32 %v4013, 0.5
    %v4021 = vmul.f32 %v4014, 0.5
    %v4022 = vmul.f32 %v4015, 0.5
    %v4023 = vmul.f32 %v4016, 0.5
    %v4024 = vmul.f32 %v4017, 0.5
    %v4025 = vmul.f32 %v4018, 0.5
    %v4026 = vmul.f32 %v4019, 0.5
    %v4027 = vadd.f32 %v4020, 0.5
    %v4028 = vadd.f32 %v4021, 0.5
    %v4029 = vadd.f32 %v4022, 0.5
    %v4030 = vadd.f32 %v4023, 0.5
    %v4031 = vadd.f32 %v4024, 0.5
    %v4032 = vadd.f32 %v4025, 0.5
    %v4033 = vadd.f32 %v4026, 0.5
    %v4034 = vpack.c.bf16 %v4027, %v4027
    %v4035 = vpack.c.bf16 %v4028, %v4028
    %v4036 = vpack.c.bf16 %v4029, %v4029
    %v4037 = vpack.c.bf16 %v4030, %v4030
    %v4038 = vpack.c.bf16 %v4031, %v4031
    %v4039 = vpack.c.bf16 %v4032, %v4032
    %v4040 = vpack.c.bf16 %v4033, %v4033
    %v4048 = vunpack.c.l.b16 %v4034
    %v4049 = vunpack.c.l.b16 %v4035
    %v4050 = vunpack.c.l.b16 %v4036
    %v4051 = vunpack.c.l.b16 %v4037
    %v4052 = vunpack.c.l.b16 %v4038
    %v4053 = vunpack.c.l.b16 %v4039
    %v4054 = vunpack.c.l.b16 %v4040
    %v4055 = vpack.c.b16 %v4049, %v4048
    %v4056 = vpack.c.b16 %v4051, %v4050
    %v4057 = vpack.c.b16 %v4053, %v4052
    %v4058 = vpack.c.b16 %v4054, %v4054
    %4063 = vst [vmem:[#allocation2] sm:$0xff] %v4055
    %4064 = vst [vmem:[#allocation2 + $0x8] sm:$0xff] %v4056
    %4065 = vst [vmem:[#allocation2 + $0x10] sm:$0xff] %v4057
    %vm4066 = vcmask 125952
    %4067 = vst.msk [vmem:[#allocation2 + $0x18] sm:$0xf] %vm4066, %v4058
    // Predicated region
    $region38: #{tpu_custom_call.1} parent=1 // pred_check
      _
    $region39: #{tpu_custom_call.1} parent=1 // pred_check_branch
      %4069 = sbr.rel (0) target = $region41
    $region40: #{tpu_custom_call.1} parent=1 // pred_region
      %s4071 = ssub.s32 448, 448
      %4072 = vsyncadd [#allocation3], %s4071
      %s4074 = sshll.u32 [#allocation2], 4
      %s4075 = int_to_ptr.vmem [resolvable:$true] %s4074
      %4077 = dma.vmem_to_hbm [thread:$0]  %s4075, 448, %s9, [#allocation3]
    $region41: #{tpu_custom_call.1} parent=1 // pred_fallthru
      _
    // Predicated region
    $region42: #{tpu_custom_call.1} parent=1 // pred_check
      _
    $region43: #{tpu_custom_call.1} parent=1 // pred_check_branch
      %4079 = sbr.rel (0) target = $region45
    $region44: #{tpu_custom_call.1} parent=1 // pred_region
      %4080 = dma.done [#allocation3], 448
    $region45: #{tpu_custom_call.1} parent=1 // pred_fallthru
      _
    %4081 = vsyncpa [#allocation3], 1

</llo_original>
